<compile_context>
chip_gen: v6e
topology: v6e:2x2x1
jax: 0.10.0
libtpu: 0.0.40
codegen_flags: <defaults>
</compile_context>

<pallas_src>
import functools

import jax
import jax.numpy as jnp
from jax import lax
from jax.experimental import pallas as pl
from jax.experimental.pallas import tpu as pltpu


def _round_up(v, m):
    return (v + m - 1) // m * m


def _pick_vmem_limit_bytes():
    # v4/v5e/v6e have 128 MiB physical VMEM -> give Mosaic most of it.
    # v7x has only 64 MiB physical -> stay well under.
    try:
        kind = jax.devices()[0].device_kind.lower()
    except Exception:
        kind = ""
    if ("v4" in kind) or ("v5" in kind) or ("v6" in kind):
        return 100 * 1024 * 1024
    return 40 * 1024 * 1024


def _block_kernel(x_ref, dww_ref, dwb_ref,
                  w1_ref, b1_ref, gg_ref, gb_ref, w2_ref, b2_ref,
                  out_ref, xpad_s, *, c_true, hid_true):
    # Shapes seen by the kernel (Cp = C padded to 128, Hp = 4C padded to 128):
    #   x_ref   : (1, H, W, Cp)    unpadded input (conv source AND residual)
    #   dww_ref : (7, 7, Cp)       depthwise conv weight, dwb_ref : (1, Cp)
    #   w1_ref  : (Cp, Hp) bf16 (LN gamma pre-folded), b1_ref : (1, Hp)
    #   gg/gb   : (1, Hp)          GRN gamma / beta
    #   w2_ref  : (Hp, Cp) bf16,   b2_ref : (1, Cp)
    #   out_ref : (1, H, W, Cp)
    #   xpad_s  : (H+6, W+6, Cp)   VMEM scratch holding the zero-padded image
    _, H, W, Cp = out_ref.shape

    # --- zero ONLY the 3-wide halo border; the interior is fully overwritten
    #     below.  (Deliberately not "zero once at program_id==0": under a
    #     core-sharded parallel grid a core may never see grid index 0 and
    #     would read an uninitialised halo.) ---
    zrow = jnp.zeros((3, W + 6, Cp), jnp.float32)
    xpad_s[0:3, :, :] = zrow
    xpad_s[H + 3:H + 6, :, :] = zrow
    zcol = jnp.zeros((H, 3, Cp), jnp.float32)
    xpad_s[3:3 + H, 0:3, :] = zcol
    xpad_s[3:3 + H, W + 3:W + 6, :] = zcol

    # interior <- input image (no long-lived (H, W, Cp) value; the residual is
    # re-read from x_ref at the very end).
    xpad_s[3:3 + H, 3:3 + W, :] = x_ref[0].astype(jnp.float32)

    # --- depthwise 7x7 conv on the VPU.  fori_loop(unroll=True) bounds live
    #     ranges: only one sublane-shifted (H+6, W, Cp) window is materialised
    #     at a time.  Bias is folded into the accumulator init; kh shifts are
    #     cheap leading-dim slices of the loaded window. ---
    acc0 = jnp.broadcast_to(dwb_ref[0].astype(jnp.float32), (H, W, Cp))

    def kw_body(kw, acc):
        xs = xpad_s[:, pl.ds(kw, W), :]                         # (H+6, W, Cp)
        wk = dww_ref[:, pl.ds(kw, 1), :].astype(jnp.float32)    # (7, 1, Cp)
        for kh in range(7):
            acc = acc + xs[kh:kh + H] * wk[kh]
        return acc

    acc = lax.fori_loop(0, 7, kw_body, acc0, unroll=True)

    # --- LayerNorm statistics over channels (eps=1e-6), one-pass moments.
    #     Padded channel lanes of `acc` are exactly zero, so dividing the lane
    #     sums by the true C gives correct statistics.  gamma/beta are folded
    #     into w1/b1 in the wrapper; the garbage that normalisation puts into
    #     the padded lanes is annihilated by the zero-padded rows of w1. ---
    inv_c = 1.0 / float(c_true)
    s1 = jnp.sum(acc, axis=-1, keepdims=True)
    s2 = jnp.sum(acc * acc, axis=-1, keepdims=True)
    mean = s1 * inv_c
    var = s2 * inv_c - mean * mean
    y = (acc - mean) * lax.rsqrt(var + 1e-6)

    # --- pwconv1 (bf16 MXU, f32 accumulate); LN affine + bias pre-folded ---
    h = jnp.dot(y.reshape(H * W, Cp).astype(jnp.bfloat16), w1_ref[...],
                preferred_element_type=jnp.float32)
    h = h + b1_ref[...]

    # --- GELU on the EUP (tanh approximation, ~1e-3 vs exact erf). ---
    # TODO(synk): use approximate=False if exact parity with torch.nn.GELU
    # (erf) is required; the erf polynomial runs on the (busy) VALU.
    h = jax.nn.gelu(h, approximate=True)                        # (H*W, Hp) f32

    # --- GRN over spatial extent: statistics in f32, elementwise in bf16.
    #     out = x*(gamma*nx + 1) + beta  (algebraically == gamma*(x*nx)+beta+x)
    gx = jnp.sqrt(jnp.sum(h * h, axis=0, keepdims=True))        # (1, Hp) f32
    gmean = jnp.sum(gx, axis=-1, keepdims=True) * (1.0 / float(hid_true))
    nx = gx / (gmean + 1e-6)
    scale = (gg_ref[...] * nx + 1.0).astype(jnp.bfloat16)       # (1, Hp)
    h = h.astype(jnp.bfloat16) * scale + gb_ref[...].astype(jnp.bfloat16)

    # --- pwconv2 (bf16 MXU, f32 accumulate) + residual re-read from x_ref ---
    o = jnp.dot(h, w2_ref[...], preferred_element_type=jnp.float32) + b2_ref[...]
    out_ref[...] = (x_ref[...].astype(jnp.float32)
                    + o.reshape(1, H, W, Cp)).astype(out_ref.dtype)


def convnextv2_block(x_nchw, params):
    """x_nchw: (N, C, H, W) float32. Returns (N, C, H, W)."""
    N, C, H, W = x_nchw.shape
    hid = 4 * C
    Cp = _round_up(C, 128)       # lane-align channels
    Hp = _round_up(hid, 128)     # lane-align hidden dim

    # Channels-last + channel-lane padding (zeros; inert through the block).
    # TODO(synk): in a full ConvNeXtV2 backbone keep activations in this padded
    # NHWC layout across consecutive blocks so these transpose/pad/slice HBM
    # passes are paid once per network instead of once per block.
    x_nhwc = jnp.transpose(x_nchw, (0, 2, 3, 1))
    x_p = jnp.pad(x_nhwc, ((0, 0), (0, 0), (0, 0), (0, Cp - C)))

    def padc(a, tgt):
        pad = [(0, 0)] * (a.ndim - 1) + [(0, tgt - a.shape[-1])]
        return jnp.pad(a, pad)

    dww = padc(params["dw_w"], Cp)                              # (7, 7, Cp)
    dwb = padc(params["dw_b"][None, :], Cp)                     # (1, Cp)
    # Fold LayerNorm gamma/beta and pwconv1 bias algebraically into w1/b1:
    #   (y_norm*g + b) @ w1 + b1  ==  y_norm @ (g[:,None]*w1) + (b @ w1 + b1)
    w1_eff = params["ln_g"][:, None] * params["w1"]             # (C, 4C)
    b1_eff = params["ln_b"] @ params["w1"] + params["b1"]       # (4C,)
    w1 = jnp.pad(w1_eff, ((0, Cp - C), (0, Hp - hid))).astype(jnp.bfloat16)
    b1 = padc(b1_eff[None, :], Hp)
    gg = padc(params["grn_g"][None, :], Hp)
    gb = padc(params["grn_b"][None, :], Hp)
    w2 = jnp.pad(params["w2"], ((0, Hp - hid), (0, Cp - C))).astype(jnp.bfloat16)
    b2 = padc(params["b2"][None, :], Cp)

    def fixed(shape):
        nd = len(shape)
        # Constant block index across the grid -> Pallas keeps the weights
        # resident in VMEM and never re-DMAs them.
        # TODO(synk): on v7x, pipeline_mode=pl.Buffered(1) here would drop the
        # redundant second weight buffer and save ~half the weight VMEM.
        return pl.BlockSpec(shape, lambda b: (0,) * nd)

    kernel = functools.partial(_block_kernel, c_true=C, hid_true=hid)

    flops = N * (4 * H * W * C * hid + 2 * 49 * H * W * C)
    transcendentals = N * H * W * hid          # one tanh per hidden element
    bytes_accessed = (2 * N * H * W * Cp) * 4 + (Cp * Hp + Hp * Cp) * 2 \
        + (7 * 7 * Cp + 4 * Cp + 3 * Hp) * 4

    out_nhwc = pl.pallas_call(
        kernel,
        out_shape=jax.ShapeDtypeStruct((N, H, W, Cp), x_nchw.dtype),
        grid_spec=pltpu.PrefetchScalarGridSpec(
            num_scalar_prefetch=0,
            # TODO(synk): for N==1 on v7x (2 TensorCores) add a second parallel
            # grid axis (H-halves with 3-row halo + two-pass GRN) to use both
            # cores; with N>=2 the batch axis already shards across them.
            grid=(N,),
            in_specs=[
                pl.BlockSpec((1, H, W, Cp), lambda b: (b, 0, 0, 0)),
                fixed(dww.shape), fixed(dwb.shape),
                fixed(w1.shape), fixed(b1.shape),
                fixed(gg.shape), fixed(gb.shape),
                fixed(w2.shape), fixed(b2.shape),
            ],
            out_specs=pl.BlockSpec((1, H, W, Cp), lambda b: (b, 0, 0, 0)),
            scratch_shapes=[pltpu.VMEM((H + 6, W + 6, Cp), jnp.float32)],
        ),
        compiler_params=pltpu.CompilerParams(
            dimension_semantics=("parallel",),
            vmem_limit_bytes=_pick_vmem_limit_bytes()),
        cost_estimate=pl.CostEstimate(
            flops=flops, transcendentals=transcendentals,
            bytes_accessed=bytes_accessed),
    )(x_p, dww, dwb, w1, b1, gg, gb, w2, b2)

    # Drop padded channels, back to NCHW.
    return jnp.transpose(out_nhwc[..., :C], (0, 3, 1, 2))


def ref_block(x_nchw, params):
    """Pure-JAX f32 reference mirroring the PyTorch forward (exact-erf GELU)."""
    N, C, H, W = x_nchw.shape
    dw_oihw = jnp.transpose(params["dw_w"], (2, 0, 1))[:, None]        # (C,1,7,7)
    y = lax.conv_general_dilated(
        x_nchw, dw_oihw, (1, 1), [(3, 3), (3, 3)],
        dimension_numbers=("NCHW", "OIHW", "NCHW"), feature_group_count=C)
    y = y + params["dw_b"][None, :, None, None]
    y = jnp.transpose(y, (0, 2, 3, 1))                                 # NHWC
    mean = y.mean(-1, keepdims=True)
    var = ((y - mean) ** 2).mean(-1, keepdims=True)
    y = (y - mean) / jnp.sqrt(var + 1e-6) * params["ln_g"] + params["ln_b"]
    y = y @ params["w1"] + params["b1"]
    y = jax.nn.gelu(y, approximate=False)
    gx = jnp.sqrt(jnp.sum(y * y, axis=(1, 2), keepdims=True))          # (N,1,1,4C)
    nx = gx / (jnp.mean(gx, axis=-1, keepdims=True) + 1e-6)
    y = params["grn_g"] * (y * nx) + params["grn_b"] + y
    y = y @ params["w2"] + params["b2"]
    return x_nchw + jnp.transpose(y, (0, 3, 1, 2))


def make_params(key, dim):
    ks = jax.random.split(key, 6)
    hid = 4 * dim
    return {
        "dw_w": 0.1 * jax.random.normal(ks[0], (7, 7, dim), jnp.float32),
        "dw_b": 0.01 * jax.random.normal(ks[1], (dim,), jnp.float32),
        "ln_g": jnp.ones((dim,), jnp.float32),
        "ln_b": jnp.zeros((dim,), jnp.float32),
        "w1": 0.1 * jax.random.normal(ks[2], (dim, hid), jnp.float32),
        "b1": 0.01 * jax.random.normal(ks[3], (hid,), jnp.float32),
        # GRN gamma/beta are initialized to zeros in ConvNeXtV2; use small
        # nonzero values so the GRN path is actually exercised.
        "grn_g": 0.05 * jnp.ones((hid,), jnp.float32),
        "grn_b": 0.02 * jnp.ones((hid,), jnp.float32),
        "w2": 0.1 * jax.random.normal(ks[4], (hid, dim), jnp.float32),
        "b2": 0.01 * jax.random.normal(ks[5], (dim,), jnp.float32),
    }


if __name__ == "__main__":
    key = jax.random.PRNGKey(0)
    kx, kp = jax.random.split(key)

    N, C, H, W = 2, 4, 16, 16
    x = jax.random.normal(kx, (N, C, H, W), jnp.float32)
    params = make_params(kp, C)

    out = convnextv2_block(x, params)
    out = jax.block_until_ready(out)

    ref = jax.block_until_ready(ref_block(x, params))
    assert out.shape == (N, C, H, W)
    # bf16 MXU matmuls + bf16 GRN path + tanh-GELU vs exact f32 reference
    # -> relaxed tolerance.
    assert jnp.allclose(out, ref, rtol=2e-2, atol=2e-2), (
        float(jnp.max(jnp.abs(out - ref))))

    print("KERNEL_OK")
</pallas_src>

<mosaic_0001>
module attributes {stable_mosaic.version = 11 : i64} {
  func.func @_block_kernel(%arg0: i32, %arg1: memref<1x16x16x128xf32, #tpu.memory_space<vmem>>, %arg2: memref<7x7x128xf32, #tpu.memory_space<vmem>>, %arg3: memref<1x128xf32, #tpu.memory_space<vmem>>, %arg4: memref<128x128xbf16, #tpu.memory_space<vmem>>, %arg5: memref<1x128xf32, #tpu.memory_space<vmem>>, %arg6: memref<1x128xf32, #tpu.memory_space<vmem>>, %arg7: memref<1x128xf32, #tpu.memory_space<vmem>>, %arg8: memref<128x128xbf16, #tpu.memory_space<vmem>>, %arg9: memref<1x128xf32, #tpu.memory_space<vmem>>, %arg10: memref<1x16x16x128xf32, #tpu.memory_space<vmem>>, %arg11: memref<22x22x128xf32, #tpu.memory_space<vmem>>) attributes {dimension_semantics = [#tpu.dimension_semantics<parallel>], iteration_bounds = array<i64: 2>, scalar_prefetch = 0 : i64, scratch_operands = 1 : i64, tpu.core_type = #tpu.core_type<tc>, window_params = [{transform_indices = @transform_0, window_bounds = array<i64: 1, 16, 16, 128>}, {pipeline_mode = #tpu.pipeline_mode<synchronous>, transform_indices = @transform_1, window_bounds = array<i64: 7, 7, 128>}, {pipeline_mode = #tpu.pipeline_mode<synchronous>, transform_indices = @transform_2, window_bounds = array<i64: 1, 128>}, {pipeline_mode = #tpu.pipeline_mode<synchronous>, transform_indices = @transform_3, window_bounds = array<i64: 128, 128>}, {pipeline_mode = #tpu.pipeline_mode<synchronous>, transform_indices = @transform_4, window_bounds = array<i64: 1, 128>}, {pipeline_mode = #tpu.pipeline_mode<synchronous>, transform_indices = @transform_5, window_bounds = array<i64: 1, 128>}, {pipeline_mode = #tpu.pipeline_mode<synchronous>, transform_indices = @transform_6, window_bounds = array<i64: 1, 128>}, {pipeline_mode = #tpu.pipeline_mode<synchronous>, transform_indices = @transform_7, window_bounds = array<i64: 128, 128>}, {pipeline_mode = #tpu.pipeline_mode<synchronous>, transform_indices = @transform_8, window_bounds = array<i64: 1, 128>}, {transform_indices = @transform_9, window_bounds = array<i64: 1, 16, 16, 128>}]} {
    %cst = arith.constant 0.000000e+00 : f32
    %0 = vector.broadcast %cst : f32 to vector<3x22x128xf32>
    %c0 = arith.constant 0 : index
    %c0_0 = arith.constant 0 : index
    %c0_1 = arith.constant 0 : index
    %1 = vector.load %arg11[%c0, %c0_0, %c0_1] : memref<22x22x128xf32, #tpu.memory_space<vmem>>, vector<3x22x128xf32>
    tpu.vector_store %arg11[%c0, %c0_0, %c0_1], %0 {strides = array<i32>} : memref<22x22x128xf32, #tpu.memory_space<vmem>>, vector<3x22x128xf32>,
    %c19 = arith.constant 19 : index
    %c0_2 = arith.constant 0 : index
    %c0_3 = arith.constant 0 : index
    %2 = vector.load %arg11[%c19, %c0_2, %c0_3] : memref<22x22x128xf32, #tpu.memory_space<vmem>>, vector<3x22x128xf32>
    tpu.vector_store %arg11[%c19, %c0_2, %c0_3], %0 {strides = array<i32>} : memref<22x22x128xf32, #tpu.memory_space<vmem>>, vector<3x22x128xf32>,
    %cst_4 = arith.constant 0.000000e+00 : f32
    %3 = vector.broadcast %cst_4 : f32 to vector<16x3x128xf32>
    %c3 = arith.constant 3 : index
    %c0_5 = arith.constant 0 : index
    %c0_6 = arith.constant 0 : index
    %4 = vector.load %arg11[%c3, %c0_5, %c0_6] : memref<22x22x128xf32, #tpu.memory_space<vmem>>, vector<16x3x128xf32>
    tpu.vector_store %arg11[%c3, %c0_5, %c0_6], %3 {strides = array<i32>} : memref<22x22x128xf32, #tpu.memory_space<vmem>>, vector<16x3x128xf32>,
    %c3_7 = arith.constant 3 : index
    %c19_8 = arith.constant 19 : index
    %c0_9 = arith.constant 0 : index
    %5 = vector.load %arg11[%c3_7, %c19_8, %c0_9] : memref<22x22x128xf32, #tpu.memory_space<vmem>>, vector<16x3x128xf32>
    tpu.vector_store %arg11[%c3_7, %c19_8, %c0_9], %3 {strides = array<i32>} : memref<22x22x128xf32, #tpu.memory_space<vmem>>, vector<16x3x128xf32>,
    %c0_10 = arith.constant 0 : index
    %c0_11 = arith.constant 0 : index
    %c0_12 = arith.constant 0 : index
    %c0_13 = arith.constant 0 : index
    %6 = vector.load %arg1[%c0_10, %c0_11, %c0_12, %c0_13] : memref<1x16x16x128xf32, #tpu.memory_space<vmem>>, vector<1x16x16x128xf32>
    %7 = vector.shape_cast %6 : vector<1x16x16x128xf32> to vector<16x16x128xf32>
    %c3_14 = arith.constant 3 : index
    %c3_15 = arith.constant 3 : index
    %c0_16 = arith.constant 0 : index
    %8 = vector.load %arg11[%c3_14, %c3_15, %c0_16] : memref<22x22x128xf32, #tpu.memory_space<vmem>>, vector<16x16x128xf32>
    tpu.vector_store %arg11[%c3_14, %c3_15, %c0_16], %7 {strides = array<i32>} : memref<22x22x128xf32, #tpu.memory_space<vmem>>, vector<16x16x128xf32>,
    %c0_17 = arith.constant 0 : index
    %c0_18 = arith.constant 0 : index
    %9 = vector.load %arg3[%c0_17, %c0_18] : memref<1x128xf32, #tpu.memory_space<vmem>>, vector<1x128xf32>
    %10 = vector.shape_cast %9 : vector<1x128xf32> to vector<128xf32>
    %11 = vector.shape_cast %10 : vector<128xf32> to vector<1x1x128xf32>
    %12 = vector.broadcast %11 : vector<1x1x128xf32> to vector<16x16x128xf32>
    %c0_i32 = arith.constant 0 : i32
    %c0_19 = arith.constant 0 : index
    %13 = arith.index_cast %c0_i32 : i32 to index
    %c0_20 = arith.constant 0 : index
    %14 = vector.load %arg11[%c0_19, %13, %c0_20] : memref<22x22x128xf32, #tpu.memory_space<vmem>>, vector<22x16x128xf32>
    %c0_21 = arith.constant 0 : index
    %15 = arith.index_cast %c0_i32 : i32 to index
    %c0_22 = arith.constant 0 : index
    %16 = vector.load %arg2[%c0_21, %15, %c0_22] : memref<7x7x128xf32, #tpu.memory_space<vmem>>, vector<7x1x128xf32>
    %17 = vector.extract_strided_slice %14 {offsets = [0, 0, 0], sizes = [16, 16, 128], strides = [1, 1, 1]} : vector<22x16x128xf32> to vector<16x16x128xf32>
    %18 = vector.extract_strided_slice %16 {offsets = [0, 0, 0], sizes = [1, 1, 128], strides = [1, 1, 1]} : vector<7x1x128xf32> to vector<1x1x128xf32>
    %19 = vector.shape_cast %18 : vector<1x1x128xf32> to vector<1x128xf32>
    %20 = vector.shape_cast %19 : vector<1x128xf32> to vector<1x1x128xf32>
    %21 = vector.broadcast %20 : vector<1x1x128xf32> to vector<16x16x128xf32>
    %22 = arith.mulf %17, %21 : vector<16x16x128xf32>
    %23 = arith.addf %12, %22 : vector<16x16x128xf32>
    %24 = vector.extract_strided_slice %14 {offsets = [1, 0, 0], sizes = [16, 16, 128], strides = [1, 1, 1]} : vector<22x16x128xf32> to vector<16x16x128xf32>
    %25 = vector.extract_strided_slice %16 {offsets = [1, 0, 0], sizes = [1, 1, 128], strides = [1, 1, 1]} : vector<7x1x128xf32> to vector<1x1x128xf32>
    %26 = vector.shape_cast %25 : vector<1x1x128xf32> to vector<1x128xf32>
    %27 = vector.shape_cast %26 : vector<1x128xf32> to vector<1x1x128xf32>
    %28 = vector.broadcast %27 : vector<1x1x128xf32> to vector<16x16x128xf32>
    %29 = arith.mulf %24, %28 : vector<16x16x128xf32>
    %30 = arith.addf %23, %29 : vector<16x16x128xf32>
    %31 = vector.extract_strided_slice %14 {offsets = [2, 0, 0], sizes = [16, 16, 128], strides = [1, 1, 1]} : vector<22x16x128xf32> to vector<16x16x128xf32>
    %32 = vector.extract_strided_slice %16 {offsets = [2, 0, 0], sizes = [1, 1, 128], strides = [1, 1, 1]} : vector<7x1x128xf32> to vector<1x1x128xf32>
    %33 = vector.shape_cast %32 : vector<1x1x128xf32> to vector<1x128xf32>
    %34 = vector.shape_cast %33 : vector<1x128xf32> to vector<1x1x128xf32>
    %35 = vector.broadcast %34 : vector<1x1x128xf32> to vector<16x16x128xf32>
    %36 = arith.mulf %31, %35 : vector<16x16x128xf32>
    %37 = arith.addf %30, %36 : vector<16x16x128xf32>
    %38 = vector.extract_strided_slice %14 {offsets = [3, 0, 0], sizes = [16, 16, 128], strides = [1, 1, 1]} : vector<22x16x128xf32> to vector<16x16x128xf32>
    %39 = vector.extract_strided_slice %16 {offsets = [3, 0, 0], sizes = [1, 1, 128], strides = [1, 1, 1]} : vector<7x1x128xf32> to vector<1x1x128xf32>
    %40 = vector.shape_cast %39 : vector<1x1x128xf32> to vector<1x128xf32>
    %41 = vector.shape_cast %40 : vector<1x128xf32> to vector<1x1x128xf32>
    %42 = vector.broadcast %41 : vector<1x1x128xf32> to vector<16x16x128xf32>
    %43 = arith.mulf %38, %42 : vector<16x16x128xf32>
    %44 = arith.addf %37, %43 : vector<16x16x128xf32>
    %45 = vector.extract_strided_slice %14 {offsets = [4, 0, 0], sizes = [16, 16, 128], strides = [1, 1, 1]} : vector<22x16x128xf32> to vector<16x16x128xf32>
    %46 = vector.extract_strided_slice %16 {offsets = [4, 0, 0], sizes = [1, 1, 128], strides = [1, 1, 1]} : vector<7x1x128xf32> to vector<1x1x128xf32>
    %47 = vector.shape_cast %46 : vector<1x1x128xf32> to vector<1x128xf32>
    %48 = vector.shape_cast %47 : vector<1x128xf32> to vector<1x1x128xf32>
    %49 = vector.broadcast %48 : vector<1x1x128xf32> to vector<16x16x128xf32>
    %50 = arith.mulf %45, %49 : vector<16x16x128xf32>
    %51 = arith.addf %44, %50 : vector<16x16x128xf32>
    %52 = vector.extract_strided_slice %14 {offsets = [5, 0, 0], sizes = [16, 16, 128], strides = [1, 1, 1]} : vector<22x16x128xf32> to vector<16x16x128xf32>
    %53 = vector.extract_strided_slice %16 {offsets = [5, 0, 0], sizes = [1, 1, 128], strides = [1, 1, 1]} : vector<7x1x128xf32> to vector<1x1x128xf32>
    %54 = vector.shape_cast %53 : vector<1x1x128xf32> to vector<1x128xf32>
    %55 = vector.shape_cast %54 : vector<1x128xf32> to vector<1x1x128xf32>
    %56 = vector.broadcast %55 : vector<1x1x128xf32> to vector<16x16x128xf32>
    %57 = arith.mulf %52, %56 : vector<16x16x128xf32>
    %58 = arith.addf %51, %57 : vector<16x16x128xf32>
    %59 = vector.extract_strided_slice %14 {offsets = [6, 0, 0], sizes = [16, 16, 128], strides = [1, 1, 1]} : vector<22x16x128xf32> to vector<16x16x128xf32>
    %60 = vector.extract_strided_slice %16 {offsets = [6, 0, 0], sizes = [1, 1, 128], strides = [1, 1, 1]} : vector<7x1x128xf32> to vector<1x1x128xf32>
    %61 = vector.shape_cast %60 : vector<1x1x128xf32> to vector<1x128xf32>
    %62 = vector.shape_cast %61 : vector<1x128xf32> to vector<1x1x128xf32>
    %63 = vector.broadcast %62 : vector<1x1x128xf32> to vector<16x16x128xf32>
    %64 = arith.mulf %59, %63 : vector<16x16x128xf32>
    %65 = arith.addf %58, %64 : vector<16x16x128xf32>
    %c1_i32 = arith.constant 1 : i32
    %c0_23 = arith.constant 0 : index
    %66 = arith.index_cast %c1_i32 : i32 to index
    %c0_24 = arith.constant 0 : index
    %67 = vector.load %arg11[%c0_23, %66, %c0_24] : memref<22x22x128xf32, #tpu.memory_space<vmem>>, vector<22x16x128xf32>
    %c0_25 = arith.constant 0 : index
    %68 = arith.index_cast %c1_i32 : i32 to index
    %c0_26 = arith.constant 0 : index
    %69 = vector.load %arg2[%c0_25, %68, %c0_26] : memref<7x7x128xf32, #tpu.memory_space<vmem>>, vector<7x1x128xf32>
    %70 = vector.extract_strided_slice %67 {offsets = [0, 0, 0], sizes = [16, 16, 128], strides = [1, 1, 1]} : vector<22x16x128xf32> to vector<16x16x128xf32>
    %71 = vector.extract_strided_slice %69 {offsets = [0, 0, 0], sizes = [1, 1, 128], strides = [1, 1, 1]} : vector<7x1x128xf32> to vector<1x1x128xf32>
    %72 = vector.shape_cast %71 : vector<1x1x128xf32> to vector<1x128xf32>
    %73 = vector.shape_cast %72 : vector<1x128xf32> to vector<1x1x128xf32>
    %74 = vector.broadcast %73 : vector<1x1x128xf32> to vector<16x16x128xf32>
    %75 = arith.mulf %70, %74 : vector<16x16x128xf32>
    %76 = arith.addf %65, %75 : vector<16x16x128xf32>
    %77 = vector.extract_strided_slice %67 {offsets = [1, 0, 0], sizes = [16, 16, 128], strides = [1, 1, 1]} : vector<22x16x128xf32> to vector<16x16x128xf32>
    %78 = vector.extract_strided_slice %69 {offsets = [1, 0, 0], sizes = [1, 1, 128], strides = [1, 1, 1]} : vector<7x1x128xf32> to vector<1x1x128xf32>
    %79 = vector.shape_cast %78 : vector<1x1x128xf32> to vector<1x128xf32>
    %80 = vector.shape_cast %79 : vector<1x128xf32> to vector<1x1x128xf32>
    %81 = vector.broadcast %80 : vector<1x1x128xf32> to vector<16x16x128xf32>
    %82 = arith.mulf %77, %81 : vector<16x16x128xf32>
    %83 = arith.addf %76, %82 : vector<16x16x128xf32>
    %84 = vector.extract_strided_slice %67 {offsets = [2, 0, 0], sizes = [16, 16, 128], strides = [1, 1, 1]} : vector<22x16x128xf32> to vector<16x16x128xf32>
    %85 = vector.extract_strided_slice %69 {offsets = [2, 0, 0], sizes = [1, 1, 128], strides = [1, 1, 1]} : vector<7x1x128xf32> to vector<1x1x128xf32>
    %86 = vector.shape_cast %85 : vector<1x1x128xf32> to vector<1x128xf32>
    %87 = vector.shape_cast %86 : vector<1x128xf32> to vector<1x1x128xf32>
    %88 = vector.broadcast %87 : vector<1x1x128xf32> to vector<16x16x128xf32>
    %89 = arith.mulf %84, %88 : vector<16x16x128xf32>
    %90 = arith.addf %83, %89 : vector<16x16x128xf32>
    %91 = vector.extract_strided_slice %67 {offsets = [3, 0, 0], sizes = [16, 16, 128], strides = [1, 1, 1]} : vector<22x16x128xf32> to vector<16x16x128xf32>
    %92 = vector.extract_strided_slice %69 {offsets = [3, 0, 0], sizes = [1, 1, 128], strides = [1, 1, 1]} : vector<7x1x128xf32> to vector<1x1x128xf32>
    %93 = vector.shape_cast %92 : vector<1x1x128xf32> to vector<1x128xf32>
    %94 = vector.shape_cast %93 : vector<1x128xf32> to vector<1x1x128xf32>
    %95 = vector.broadcast %94 : vector<1x1x128xf32> to vector<16x16x128xf32>
    %96 = arith.mulf %91, %95 : vector<16x16x128xf32>
    %97 = arith.addf %90, %96 : vector<16x16x128xf32>
    %98 = vector.extract_strided_slice %67 {offsets = [4, 0, 0], sizes = [16, 16, 128], strides = [1, 1, 1]} : vector<22x16x128xf32> to vector<16x16x128xf32>
    %99 = vector.extract_strided_slice %69 {offsets = [4, 0, 0], sizes = [1, 1, 128], strides = [1, 1, 1]} : vector<7x1x128xf32> to vector<1x1x128xf32>
    %100 = vector.shape_cast %99 : vector<1x1x128xf32> to vector<1x128xf32>
    %101 = vector.shape_cast %100 : vector<1x128xf32> to vector<1x1x128xf32>
    %102 = vector.broadcast %101 : vector<1x1x128xf32> to vector<16x16x128xf32>
    %103 = arith.mulf %98, %102 : vector<16x16x128xf32>
    %104 = arith.addf %97, %103 : vector<16x16x128xf32>
    %105 = vector.extract_strided_slice %67 {offsets = [5, 0, 0], sizes = [16, 16, 128], strides = [1, 1, 1]} : vector<22x16x128xf32> to vector<16x16x128xf32>
    %106 = vector.extract_strided_slice %69 {offsets = [5, 0, 0], sizes = [1, 1, 128], strides = [1, 1, 1]} : vector<7x1x128xf32> to vector<1x1x128xf32>
    %107 = vector.shape_cast %106 : vector<1x1x128xf32> to vector<1x128xf32>
    %108 = vector.shape_cast %107 : vector<1x128xf32> to vector<1x1x128xf32>
    %109 = vector.broadcast %108 : vector<1x1x128xf32> to vector<16x16x128xf32>
    %110 = arith.mulf %105, %109 : vector<16x16x128xf32>
    %111 = arith.addf %104, %110 : vector<16x16x128xf32>
    %112 = vector.extract_strided_slice %67 {offsets = [6, 0, 0], sizes = [16, 16, 128], strides = [1, 1, 1]} : vector<22x16x128xf32> to vector<16x16x128xf32>
    %113 = vector.extract_strided_slice %69 {offsets = [6, 0, 0], sizes = [1, 1, 128], strides = [1, 1, 1]} : vector<7x1x128xf32> to vector<1x1x128xf32>
    %114 = vector.shape_cast %113 : vector<1x1x128xf32> to vector<1x128xf32>
    %115 = vector.shape_cast %114 : vector<1x128xf32> to vector<1x1x128xf32>
    %116 = vector.broadcast %115 : vector<1x1x128xf32> to vector<16x16x128xf32>
    %117 = arith.mulf %112, %116 : vector<16x16x128xf32>
    %118 = arith.addf %111, %117 : vector<16x16x128xf32>
    %c2_i32 = arith.constant 2 : i32
    %c0_27 = arith.constant 0 : index
    %119 = arith.index_cast %c2_i32 : i32 to index
    %c0_28 = arith.constant 0 : index
    %120 = vector.load %arg11[%c0_27, %119, %c0_28] : memref<22x22x128xf32, #tpu.memory_space<vmem>>, vector<22x16x128xf32>
    %c0_29 = arith.constant 0 : index
    %121 = arith.index_cast %c2_i32 : i32 to index
    %c0_30 = arith.constant 0 : index
    %122 = vector.load %arg2[%c0_29, %121, %c0_30] : memref<7x7x128xf32, #tpu.memory_space<vmem>>, vector<7x1x128xf32>
    %123 = vector.extract_strided_slice %120 {offsets = [0, 0, 0], sizes = [16, 16, 128], strides = [1, 1, 1]} : vector<22x16x128xf32> to vector<16x16x128xf32>
    %124 = vector.extract_strided_slice %122 {offsets = [0, 0, 0], sizes = [1, 1, 128], strides = [1, 1, 1]} : vector<7x1x128xf32> to vector<1x1x128xf32>
    %125 = vector.shape_cast %124 : vector<1x1x128xf32> to vector<1x128xf32>
    %126 = vector.shape_cast %125 : vector<1x128xf32> to vector<1x1x128xf32>
    %127 = vector.broadcast %126 : vector<1x1x128xf32> to vector<16x16x128xf32>
    %128 = arith.mulf %123, %127 : vector<16x16x128xf32>
    %129 = arith.addf %118, %128 : vector<16x16x128xf32>
    %130 = vector.extract_strided_slice %120 {offsets = [1, 0, 0], sizes = [16, 16, 128], strides = [1, 1, 1]} : vector<22x16x128xf32> to vector<16x16x128xf32>
    %131 = vector.extract_strided_slice %122 {offsets = [1, 0, 0], sizes = [1, 1, 128], strides = [1, 1, 1]} : vector<7x1x128xf32> to vector<1x1x128xf32>
    %132 = vector.shape_cast %131 : vector<1x1x128xf32> to vector<1x128xf32>
    %133 = vector.shape_cast %132 : vector<1x128xf32> to vector<1x1x128xf32>
    %134 = vector.broadcast %133 : vector<1x1x128xf32> to vector<16x16x128xf32>
    %135 = arith.mulf %130, %134 : vector<16x16x128xf32>
    %136 = arith.addf %129, %135 : vector<16x16x128xf32>
    %137 = vector.extract_strided_slice %120 {offsets = [2, 0, 0], sizes = [16, 16, 128], strides = [1, 1, 1]} : vector<22x16x128xf32> to vector<16x16x128xf32>
    %138 = vector.extract_strided_slice %122 {offsets = [2, 0, 0], sizes = [1, 1, 128], strides = [1, 1, 1]} : vector<7x1x128xf32> to vector<1x1x128xf32>
    %139 = vector.shape_cast %138 : vector<1x1x128xf32> to vector<1x128xf32>
    %140 = vector.shape_cast %139 : vector<1x128xf32> to vector<1x1x128xf32>
    %141 = vector.broadcast %140 : vector<1x1x128xf32> to vector<16x16x128xf32>
    %142 = arith.mulf %137, %141 : vector<16x16x128xf32>
    %143 = arith.addf %136, %142 : vector<16x16x128xf32>
    %144 = vector.extract_strided_slice %120 {offsets = [3, 0, 0], sizes = [16, 16, 128], strides = [1, 1, 1]} : vector<22x16x128xf32> to vector<16x16x128xf32>
    %145 = vector.extract_strided_slice %122 {offsets = [3, 0, 0], sizes = [1, 1, 128], strides = [1, 1, 1]} : vector<7x1x128xf32> to vector<1x1x128xf32>
    %146 = vector.shape_cast %145 : vector<1x1x128xf32> to vector<1x128xf32>
    %147 = vector.shape_cast %146 : vector<1x128xf32> to vector<1x1x128xf32>
    %148 = vector.broadcast %147 : vector<1x1x128xf32> to vector<16x16x128xf32>
    %149 = arith.mulf %144, %148 : vector<16x16x128xf32>
    %150 = arith.addf %143, %149 : vector<16x16x128xf32>
    %151 = vector.extract_strided_slice %120 {offsets = [4, 0, 0], sizes = [16, 16, 128], strides = [1, 1, 1]} : vector<22x16x128xf32> to vector<16x16x128xf32>
    %152 = vector.extract_strided_slice %122 {offsets = [4, 0, 0], sizes = [1, 1, 128], strides = [1, 1, 1]} : vector<7x1x128xf32> to vector<1x1x128xf32>
    %153 = vector.shape_cast %152 : vector<1x1x128xf32> to vector<1x128xf32>
    %154 = vector.shape_cast %153 : vector<1x128xf32> to vector<1x1x128xf32>
    %155 = vector.broadcast %154 : vector<1x1x128xf32> to vector<16x16x128xf32>
    %156 = arith.mulf %151, %155 : vector<16x16x128xf32>
    %157 = arith.addf %150, %156 : vector<16x16x128xf32>
    %158 = vector.extract_strided_slice %120 {offsets = [5, 0, 0], sizes = [16, 16, 128], strides = [1, 1, 1]} : vector<22x16x128xf32> to vector<16x16x128xf32>
    %159 = vector.extract_strided_slice %122 {offsets = [5, 0, 0], sizes = [1, 1, 128], strides = [1, 1, 1]} : vector<7x1x128xf32> to vector<1x1x128xf32>
    %160 = vector.shape_cast %159 : vector<1x1x128xf32> to vector<1x128xf32>
    %161 = vector.shape_cast %160 : vector<1x128xf32> to vector<1x1x128xf32>
    %162 = vector.broadcast %161 : vector<1x1x128xf32> to vector<16x16x128xf32>
    %163 = arith.mulf %158, %162 : vector<16x16x128xf32>
    %164 = arith.addf %157, %163 : vector<16x16x128xf32>
    %165 = vector.extract_strided_slice %120 {offsets = [6, 0, 0], sizes = [16, 16, 128], strides = [1, 1, 1]} : vector<22x16x128xf32> to vector<16x16x128xf32>
    %166 = vector.extract_strided_slice %122 {offsets = [6, 0, 0], sizes = [1, 1, 128], strides = [1, 1, 1]} : vector<7x1x128xf32> to vector<1x1x128xf32>
    %167 = vector.shape_cast %166 : vector<1x1x128xf32> to vector<1x128xf32>
    %168 = vector.shape_cast %167 : vector<1x128xf32> to vector<1x1x128xf32>
    %169 = vector.broadcast %168 : vector<1x1x128xf32> to vector<16x16x128xf32>
    %170 = arith.mulf %165, %169 : vector<16x16x128xf32>
    %171 = arith.addf %164, %170 : vector<16x16x128xf32>
    %c3_i32 = arith.constant 3 : i32
    %c0_31 = arith.constant 0 : index
    %172 = arith.index_cast %c3_i32 : i32 to index
    %c0_32 = arith.constant 0 : index
    %173 = vector.load %arg11[%c0_31, %172, %c0_32] : memref<22x22x128xf32, #tpu.memory_space<vmem>>, vector<22x16x128xf32>
    %c0_33 = arith.constant 0 : index
    %174 = arith.index_cast %c3_i32 : i32 to index
    %c0_34 = arith.constant 0 : index
    %175 = vector.load %arg2[%c0_33, %174, %c0_34] : memref<7x7x128xf32, #tpu.memory_space<vmem>>, vector<7x1x128xf32>
    %176 = vector.extract_strided_slice %173 {offsets = [0, 0, 0], sizes = [16, 16, 128], strides = [1, 1, 1]} : vector<22x16x128xf32> to vector<16x16x128xf32>
    %177 = vector.extract_strided_slice %175 {offsets = [0, 0, 0], sizes = [1, 1, 128], strides = [1, 1, 1]} : vector<7x1x128xf32> to vector<1x1x128xf32>
    %178 = vector.shape_cast %177 : vector<1x1x128xf32> to vector<1x128xf32>
    %179 = vector.shape_cast %178 : vector<1x128xf32> to vector<1x1x128xf32>
    %180 = vector.broadcast %179 : vector<1x1x128xf32> to vector<16x16x128xf32>
    %181 = arith.mulf %176, %180 : vector<16x16x128xf32>
    %182 = arith.addf %171, %181 : vector<16x16x128xf32>
    %183 = vector.extract_strided_slice %173 {offsets = [1, 0, 0], sizes = [16, 16, 128], strides = [1, 1, 1]} : vector<22x16x128xf32> to vector<16x16x128xf32>
    %184 = vector.extract_strided_slice %175 {offsets = [1, 0, 0], sizes = [1, 1, 128], strides = [1, 1, 1]} : vector<7x1x128xf32> to vector<1x1x128xf32>
    %185 = vector.shape_cast %184 : vector<1x1x128xf32> to vector<1x128xf32>
    %186 = vector.shape_cast %185 : vector<1x128xf32> to vector<1x1x128xf32>
    %187 = vector.broadcast %186 : vector<1x1x128xf32> to vector<16x16x128xf32>
    %188 = arith.mulf %183, %187 : vector<16x16x128xf32>
    %189 = arith.addf %182, %188 : vector<16x16x128xf32>
    %190 = vector.extract_strided_slice %173 {offsets = [2, 0, 0], sizes = [16, 16, 128], strides = [1, 1, 1]} : vector<22x16x128xf32> to vector<16x16x128xf32>
    %191 = vector.extract_strided_slice %175 {offsets = [2, 0, 0], sizes = [1, 1, 128], strides = [1, 1, 1]} : vector<7x1x128xf32> to vector<1x1x128xf32>
    %192 = vector.shape_cast %191 : vector<1x1x128xf32> to vector<1x128xf32>
    %193 = vector.shape_cast %192 : vector<1x128xf32> to vector<1x1x128xf32>
    %194 = vector.broadcast %193 : vector<1x1x128xf32> to vector<16x16x128xf32>
    %195 = arith.mulf %190, %194 : vector<16x16x128xf32>
    %196 = arith.addf %189, %195 : vector<16x16x128xf32>
    %197 = vector.extract_strided_slice %173 {offsets = [3, 0, 0], sizes = [16, 16, 128], strides = [1, 1, 1]} : vector<22x16x128xf32> to vector<16x16x128xf32>
    %198 = vector.extract_strided_slice %175 {offsets = [3, 0, 0], sizes = [1, 1, 128], strides = [1, 1, 1]} : vector<7x1x128xf32> to vector<1x1x128xf32>
    %199 = vector.shape_cast %198 : vector<1x1x128xf32> to vector<1x128xf32>
    %200 = vector.shape_cast %199 : vector<1x128xf32> to vector<1x1x128xf32>
    %201 = vector.broadcast %200 : vector<1x1x128xf32> to vector<16x16x128xf32>
    %202 = arith.mulf %197, %201 : vector<16x16x128xf32>
    %203 = arith.addf %196, %202 : vector<16x16x128xf32>
    %204 = vector.extract_strided_slice %173 {offsets = [4, 0, 0], sizes = [16, 16, 128], strides = [1, 1, 1]} : vector<22x16x128xf32> to vector<16x16x128xf32>
    %205 = vector.extract_strided_slice %175 {offsets = [4, 0, 0], sizes = [1, 1, 128], strides = [1, 1, 1]} : vector<7x1x128xf32> to vector<1x1x128xf32>
    %206 = vector.shape_cast %205 : vector<1x1x128xf32> to vector<1x128xf32>
    %207 = vector.shape_cast %206 : vector<1x128xf32> to vector<1x1x128xf32>
    %208 = vector.broadcast %207 : vector<1x1x128xf32> to vector<16x16x128xf32>
    %209 = arith.mulf %204, %208 : vector<16x16x128xf32>
    %210 = arith.addf %203, %209 : vector<16x16x128xf32>
    %211 = vector.extract_strided_slice %173 {offsets = [5, 0, 0], sizes = [16, 16, 128], strides = [1, 1, 1]} : vector<22x16x128xf32> to vector<16x16x128xf32>
    %212 = vector.extract_strided_slice %175 {offsets = [5, 0, 0], sizes = [1, 1, 128], strides = [1, 1, 1]} : vector<7x1x128xf32> to vector<1x1x128xf32>
    %213 = vector.shape_cast %212 : vector<1x1x128xf32> to vector<1x128xf32>
    %214 = vector.shape_cast %213 : vector<1x128xf32> to vector<1x1x128xf32>
    %215 = vector.broadcast %214 : vector<1x1x128xf32> to vector<16x16x128xf32>
    %216 = arith.mulf %211, %215 : vector<16x16x128xf32>
    %217 = arith.addf %210, %216 : vector<16x16x128xf32>
    %218 = vector.extract_strided_slice %173 {offsets = [6, 0, 0], sizes = [16, 16, 128], strides = [1, 1, 1]} : vector<22x16x128xf32> to vector<16x16x128xf32>
    %219 = vector.extract_strided_slice %175 {offsets = [6, 0, 0], sizes = [1, 1, 128], strides = [1, 1, 1]} : vector<7x1x128xf32> to vector<1x1x128xf32>
    %220 = vector.shape_cast %219 : vector<1x1x128xf32> to vector<1x128xf32>
    %221 = vector.shape_cast %220 : vector<1x128xf32> to vector<1x1x128xf32>
    %222 = vector.broadcast %221 : vector<1x1x128xf32> to vector<16x16x128xf32>
    %223 = arith.mulf %218, %222 : vector<16x16x128xf32>
    %224 = arith.addf %217, %223 : vector<16x16x128xf32>
    %c4_i32 = arith.constant 4 : i32
    %c0_35 = arith.constant 0 : index
    %225 = arith.index_cast %c4_i32 : i32 to index
    %c0_36 = arith.constant 0 : index
    %226 = vector.load %arg11[%c0_35, %225, %c0_36] : memref<22x22x128xf32, #tpu.memory_space<vmem>>, vector<22x16x128xf32>
    %c0_37 = arith.constant 0 : index
    %227 = arith.index_cast %c4_i32 : i32 to index
    %c0_38 = arith.constant 0 : index
    %228 = vector.load %arg2[%c0_37, %227, %c0_38] : memref<7x7x128xf32, #tpu.memory_space<vmem>>, vector<7x1x128xf32>
    %229 = vector.extract_strided_slice %226 {offsets = [0, 0, 0], sizes = [16, 16, 128], strides = [1, 1, 1]} : vector<22x16x128xf32> to vector<16x16x128xf32>
    %230 = vector.extract_strided_slice %228 {offsets = [0, 0, 0], sizes = [1, 1, 128], strides = [1, 1, 1]} : vector<7x1x128xf32> to vector<1x1x128xf32>
    %231 = vector.shape_cast %230 : vector<1x1x128xf32> to vector<1x128xf32>
    %232 = vector.shape_cast %231 : vector<1x128xf32> to vector<1x1x128xf32>
    %233 = vector.broadcast %232 : vector<1x1x128xf32> to vector<16x16x128xf32>
    %234 = arith.mulf %229, %233 : vector<16x16x128xf32>
    %235 = arith.addf %224, %234 : vector<16x16x128xf32>
    %236 = vector.extract_strided_slice %226 {offsets = [1, 0, 0], sizes = [16, 16, 128], strides = [1, 1, 1]} : vector<22x16x128xf32> to vector<16x16x128xf32>
    %237 = vector.extract_strided_slice %228 {offsets = [1, 0, 0], sizes = [1, 1, 128], strides = [1, 1, 1]} : vector<7x1x128xf32> to vector<1x1x128xf32>
    %238 = vector.shape_cast %237 : vector<1x1x128xf32> to vector<1x128xf32>
    %239 = vector.shape_cast %238 : vector<1x128xf32> to vector<1x1x128xf32>
    %240 = vector.broadcast %239 : vector<1x1x128xf32> to vector<16x16x128xf32>
    %241 = arith.mulf %236, %240 : vector<16x16x128xf32>
    %242 = arith.addf %235, %241 : vector<16x16x128xf32>
    %243 = vector.extract_strided_slice %226 {offsets = [2, 0, 0], sizes = [16, 16, 128], strides = [1, 1, 1]} : vector<22x16x128xf32> to vector<16x16x128xf32>
    %244 = vector.extract_strided_slice %228 {offsets = [2, 0, 0], sizes = [1, 1, 128], strides = [1, 1, 1]} : vector<7x1x128xf32> to vector<1x1x128xf32>
    %245 = vector.shape_cast %244 : vector<1x1x128xf32> to vector<1x128xf32>
    %246 = vector.shape_cast %245 : vector<1x128xf32> to vector<1x1x128xf32>
    %247 = vector.broadcast %246 : vector<1x1x128xf32> to vector<16x16x128xf32>
    %248 = arith.mulf %243, %247 : vector<16x16x128xf32>
    %249 = arith.addf %242, %248 : vector<16x16x128xf32>
    %250 = vector.extract_strided_slice %226 {offsets = [3, 0, 0], sizes = [16, 16, 128], strides = [1, 1, 1]} : vector<22x16x128xf32> to vector<16x16x128xf32>
    %251 = vector.extract_strided_slice %228 {offsets = [3, 0, 0], sizes = [1, 1, 128], strides = [1, 1, 1]} : vector<7x1x128xf32> to vector<1x1x128xf32>
    %252 = vector.shape_cast %251 : vector<1x1x128xf32> to vector<1x128xf32>
    %253 = vector.shape_cast %252 : vector<1x128xf32> to vector<1x1x128xf32>
    %254 = vector.broadcast %253 : vector<1x1x128xf32> to vector<16x16x128xf32>
    %255 = arith.mulf %250, %254 : vector<16x16x128xf32>
    %256 = arith.addf %249, %255 : vector<16x16x128xf32>
    %257 = vector.extract_strided_slice %226 {offsets = [4, 0, 0], sizes = [16, 16, 128], strides = [1, 1, 1]} : vector<22x16x128xf32> to vector<16x16x128xf32>
    %258 = vector.extract_strided_slice %228 {offsets = [4, 0, 0], sizes = [1, 1, 128], strides = [1, 1, 1]} : vector<7x1x128xf32> to vector<1x1x128xf32>
    %259 = vector.shape_cast %258 : vector<1x1x128xf32> to vector<1x128xf32>
    %260 = vector.shape_cast %259 : vector<1x128xf32> to vector<1x1x128xf32>
    %261 = vector.broadcast %260 : vector<1x1x128xf32> to vector<16x16x128xf32>
    %262 = arith.mulf %257, %261 : vector<16x16x128xf32>
    %263 = arith.addf %256, %262 : vector<16x16x128xf32>
    %264 = vector.extract_strided_slice %226 {offsets = [5, 0, 0], sizes = [16, 16, 128], strides = [1, 1, 1]} : vector<22x16x128xf32> to vector<16x16x128xf32>
    %265 = vector.extract_strided_slice %228 {offsets = [5, 0, 0], sizes = [1, 1, 128], strides = [1, 1, 1]} : vector<7x1x128xf32> to vector<1x1x128xf32>
    %266 = vector.shape_cast %265 : vector<1x1x128xf32> to vector<1x128xf32>
    %267 = vector.shape_cast %266 : vector<1x128xf32> to vector<1x1x128xf32>
    %268 = vector.broadcast %267 : vector<1x1x128xf32> to vector<16x16x128xf32>
    %269 = arith.mulf %264, %268 : vector<16x16x128xf32>
    %270 = arith.addf %263, %269 : vector<16x16x128xf32>
    %271 = vector.extract_strided_slice %226 {offsets = [6, 0, 0], sizes = [16, 16, 128], strides = [1, 1, 1]} : vector<22x16x128xf32> to vector<16x16x128xf32>
    %272 = vector.extract_strided_slice %228 {offsets = [6, 0, 0], sizes = [1, 1, 128], strides = [1, 1, 1]} : vector<7x1x128xf32> to vector<1x1x128xf32>
    %273 = vector.shape_cast %272 : vector<1x1x128xf32> to vector<1x128xf32>
    %274 = vector.shape_cast %273 : vector<1x128xf32> to vector<1x1x128xf32>
    %275 = vector.broadcast %274 : vector<1x1x128xf32> to vector<16x16x128xf32>
    %276 = arith.mulf %271, %275 : vector<16x16x128xf32>
    %277 = arith.addf %270, %276 : vector<16x16x128xf32>
    %c5_i32 = arith.constant 5 : i32
    %c0_39 = arith.constant 0 : index
    %278 = arith.index_cast %c5_i32 : i32 to index
    %c0_40 = arith.constant 0 : index
    %279 = vector.load %arg11[%c0_39, %278, %c0_40] : memref<22x22x128xf32, #tpu.memory_space<vmem>>, vector<22x16x128xf32>
    %c0_41 = arith.constant 0 : index
    %280 = arith.index_cast %c5_i32 : i32 to index
    %c0_42 = arith.constant 0 : index
    %281 = vector.load %arg2[%c0_41, %280, %c0_42] : memref<7x7x128xf32, #tpu.memory_space<vmem>>, vector<7x1x128xf32>
    %282 = vector.extract_strided_slice %279 {offsets = [0, 0, 0], sizes = [16, 16, 128], strides = [1, 1, 1]} : vector<22x16x128xf32> to vector<16x16x128xf32>
    %283 = vector.extract_strided_slice %281 {offsets = [0, 0, 0], sizes = [1, 1, 128], strides = [1, 1, 1]} : vector<7x1x128xf32> to vector<1x1x128xf32>
    %284 = vector.shape_cast %283 : vector<1x1x128xf32> to vector<1x128xf32>
    %285 = vector.shape_cast %284 : vector<1x128xf32> to vector<1x1x128xf32>
    %286 = vector.broadcast %285 : vector<1x1x128xf32> to vector<16x16x128xf32>
    %287 = arith.mulf %282, %286 : vector<16x16x128xf32>
    %288 = arith.addf %277, %287 : vector<16x16x128xf32>
    %289 = vector.extract_strided_slice %279 {offsets = [1, 0, 0], sizes = [16, 16, 128], strides = [1, 1, 1]} : vector<22x16x128xf32> to vector<16x16x128xf32>
    %290 = vector.extract_strided_slice %281 {offsets = [1, 0, 0], sizes = [1, 1, 128], strides = [1, 1, 1]} : vector<7x1x128xf32> to vector<1x1x128xf32>
    %291 = vector.shape_cast %290 : vector<1x1x128xf32> to vector<1x128xf32>
    %292 = vector.shape_cast %291 : vector<1x128xf32> to vector<1x1x128xf32>
    %293 = vector.broadcast %292 : vector<1x1x128xf32> to vector<16x16x128xf32>
    %294 = arith.mulf %289, %293 : vector<16x16x128xf32>
    %295 = arith.addf %288, %294 : vector<16x16x128xf32>
    %296 = vector.extract_strided_slice %279 {offsets = [2, 0, 0], sizes = [16, 16, 128], strides = [1, 1, 1]} : vector<22x16x128xf32> to vector<16x16x128xf32>
    %297 = vector.extract_strided_slice %281 {offsets = [2, 0, 0], sizes = [1, 1, 128], strides = [1, 1, 1]} : vector<7x1x128xf32> to vector<1x1x128xf32>
    %298 = vector.shape_cast %297 : vector<1x1x128xf32> to vector<1x128xf32>
    %299 = vector.shape_cast %298 : vector<1x128xf32> to vector<1x1x128xf32>
    %300 = vector.broadcast %299 : vector<1x1x128xf32> to vector<16x16x128xf32>
    %301 = arith.mulf %296, %300 : vector<16x16x128xf32>
    %302 = arith.addf %295, %301 : vector<16x16x128xf32>
    %303 = vector.extract_strided_slice %279 {offsets = [3, 0, 0], sizes = [16, 16, 128], strides = [1, 1, 1]} : vector<22x16x128xf32> to vector<16x16x128xf32>
    %304 = vector.extract_strided_slice %281 {offsets = [3, 0, 0], sizes = [1, 1, 128], strides = [1, 1, 1]} : vector<7x1x128xf32> to vector<1x1x128xf32>
    %305 = vector.shape_cast %304 : vector<1x1x128xf32> to vector<1x128xf32>
    %306 = vector.shape_cast %305 : vector<1x128xf32> to vector<1x1x128xf32>
    %307 = vector.broadcast %306 : vector<1x1x128xf32> to vector<16x16x128xf32>
    %308 = arith.mulf %303, %307 : vector<16x16x128xf32>
    %309 = arith.addf %302, %308 : vector<16x16x128xf32>
    %310 = vector.extract_strided_slice %279 {offsets = [4, 0, 0], sizes = [16, 16, 128], strides = [1, 1, 1]} : vector<22x16x128xf32> to vector<16x16x128xf32>
    %311 = vector.extract_strided_slice %281 {offsets = [4, 0, 0], sizes = [1, 1, 128], strides = [1, 1, 1]} : vector<7x1x128xf32> to vector<1x1x128xf32>
    %312 = vector.shape_cast %311 : vector<1x1x128xf32> to vector<1x128xf32>
    %313 = vector.shape_cast %312 : vector<1x128xf32> to vector<1x1x128xf32>
    %314 = vector.broadcast %313 : vector<1x1x128xf32> to vector<16x16x128xf32>
    %315 = arith.mulf %310, %314 : vector<16x16x128xf32>
    %316 = arith.addf %309, %315 : vector<16x16x128xf32>
    %317 = vector.extract_strided_slice %279 {offsets = [5, 0, 0], sizes = [16, 16, 128], strides = [1, 1, 1]} : vector<22x16x128xf32> to vector<16x16x128xf32>
    %318 = vector.extract_strided_slice %281 {offsets = [5, 0, 0], sizes = [1, 1, 128], strides = [1, 1, 1]} : vector<7x1x128xf32> to vector<1x1x128xf32>
    %319 = vector.shape_cast %318 : vector<1x1x128xf32> to vector<1x128xf32>
    %320 = vector.shape_cast %319 : vector<1x128xf32> to vector<1x1x128xf32>
    %321 = vector.broadcast %320 : vector<1x1x128xf32> to vector<16x16x128xf32>
    %322 = arith.mulf %317, %321 : vector<16x16x128xf32>
    %323 = arith.addf %316, %322 : vector<16x16x128xf32>
    %324 = vector.extract_strided_slice %279 {offsets = [6, 0, 0], sizes = [16, 16, 128], strides = [1, 1, 1]} : vector<22x16x128xf32> to vector<16x16x128xf32>
    %325 = vector.extract_strided_slice %281 {offsets = [6, 0, 0], sizes = [1, 1, 128], strides = [1, 1, 1]} : vector<7x1x128xf32> to vector<1x1x128xf32>
    %326 = vector.shape_cast %325 : vector<1x1x128xf32> to vector<1x128xf32>
    %327 = vector.shape_cast %326 : vector<1x128xf32> to vector<1x1x128xf32>
    %328 = vector.broadcast %327 : vector<1x1x128xf32> to vector<16x16x128xf32>
    %329 = arith.mulf %324, %328 : vector<16x16x128xf32>
    %330 = arith.addf %323, %329 : vector<16x16x128xf32>
    %c6_i32 = arith.constant 6 : i32
    %c0_43 = arith.constant 0 : index
    %331 = arith.index_cast %c6_i32 : i32 to index
    %c0_44 = arith.constant 0 : index
    %332 = vector.load %arg11[%c0_43, %331, %c0_44] : memref<22x22x128xf32, #tpu.memory_space<vmem>>, vector<22x16x128xf32>
    %c0_45 = arith.constant 0 : index
    %333 = arith.index_cast %c6_i32 : i32 to index
    %c0_46 = arith.constant 0 : index
    %334 = vector.load %arg2[%c0_45, %333, %c0_46] : memref<7x7x128xf32, #tpu.memory_space<vmem>>, vector<7x1x128xf32>
    %335 = vector.extract_strided_slice %332 {offsets = [0, 0, 0], sizes = [16, 16, 128], strides = [1, 1, 1]} : vector<22x16x128xf32> to vector<16x16x128xf32>
    %336 = vector.extract_strided_slice %334 {offsets = [0, 0, 0], sizes = [1, 1, 128], strides = [1, 1, 1]} : vector<7x1x128xf32> to vector<1x1x128xf32>
    %337 = vector.shape_cast %336 : vector<1x1x128xf32> to vector<1x128xf32>
    %338 = vector.shape_cast %337 : vector<1x128xf32> to vector<1x1x128xf32>
    %339 = vector.broadcast %338 : vector<1x1x128xf32> to vector<16x16x128xf32>
    %340 = arith.mulf %335, %339 : vector<16x16x128xf32>
    %341 = arith.addf %330, %340 : vector<16x16x128xf32>
    %342 = vector.extract_strided_slice %332 {offsets = [1, 0, 0], sizes = [16, 16, 128], strides = [1, 1, 1]} : vector<22x16x128xf32> to vector<16x16x128xf32>
    %343 = vector.extract_strided_slice %334 {offsets = [1, 0, 0], sizes = [1, 1, 128], strides = [1, 1, 1]} : vector<7x1x128xf32> to vector<1x1x128xf32>
    %344 = vector.shape_cast %343 : vector<1x1x128xf32> to vector<1x128xf32>
    %345 = vector.shape_cast %344 : vector<1x128xf32> to vector<1x1x128xf32>
    %346 = vector.broadcast %345 : vector<1x1x128xf32> to vector<16x16x128xf32>
    %347 = arith.mulf %342, %346 : vector<16x16x128xf32>
    %348 = arith.addf %341, %347 : vector<16x16x128xf32>
    %349 = vector.extract_strided_slice %332 {offsets = [2, 0, 0], sizes = [16, 16, 128], strides = [1, 1, 1]} : vector<22x16x128xf32> to vector<16x16x128xf32>
    %350 = vector.extract_strided_slice %334 {offsets = [2, 0, 0], sizes = [1, 1, 128], strides = [1, 1, 1]} : vector<7x1x128xf32> to vector<1x1x128xf32>
    %351 = vector.shape_cast %350 : vector<1x1x128xf32> to vector<1x128xf32>
    %352 = vector.shape_cast %351 : vector<1x128xf32> to vector<1x1x128xf32>
    %353 = vector.broadcast %352 : vector<1x1x128xf32> to vector<16x16x128xf32>
    %354 = arith.mulf %349, %353 : vector<16x16x128xf32>
    %355 = arith.addf %348, %354 : vector<16x16x128xf32>
    %356 = vector.extract_strided_slice %332 {offsets = [3, 0, 0], sizes = [16, 16, 128], strides = [1, 1, 1]} : vector<22x16x128xf32> to vector<16x16x128xf32>
    %357 = vector.extract_strided_slice %334 {offsets = [3, 0, 0], sizes = [1, 1, 128], strides = [1, 1, 1]} : vector<7x1x128xf32> to vector<1x1x128xf32>
    %358 = vector.shape_cast %357 : vector<1x1x128xf32> to vector<1x128xf32>
    %359 = vector.shape_cast %358 : vector<1x128xf32> to vector<1x1x128xf32>
    %360 = vector.broadcast %359 : vector<1x1x128xf32> to vector<16x16x128xf32>
    %361 = arith.mulf %356, %360 : vector<16x16x128xf32>
    %362 = arith.addf %355, %361 : vector<16x16x128xf32>
    %363 = vector.extract_strided_slice %332 {offsets = [4, 0, 0], sizes = [16, 16, 128], strides = [1, 1, 1]} : vector<22x16x128xf32> to vector<16x16x128xf32>
    %364 = vector.extract_strided_slice %334 {offsets = [4, 0, 0], sizes = [1, 1, 128], strides = [1, 1, 1]} : vector<7x1x128xf32> to vector<1x1x128xf32>
    %365 = vector.shape_cast %364 : vector<1x1x128xf32> to vector<1x128xf32>
    %366 = vector.shape_cast %365 : vector<1x128xf32> to vector<1x1x128xf32>
    %367 = vector.broadcast %366 : vector<1x1x128xf32> to vector<16x16x128xf32>
    %368 = arith.mulf %363, %367 : vector<16x16x128xf32>
    %369 = arith.addf %362, %368 : vector<16x16x128xf32>
    %370 = vector.extract_strided_slice %332 {offsets = [5, 0, 0], sizes = [16, 16, 128], strides = [1, 1, 1]} : vector<22x16x128xf32> to vector<16x16x128xf32>
    %371 = vector.extract_strided_slice %334 {offsets = [5, 0, 0], sizes = [1, 1, 128], strides = [1, 1, 1]} : vector<7x1x128xf32> to vector<1x1x128xf32>
    %372 = vector.shape_cast %371 : vector<1x1x128xf32> to vector<1x128xf32>
    %373 = vector.shape_cast %372 : vector<1x128xf32> to vector<1x1x128xf32>
    %374 = vector.broadcast %373 : vector<1x1x128xf32> to vector<16x16x128xf32>
    %375 = arith.mulf %370, %374 : vector<16x16x128xf32>
    %376 = arith.addf %369, %375 : vector<16x16x128xf32>
    %377 = vector.extract_strided_slice %332 {offsets = [6, 0, 0], sizes = [16, 16, 128], strides = [1, 1, 1]} : vector<22x16x128xf32> to vector<16x16x128xf32>
    %378 = vector.extract_strided_slice %334 {offsets = [6, 0, 0], sizes = [1, 1, 128], strides = [1, 1, 1]} : vector<7x1x128xf32> to vector<1x1x128xf32>
    %379 = vector.shape_cast %378 : vector<1x1x128xf32> to vector<1x128xf32>
    %380 = vector.shape_cast %379 : vector<1x128xf32> to vector<1x1x128xf32>
    %381 = vector.broadcast %380 : vector<1x1x128xf32> to vector<16x16x128xf32>
    %382 = arith.mulf %377, %381 : vector<16x16x128xf32>
    %383 = arith.addf %376, %382 : vector<16x16x128xf32>
    %c7_i32 = arith.constant 7 : i32
    %cst_47 = arith.constant dense<0.000000e+00> : vector<16x16xf32>
    %384 = vector.multi_reduction <add>, %383, %cst_47 [2] : vector<16x16x128xf32> to vector<16x16xf32>
    %385 = vector.shape_cast %384 : vector<16x16xf32> to vector<16x16x1xf32>
    %386 = arith.mulf %383, %383 : vector<16x16x128xf32>
    %cst_48 = arith.constant dense<0.000000e+00> : vector<16x16xf32>
    %387 = vector.multi_reduction <add>, %386, %cst_48 [2] : vector<16x16x128xf32> to vector<16x16xf32>
    %388 = vector.shape_cast %387 : vector<16x16xf32> to vector<16x16x1xf32>
    %cst_49 = arith.constant 2.500000e-01 : f32
    %389 = vector.broadcast %cst_49 : f32 to vector<16x16x1xf32>
    %390 = arith.mulf %385, %389 : vector<16x16x1xf32>
    %cst_50 = arith.constant 2.500000e-01 : f32
    %391 = vector.broadcast %cst_50 : f32 to vector<16x16x1xf32>
    %392 = arith.mulf %388, %391 : vector<16x16x1xf32>
    %393 = arith.mulf %390, %390 : vector<16x16x1xf32>
    %394 = arith.subf %392, %393 : vector<16x16x1xf32>
    %395 = vector.broadcast %390 : vector<16x16x1xf32> to vector<16x16x128xf32>
    %396 = arith.subf %383, %395 : vector<16x16x128xf32>
    %cst_51 = arith.constant 9.99999997E-7 : f32
    %397 = vector.broadcast %cst_51 : f32 to vector<16x16x1xf32>
    %398 = arith.addf %394, %397 : vector<16x16x1xf32>
    %399 = math.rsqrt %398 : vector<16x16x1xf32>
    %400 = vector.broadcast %399 : vector<16x16x1xf32> to vector<16x16x128xf32>
    %401 = arith.mulf %396, %400 : vector<16x16x128xf32>
    %402 = vector.shape_cast %401 : vector<16x16x128xf32> to vector<256x128xf32>
    %403 = arith.truncf %402 : vector<256x128xf32> to vector<256x128xbf16>
    %c0_52 = arith.constant 0 : index
    %c0_53 = arith.constant 0 : index
    %404 = vector.load %arg4[%c0_52, %c0_53] : memref<128x128xbf16, #tpu.memory_space<vmem>>, vector<128x128xbf16>
    %cst_54 = arith.constant dense<0.000000e+00> : vector<256x128xf32>
    %405 = tpu.matmul %403, %404, %cst_54 {dimension_numbers = #tpu.dot_dimension_numbers<[1], [0], [0], [1], [0, 0, 1, 1], [], []>} : vector<256x128xbf16>, vector<128x128xbf16>, vector<256x128xf32> -> vector<256x128xf32>
    %c0_55 = arith.constant 0 : index
    %c0_56 = arith.constant 0 : index
    %406 = vector.load %arg5[%c0_55, %c0_56] : memref<1x128xf32, #tpu.memory_space<vmem>>, vector<1x128xf32>
    %407 = vector.broadcast %406 : vector<1x128xf32> to vector<256x128xf32>
    %408 = arith.addf %405, %407 : vector<256x128xf32>
    %409 = arith.mulf %408, %408 : vector<256x128xf32>
    %410 = arith.mulf %408, %409 : vector<256x128xf32>
    %cst_57 = arith.constant 4.471500e-02 : f32
    %411 = vector.broadcast %cst_57 : f32 to vector<256x128xf32>
    %412 = arith.mulf %411, %410 : vector<256x128xf32>
    %413 = arith.addf %408, %412 : vector<256x128xf32>
    %cst_58 = arith.constant 0.797884583 : f32
    %414 = vector.broadcast %cst_58 : f32 to vector<256x128xf32>
    %415 = arith.mulf %414, %413 : vector<256x128xf32>
    %416 = math.tanh %415 : vector<256x128xf32>
    %cst_59 = arith.constant 1.000000e+00 : f32
    %417 = vector.broadcast %cst_59 : f32 to vector<256x128xf32>
    %418 = arith.addf %417, %416 : vector<256x128xf32>
    %cst_60 = arith.constant 5.000000e-01 : f32
    %419 = vector.broadcast %cst_60 : f32 to vector<256x128xf32>
    %420 = arith.mulf %419, %418 : vector<256x128xf32>
    %421 = arith.mulf %408, %420 : vector<256x128xf32>
    %422 = arith.mulf %421, %421 : vector<256x128xf32>
    %cst_61 = arith.constant dense<0.000000e+00> : vector<128xf32>
    %423 = vector.multi_reduction <add>, %422, %cst_61 [0] : vector<256x128xf32> to vector<128xf32>
    %424 = vector.shape_cast %423 : vector<128xf32> to vector<1x128xf32>
    %425 = math.sqrt %424 : vector<1x128xf32>
    %cst_62 = arith.constant dense<0.000000e+00> : vector<1xf32>
    %426 = vector.multi_reduction <add>, %425, %cst_62 [1] : vector<1x128xf32> to vector<1xf32>
    %427 = vector.shape_cast %426 : vector<1xf32> to vector<1x1xf32>
    %cst_63 = arith.constant 6.250000e-02 : f32
    %428 = vector.broadcast %cst_63 : f32 to vector<1x1xf32>
    %429 = arith.mulf %427, %428 : vector<1x1xf32>
    %cst_64 = arith.constant 9.99999997E-7 : f32
    %430 = vector.broadcast %cst_64 : f32 to vector<1x1xf32>
    %431 = arith.addf %429, %430 : vector<1x1xf32>
    %432 = vector.broadcast %431 : vector<1x1xf32> to vector<1x128xf32>
    %433 = arith.divf %425, %432 : vector<1x128xf32>
    %c0_65 = arith.constant 0 : index
    %c0_66 = arith.constant 0 : index
    %434 = vector.load %arg6[%c0_65, %c0_66] : memref<1x128xf32, #tpu.memory_space<vmem>>, vector<1x128xf32>
    %435 = arith.mulf %434, %433 : vector<1x128xf32>
    %cst_67 = arith.constant 1.000000e+00 : f32
    %436 = vector.broadcast %cst_67 : f32 to vector<1x128xf32>
    %437 = arith.addf %435, %436 : vector<1x128xf32>
    %438 = arith.truncf %437 : vector<1x128xf32> to vector<1x128xbf16>
    %439 = arith.truncf %421 : vector<256x128xf32> to vector<256x128xbf16>
    %440 = vector.broadcast %438 : vector<1x128xbf16> to vector<256x128xbf16>
    %441 = arith.mulf %439, %440 : vector<256x128xbf16>
    %c0_68 = arith.constant 0 : index
    %c0_69 = arith.constant 0 : index
    %442 = vector.load %arg7[%c0_68, %c0_69] : memref<1x128xf32, #tpu.memory_space<vmem>>, vector<1x128xf32>
    %443 = arith.truncf %442 : vector<1x128xf32> to vector<1x128xbf16>
    %444 = vector.broadcast %443 : vector<1x128xbf16> to vector<256x128xbf16>
    %445 = arith.addf %441, %444 : vector<256x128xbf16>
    %c0_70 = arith.constant 0 : index
    %c0_71 = arith.constant 0 : index
    %446 = vector.load %arg8[%c0_70, %c0_71] : memref<128x128xbf16, #tpu.memory_space<vmem>>, vector<128x128xbf16>
    %cst_72 = arith.constant dense<0.000000e+00> : vector<256x128xf32>
    %447 = tpu.matmul %445, %446, %cst_72 {dimension_numbers = #tpu.dot_dimension_numbers<[1], [0], [0], [1], [0, 0, 1, 1], [], []>} : vector<256x128xbf16>, vector<128x128xbf16>, vector<256x128xf32> -> vector<256x128xf32>
    %c0_73 = arith.constant 0 : index
    %c0_74 = arith.constant 0 : index
    %448 = vector.load %arg9[%c0_73, %c0_74] : memref<1x128xf32, #tpu.memory_space<vmem>>, vector<1x128xf32>
    %449 = vector.broadcast %448 : vector<1x128xf32> to vector<256x128xf32>
    %450 = arith.addf %447, %449 : vector<256x128xf32>
    %c0_75 = arith.constant 0 : index
    %c0_76 = arith.constant 0 : index
    %c0_77 = arith.constant 0 : index
    %c0_78 = arith.constant 0 : index
    %451 = vector.load %arg1[%c0_75, %c0_76, %c0_77, %c0_78] : memref<1x16x16x128xf32, #tpu.memory_space<vmem>>, vector<1x16x16x128xf32>
    %452 = vector.shape_cast %450 : vector<256x128xf32> to vector<1x16x16x128xf32>
    %453 = arith.addf %451, %452 : vector<1x16x16x128xf32>
    %c0_79 = arith.constant 0 : index
    %c0_80 = arith.constant 0 : index
    %c0_81 = arith.constant 0 : index
    %c0_82 = arith.constant 0 : index
    %454 = vector.load %arg10[%c0_79, %c0_80, %c0_81, %c0_82] : memref<1x16x16x128xf32, #tpu.memory_space<vmem>>, vector<1x16x16x128xf32>
    tpu.vector_store %arg10[%c0_79, %c0_80, %c0_81, %c0_82], %453 {strides = array<i32>} : memref<1x16x16x128xf32, #tpu.memory_space<vmem>>, vector<1x16x16x128xf32>,
    return
  }
  func.func @transform_0(%arg0: i32) -> (i32, i32, i32, i32) {
    %c0_i32 = arith.constant 0 : i32
    %c0_i32_0 = arith.constant 0 : i32
    %c0_i32_1 = arith.constant 0 : i32
    %c0_i32_2 = arith.constant 0 : i32
    return %arg0, %c0_i32, %c0_i32_0, %c0_i32_1 : i32, i32, i32, i32
  }
  func.func @transform_1(%arg0: i32) -> (i32, i32, i32) {
    %c0_i32 = arith.constant 0 : i32
    %c0_i32_0 = arith.constant 0 : i32
    %c0_i32_1 = arith.constant 0 : i32
    %c0_i32_2 = arith.constant 0 : i32
    return %c0_i32, %c0_i32_0, %c0_i32_1 : i32, i32, i32
  }
  func.func @transform_2(%arg0: i32) -> (i32, i32) {
    %c0_i32 = arith.constant 0 : i32
    %c0_i32_0 = arith.constant 0 : i32
    %c0_i32_1 = arith.constant 0 : i32
    return %c0_i32, %c0_i32_0 : i32, i32
  }
  func.func @transform_3(%arg0: i32) -> (i32, i32) {
    %c0_i32 = arith.constant 0 : i32
    %c0_i32_0 = arith.constant 0 : i32
    %c0_i32_1 = arith.constant 0 : i32
    return %c0_i32, %c0_i32_0 : i32, i32
  }
  func.func @transform_4(%arg0: i32) -> (i32, i32) {
    %c0_i32 = arith.constant 0 : i32
    %c0_i32_0 = arith.constant 0 : i32
    %c0_i32_1 = arith.constant 0 : i32
    return %c0_i32, %c0_i32_0 : i32, i32
  }
  func.func @transform_5(%arg0: i32) -> (i32, i32) {
    %c0_i32 = arith.constant 0 : i32
    %c0_i32_0 = arith.constant 0 : i32
    %c0_i32_1 = arith.constant 0 : i32
    return %c0_i32, %c0_i32_0 : i32, i32
  }
  func.func @transform_6(%arg0: i32) -> (i32, i32) {
    %c0_i32 = arith.constant 0 : i32
    %c0_i32_0 = arith.constant 0 : i32
    %c0_i32_1 = arith.constant 0 : i32
    return %c0_i32, %c0_i32_0 : i32, i32
  }
  func.func @transform_7(%arg0: i32) -> (i32, i32) {
    %c0_i32 = arith.constant 0 : i32
    %c0_i32_0 = arith.constant 0 : i32
    %c0_i32_1 = arith.constant 0 : i32
    return %c0_i32, %c0_i32_0 : i32, i32
  }
  func.func @transform_8(%arg0: i32) -> (i32, i32) {
    %c0_i32 = arith.constant 0 : i32
    %c0_i32_0 = arith.constant 0 : i32
    %c0_i32_1 = arith.constant 0 : i32
    return %c0_i32, %c0_i32_0 : i32, i32
  }
  func.func @transform_9(%arg0: i32) -> (i32, i32, i32, i32) {
    %c0_i32 = arith.constant 0 : i32
    %c0_i32_0 = arith.constant 0 : i32
    %c0_i32_1 = arith.constant 0 : i32
    %c0_i32_2 = arith.constant 0 : i32
    return %arg0, %c0_i32, %c0_i32_0, %c0_i32_1 : i32, i32, i32, i32
  }
}

</mosaic_0001>

<llo_original>
// kernel: tpu_custom_call.1
$region0: #{tpu_custom_call.1}
  #allocation0 [shape = 'u32[]', space=smem, size = 0x4, offset = 0x4, fixed_abs, tag = 'smem constant byte address 0x4 - core index']
  #allocation1 [shape = 'u32[144,128]{1,0:T(1,128)}', space=vmem, size = 0x12000, scoped, tag = 'internal scratch']
  #allocation2 [shape = 'f32[22,22,128]{2,1,0:T(8,128)}', space=vmem, size = 0x42000, scoped, tag = 'scratch operand']
  %s0 = inlined_call_operand.hbm [shape: f32[2,16,16,128], index: 0, kind: input, shape index: {}]
  %s1 = inlined_call_operand.hbm [shape: f32[7,7,128], index: 1, kind: input, shape index: {}]
  %s2 = inlined_call_operand.vmem [shape: f32[1,128], index: 2, kind: input, shape index: {}]
  %s3 = inlined_call_operand.hbm [shape: bf16[128,128], index: 3, kind: input, shape index: {}]
  %s4 = inlined_call_operand.vmem [shape: f32[1,128], index: 4, kind: input, shape index: {}]
  %s5 = inlined_call_operand.vmem [shape: f32[1,128], index: 5, kind: input, shape index: {}]
  %s6 = inlined_call_operand.vmem [shape: f32[1,128], index: 6, kind: input, shape index: {}]
  %s7 = inlined_call_operand.hbm [shape: bf16[128,128], index: 7, kind: input, shape index: {}]
  %s8 = inlined_call_operand.vmem [shape: f32[1,128], index: 8, kind: input, shape index: {}]
  %s9 = inlined_call_operand.hbm [shape: f32[2,16,16,128], index: 9, kind: output, shape index: {}]
  %s10 = sld [smem:[#allocation0]]
  $region85: #{tpu_custom_call.1} parent=0
    _
  %s12 = ssub.s32 1, %s10
  %s13 = scalar_select 0, %s12, %s10
  $region1: #{tpu_custom_call.1} parent=0
    #allocation3 [shape = 'u8[262144]{0}', space=vmem, size = 0x40000, scoped, tag = 'input window, operand 0']
    #allocation4 [shape = 's32[2]{0}', space=sflag, size = 0x8, scoped, tag = 'scoped memory for tpu_custom_call.1']
    #allocation5 [shape = 's32[2]{0}', space=sflag, size = 0x8, scoped, tag = 'scoped memory for tpu_custom_call.1']
    #allocation6 [shape = 'u8[28672]{0}', space=vmem, size = 0x7000, scoped, tag = 'input window, operand 1, single buffered']
    #allocation7 [shape = 's32[1]{0}', space=sflag, size = 0x4, scoped, tag = 'scoped memory for tpu_custom_call.1']
    #allocation8 [shape = 'u8[32768]{0}', space=vmem, size = 0x8000, scoped, tag = 'input window, operand 3, single buffered']
    #allocation9 [shape = 'u8[32768]{0}', space=vmem, size = 0x8000, scoped, tag = 'input window, operand 7, single buffered']
    #allocation10 [shape = 's32[1]{0}', space=sflag, size = 0x4, scoped, tag = 'scoped memory for tpu_custom_call.1']
    #allocation11 [shape = 'u8[262144]{0}', space=vmem, size = 0x40000, scoped, tag = 'output window, operand 0']
    %14 = vsyncpa [#allocation4], 0
    %s15 = scalar_lea.sflag [#allocation4], 1
    %16 = vsyncpa %s15, 0
    %17 = vsyncpa [#allocation7], 0
    %18 = vsyncpa [#allocation10], 0
    %19 = vsyncpa [#allocation5], 0
    %s20 = scalar_lea.sflag [#allocation5], 1
    %21 = vsyncpa %s20, 0
    loop: start=0, step=1, limit=4
    $region2: #{tpu_custom_call.1} parent=1 // loop_pre_header
      _
    $region3: #{tpu_custom_call.1} parent=1 // loop_header
      %s23 = sphi 0, %s27
      %p24 = scmp.ge.s32.totalorder %s23, 4
      %s33 = sphi 0, %s35
      %s36 = sphi 0, %s33
      %s37 = sphi 0, %s36
      %s53 = sphi 0, %s37
      %s57 = sphi 0, %s57
      %s59 = sphi 0, %s57
      %s60 = sphi 0, %s59
      %s74 = sphi 0, %s60
      %s78 = sphi 0, %s78
      %s80 = sphi 0, %s78
      %s81 = sphi 0, %s80
      %s95 = sphi 0, %s81
      %s99 = sphi 0, %s99
      %s101 = sphi 0, %s99
      %s102 = sphi 0, %s101
      %s116 = sphi 0, %s102
      %s120 = sphi 0, %s120
      %s122 = sphi 0, %s120
      %s123 = sphi 0, %s122
      %s137 = sphi 0, %s123
      %s141 = sphi 0, %s141
      %s143 = sphi 0, %s141
      %s144 = sphi 0, %s143
      %s158 = sphi 0, %s144
      %s162 = sphi 0, %s162
      %s164 = sphi 0, %s162
      %s165 = sphi 0, %s164
      %s179 = sphi 0, %s165
      %s183 = sphi 0, %s183
      %s185 = sphi 0, %s183
      %s186 = sphi 0, %s185
      %s200 = sphi 0, %s186
      %s204 = sphi 0, %s204
      %s206 = sphi 0, %s204
      %s207 = sphi 0, %s206
      %s221 = sphi 0, %s207
      %s227 = sphi 0, %s229
      %s230 = sphi 0, %s227
      %s231 = sphi 0, %s230
      %s247 = sphi 0, %s231
    $region4: #{tpu_custom_call.1} parent=1 // loop_header_branch
      %26 = sbr.rel (%p24) target = $region8
    $region5: #{tpu_custom_call.1} parent=1 // loop_body
      %s28 = ssub.s32 %s23, 1
      %s29 = ssub.s32 %s23, 2
      %s30 = sadd.s32 %s23, 1
      %s31 = ssub.s32 %s23, %s30
      %p32 = scmp.eq.s32.totalorder %s31, 0
      %s34 = sadd.s32 %s33, 1
      %s35 = scalar_select %p32, %s33, %s34
      %p38 = pneg %p32
      %p39 = scmp.eq.s32.totalorder %s23, 1
      %p40 = por %p38, %p39
      %p41 = scmp.ne.s32.totalorder %s33, %s36
      %p42 = scmp.eq.s32.totalorder %s23, 0
      %p43 = por %p41, %p42
      %p44 = scmp.ne.s32.totalorder %s33, %s36
      %p45 = scmp.eq.s32.totalorder %s28, 1
      %p46 = por %p44, %p45
      %p47 = scmp.ne.s32.totalorder %s36, %s37
      %p48 = scmp.eq.s32.totalorder %s28, 0
      %p49 = por %p47, %p48
      %p50 = scmp.ne.s32.totalorder %s36, %s37
      %p51 = scmp.eq.s32.totalorder %s29, 1
      %p52 = por %p50, %p51
      %p54 = scmp.ne.s32.totalorder %s37, %s53
      %p55 = scmp.eq.s32.totalorder %s29, 0
      %p56 = por %p54, %p55
      %s58 = sadd.s32 %s57, 1
      %p61 = scmp.eq.s32.totalorder %s23, 1
      %p62 = scmp.ne.s32.totalorder %s57, %s59
      %p63 = scmp.eq.s32.totalorder %s23, 0
      %p64 = por %p62, %p63
      %p65 = scmp.ne.s32.totalorder %s57, %s59
      %p66 = scmp.eq.s32.totalorder %s28, 1
      %p67 = por %p65, %p66
      %p68 = scmp.ne.s32.totalorder %s59, %s60
      %p69 = scmp.eq.s32.totalorder %s28, 0
      %p70 = por %p68, %p69
      %p71 = scmp.ne.s32.totalorder %s59, %s60
      %p72 = scmp.eq.s32.totalorder %s29, 1
      %p73 = por %p71, %p72
      %p75 = scmp.ne.s32.totalorder %s60, %s74
      %p76 = scmp.eq.s32.totalorder %s29, 0
      %p77 = por %p75, %p76
      %s79 = sadd.s32 %s78, 1
      %p82 = scmp.eq.s32.totalorder %s23, 1
      %p83 = scmp.ne.s32.totalorder %s78, %s80
      %p84 = scmp.eq.s32.totalorder %s23, 0
      %p85 = por %p83, %p84
      %p86 = scmp.ne.s32.totalorder %s78, %s80
      %p87 = scmp.eq.s32.totalorder %s28, 1
      %p88 = por %p86, %p87
      %p89 = scmp.ne.s32.totalorder %s80, %s81
      %p90 = scmp.eq.s32.totalorder %s28, 0
      %p91 = por %p89, %p90
      %p92 = scmp.ne.s32.totalorder %s80, %s81
      %p93 = scmp.eq.s32.totalorder %s29, 1
      %p94 = por %p92, %p93
      %p96 = scmp.ne.s32.totalorder %s81, %s95
      %p97 = scmp.eq.s32.totalorder %s29, 0
      %p98 = por %p96, %p97
      %s100 = sadd.s32 %s99, 1
      %p103 = scmp.eq.s32.totalorder %s23, 1
      %p104 = scmp.ne.s32.totalorder %s99, %s101
      %p105 = scmp.eq.s32.totalorder %s23, 0
      %p106 = por %p104, %p105
      %p107 = scmp.ne.s32.totalorder %s99, %s101
      %p108 = scmp.eq.s32.totalorder %s28, 1
      %p109 = por %p107, %p108
      %p110 = scmp.ne.s32.totalorder %s101, %s102
      %p111 = scmp.eq.s32.totalorder %s28, 0
      %p112 = por %p110, %p111
      %p113 = scmp.ne.s32.totalorder %s101, %s102
      %p114 = scmp.eq.s32.totalorder %s29, 1
      %p115 = por %p113, %p114
      %p117 = scmp.ne.s32.totalorder %s102, %s116
      %p118 = scmp.eq.s32.totalorder %s29, 0
      %p119 = por %p117, %p118
      %s121 = sadd.s32 %s120, 1
      %p124 = scmp.eq.s32.totalorder %s23, 1
      %p125 = scmp.ne.s32.totalorder %s120, %s122
      %p126 = scmp.eq.s32.totalorder %s23, 0
      %p127 = por %p125, %p126
      %p128 = scmp.ne.s32.totalorder %s120, %s122
      %p129 = scmp.eq.s32.totalorder %s28, 1
      %p130 = por %p128, %p129
      %p131 = scmp.ne.s32.totalorder %s122, %s123
      %p132 = scmp.eq.s32.totalorder %s28, 0
      %p133 = por %p131, %p132
      %p134 = scmp.ne.s32.totalorder %s122, %s123
      %p135 = scmp.eq.s32.totalorder %s29, 1
      %p136 = por %p134, %p135
      %p138 = scmp.ne.s32.totalorder %s123, %s137
      %p139 = scmp.eq.s32.totalorder %s29, 0
      %p140 = por %p138, %p139
      %s142 = sadd.s32 %s141, 1
      %p145 = scmp.eq.s32.totalorder %s23, 1
      %p146 = scmp.ne.s32.totalorder %s141, %s143
      %p147 = scmp.eq.s32.totalorder %s23, 0
      %p148 = por %p146, %p147
      %p149 = scmp.ne.s32.totalorder %s141, %s143
      %p150 = scmp.eq.s32.totalorder %s28, 1
      %p151 = por %p149, %p150
      %p152 = scmp.ne.s32.totalorder %s143, %s144
      %p153 = scmp.eq.s32.totalorder %s28, 0
      %p154 = por %p152, %p153
      %p155 = scmp.ne.s32.totalorder %s143, %s144
      %p156 = scmp.eq.s32.totalorder %s29, 1
      %p157 = por %p155, %p156
      %p159 = scmp.ne.s32.totalorder %s144, %s158
      %p160 = scmp.eq.s32.totalorder %s29, 0
      %p161 = por %p159, %p160
      %s163 = sadd.s32 %s162, 1
      %p166 = scmp.eq.s32.totalorder %s23, 1
      %p167 = scmp.ne.s32.totalorder %s162, %s164
      %p168 = scmp.eq.s32.totalorder %s23, 0
      %p169 = por %p167, %p168
      %p170 = scmp.ne.s32.totalorder %s162, %s164
      %p171 = scmp.eq.s32.totalorder %s28, 1
      %p172 = por %p170, %p171
      %p173 = scmp.ne.s32.totalorder %s164, %s165
      %p174 = scmp.eq.s32.totalorder %s28, 0
      %p175 = por %p173, %p174
      %p176 = scmp.ne.s32.totalorder %s164, %s165
      %p177 = scmp.eq.s32.totalorder %s29, 1
      %p178 = por %p176, %p177
      %p180 = scmp.ne.s32.totalorder %s165, %s179
      %p181 = scmp.eq.s32.totalorder %s29, 0
      %p182 = por %p180, %p181
      %s184 = sadd.s32 %s183, 1
      %p187 = scmp.eq.s32.totalorder %s23, 1
      %p188 = scmp.ne.s32.totalorder %s183, %s185
      %p189 = scmp.eq.s32.totalorder %s23, 0
      %p190 = por %p188, %p189
      %p191 = scmp.ne.s32.totalorder %s183, %s185
      %p192 = scmp.eq.s32.totalorder %s28, 1
      %p193 = por %p191, %p192
      %p194 = scmp.ne.s32.totalorder %s185, %s186
      %p195 = scmp.eq.s32.totalorder %s28, 0
      %p196 = por %p194, %p195
      %p197 = scmp.ne.s32.totalorder %s185, %s186
      %p198 = scmp.eq.s32.totalorder %s29, 1
      %p199 = por %p197, %p198
      %p201 = scmp.ne.s32.totalorder %s186, %s200
      %p202 = scmp.eq.s32.totalorder %s29, 0
      %p203 = por %p201, %p202
      %s205 = sadd.s32 %s204, 1
      %p208 = scmp.eq.s32.totalorder %s23, 1
      %p209 = scmp.ne.s32.totalorder %s204, %s206
      %p210 = scmp.eq.s32.totalorder %s23, 0
      %p211 = por %p209, %p210
      %p212 = scmp.ne.s32.totalorder %s204, %s206
      %p213 = scmp.eq.s32.totalorder %s28, 1
      %p214 = por %p212, %p213
      %p215 = scmp.ne.s32.totalorder %s206, %s207
      %p216 = scmp.eq.s32.totalorder %s28, 0
      %p217 = por %p215, %p216
      %p218 = scmp.ne.s32.totalorder %s206, %s207
      %p219 = scmp.eq.s32.totalorder %s29, 1
      %p220 = por %p218, %p219
      %p222 = scmp.ne.s32.totalorder %s207, %s221
      %p223 = scmp.eq.s32.totalorder %s29, 0
      %p224 = por %p222, %p223
      %s225 = ssub.s32 %s23, %s30
      %p226 = scmp.eq.s32.totalorder %s225, 0
      %s228 = sadd.s32 %s227, 1
      %s229 = scalar_select %p226, %s227, %s228
      %p232 = pneg %p226
      %p233 = scmp.eq.s32.totalorder %s23, 1
      %p234 = por %p232, %p233
      %p235 = scmp.ne.s32.totalorder %s227, %s230
      %p236 = scmp.eq.s32.totalorder %s23, 0
      %p237 = por %p235, %p236
      %p238 = scmp.ne.s32.totalorder %s227, %s230
      %p239 = scmp.eq.s32.totalorder %s28, 1
      %p240 = por %p238, %p239
      %p241 = scmp.ne.s32.totalorder %s230, %s231
      %p242 = scmp.eq.s32.totalorder %s28, 0
      %p243 = por %p241, %p242
      %p244 = scmp.ne.s32.totalorder %s230, %s231
      %p245 = scmp.eq.s32.totalorder %s29, 1
      %p246 = por %p244, %p245
      %p248 = scmp.ne.s32.totalorder %s231, %s247
      %p249 = scmp.eq.s32.totalorder %s29, 0
      %p250 = por %p248, %p249
      %p251 = scmp.le.s32.totalorder 1, %s23
      %p252 = scmp.lt.s32.totalorder %s23, 3
      %p253 = pnand %p251, %p252
      %p254 = pneg %p253
      // Predicated region
      $region9: #{tpu_custom_call.1} parent=5 // pred_check
        _
      $region10: #{tpu_custom_call.1} parent=5 // pred_check_branch
        %256 = sbr.rel (%p253) target = $region12
      $region11: #{tpu_custom_call.1} parent=5 // pred_region
        %s257 = ssub.s32 %s23, 1
        // Predicated region
        $region13: #{tpu_custom_call.1} parent=11 // pred_check
          %p258 = pneg %p70
        $region14: #{tpu_custom_call.1} parent=11 // pred_check_branch
          %260 = sbr.rel (%p258) target = $region16
        $region15: #{tpu_custom_call.1} parent=11 // pred_region
          %s262 = ssub.s32 896, 896
          %263 = vsyncadd [#allocation7], %s262
          %s264 = sshll.u32 [#allocation6], 4
          %s265 = int_to_ptr.vmem [resolvable:$true] %s264
          %270 = dma.hbm_to_vmem [thread:$0]  %s1, 896, %s265, [#allocation7], 128, 128, 8
        $region16: #{tpu_custom_call.1} parent=11 // pred_fallthru
          _
        // Predicated region
        $region17: #{tpu_custom_call.1} parent=11 // pred_check
          %p271 = pneg %p91
        $region18: #{tpu_custom_call.1} parent=11 // pred_check_branch
          %273 = sbr.rel (%p271) target = $region20
        $region19: #{tpu_custom_call.1} parent=11 // pred_region
          _
        $region20: #{tpu_custom_call.1} parent=11 // pred_fallthru
          _
        // Predicated region
        $region21: #{tpu_custom_call.1} parent=11 // pred_check
          %p274 = pneg %p112
        $region22: #{tpu_custom_call.1} parent=11 // pred_check_branch
          %276 = sbr.rel (%p274) target = $region24
        $region23: #{tpu_custom_call.1} parent=11 // pred_region
          %s278 = ssub.s32 1024, 1024
          %279 = vsyncadd [#allocation7], %s278
          %s280 = sshll.u32 [#allocation8], 4
          %s281 = int_to_ptr.vmem [resolvable:$true] %s280
          %286 = dma.hbm_to_vmem [thread:$0]  %s3, 1024, %s281, [#allocation7], 64, 64, 4
        $region24: #{tpu_custom_call.1} parent=11 // pred_fallthru
          _
        // Predicated region
        $region25: #{tpu_custom_call.1} parent=11 // pred_check
          %p287 = pneg %p133
        $region26: #{tpu_custom_call.1} parent=11 // pred_check_branch
          %289 = sbr.rel (%p287) target = $region28
        $region27: #{tpu_custom_call.1} parent=11 // pred_region
          _
        $region28: #{tpu_custom_call.1} parent=11 // pred_fallthru
          _
        // Predicated region
        $region29: #{tpu_custom_call.1} parent=11 // pred_check
          %p290 = pneg %p154
        $region30: #{tpu_custom_call.1} parent=11 // pred_check_branch
          %292 = sbr.rel (%p290) target = $region32
        $region31: #{tpu_custom_call.1} parent=11 // pred_region
          _
        $region32: #{tpu_custom_call.1} parent=11 // pred_fallthru
          _
        // Predicated region
        $region33: #{tpu_custom_call.1} parent=11 // pred_check
          %p293 = pneg %p175
        $region34: #{tpu_custom_call.1} parent=11 // pred_check_branch
          %295 = sbr.rel (%p293) target = $region36
        $region35: #{tpu_custom_call.1} parent=11 // pred_region
          _
        $region36: #{tpu_custom_call.1} parent=11 // pred_fallthru
          _
        // Predicated region
        $region37: #{tpu_custom_call.1} parent=11 // pred_check
          %p296 = pneg %p196
        $region38: #{tpu_custom_call.1} parent=11 // pred_check_branch
          %298 = sbr.rel (%p296) target = $region40
        $region39: #{tpu_custom_call.1} parent=11 // pred_region
          %s300 = ssub.s32 1024, 1024
          %301 = vsyncadd [#allocation10], %s300
          %s302 = sshll.u32 [#allocation9], 4
          %s303 = int_to_ptr.vmem [resolvable:$true] %s302
          %308 = dma.hbm_to_vmem [thread:$0]  %s7, 1024, %s303, [#allocation10], 64, 64, 4
        $region40: #{tpu_custom_call.1} parent=11 // pred_fallthru
          _
        // Predicated region
        $region41: #{tpu_custom_call.1} parent=11 // pred_check
          %p309 = pneg %p217
        $region42: #{tpu_custom_call.1} parent=11 // pred_check_branch
          %311 = sbr.rel (%p309) target = $region44
        $region43: #{tpu_custom_call.1} parent=11 // pred_region
          _
        $region44: #{tpu_custom_call.1} parent=11 // pred_fallthru
          _
      $region12: #{tpu_custom_call.1} parent=5 // pred_fallthru
        _
      %p312 = scmp.lt.s32.totalorder %s23, 2
      // Predicated region
      $region45: #{tpu_custom_call.1} parent=5 // pred_check
        %p313 = pneg %p312
      $region46: #{tpu_custom_call.1} parent=5 // pred_check_branch
        %315 = sbr.rel (%p313) target = $region48
      $region47: #{tpu_custom_call.1} parent=5 // pred_region
        // Predicated region
        $region49: #{tpu_custom_call.1} parent=47 // pred_check
          %p316 = pneg %p43
        $region50: #{tpu_custom_call.1} parent=47 // pred_check_branch
          %318 = sbr.rel (%p316) target = $region52
        $region51: #{tpu_custom_call.1} parent=47 // pred_region
          %s319 = sand.u32 %s33, 1
          %s320 = scalar_lea.sflag [#allocation4], %s319
          %s321 = sand.u32 %s33, 1
          %s322 = smul.addr %s321, 256
          %s323 = scalar_lea.vmem [#allocation3], %s322
          %s325 = ssub.s32 4096, 4096
          %326 = vsyncadd %s320, %s325
          %s327 = smul.addr %s23, 32
          %s328 = smul.addr %s327, 128
          %s329 = scalar_lea.hbm %s0, %s328
          %s330 = sshll.u32 %s323, 4
          %s331 = int_to_ptr.vmem [resolvable:$true] %s330
          %336 = dma.hbm_to_vmem [thread:$0]  %s329, 4096, %s331, %s320, 128, 128, 8
        $region52: #{tpu_custom_call.1} parent=47 // pred_fallthru
          _
      $region48: #{tpu_custom_call.1} parent=5 // pred_fallthru
        _
      %p337 = scmp.le.s32.totalorder 1, %s23
      %p338 = scmp.lt.s32.totalorder %s23, 3
      %p339 = pnand %p337, %p338
      %p340 = pneg %p339
      // Predicated region
      $region53: #{tpu_custom_call.1} parent=5 // pred_check
        _
      $region54: #{tpu_custom_call.1} parent=5 // pred_check_branch
        %342 = sbr.rel (%p339) target = $region56
      $region55: #{tpu_custom_call.1} parent=5 // pred_region
        %s343 = ssub.s32 %s23, 1
        %s344 = sand.u32 %s36, 1
        %s345 = scalar_lea.sflag [#allocation4], %s344
        %s346 = sand.u32 %s36, 1
        %s347 = smul.addr %s346, 256
        %s348 = scalar_lea.vmem [#allocation3], %s347
        // Predicated region
        $region57: #{tpu_custom_call.1} parent=55 // pred_check
          %p349 = pneg %p49
        $region58: #{tpu_custom_call.1} parent=55 // pred_check_branch
          %351 = sbr.rel (%p349) target = $region60
        $region59: #{tpu_custom_call.1} parent=55 // pred_region
          %352 = dma.done %s345, 4096
        $region60: #{tpu_custom_call.1} parent=55 // pred_fallthru
          _
        // Predicated region
        $region61: #{tpu_custom_call.1} parent=55 // pred_check
          %p353 = pneg %p70
        $region62: #{tpu_custom_call.1} parent=55 // pred_check_branch
          %355 = sbr.rel (%p353) target = $region64
        $region63: #{tpu_custom_call.1} parent=55 // pred_region
          %356 = dma.done [#allocation7], 896
        $region64: #{tpu_custom_call.1} parent=55 // pred_fallthru
          _
        // Predicated region
        $region65: #{tpu_custom_call.1} parent=55 // pred_check
          %p357 = pneg %p112
        $region66: #{tpu_custom_call.1} parent=55 // pred_check_branch
          %359 = sbr.rel (%p357) target = $region68
        $region67: #{tpu_custom_call.1} parent=55 // pred_region
          %360 = dma.done [#allocation7], 1024
        $region68: #{tpu_custom_call.1} parent=55 // pred_fallthru
          _
        // Predicated region
        $region69: #{tpu_custom_call.1} parent=55 // pred_check
          %p361 = pneg %p196
        $region70: #{tpu_custom_call.1} parent=55 // pred_check_branch
          %363 = sbr.rel (%p361) target = $region72
        $region71: #{tpu_custom_call.1} parent=55 // pred_region
          %364 = dma.done [#allocation10], 1024
        $region72: #{tpu_custom_call.1} parent=55 // pred_fallthru
          _
        %s365 = sand.u32 %s36, 1
        %s366 = scalar_lea.sflag [#allocation4], %s365
        %s367 = sand.u32 %s36, 1
        %s368 = smul.addr %s367, 256
        %s369 = scalar_lea.vmem [#allocation3], %s368
        %p370 = pneg %p49
        %p371 = pneg %p46
        %p372 = pneg %p70
        %p373 = pneg %p67
        %p374 = pneg %p91
        %p375 = pneg %p88
        %p376 = pneg %p112
        %p377 = pneg %p109
        %p378 = pneg %p133
        %p379 = pneg %p130
        %p380 = pneg %p154
        %p381 = pneg %p151
        %p382 = pneg %p175
        %p383 = pneg %p172
        %p384 = pneg %p196
        %p385 = pneg %p193
        %p386 = pneg %p217
        %p387 = pneg %p214
        %p388 = pneg %p243
        %p389 = pneg %p240
        %s390 = sand.u32 %s230, 1
        %s391 = scalar_lea.sflag [#allocation5], %s390
        %s392 = sand.u32 %s230, 1
        %s393 = smul.addr %s392, 256
        %s394 = scalar_lea.vmem [#allocation11], %s393
        %396 = vst [vmem:[#allocation2] sm:$0xff] 0.0
        %397 = vst [vmem:[#allocation2 + $0x8] sm:$0xff] 0.0
        %398 = vst [vmem:[#allocation2 + $0x10] sm:$0x3f] 0.0
        %399 = vst [vmem:[#allocation2 + $0x18] sm:$0xff] 0.0
        %400 = vst [vmem:[#allocation2 + $0x20] sm:$0xff] 0.0
        %401 = vst [vmem:[#allocation2 + $0x28] sm:$0x3f] 0.0
        %402 = vst [vmem:[#allocation2 + $0x30] sm:$0xff] 0.0
        %403 = vst [vmem:[#allocation2 + $0x38] sm:$0xff] 0.0
        %404 = vst [vmem:[#allocation2 + $0x40] sm:$0x3f] 0.0
        %s405 = scalar_lea.vmem [#allocation2], 456
        %406 = vst [vmem:[%s405] sm:$0xff] 0.0
        %407 = vst [vmem:[%s405 + $0x8] sm:$0xff] 0.0
        %408 = vst [vmem:[%s405 + $0x10] sm:$0x3f] 0.0
        %409 = vst [vmem:[%s405 + $0x18] sm:$0xff] 0.0
        %410 = vst [vmem:[%s405 + $0x20] sm:$0xff] 0.0
        %411 = vst [vmem:[%s405 + $0x28] sm:$0x3f] 0.0
        %412 = vst [vmem:[%s405 + $0x30] sm:$0xff] 0.0
        %413 = vst [vmem:[%s405 + $0x38] sm:$0xff] 0.0
        %414 = vst [vmem:[%s405 + $0x40] sm:$0x3f] 0.0
        %s415 = scalar_lea.vmem [#allocation2], 72
        %416 = vst [vmem:[%s415] sm:$0x7] 0.0
        %417 = vst [vmem:[%s415 + $0x18] sm:$0x7] 0.0
        %418 = vst [vmem:[%s415 + $0x30] sm:$0x7] 0.0
        %419 = vst [vmem:[%s415 + $0x48] sm:$0x7] 0.0
        %420 = vst [vmem:[%s415 + $0x60] sm:$0x7] 0.0
        %421 = vst [vmem:[%s415 + $0x78] sm:$0x7] 0.0
        %422 = vst [vmem:[%s415 + $0x90] sm:$0x7] 0.0
        %423 = vst [vmem:[%s415 + $0xa8] sm:$0x7] 0.0
        %424 = vst [vmem:[%s415 + $0xc0] sm:$0x7] 0.0
        %425 = vst [vmem:[%s415 + $0xd8] sm:$0x7] 0.0
        %426 = vst [vmem:[%s415 + $0xf0] sm:$0x7] 0.0
        %427 = vst [vmem:[%s415 + $0x108] sm:$0x7] 0.0
        %428 = vst [vmem:[%s415 + $0x120] sm:$0x7] 0.0
        %429 = vst [vmem:[%s415 + $0x138] sm:$0x7] 0.0
        %430 = vst [vmem:[%s415 + $0x150] sm:$0x7] 0.0
        %431 = vst [vmem:[%s415 + $0x168] sm:$0x7] 0.0
        %432 = vst [vmem:[%s415 + $0x13] sm:$0x7] 0.0
        %433 = vst [vmem:[%s415 + $0x2b] sm:$0x7] 0.0
        %434 = vst [vmem:[%s415 + $0x43] sm:$0x7] 0.0
        %435 = vst [vmem:[%s415 + $0x5b] sm:$0x7] 0.0
        %436 = vst [vmem:[%s415 + $0x73] sm:$0x7] 0.0
        %437 = vst [vmem:[%s415 + $0x8b] sm:$0x7] 0.0
        %438 = vst [vmem:[%s415 + $0xa3] sm:$0x7] 0.0
        %439 = vst [vmem:[%s415 + $0xbb] sm:$0x7] 0.0
        %440 = vst [vmem:[%s415 + $0xd3] sm:$0x7] 0.0
        %441 = vst [vmem:[%s415 + $0xeb] sm:$0x7] 0.0
        %442 = vst [vmem:[%s415 + $0x103] sm:$0x7] 0.0
        %443 = vst [vmem:[%s415 + $0x11b] sm:$0x7] 0.0
        %444 = vst [vmem:[%s415 + $0x133] sm:$0x7] 0.0
        %445 = vst [vmem:[%s415 + $0x14b] sm:$0x7] 0.0
        %446 = vst [vmem:[%s415 + $0x163] sm:$0x7] 0.0
        %447 = vst [vmem:[%s415 + $0x17b] sm:$0x7] 0.0
        %v448 = vld [vmem:[%s348] sm:$0xff]
        %v449 = vld [vmem:[%s348 + $0x8] sm:$0xff]
        %v450 = vld [vmem:[%s348 + $0x10] sm:$0xff]
        %v451 = vld [vmem:[%s348 + $0x18] sm:$0xff]
        %v452 = vld [vmem:[%s348 + $0x20] sm:$0xff]
        %v453 = vld [vmem:[%s348 + $0x28] sm:$0xff]
        %v454 = vld [vmem:[%s348 + $0x30] sm:$0xff]
        %v455 = vld [vmem:[%s348 + $0x38] sm:$0xff]
        %v456 = vld [vmem:[%s348 + $0x40] sm:$0xff]
        %v457 = vld [vmem:[%s348 + $0x48] sm:$0xff]
        %v458 = vld [vmem:[%s348 + $0x50] sm:$0xff]
        %v459 = vld [vmem:[%s348 + $0x58] sm:$0xff]
        %v460 = vld [vmem:[%s348 + $0x60] sm:$0xff]
        %v461 = vld [vmem:[%s348 + $0x68] sm:$0xff]
        %v462 = vld [vmem:[%s348 + $0x70] sm:$0xff]
        %v463 = vld [vmem:[%s348 + $0x78] sm:$0xff]
        %v464 = vld [vmem:[%s348 + $0x80] sm:$0xff]
        %v465 = vld [vmem:[%s348 + $0x88] sm:$0xff]
        %v466 = vld [vmem:[%s348 + $0x90] sm:$0xff]
        %v467 = vld [vmem:[%s348 + $0x98] sm:$0xff]
        %v468 = vld [vmem:[%s348 + $0xa0] sm:$0xff]
        %v469 = vld [vmem:[%s348 + $0xa8] sm:$0xff]
        %v470 = vld [vmem:[%s348 + $0xb0] sm:$0xff]
        %v471 = vld [vmem:[%s348 + $0xb8] sm:$0xff]
        %v472 = vld [vmem:[%s348 + $0xc0] sm:$0xff]
        %v473 = vld [vmem:[%s348 + $0xc8] sm:$0xff]
        %v474 = vld [vmem:[%s348 + $0xd0] sm:$0xff]
        %v475 = vld [vmem:[%s348 + $0xd8] sm:$0xff]
        %v476 = vld [vmem:[%s348 + $0xe0] sm:$0xff]
        %v477 = vld [vmem:[%s348 + $0xe8] sm:$0xff]
        %v478 = vld [vmem:[%s348 + $0xf0] sm:$0xff]
        %v479 = vld [vmem:[%s348 + $0xf8] sm:$0xff]
        %480 = vst [vmem:[%s415 + $0x3] sm:$0xff] %v448
        %481 = vst [vmem:[%s415 + $0xb] sm:$0xff] %v449
        %482 = vst [vmem:[%s415 + $0x1b] sm:$0xff] %v450
        %483 = vst [vmem:[%s415 + $0x23] sm:$0xff] %v451
        %484 = vst [vmem:[%s415 + $0x33] sm:$0xff] %v452
        %485 = vst [vmem:[%s415 + $0x3b] sm:$0xff] %v453
        %486 = vst [vmem:[%s415 + $0x4b] sm:$0xff] %v454
        %487 = vst [vmem:[%s415 + $0x53] sm:$0xff] %v455
        %488 = vst [vmem:[%s415 + $0x63] sm:$0xff] %v456
        %489 = vst [vmem:[%s415 + $0x6b] sm:$0xff] %v457
        %490 = vst [vmem:[%s415 + $0x7b] sm:$0xff] %v458
        %491 = vst [vmem:[%s415 + $0x83] sm:$0xff] %v459
        %492 = vst [vmem:[%s415 + $0x93] sm:$0xff] %v460
        %493 = vst [vmem:[%s415 + $0x9b] sm:$0xff] %v461
        %494 = vst [vmem:[%s415 + $0xab] sm:$0xff] %v462
        %495 = vst [vmem:[%s415 + $0xb3] sm:$0xff] %v463
        %496 = vst [vmem:[%s415 + $0xc3] sm:$0xff] %v464
        %497 = vst [vmem:[%s415 + $0xcb] sm:$0xff] %v465
        %498 = vst [vmem:[%s415 + $0xdb] sm:$0xff] %v466
        %499 = vst [vmem:[%s415 + $0xe3] sm:$0xff] %v467
        %500 = vst [vmem:[%s415 + $0xf3] sm:$0xff] %v468
        %501 = vst [vmem:[%s415 + $0xfb] sm:$0xff] %v469
        %502 = vst [vmem:[%s415 + $0x10b] sm:$0xff] %v470
        %503 = vst [vmem:[%s415 + $0x113] sm:$0xff] %v471
        %504 = vst [vmem:[%s415 + $0x123] sm:$0xff] %v472
        %505 = vst [vmem:[%s415 + $0x12b] sm:$0xff] %v473
        %506 = vst [vmem:[%s415 + $0x13b] sm:$0xff] %v474
        %507 = vst [vmem:[%s415 + $0x143] sm:$0xff] %v475
        %508 = vst [vmem:[%s415 + $0x153] sm:$0xff] %v476
        %509 = vst [vmem:[%s415 + $0x15b] sm:$0xff] %v477
        %510 = vst [vmem:[%s415 + $0x16b] sm:$0xff] %v478
        %511 = vst [vmem:[%s415 + $0x173] sm:$0xff] %v479
        %v512 = vld [vmem:[%s2] sm:$0x1]
        %v514 = vlaneseq
        %v515 = vshrl.u32 %v514, 7
        %v516 = vsub.s32 0, %v515
        %v517 = vrot.slane %v512, %v516
        %v519 = vld [vmem:[#allocation2] sm:$0xff]
        %v520 = vld [vmem:[#allocation2 + $0x8] sm:$0xff]
        %v521 = vld [vmem:[#allocation2 + $0x18] sm:$0xff]
        %v522 = vld [vmem:[#allocation2 + $0x20] sm:$0xff]
        %v523 = vld [vmem:[#allocation2 + $0x30] sm:$0xff]
        %v524 = vld [vmem:[#allocation2 + $0x38] sm:$0xff]
        %v525 = vld [vmem:[#allocation2 + $0x48] sm:$0xff]
        %v526 = vld [vmem:[#allocation2 + $0x50] sm:$0xff]
        %v527 = vld [vmem:[#allocation2 + $0x60] sm:$0xff]
        %v528 = vld [vmem:[#allocation2 + $0x68] sm:$0xff]
        %v529 = vld [vmem:[#allocation2 + $0x78] sm:$0xff]
        %v530 = vld [vmem:[#allocation2 + $0x80] sm:$0xff]
        %v531 = vld [vmem:[#allocation2 + $0x90] sm:$0xff]
        %v532 = vld [vmem:[#allocation2 + $0x98] sm:$0xff]
        %v533 = vld [vmem:[#allocation2 + $0xa8] sm:$0xff]
        %v534 = vld [vmem:[#allocation2 + $0xb0] sm:$0xff]
        %v535 = vld [vmem:[#allocation2 + $0xc0] sm:$0xff]
        %v536 = vld [vmem:[#allocation2 + $0xc8] sm:$0xff]
        %v537 = vld [vmem:[#allocation2 + $0xd8] sm:$0xff]
        %v538 = vld [vmem:[#allocation2 + $0xe0] sm:$0xff]
        %v539 = vld [vmem:[#allocation2 + $0xf0] sm:$0xff]
        %v540 = vld [vmem:[#allocation2 + $0xf8] sm:$0xff]
        %v541 = vld [vmem:[#allocation2 + $0x108] sm:$0xff]
        %v542 = vld [vmem:[#allocation2 + $0x110] sm:$0xff]
        %v543 = vld [vmem:[#allocation2 + $0x120] sm:$0xff]
        %v544 = vld [vmem:[#allocation2 + $0x128] sm:$0xff]
        %v545 = vld [vmem:[#allocation2 + $0x138] sm:$0xff]
        %v546 = vld [vmem:[#allocation2 + $0x140] sm:$0xff]
        %v547 = vld [vmem:[#allocation2 + $0x150] sm:$0xff]
        %v548 = vld [vmem:[#allocation2 + $0x158] sm:$0xff]
        %v549 = vld [vmem:[#allocation2 + $0x168] sm:$0xff]
        %v550 = vld [vmem:[#allocation2 + $0x170] sm:$0xff]
        %v551 = vld [vmem:[#allocation2 + $0x180] sm:$0xff]
        %v552 = vld [vmem:[#allocation2 + $0x188] sm:$0xff]
        %v553 = vld [vmem:[#allocation2 + $0x198] sm:$0xff]
        %v554 = vld [vmem:[#allocation2 + $0x1a0] sm:$0xff]
        %v555 = vld [vmem:[#allocation2 + $0x1b0] sm:$0xff]
        %v556 = vld [vmem:[#allocation2 + $0x1b8] sm:$0xff]
        %v557 = vld [vmem:[#allocation2 + $0x1c8] sm:$0xff]
        %v558 = vld [vmem:[#allocation2 + $0x1d0] sm:$0xff]
        %v559 = vld [vmem:[#allocation2 + $0x1e0] sm:$0xff]
        %v560 = vld [vmem:[#allocation2 + $0x1e8] sm:$0xff]
        %v561 = vld [vmem:[#allocation2 + $0x1f8] sm:$0xff]
        %v562 = vld [vmem:[#allocation2 + $0x200] sm:$0xff]
        %v563 = vld [vmem:[#allocation6] sm:$0x1]
        %v564 = vld [vmem:[#allocation6 + $0x8] sm:$0x1]
        %v565 = vld [vmem:[#allocation6 + $0x10] sm:$0x1]
        %v566 = vld [vmem:[#allocation6 + $0x18] sm:$0x1]
        %v567 = vld [vmem:[#allocation6 + $0x20] sm:$0x1]
        %v568 = vld [vmem:[#allocation6 + $0x28] sm:$0x1]
        %v569 = vld [vmem:[#allocation6 + $0x30] sm:$0x1]
        %v570 = vlaneseq
        %v571 = vshrl.u32 %v570, 7
        %v572 = vsub.s32 0, %v571
        %v573 = vrot.slane %v563, %v572
        %v574 = vmul.f32 %v519, %v573
        %v575 = vmul.f32 %v520, %v573
        %v576 = vmul.f32 %v521, %v573
        %v577 = vmul.f32 %v522, %v573
        %v578 = vmul.f32 %v523, %v573
        %v579 = vmul.f32 %v524, %v573
        %v580 = vmul.f32 %v525, %v573
        %v581 = vmul.f32 %v526, %v573
        %v582 = vmul.f32 %v527, %v573
        %v583 = vmul.f32 %v528, %v573
        %v584 = vmul.f32 %v529, %v573
        %v585 = vmul.f32 %v530, %v573
        %v586 = vmul.f32 %v531, %v573
        %v587 = vmul.f32 %v532, %v573
        %v588 = vmul.f32 %v533, %v573
        %v589 = vmul.f32 %v534, %v573
        %v590 = vmul.f32 %v535, %v573
        %v591 = vmul.f32 %v536, %v573
        %v592 = vmul.f32 %v537, %v573
        %v593 = vmul.f32 %v538, %v573
        %v594 = vmul.f32 %v539, %v573
        %v595 = vmul.f32 %v540, %v573
        %v596 = vmul.f32 %v541, %v573
        %v597 = vmul.f32 %v542, %v573
        %v598 = vmul.f32 %v543, %v573
        %v599 = vmul.f32 %v544, %v573
        %v600 = vmul.f32 %v545, %v573
        %v601 = vmul.f32 %v546, %v573
        %v602 = vmul.f32 %v547, %v573
        %v603 = vmul.f32 %v548, %v573
        %v604 = vmul.f32 %v549, %v573
        %v605 = vmul.f32 %v550, %v573
        %v606 = vadd.f32 %v517, %v574
        %v607 = vadd.f32 %v517, %v575
        %v608 = vadd.f32 %v517, %v576
        %v609 = vadd.f32 %v517, %v577
        %v610 = vadd.f32 %v517, %v578
        %v611 = vadd.f32 %v517, %v579
        %v612 = vadd.f32 %v517, %v580
        %v613 = vadd.f32 %v517, %v581
        %v614 = vadd.f32 %v517, %v582
        %v615 = vadd.f32 %v517, %v583
        %v616 = vadd.f32 %v517, %v584
        %v617 = vadd.f32 %v517, %v585
        %v618 = vadd.f32 %v517, %v586
        %v619 = vadd.f32 %v517, %v587
        %v620 = vadd.f32 %v517, %v588
        %v621 = vadd.f32 %v517, %v589
        %v622 = vadd.f32 %v517, %v590
        %v623 = vadd.f32 %v517, %v591
        %v624 = vadd.f32 %v517, %v592
        %v625 = vadd.f32 %v517, %v593
        %v626 = vadd.f32 %v517, %v594
        %v627 = vadd.f32 %v517, %v595
        %v628 = vadd.f32 %v517, %v596
        %v629 = vadd.f32 %v517, %v597
        %v630 = vadd.f32 %v517, %v598
        %v631 = vadd.f32 %v517, %v599
        %v632 = vadd.f32 %v517, %v600
        %v633 = vadd.f32 %v517, %v601
        %v634 = vadd.f32 %v517, %v602
        %v635 = vadd.f32 %v517, %v603
        %v636 = vadd.f32 %v517, %v604
        %v637 = vadd.f32 %v517, %v605
        %v638 = vlaneseq
        %v639 = vshrl.u32 %v638, 7
        %v640 = vsub.s32 0, %v639
        %v641 = vrot.slane %v564, %v640
        %v642 = vmul.f32 %v521, %v641
        %v643 = vmul.f32 %v522, %v641
        %v644 = vmul.f32 %v523, %v641
        %v645 = vmul.f32 %v524, %v641
        %v646 = vmul.f32 %v525, %v641
        %v647 = vmul.f32 %v526, %v641
        %v648 = vmul.f32 %v527, %v641
        %v649 = vmul.f32 %v528, %v641
        %v650 = vmul.f32 %v529, %v641
        %v651 = vmul.f32 %v530, %v641
        %v652 = vmul.f32 %v531, %v641
        %v653 = vmul.f32 %v532, %v641
        %v654 = vmul.f32 %v533, %v641
        %v655 = vmul.f32 %v534, %v641
        %v656 = vmul.f32 %v535, %v641
        %v657 = vmul.f32 %v536, %v641
        %v658 = vmul.f32 %v537, %v641
        %v659 = vmul.f32 %v538, %v641
        %v660 = vmul.f32 %v539, %v641
        %v661 = vmul.f32 %v540, %v641
        %v662 = vmul.f32 %v541, %v641
        %v663 = vmul.f32 %v542, %v641
        %v664 = vmul.f32 %v543, %v641
        %v665 = vmul.f32 %v544, %v641
        %v666 = vmul.f32 %v545, %v641
        %v667 = vmul.f32 %v546, %v641
        %v668 = vmul.f32 %v547, %v641
        %v669 = vmul.f32 %v548, %v641
        %v670 = vmul.f32 %v549, %v641
        %v671 = vmul.f32 %v550, %v641
        %v672 = vmul.f32 %v551, %v641
        %v673 = vmul.f32 %v552, %v641
        %v674 = vadd.f32 %v606, %v642
        %v675 = vadd.f32 %v607, %v643
        %v676 = vadd.f32 %v608, %v644
        %v677 = vadd.f32 %v609, %v645
        %v678 = vadd.f32 %v610, %v646
        %v679 = vadd.f32 %v611, %v647
        %v680 = vadd.f32 %v612, %v648
        %v681 = vadd.f32 %v613, %v649
        %v682 = vadd.f32 %v614, %v650
        %v683 = vadd.f32 %v615, %v651
        %v684 = vadd.f32 %v616, %v652
        %v685 = vadd.f32 %v617, %v653
        %v686 = vadd.f32 %v618, %v654
        %v687 = vadd.f32 %v619, %v655
        %v688 = vadd.f32 %v620, %v656
        %v689 = vadd.f32 %v621, %v657
        %v690 = vadd.f32 %v622, %v658
        %v691 = vadd.f32 %v623, %v659
        %v692 = vadd.f32 %v624, %v660
        %v693 = vadd.f32 %v625, %v661
        %v694 = vadd.f32 %v626, %v662
        %v695 = vadd.f32 %v627, %v663
        %v696 = vadd.f32 %v628, %v664
        %v697 = vadd.f32 %v629, %v665
        %v698 = vadd.f32 %v630, %v666
        %v699 = vadd.f32 %v631, %v667
        %v700 = vadd.f32 %v632, %v668
        %v701 = vadd.f32 %v633, %v669
        %v702 = vadd.f32 %v634, %v670
        %v703 = vadd.f32 %v635, %v671
        %v704 = vadd.f32 %v636, %v672
        %v705 = vadd.f32 %v637, %v673
        %v706 = vlaneseq
        %v707 = vshrl.u32 %v706, 7
        %v708 = vsub.s32 0, %v707
        %v709 = vrot.slane %v565, %v708
        %v710 = vmul.f32 %v523, %v709
        %v711 = vmul.f32 %v524, %v709
        %v712 = vmul.f32 %v525, %v709
        %v713 = vmul.f32 %v526, %v709
        %v714 = vmul.f32 %v527, %v709
        %v715 = vmul.f32 %v528, %v709
        %v716 = vmul.f32 %v529, %v709
        %v717 = vmul.f32 %v530, %v709
        %v718 = vmul.f32 %v531, %v709
        %v719 = vmul.f32 %v532, %v709
        %v720 = vmul.f32 %v533, %v709
        %v721 = vmul.f32 %v534, %v709
        %v722 = vmul.f32 %v535, %v709
        %v723 = vmul.f32 %v536, %v709
        %v724 = vmul.f32 %v537, %v709
        %v725 = vmul.f32 %v538, %v709
        %v726 = vmul.f32 %v539, %v709
        %v727 = vmul.f32 %v540, %v709
        %v728 = vmul.f32 %v541, %v709
        %v729 = vmul.f32 %v542, %v709
        %v730 = vmul.f32 %v543, %v709
        %v731 = vmul.f32 %v544, %v709
        %v732 = vmul.f32 %v545, %v709
        %v733 = vmul.f32 %v546, %v709
        %v734 = vmul.f32 %v547, %v709
        %v735 = vmul.f32 %v548, %v709
        %v736 = vmul.f32 %v549, %v709
        %v737 = vmul.f32 %v550, %v709
        %v738 = vmul.f32 %v551, %v709
        %v739 = vmul.f32 %v552, %v709
        %v740 = vmul.f32 %v553, %v709
        %v741 = vmul.f32 %v554, %v709
        %v742 = vadd.f32 %v674, %v710
        %v743 = vadd.f32 %v675, %v711
        %v744 = vadd.f32 %v676, %v712
        %v745 = vadd.f32 %v677, %v713
        %v746 = vadd.f32 %v678, %v714
        %v747 = vadd.f32 %v679, %v715
        %v748 = vadd.f32 %v680, %v716
        %v749 = vadd.f32 %v681, %v717
        %v750 = vadd.f32 %v682, %v718
        %v751 = vadd.f32 %v683, %v719
        %v752 = vadd.f32 %v684, %v720
        %v753 = vadd.f32 %v685, %v721
        %v754 = vadd.f32 %v686, %v722
        %v755 = vadd.f32 %v687, %v723
        %v756 = vadd.f32 %v688, %v724
        %v757 = vadd.f32 %v689, %v725
        %v758 = vadd.f32 %v690, %v726
        %v759 = vadd.f32 %v691, %v727
        %v760 = vadd.f32 %v692, %v728
        %v761 = vadd.f32 %v693, %v729
        %v762 = vadd.f32 %v694, %v730
        %v763 = vadd.f32 %v695, %v731
        %v764 = vadd.f32 %v696, %v732
        %v765 = vadd.f32 %v697, %v733
        %v766 = vadd.f32 %v698, %v734
        %v767 = vadd.f32 %v699, %v735
        %v768 = vadd.f32 %v700, %v736
        %v769 = vadd.f32 %v701, %v737
        %v770 = vadd.f32 %v702, %v738
        %v771 = vadd.f32 %v703, %v739
        %v772 = vadd.f32 %v704, %v740
        %v773 = vadd.f32 %v705, %v741
        %v774 = vlaneseq
        %v775 = vshrl.u32 %v774, 7
        %v776 = vsub.s32 0, %v775
        %v777 = vrot.slane %v566, %v776
        %v778 = vmul.f32 %v525, %v777
        %v779 = vmul.f32 %v526, %v777
        %v780 = vmul.f32 %v527, %v777
        %v781 = vmul.f32 %v528, %v777
        %v782 = vmul.f32 %v529, %v777
        %v783 = vmul.f32 %v530, %v777
        %v784 = vmul.f32 %v531, %v777
        %v785 = vmul.f32 %v532, %v777
        %v786 = vmul.f32 %v533, %v777
        %v787 = vmul.f32 %v534, %v777
        %v788 = vmul.f32 %v535, %v777
        %v789 = vmul.f32 %v536, %v777
        %v790 = vmul.f32 %v537, %v777
        %v791 = vmul.f32 %v538, %v777
        %v792 = vmul.f32 %v539, %v777
        %v793 = vmul.f32 %v540, %v777
        %v794 = vmul.f32 %v541, %v777
        %v795 = vmul.f32 %v542, %v777
        %v796 = vmul.f32 %v543, %v777
        %v797 = vmul.f32 %v544, %v777
        %v798 = vmul.f32 %v545, %v777
        %v799 = vmul.f32 %v546, %v777
        %v800 = vmul.f32 %v547, %v777
        %v801 = vmul.f32 %v548, %v777
        %v802 = vmul.f32 %v549, %v777
        %v803 = vmul.f32 %v550, %v777
        %v804 = vmul.f32 %v551, %v777
        %v805 = vmul.f32 %v552, %v777
        %v806 = vmul.f32 %v553, %v777
        %v807 = vmul.f32 %v554, %v777
        %v808 = vmul.f32 %v555, %v777
        %v809 = vmul.f32 %v556, %v777
        %v810 = vadd.f32 %v742, %v778
        %v811 = vadd.f32 %v743, %v779
        %v812 = vadd.f32 %v744, %v780
        %v813 = vadd.f32 %v745, %v781
        %v814 = vadd.f32 %v746, %v782
        %v815 = vadd.f32 %v747, %v783
        %v816 = vadd.f32 %v748, %v784
        %v817 = vadd.f32 %v749, %v785
        %v818 = vadd.f32 %v750, %v786
        %v819 = vadd.f32 %v751, %v787
        %v820 = vadd.f32 %v752, %v788
        %v821 = vadd.f32 %v753, %v789
        %v822 = vadd.f32 %v754, %v790
        %v823 = vadd.f32 %v755, %v791
        %v824 = vadd.f32 %v756, %v792
        %v825 = vadd.f32 %v757, %v793
        %v826 = vadd.f32 %v758, %v794
        %v827 = vadd.f32 %v759, %v795
        %v828 = vadd.f32 %v760, %v796
        %v829 = vadd.f32 %v761, %v797
        %v830 = vadd.f32 %v762, %v798
        %v831 = vadd.f32 %v763, %v799
        %v832 = vadd.f32 %v764, %v800
        %v833 = vadd.f32 %v765, %v801
        %v834 = vadd.f32 %v766, %v802
        %v835 = vadd.f32 %v767, %v803
        %v836 = vadd.f32 %v768, %v804
        %v837 = vadd.f32 %v769, %v805
        %v838 = vadd.f32 %v770, %v806
        %v839 = vadd.f32 %v771, %v807
        %v840 = vadd.f32 %v772, %v808
        %v841 = vadd.f32 %v773, %v809
        %v842 = vlaneseq
        %v843 = vshrl.u32 %v842, 7
        %v844 = vsub.s32 0, %v843
        %v845 = vrot.slane %v567, %v844
        %v846 = vmul.f32 %v527, %v845
        %v847 = vmul.f32 %v528, %v845
        %v848 = vmul.f32 %v529, %v845
        %v849 = vmul.f32 %v530, %v845
        %v850 = vmul.f32 %v531, %v845
        %v851 = vmul.f32 %v532, %v845
        %v852 = vmul.f32 %v533, %v845
        %v853 = vmul.f32 %v534, %v845
        %v854 = vmul.f32 %v535, %v845
        %v855 = vmul.f32 %v536, %v845
        %v856 = vmul.f32 %v537, %v845
        %v857 = vmul.f32 %v538, %v845
        %v858 = vmul.f32 %v539, %v845
        %v859 = vmul.f32 %v540, %v845
        %v860 = vmul.f32 %v541, %v845
        %v861 = vmul.f32 %v542, %v845
        %v862 = vmul.f32 %v543, %v845
        %v863 = vmul.f32 %v544, %v845
        %v864 = vmul.f32 %v545, %v845
        %v865 = vmul.f32 %v546, %v845
        %v866 = vmul.f32 %v547, %v845
        %v867 = vmul.f32 %v548, %v845
        %v868 = vmul.f32 %v549, %v845
        %v869 = vmul.f32 %v550, %v845
        %v870 = vmul.f32 %v551, %v845
        %v871 = vmul.f32 %v552, %v845
        %v872 = vmul.f32 %v553, %v845
        %v873 = vmul.f32 %v554, %v845
        %v874 = vmul.f32 %v555, %v845
        %v875 = vmul.f32 %v556, %v845
        %v876 = vmul.f32 %v557, %v845
        %v877 = vmul.f32 %v558, %v845
        %v878 = vadd.f32 %v810, %v846
        %v879 = vadd.f32 %v811, %v847
        %v880 = vadd.f32 %v812, %v848
        %v881 = vadd.f32 %v813, %v849
        %v882 = vadd.f32 %v814, %v850
        %v883 = vadd.f32 %v815, %v851
        %v884 = vadd.f32 %v816, %v852
        %v885 = vadd.f32 %v817, %v853
        %v886 = vadd.f32 %v818, %v854
        %v887 = vadd.f32 %v819, %v855
        %v888 = vadd.f32 %v820, %v856
        %v889 = vadd.f32 %v821, %v857
        %v890 = vadd.f32 %v822, %v858
        %v891 = vadd.f32 %v823, %v859
        %v892 = vadd.f32 %v824, %v860
        %v893 = vadd.f32 %v825, %v861
        %v894 = vadd.f32 %v826, %v862
        %v895 = vadd.f32 %v827, %v863
        %v896 = vadd.f32 %v828, %v864
        %v897 = vadd.f32 %v829, %v865
        %v898 = vadd.f32 %v830, %v866
        %v899 = vadd.f32 %v831, %v867
        %v900 = vadd.f32 %v832, %v868
        %v901 = vadd.f32 %v833, %v869
        %v902 = vadd.f32 %v834, %v870
        %v903 = vadd.f32 %v835, %v871
        %v904 = vadd.f32 %v836, %v872
        %v905 = vadd.f32 %v837, %v873
        %v906 = vadd.f32 %v838, %v874
        %v907 = vadd.f32 %v839, %v875
        %v908 = vadd.f32 %v840, %v876
        %v909 = vadd.f32 %v841, %v877
        %v910 = vlaneseq
        %v911 = vshrl.u32 %v910, 7
        %v912 = vsub.s32 0, %v911
        %v913 = vrot.slane %v568, %v912
        %v914 = vmul.f32 %v529, %v913
        %v915 = vmul.f32 %v530, %v913
        %v916 = vmul.f32 %v531, %v913
        %v917 = vmul.f32 %v532, %v913
        %v918 = vmul.f32 %v533, %v913
        %v919 = vmul.f32 %v534, %v913
        %v920 = vmul.f32 %v535, %v913
        %v921 = vmul.f32 %v536, %v913
        %v922 = vmul.f32 %v537, %v913
        %v923 = vmul.f32 %v538, %v913
        %v924 = vmul.f32 %v539, %v913
        %v925 = vmul.f32 %v540, %v913
        %v926 = vmul.f32 %v541, %v913
        %v927 = vmul.f32 %v542, %v913
        %v928 = vmul.f32 %v543, %v913
        %v929 = vmul.f32 %v544, %v913
        %v930 = vmul.f32 %v545, %v913
        %v931 = vmul.f32 %v546, %v913
        %v932 = vmul.f32 %v547, %v913
        %v933 = vmul.f32 %v548, %v913
        %v934 = vmul.f32 %v549, %v913
        %v935 = vmul.f32 %v550, %v913
        %v936 = vmul.f32 %v551, %v913
        %v937 = vmul.f32 %v552, %v913
        %v938 = vmul.f32 %v553, %v913
        %v939 = vmul.f32 %v554, %v913
        %v940 = vmul.f32 %v555, %v913
        %v941 = vmul.f32 %v556, %v913
        %v942 = vmul.f32 %v557, %v913
        %v943 = vmul.f32 %v558, %v913
        %v944 = vmul.f32 %v559, %v913
        %v945 = vmul.f32 %v560, %v913
        %v946 = vadd.f32 %v878, %v914
        %v947 = vadd.f32 %v879, %v915
        %v948 = vadd.f32 %v880, %v916
        %v949 = vadd.f32 %v881, %v917
        %v950 = vadd.f32 %v882, %v918
        %v951 = vadd.f32 %v883, %v919
        %v952 = vadd.f32 %v884, %v920
        %v953 = vadd.f32 %v885, %v921
        %v954 = vadd.f32 %v886, %v922
        %v955 = vadd.f32 %v887, %v923
        %v956 = vadd.f32 %v888, %v924
        %v957 = vadd.f32 %v889, %v925
        %v958 = vadd.f32 %v890, %v926
        %v959 = vadd.f32 %v891, %v927
        %v960 = vadd.f32 %v892, %v928
        %v961 = vadd.f32 %v893, %v929
        %v962 = vadd.f32 %v894, %v930
        %v963 = vadd.f32 %v895, %v931
        %v964 = vadd.f32 %v896, %v932
        %v965 = vadd.f32 %v897, %v933
        %v966 = vadd.f32 %v898, %v934
        %v967 = vadd.f32 %v899, %v935
        %v968 = vadd.f32 %v900, %v936
        %v969 = vadd.f32 %v901, %v937
        %v970 = vadd.f32 %v902, %v938
        %v971 = vadd.f32 %v903, %v939
        %v972 = vadd.f32 %v904, %v940
        %v973 = vadd.f32 %v905, %v941
        %v974 = vadd.f32 %v906, %v942
        %v975 = vadd.f32 %v907, %v943
        %v976 = vadd.f32 %v908, %v944
        %v977 = vadd.f32 %v909, %v945
        %v978 = vlaneseq
        %v979 = vshrl.u32 %v978, 7
        %v980 = vsub.s32 0, %v979
        %v981 = vrot.slane %v569, %v980
        %v982 = vmul.f32 %v531, %v981
        %v983 = vmul.f32 %v532, %v981
        %v984 = vmul.f32 %v533, %v981
        %v985 = vmul.f32 %v534, %v981
        %v986 = vmul.f32 %v535, %v981
        %v987 = vmul.f32 %v536, %v981
        %v988 = vmul.f32 %v537, %v981
        %v989 = vmul.f32 %v538, %v981
        %v990 = vmul.f32 %v539, %v981
        %v991 = vmul.f32 %v540, %v981
        %v992 = vmul.f32 %v541, %v981
        %v993 = vmul.f32 %v542, %v981
        %v994 = vmul.f32 %v543, %v981
        %v995 = vmul.f32 %v544, %v981
        %v996 = vmul.f32 %v545, %v981
        %v997 = vmul.f32 %v546, %v981
        %v998 = vmul.f32 %v547, %v981
        %v999 = vmul.f32 %v548, %v981
        %v1000 = vmul.f32 %v549, %v981
        %v1001 = vmul.f32 %v550, %v981
        %v1002 = vmul.f32 %v551, %v981
        %v1003 = vmul.f32 %v552, %v981
        %v1004 = vmul.f32 %v553, %v981
        %v1005 = vmul.f32 %v554, %v981
        %v1006 = vmul.f32 %v555, %v981
        %v1007 = vmul.f32 %v556, %v981
        %v1008 = vmul.f32 %v557, %v981
        %v1009 = vmul.f32 %v558, %v981
        %v1010 = vmul.f32 %v559, %v981
        %v1011 = vmul.f32 %v560, %v981
        %v1012 = vmul.f32 %v561, %v981
        %v1013 = vmul.f32 %v562, %v981
        %v1014 = vadd.f32 %v946, %v982
        %v1015 = vadd.f32 %v947, %v983
        %v1016 = vadd.f32 %v948, %v984
        %v1017 = vadd.f32 %v949, %v985
        %v1018 = vadd.f32 %v950, %v986
        %v1019 = vadd.f32 %v951, %v987
        %v1020 = vadd.f32 %v952, %v988
        %v1021 = vadd.f32 %v953, %v989
        %v1022 = vadd.f32 %v954, %v990
        %v1023 = vadd.f32 %v955, %v991
        %v1024 = vadd.f32 %v956, %v992
        %v1025 = vadd.f32 %v957, %v993
        %v1026 = vadd.f32 %v958, %v994
        %v1027 = vadd.f32 %v959, %v995
        %v1028 = vadd.f32 %v960, %v996
        %v1029 = vadd.f32 %v961, %v997
        %v1030 = vadd.f32 %v962, %v998
        %v1031 = vadd.f32 %v963, %v999
        %v1032 = vadd.f32 %v964, %v1000
        %v1033 = vadd.f32 %v965, %v1001
        %v1034 = vadd.f32 %v966, %v1002
        %v1035 = vadd.f32 %v967, %v1003
        %v1036 = vadd.f32 %v968, %v1004
        %v1037 = vadd.f32 %v969, %v1005
        %v1038 = vadd.f32 %v970, %v1006
        %v1039 = vadd.f32 %v971, %v1007
        %v1040 = vadd.f32 %v972, %v1008
        %v1041 = vadd.f32 %v973, %v1009
        %v1042 = vadd.f32 %v974, %v1010
        %v1043 = vadd.f32 %v975, %v1011
        %v1044 = vadd.f32 %v976, %v1012
        %v1045 = vadd.f32 %v977, %v1013
        %v1046 = vld [vmem:[#allocation2 + $0x1] sm:$0xff]
        %v1047 = vld [vmem:[#allocation2 + $0x9] sm:$0xff]
        %v1048 = vld [vmem:[#allocation2 + $0x19] sm:$0xff]
        %v1049 = vld [vmem:[#allocation2 + $0x21] sm:$0xff]
        %v1050 = vld [vmem:[#allocation2 + $0x31] sm:$0xff]
        %v1051 = vld [vmem:[#allocation2 + $0x39] sm:$0xff]
        %v1052 = vld [vmem:[#allocation2 + $0x49] sm:$0xff]
        %v1053 = vld [vmem:[#allocation2 + $0x51] sm:$0xff]
        %v1054 = vld [vmem:[#allocation2 + $0x61] sm:$0xff]
        %v1055 = vld [vmem:[#allocation2 + $0x69] sm:$0xff]
        %v1056 = vld [vmem:[#allocation2 + $0x79] sm:$0xff]
        %v1057 = vld [vmem:[#allocation2 + $0x81] sm:$0xff]
        %v1058 = vld [vmem:[#allocation2 + $0x91] sm:$0xff]
        %v1059 = vld [vmem:[#allocation2 + $0x99] sm:$0xff]
        %v1060 = vld [vmem:[#allocation2 + $0xa9] sm:$0xff]
        %v1061 = vld [vmem:[#allocation2 + $0xb1] sm:$0xff]
        %v1062 = vld [vmem:[#allocation2 + $0xc1] sm:$0xff]
        %v1063 = vld [vmem:[#allocation2 + $0xc9] sm:$0xff]
        %v1064 = vld [vmem:[#allocation2 + $0xd9] sm:$0xff]
        %v1065 = vld [vmem:[#allocation2 + $0xe1] sm:$0xff]
        %v1066 = vld [vmem:[#allocation2 + $0xf1] sm:$0xff]
        %v1067 = vld [vmem:[#allocation2 + $0xf9] sm:$0xff]
        %v1068 = vld [vmem:[#allocation2 + $0x109] sm:$0xff]
        %v1069 = vld [vmem:[#allocation2 + $0x111] sm:$0xff]
        %v1070 = vld [vmem:[#allocation2 + $0x121] sm:$0xff]
        %v1071 = vld [vmem:[#allocation2 + $0x129] sm:$0xff]
        %v1072 = vld [vmem:[#allocation2 + $0x139] sm:$0xff]
        %v1073 = vld [vmem:[#allocation2 + $0x141] sm:$0xff]
        %v1074 = vld [vmem:[#allocation2 + $0x151] sm:$0xff]
        %v1075 = vld [vmem:[#allocation2 + $0x159] sm:$0xff]
        %v1076 = vld [vmem:[#allocation2 + $0x169] sm:$0xff]
        %v1077 = vld [vmem:[#allocation2 + $0x171] sm:$0xff]
        %v1078 = vld [vmem:[#allocation2 + $0x181] sm:$0xff]
        %v1079 = vld [vmem:[#allocation2 + $0x189] sm:$0xff]
        %v1080 = vld [vmem:[#allocation2 + $0x199] sm:$0xff]
        %v1081 = vld [vmem:[#allocation2 + $0x1a1] sm:$0xff]
        %v1082 = vld [vmem:[#allocation2 + $0x1b1] sm:$0xff]
        %v1083 = vld [vmem:[#allocation2 + $0x1b9] sm:$0xff]
        %v1084 = vld [vmem:[#allocation2 + $0x1c9] sm:$0xff]
        %v1085 = vld [vmem:[#allocation2 + $0x1d1] sm:$0xff]
        %v1086 = vld [vmem:[#allocation2 + $0x1e1] sm:$0xff]
        %v1087 = vld [vmem:[#allocation2 + $0x1e9] sm:$0xff]
        %v1088 = vld [vmem:[#allocation2 + $0x1f9] sm:$0xff]
        %v1089 = vld [vmem:[#allocation2 + $0x201] sm:$0xff]
        %v1090 = vld [vmem:[#allocation6 + $0x1] sm:$0x1]
        %v1091 = vld [vmem:[#allocation6 + $0x9] sm:$0x1]
        %v1092 = vld [vmem:[#allocation6 + $0x11] sm:$0x1]
        %v1093 = vld [vmem:[#allocation6 + $0x19] sm:$0x1]
        %v1094 = vld [vmem:[#allocation6 + $0x21] sm:$0x1]
        %v1095 = vld [vmem:[#allocation6 + $0x29] sm:$0x1]
        %v1096 = vld [vmem:[#allocation6 + $0x31] sm:$0x1]
        %v1097 = vlaneseq
        %v1098 = vshrl.u32 %v1097, 7
        %v1099 = vsub.s32 0, %v1098
        %v1100 = vrot.slane %v1090, %v1099
        %v1101 = vmul.f32 %v1046, %v1100
        %v1102 = vmul.f32 %v1047, %v1100
        %v1103 = vmul.f32 %v1048, %v1100
        %v1104 = vmul.f32 %v1049, %v1100
        %v1105 = vmul.f32 %v1050, %v1100
        %v1106 = vmul.f32 %v1051, %v1100
        %v1107 = vmul.f32 %v1052, %v1100
        %v1108 = vmul.f32 %v1053, %v1100
        %v1109 = vmul.f32 %v1054, %v1100
        %v1110 = vmul.f32 %v1055, %v1100
        %v1111 = vmul.f32 %v1056, %v1100
        %v1112 = vmul.f32 %v1057, %v1100
        %v1113 = vmul.f32 %v1058, %v1100
        %v1114 = vmul.f32 %v1059, %v1100
        %v1115 = vmul.f32 %v1060, %v1100
        %v1116 = vmul.f32 %v1061, %v1100
        %v1117 = vmul.f32 %v1062, %v1100
        %v1118 = vmul.f32 %v1063, %v1100
        %v1119 = vmul.f32 %v1064, %v1100
        %v1120 = vmul.f32 %v1065, %v1100
        %v1121 = vmul.f32 %v1066, %v1100
        %v1122 = vmul.f32 %v1067, %v1100
        %v1123 = vmul.f32 %v1068, %v1100
        %v1124 = vmul.f32 %v1069, %v1100
        %v1125 = vmul.f32 %v1070, %v1100
        %v1126 = vmul.f32 %v1071, %v1100
        %v1127 = vmul.f32 %v1072, %v1100
        %v1128 = vmul.f32 %v1073, %v1100
        %v1129 = vmul.f32 %v1074, %v1100
        %v1130 = vmul.f32 %v1075, %v1100
        %v1131 = vmul.f32 %v1076, %v1100
        %v1132 = vmul.f32 %v1077, %v1100
        %v1133 = vadd.f32 %v1014, %v1101
        %v1134 = vadd.f32 %v1015, %v1102
        %v1135 = vadd.f32 %v1016, %v1103
        %v1136 = vadd.f32 %v1017, %v1104
        %v1137 = vadd.f32 %v1018, %v1105
        %v1138 = vadd.f32 %v1019, %v1106
        %v1139 = vadd.f32 %v1020, %v1107
        %v1140 = vadd.f32 %v1021, %v1108
        %v1141 = vadd.f32 %v1022, %v1109
        %v1142 = vadd.f32 %v1023, %v1110
        %v1143 = vadd.f32 %v1024, %v1111
        %v1144 = vadd.f32 %v1025, %v1112
        %v1145 = vadd.f32 %v1026, %v1113
        %v1146 = vadd.f32 %v1027, %v1114
        %v1147 = vadd.f32 %v1028, %v1115
        %v1148 = vadd.f32 %v1029, %v1116
        %v1149 = vadd.f32 %v1030, %v1117
        %v1150 = vadd.f32 %v1031, %v1118
        %v1151 = vadd.f32 %v1032, %v1119
        %v1152 = vadd.f32 %v1033, %v1120
        %v1153 = vadd.f32 %v1034, %v1121
        %v1154 = vadd.f32 %v1035, %v1122
        %v1155 = vadd.f32 %v1036, %v1123
        %v1156 = vadd.f32 %v1037, %v1124
        %v1157 = vadd.f32 %v1038, %v1125
        %v1158 = vadd.f32 %v1039, %v1126
        %v1159 = vadd.f32 %v1040, %v1127
        %v1160 = vadd.f32 %v1041, %v1128
        %v1161 = vadd.f32 %v1042, %v1129
        %v1162 = vadd.f32 %v1043, %v1130
        %v1163 = vadd.f32 %v1044, %v1131
        %v1164 = vadd.f32 %v1045, %v1132
        %v1165 = vlaneseq
        %v1166 = vshrl.u32 %v1165, 7
        %v1167 = vsub.s32 0, %v1166
        %v1168 = vrot.slane %v1091, %v1167
        %v1169 = vmul.f32 %v1048, %v1168
        %v1170 = vmul.f32 %v1049, %v1168
        %v1171 = vmul.f32 %v1050, %v1168
        %v1172 = vmul.f32 %v1051, %v1168
        %v1173 = vmul.f32 %v1052, %v1168
        %v1174 = vmul.f32 %v1053, %v1168
        %v1175 = vmul.f32 %v1054, %v1168
        %v1176 = vmul.f32 %v1055, %v1168
        %v1177 = vmul.f32 %v1056, %v1168
        %v1178 = vmul.f32 %v1057, %v1168
        %v1179 = vmul.f32 %v1058, %v1168
        %v1180 = vmul.f32 %v1059, %v1168
        %v1181 = vmul.f32 %v1060, %v1168
        %v1182 = vmul.f32 %v1061, %v1168
        %v1183 = vmul.f32 %v1062, %v1168
        %v1184 = vmul.f32 %v1063, %v1168
        %v1185 = vmul.f32 %v1064, %v1168
        %v1186 = vmul.f32 %v1065, %v1168
        %v1187 = vmul.f32 %v1066, %v1168
        %v1188 = vmul.f32 %v1067, %v1168
        %v1189 = vmul.f32 %v1068, %v1168
        %v1190 = vmul.f32 %v1069, %v1168
        %v1191 = vmul.f32 %v1070, %v1168
        %v1192 = vmul.f32 %v1071, %v1168
        %v1193 = vmul.f32 %v1072, %v1168
        %v1194 = vmul.f32 %v1073, %v1168
        %v1195 = vmul.f32 %v1074, %v1168
        %v1196 = vmul.f32 %v1075, %v1168
        %v1197 = vmul.f32 %v1076, %v1168
        %v1198 = vmul.f32 %v1077, %v1168
        %v1199 = vmul.f32 %v1078, %v1168
        %v1200 = vmul.f32 %v1079, %v1168
        %v1201 = vadd.f32 %v1133, %v1169
        %v1202 = vadd.f32 %v1134, %v1170
        %v1203 = vadd.f32 %v1135, %v1171
        %v1204 = vadd.f32 %v1136, %v1172
        %v1205 = vadd.f32 %v1137, %v1173
        %v1206 = vadd.f32 %v1138, %v1174
        %v1207 = vadd.f32 %v1139, %v1175
        %v1208 = vadd.f32 %v1140, %v1176
        %v1209 = vadd.f32 %v1141, %v1177
        %v1210 = vadd.f32 %v1142, %v1178
        %v1211 = vadd.f32 %v1143, %v1179
        %v1212 = vadd.f32 %v1144, %v1180
        %v1213 = vadd.f32 %v1145, %v1181
        %v1214 = vadd.f32 %v1146, %v1182
        %v1215 = vadd.f32 %v1147, %v1183
        %v1216 = vadd.f32 %v1148, %v1184
        %v1217 = vadd.f32 %v1149, %v1185
        %v1218 = vadd.f32 %v1150, %v1186
        %v1219 = vadd.f32 %v1151, %v1187
        %v1220 = vadd.f32 %v1152, %v1188
        %v1221 = vadd.f32 %v1153, %v1189
        %v1222 = vadd.f32 %v1154, %v1190
        %v1223 = vadd.f32 %v1155, %v1191
        %v1224 = vadd.f32 %v1156, %v1192
        %v1225 = vadd.f32 %v1157, %v1193
        %v1226 = vadd.f32 %v1158, %v1194
        %v1227 = vadd.f32 %v1159, %v1195
        %v1228 = vadd.f32 %v1160, %v1196
        %v1229 = vadd.f32 %v1161, %v1197
        %v1230 = vadd.f32 %v1162, %v1198
        %v1231 = vadd.f32 %v1163, %v1199
        %v1232 = vadd.f32 %v1164, %v1200
        %v1233 = vlaneseq
        %v1234 = vshrl.u32 %v1233, 7
        %v1235 = vsub.s32 0, %v1234
        %v1236 = vrot.slane %v1092, %v1235
        %v1237 = vmul.f32 %v1050, %v1236
        %v1238 = vmul.f32 %v1051, %v1236
        %v1239 = vmul.f32 %v1052, %v1236
        %v1240 = vmul.f32 %v1053, %v1236
        %v1241 = vmul.f32 %v1054, %v1236
        %v1242 = vmul.f32 %v1055, %v1236
        %v1243 = vmul.f32 %v1056, %v1236
        %v1244 = vmul.f32 %v1057, %v1236
        %v1245 = vmul.f32 %v1058, %v1236
        %v1246 = vmul.f32 %v1059, %v1236
        %v1247 = vmul.f32 %v1060, %v1236
        %v1248 = vmul.f32 %v1061, %v1236
        %v1249 = vmul.f32 %v1062, %v1236
        %v1250 = vmul.f32 %v1063, %v1236
        %v1251 = vmul.f32 %v1064, %v1236
        %v1252 = vmul.f32 %v1065, %v1236
        %v1253 = vmul.f32 %v1066, %v1236
        %v1254 = vmul.f32 %v1067, %v1236
        %v1255 = vmul.f32 %v1068, %v1236
        %v1256 = vmul.f32 %v1069, %v1236
        %v1257 = vmul.f32 %v1070, %v1236
        %v1258 = vmul.f32 %v1071, %v1236
        %v1259 = vmul.f32 %v1072, %v1236
        %v1260 = vmul.f32 %v1073, %v1236
        %v1261 = vmul.f32 %v1074, %v1236
        %v1262 = vmul.f32 %v1075, %v1236
        %v1263 = vmul.f32 %v1076, %v1236
        %v1264 = vmul.f32 %v1077, %v1236
        %v1265 = vmul.f32 %v1078, %v1236
        %v1266 = vmul.f32 %v1079, %v1236
        %v1267 = vmul.f32 %v1080, %v1236
        %v1268 = vmul.f32 %v1081, %v1236
        %v1269 = vadd.f32 %v1201, %v1237
        %v1270 = vadd.f32 %v1202, %v1238
        %v1271 = vadd.f32 %v1203, %v1239
        %v1272 = vadd.f32 %v1204, %v1240
        %v1273 = vadd.f32 %v1205, %v1241
        %v1274 = vadd.f32 %v1206, %v1242
        %v1275 = vadd.f32 %v1207, %v1243
        %v1276 = vadd.f32 %v1208, %v1244
        %v1277 = vadd.f32 %v1209, %v1245
        %v1278 = vadd.f32 %v1210, %v1246
        %v1279 = vadd.f32 %v1211, %v1247
        %v1280 = vadd.f32 %v1212, %v1248
        %v1281 = vadd.f32 %v1213, %v1249
        %v1282 = vadd.f32 %v1214, %v1250
        %v1283 = vadd.f32 %v1215, %v1251
        %v1284 = vadd.f32 %v1216, %v1252
        %v1285 = vadd.f32 %v1217, %v1253
        %v1286 = vadd.f32 %v1218, %v1254
        %v1287 = vadd.f32 %v1219, %v1255
        %v1288 = vadd.f32 %v1220, %v1256
        %v1289 = vadd.f32 %v1221, %v1257
        %v1290 = vadd.f32 %v1222, %v1258
        %v1291 = vadd.f32 %v1223, %v1259
        %v1292 = vadd.f32 %v1224, %v1260
        %v1293 = vadd.f32 %v1225, %v1261
        %v1294 = vadd.f32 %v1226, %v1262
        %v1295 = vadd.f32 %v1227, %v1263
        %v1296 = vadd.f32 %v1228, %v1264
        %v1297 = vadd.f32 %v1229, %v1265
        %v1298 = vadd.f32 %v1230, %v1266
        %v1299 = vadd.f32 %v1231, %v1267
        %v1300 = vadd.f32 %v1232, %v1268
        %v1301 = vlaneseq
        %v1302 = vshrl.u32 %v1301, 7
        %v1303 = vsub.s32 0, %v1302
        %v1304 = vrot.slane %v1093, %v1303
        %v1305 = vmul.f32 %v1052, %v1304
        %v1306 = vmul.f32 %v1053, %v1304
        %v1307 = vmul.f32 %v1054, %v1304
        %v1308 = vmul.f32 %v1055, %v1304
        %v1309 = vmul.f32 %v1056, %v1304
        %v1310 = vmul.f32 %v1057, %v1304
        %v1311 = vmul.f32 %v1058, %v1304
        %v1312 = vmul.f32 %v1059, %v1304
        %v1313 = vmul.f32 %v1060, %v1304
        %v1314 = vmul.f32 %v1061, %v1304
        %v1315 = vmul.f32 %v1062, %v1304
        %v1316 = vmul.f32 %v1063, %v1304
        %v1317 = vmul.f32 %v1064, %v1304
        %v1318 = vmul.f32 %v1065, %v1304
        %v1319 = vmul.f32 %v1066, %v1304
        %v1320 = vmul.f32 %v1067, %v1304
        %v1321 = vmul.f32 %v1068, %v1304
        %v1322 = vmul.f32 %v1069, %v1304
        %v1323 = vmul.f32 %v1070, %v1304
        %v1324 = vmul.f32 %v1071, %v1304
        %v1325 = vmul.f32 %v1072, %v1304
        %v1326 = vmul.f32 %v1073, %v1304
        %v1327 = vmul.f32 %v1074, %v1304
        %v1328 = vmul.f32 %v1075, %v1304
        %v1329 = vmul.f32 %v1076, %v1304
        %v1330 = vmul.f32 %v1077, %v1304
        %v1331 = vmul.f32 %v1078, %v1304
        %v1332 = vmul.f32 %v1079, %v1304
        %v1333 = vmul.f32 %v1080, %v1304
        %v1334 = vmul.f32 %v1081, %v1304
        %v1335 = vmul.f32 %v1082, %v1304
        %v1336 = vmul.f32 %v1083, %v1304
        %v1337 = vadd.f32 %v1269, %v1305
        %v1338 = vadd.f32 %v1270, %v1306
        %v1339 = vadd.f32 %v1271, %v1307
        %v1340 = vadd.f32 %v1272, %v1308
        %v1341 = vadd.f32 %v1273, %v1309
        %v1342 = vadd.f32 %v1274, %v1310
        %v1343 = vadd.f32 %v1275, %v1311
        %v1344 = vadd.f32 %v1276, %v1312
        %v1345 = vadd.f32 %v1277, %v1313
        %v1346 = vadd.f32 %v1278, %v1314
        %v1347 = vadd.f32 %v1279, %v1315
        %v1348 = vadd.f32 %v1280, %v1316
        %v1349 = vadd.f32 %v1281, %v1317
        %v1350 = vadd.f32 %v1282, %v1318
        %v1351 = vadd.f32 %v1283, %v1319
        %v1352 = vadd.f32 %v1284, %v1320
        %v1353 = vadd.f32 %v1285, %v1321
        %v1354 = vadd.f32 %v1286, %v1322
        %v1355 = vadd.f32 %v1287, %v1323
        %v1356 = vadd.f32 %v1288, %v1324
        %v1357 = vadd.f32 %v1289, %v1325
        %v1358 = vadd.f32 %v1290, %v1326
        %v1359 = vadd.f32 %v1291, %v1327
        %v1360 = vadd.f32 %v1292, %v1328
        %v1361 = vadd.f32 %v1293, %v1329
        %v1362 = vadd.f32 %v1294, %v1330
        %v1363 = vadd.f32 %v1295, %v1331
        %v1364 = vadd.f32 %v1296, %v1332
        %v1365 = vadd.f32 %v1297, %v1333
        %v1366 = vadd.f32 %v1298, %v1334
        %v1367 = vadd.f32 %v1299, %v1335
        %v1368 = vadd.f32 %v1300, %v1336
        %v1369 = vlaneseq
        %v1370 = vshrl.u32 %v1369, 7
        %v1371 = vsub.s32 0, %v1370
        %v1372 = vrot.slane %v1094, %v1371
        %v1373 = vmul.f32 %v1054, %v1372
        %v1374 = vmul.f32 %v1055, %v1372
        %v1375 = vmul.f32 %v1056, %v1372
        %v1376 = vmul.f32 %v1057, %v1372
        %v1377 = vmul.f32 %v1058, %v1372
        %v1378 = vmul.f32 %v1059, %v1372
        %v1379 = vmul.f32 %v1060, %v1372
        %v1380 = vmul.f32 %v1061, %v1372
        %v1381 = vmul.f32 %v1062, %v1372
        %v1382 = vmul.f32 %v1063, %v1372
        %v1383 = vmul.f32 %v1064, %v1372
        %v1384 = vmul.f32 %v1065, %v1372
        %v1385 = vmul.f32 %v1066, %v1372
        %v1386 = vmul.f32 %v1067, %v1372
        %v1387 = vmul.f32 %v1068, %v1372
        %v1388 = vmul.f32 %v1069, %v1372
        %v1389 = vmul.f32 %v1070, %v1372
        %v1390 = vmul.f32 %v1071, %v1372
        %v1391 = vmul.f32 %v1072, %v1372
        %v1392 = vmul.f32 %v1073, %v1372
        %v1393 = vmul.f32 %v1074, %v1372
        %v1394 = vmul.f32 %v1075, %v1372
        %v1395 = vmul.f32 %v1076, %v1372
        %v1396 = vmul.f32 %v1077, %v1372
        %v1397 = vmul.f32 %v1078, %v1372
        %v1398 = vmul.f32 %v1079, %v1372
        %v1399 = vmul.f32 %v1080, %v1372
        %v1400 = vmul.f32 %v1081, %v1372
        %v1401 = vmul.f32 %v1082, %v1372
        %v1402 = vmul.f32 %v1083, %v1372
        %v1403 = vmul.f32 %v1084, %v1372
        %v1404 = vmul.f32 %v1085, %v1372
        %v1405 = vadd.f32 %v1337, %v1373
        %v1406 = vadd.f32 %v1338, %v1374
        %v1407 = vadd.f32 %v1339, %v1375
        %v1408 = vadd.f32 %v1340, %v1376
        %v1409 = vadd.f32 %v1341, %v1377
        %v1410 = vadd.f32 %v1342, %v1378
        %v1411 = vadd.f32 %v1343, %v1379
        %v1412 = vadd.f32 %v1344, %v1380
        %v1413 = vadd.f32 %v1345, %v1381
        %v1414 = vadd.f32 %v1346, %v1382
        %v1415 = vadd.f32 %v1347, %v1383
        %v1416 = vadd.f32 %v1348, %v1384
        %v1417 = vadd.f32 %v1349, %v1385
        %v1418 = vadd.f32 %v1350, %v1386
        %v1419 = vadd.f32 %v1351, %v1387
        %v1420 = vadd.f32 %v1352, %v1388
        %v1421 = vadd.f32 %v1353, %v1389
        %v1422 = vadd.f32 %v1354, %v1390
        %v1423 = vadd.f32 %v1355, %v1391
        %v1424 = vadd.f32 %v1356, %v1392
        %v1425 = vadd.f32 %v1357, %v1393
        %v1426 = vadd.f32 %v1358, %v1394
        %v1427 = vadd.f32 %v1359, %v1395
        %v1428 = vadd.f32 %v1360, %v1396
        %v1429 = vadd.f32 %v1361, %v1397
        %v1430 = vadd.f32 %v1362, %v1398
        %v1431 = vadd.f32 %v1363, %v1399
        %v1432 = vadd.f32 %v1364, %v1400
        %v1433 = vadd.f32 %v1365, %v1401
        %v1434 = vadd.f32 %v1366, %v1402
        %v1435 = vadd.f32 %v1367, %v1403
        %v1436 = vadd.f32 %v1368, %v1404
        %v1437 = vlaneseq
        %v1438 = vshrl.u32 %v1437, 7
        %v1439 = vsub.s32 0, %v1438
        %v1440 = vrot.slane %v1095, %v1439
        %v1441 = vmul.f32 %v1056, %v1440
        %v1442 = vmul.f32 %v1057, %v1440
        %v1443 = vmul.f32 %v1058, %v1440
        %v1444 = vmul.f32 %v1059, %v1440
        %v1445 = vmul.f32 %v1060, %v1440
        %v1446 = vmul.f32 %v1061, %v1440
        %v1447 = vmul.f32 %v1062, %v1440
        %v1448 = vmul.f32 %v1063, %v1440
        %v1449 = vmul.f32 %v1064, %v1440
        %v1450 = vmul.f32 %v1065, %v1440
        %v1451 = vmul.f32 %v1066, %v1440
        %v1452 = vmul.f32 %v1067, %v1440
        %v1453 = vmul.f32 %v1068, %v1440
        %v1454 = vmul.f32 %v1069, %v1440
        %v1455 = vmul.f32 %v1070, %v1440
        %v1456 = vmul.f32 %v1071, %v1440
        %v1457 = vmul.f32 %v1072, %v1440
        %v1458 = vmul.f32 %v1073, %v1440
        %v1459 = vmul.f32 %v1074, %v1440
        %v1460 = vmul.f32 %v1075, %v1440
        %v1461 = vmul.f32 %v1076, %v1440
        %v1462 = vmul.f32 %v1077, %v1440
        %v1463 = vmul.f32 %v1078, %v1440
        %v1464 = vmul.f32 %v1079, %v1440
        %v1465 = vmul.f32 %v1080, %v1440
        %v1466 = vmul.f32 %v1081, %v1440
        %v1467 = vmul.f32 %v1082, %v1440
        %v1468 = vmul.f32 %v1083, %v1440
        %v1469 = vmul.f32 %v1084, %v1440
        %v1470 = vmul.f32 %v1085, %v1440
        %v1471 = vmul.f32 %v1086, %v1440
        %v1472 = vmul.f32 %v1087, %v1440
        %v1473 = vadd.f32 %v1405, %v1441
        %v1474 = vadd.f32 %v1406, %v1442
        %v1475 = vadd.f32 %v1407, %v1443
        %v1476 = vadd.f32 %v1408, %v1444
        %v1477 = vadd.f32 %v1409, %v1445
        %v1478 = vadd.f32 %v1410, %v1446
        %v1479 = vadd.f32 %v1411, %v1447
        %v1480 = vadd.f32 %v1412, %v1448
        %v1481 = vadd.f32 %v1413, %v1449
        %v1482 = vadd.f32 %v1414, %v1450
        %v1483 = vadd.f32 %v1415, %v1451
        %v1484 = vadd.f32 %v1416, %v1452
        %v1485 = vadd.f32 %v1417, %v1453
        %v1486 = vadd.f32 %v1418, %v1454
        %v1487 = vadd.f32 %v1419, %v1455
        %v1488 = vadd.f32 %v1420, %v1456
        %v1489 = vadd.f32 %v1421, %v1457
        %v1490 = vadd.f32 %v1422, %v1458
        %v1491 = vadd.f32 %v1423, %v1459
        %v1492 = vadd.f32 %v1424, %v1460
        %v1493 = vadd.f32 %v1425, %v1461
        %v1494 = vadd.f32 %v1426, %v1462
        %v1495 = vadd.f32 %v1427, %v1463
        %v1496 = vadd.f32 %v1428, %v1464
        %v1497 = vadd.f32 %v1429, %v1465
        %v1498 = vadd.f32 %v1430, %v1466
        %v1499 = vadd.f32 %v1431, %v1467
        %v1500 = vadd.f32 %v1432, %v1468
        %v1501 = vadd.f32 %v1433, %v1469
        %v1502 = vadd.f32 %v1434, %v1470
        %v1503 = vadd.f32 %v1435, %v1471
        %v1504 = vadd.f32 %v1436, %v1472
        %v1505 = vlaneseq
        %v1506 = vshrl.u32 %v1505, 7
        %v1507 = vsub.s32 0, %v1506
        %v1508 = vrot.slane %v1096, %v1507
        %v1509 = vmul.f32 %v1058, %v1508
        %v1510 = vmul.f32 %v1059, %v1508
        %v1511 = vmul.f32 %v1060, %v1508
        %v1512 = vmul.f32 %v1061, %v1508
        %v1513 = vmul.f32 %v1062, %v1508
        %v1514 = vmul.f32 %v1063, %v1508
        %v1515 = vmul.f32 %v1064, %v1508
        %v1516 = vmul.f32 %v1065, %v1508
        %v1517 = vmul.f32 %v1066, %v1508
        %v1518 = vmul.f32 %v1067, %v1508
        %v1519 = vmul.f32 %v1068, %v1508
        %v1520 = vmul.f32 %v1069, %v1508
        %v1521 = vmul.f32 %v1070, %v1508
        %v1522 = vmul.f32 %v1071, %v1508
        %v1523 = vmul.f32 %v1072, %v1508
        %v1524 = vmul.f32 %v1073, %v1508
        %v1525 = vmul.f32 %v1074, %v1508
        %v1526 = vmul.f32 %v1075, %v1508
        %v1527 = vmul.f32 %v1076, %v1508
        %v1528 = vmul.f32 %v1077, %v1508
        %v1529 = vmul.f32 %v1078, %v1508
        %v1530 = vmul.f32 %v1079, %v1508
        %v1531 = vmul.f32 %v1080, %v1508
        %v1532 = vmul.f32 %v1081, %v1508
        %v1533 = vmul.f32 %v1082, %v1508
        %v1534 = vmul.f32 %v1083, %v1508
        %v1535 = vmul.f32 %v1084, %v1508
        %v1536 = vmul.f32 %v1085, %v1508
        %v1537 = vmul.f32 %v1086, %v1508
        %v1538 = vmul.f32 %v1087, %v1508
        %v1539 = vmul.f32 %v1088, %v1508
        %v1540 = vmul.f32 %v1089, %v1508
        %v1541 = vadd.f32 %v1473, %v1509
        %v1542 = vadd.f32 %v1474, %v1510
        %v1543 = vadd.f32 %v1475, %v1511
        %v1544 = vadd.f32 %v1476, %v1512
        %v1545 = vadd.f32 %v1477, %v1513
        %v1546 = vadd.f32 %v1478, %v1514
        %v1547 = vadd.f32 %v1479, %v1515
        %v1548 = vadd.f32 %v1480, %v1516
        %v1549 = vadd.f32 %v1481, %v1517
        %v1550 = vadd.f32 %v1482, %v1518
        %v1551 = vadd.f32 %v1483, %v1519
        %v1552 = vadd.f32 %v1484, %v1520
        %v1553 = vadd.f32 %v1485, %v1521
        %v1554 = vadd.f32 %v1486, %v1522
        %v1555 = vadd.f32 %v1487, %v1523
        %v1556 = vadd.f32 %v1488, %v1524
        %v1557 = vadd.f32 %v1489, %v1525
        %v1558 = vadd.f32 %v1490, %v1526
        %v1559 = vadd.f32 %v1491, %v1527
        %v1560 = vadd.f32 %v1492, %v1528
        %v1561 = vadd.f32 %v1493, %v1529
        %v1562 = vadd.f32 %v1494, %v1530
        %v1563 = vadd.f32 %v1495, %v1531
        %v1564 = vadd.f32 %v1496, %v1532
        %v1565 = vadd.f32 %v1497, %v1533
        %v1566 = vadd.f32 %v1498, %v1534
        %v1567 = vadd.f32 %v1499, %v1535
        %v1568 = vadd.f32 %v1500, %v1536
        %v1569 = vadd.f32 %v1501, %v1537
        %v1570 = vadd.f32 %v1502, %v1538
        %v1571 = vadd.f32 %v1503, %v1539
        %v1572 = vadd.f32 %v1504, %v1540
        %v1573 = vld [vmem:[#allocation2 + $0x2] sm:$0xff]
        %v1574 = vld [vmem:[#allocation2 + $0xa] sm:$0xff]
        %v1575 = vld [vmem:[#allocation2 + $0x1a] sm:$0xff]
        %v1576 = vld [vmem:[#allocation2 + $0x22] sm:$0xff]
        %v1577 = vld [vmem:[#allocation2 + $0x32] sm:$0xff]
        %v1578 = vld [vmem:[#allocation2 + $0x3a] sm:$0xff]
        %v1579 = vld [vmem:[#allocation2 + $0x4a] sm:$0xff]
        %v1580 = vld [vmem:[#allocation2 + $0x52] sm:$0xff]
        %v1581 = vld [vmem:[#allocation2 + $0x62] sm:$0xff]
        %v1582 = vld [vmem:[#allocation2 + $0x6a] sm:$0xff]
        %v1583 = vld [vmem:[#allocation2 + $0x7a] sm:$0xff]
        %v1584 = vld [vmem:[#allocation2 + $0x82] sm:$0xff]
        %v1585 = vld [vmem:[#allocation2 + $0x92] sm:$0xff]
        %v1586 = vld [vmem:[#allocation2 + $0x9a] sm:$0xff]
        %v1587 = vld [vmem:[#allocation2 + $0xaa] sm:$0xff]
        %v1588 = vld [vmem:[#allocation2 + $0xb2] sm:$0xff]
        %v1589 = vld [vmem:[#allocation2 + $0xc2] sm:$0xff]
        %v1590 = vld [vmem:[#allocation2 + $0xca] sm:$0xff]
        %v1591 = vld [vmem:[#allocation2 + $0xda] sm:$0xff]
        %v1592 = vld [vmem:[#allocation2 + $0xe2] sm:$0xff]
        %v1593 = vld [vmem:[#allocation2 + $0xf2] sm:$0xff]
        %v1594 = vld [vmem:[#allocation2 + $0xfa] sm:$0xff]
        %v1595 = vld [vmem:[#allocation2 + $0x10a] sm:$0xff]
        %v1596 = vld [vmem:[#allocation2 + $0x112] sm:$0xff]
        %v1597 = vld [vmem:[#allocation2 + $0x122] sm:$0xff]
        %v1598 = vld [vmem:[#allocation2 + $0x12a] sm:$0xff]
        %v1599 = vld [vmem:[#allocation2 + $0x13a] sm:$0xff]
        %v1600 = vld [vmem:[#allocation2 + $0x142] sm:$0xff]
        %v1601 = vld [vmem:[#allocation2 + $0x152] sm:$0xff]
        %v1602 = vld [vmem:[#allocation2 + $0x15a] sm:$0xff]
        %v1603 = vld [vmem:[#allocation2 + $0x16a] sm:$0xff]
        %v1604 = vld [vmem:[#allocation2 + $0x172] sm:$0xff]
        %v1605 = vld [vmem:[#allocation2 + $0x182] sm:$0xff]
        %v1606 = vld [vmem:[#allocation2 + $0x18a] sm:$0xff]
        %v1607 = vld [vmem:[#allocation2 + $0x19a] sm:$0xff]
        %v1608 = vld [vmem:[#allocation2 + $0x1a2] sm:$0xff]
        %v1609 = vld [vmem:[#allocation2 + $0x1b2] sm:$0xff]
        %v1610 = vld [vmem:[#allocation2 + $0x1ba] sm:$0xff]
        %v1611 = vld [vmem:[#allocation2 + $0x1ca] sm:$0xff]
        %v1612 = vld [vmem:[#allocation2 + $0x1d2] sm:$0xff]
        %v1613 = vld [vmem:[#allocation2 + $0x1e2] sm:$0xff]
        %v1614 = vld [vmem:[#allocation2 + $0x1ea] sm:$0xff]
        %v1615 = vld [vmem:[#allocation2 + $0x1fa] sm:$0xff]
        %v1616 = vld [vmem:[#allocation2 + $0x202] sm:$0xff]
        %v1617 = vld [vmem:[#allocation6 + $0x2] sm:$0x1]
        %v1618 = vld [vmem:[#allocation6 + $0xa] sm:$0x1]
        %v1619 = vld [vmem:[#allocation6 + $0x12] sm:$0x1]
        %v1620 = vld [vmem:[#allocation6 + $0x1a] sm:$0x1]
        %v1621 = vld [vmem:[#allocation6 + $0x22] sm:$0x1]
        %v1622 = vld [vmem:[#allocation6 + $0x2a] sm:$0x1]
        %v1623 = vld [vmem:[#allocation6 + $0x32] sm:$0x1]
        %v1624 = vlaneseq
        %v1625 = vshrl.u32 %v1624, 7
        %v1626 = vsub.s32 0, %v1625
        %v1627 = vrot.slane %v1617, %v1626
        %v1628 = vmul.f32 %v1573, %v1627
        %v1629 = vmul.f32 %v1574, %v1627
        %v1630 = vmul.f32 %v1575, %v1627
        %v1631 = vmul.f32 %v1576, %v1627
        %v1632 = vmul.f32 %v1577, %v1627
        %v1633 = vmul.f32 %v1578, %v1627
        %v1634 = vmul.f32 %v1579, %v1627
        %v1635 = vmul.f32 %v1580, %v1627
        %v1636 = vmul.f32 %v1581, %v1627
        %v1637 = vmul.f32 %v1582, %v1627
        %v1638 = vmul.f32 %v1583, %v1627
        %v1639 = vmul.f32 %v1584, %v1627
        %v1640 = vmul.f32 %v1585, %v1627
        %v1641 = vmul.f32 %v1586, %v1627
        %v1642 = vmul.f32 %v1587, %v1627
        %v1643 = vmul.f32 %v1588, %v1627
        %v1644 = vmul.f32 %v1589, %v1627
        %v1645 = vmul.f32 %v1590, %v1627
        %v1646 = vmul.f32 %v1591, %v1627
        %v1647 = vmul.f32 %v1592, %v1627
        %v1648 = vmul.f32 %v1593, %v1627
        %v1649 = vmul.f32 %v1594, %v1627
        %v1650 = vmul.f32 %v1595, %v1627
        %v1651 = vmul.f32 %v1596, %v1627
        %v1652 = vmul.f32 %v1597, %v1627
        %v1653 = vmul.f32 %v1598, %v1627
        %v1654 = vmul.f32 %v1599, %v1627
        %v1655 = vmul.f32 %v1600, %v1627
        %v1656 = vmul.f32 %v1601, %v1627
        %v1657 = vmul.f32 %v1602, %v1627
        %v1658 = vmul.f32 %v1603, %v1627
        %v1659 = vmul.f32 %v1604, %v1627
        %v1660 = vadd.f32 %v1541, %v1628
        %v1661 = vadd.f32 %v1542, %v1629
        %v1662 = vadd.f32 %v1543, %v1630
        %v1663 = vadd.f32 %v1544, %v1631
        %v1664 = vadd.f32 %v1545, %v1632
        %v1665 = vadd.f32 %v1546, %v1633
        %v1666 = vadd.f32 %v1547, %v1634
        %v1667 = vadd.f32 %v1548, %v1635
        %v1668 = vadd.f32 %v1549, %v1636
        %v1669 = vadd.f32 %v1550, %v1637
        %v1670 = vadd.f32 %v1551, %v1638
        %v1671 = vadd.f32 %v1552, %v1639
        %v1672 = vadd.f32 %v1553, %v1640
        %v1673 = vadd.f32 %v1554, %v1641
        %v1674 = vadd.f32 %v1555, %v1642
        %v1675 = vadd.f32 %v1556, %v1643
        %v1676 = vadd.f32 %v1557, %v1644
        %v1677 = vadd.f32 %v1558, %v1645
        %v1678 = vadd.f32 %v1559, %v1646
        %v1679 = vadd.f32 %v1560, %v1647
        %v1680 = vadd.f32 %v1561, %v1648
        %v1681 = vadd.f32 %v1562, %v1649
        %v1682 = vadd.f32 %v1563, %v1650
        %v1683 = vadd.f32 %v1564, %v1651
        %v1684 = vadd.f32 %v1565, %v1652
        %v1685 = vadd.f32 %v1566, %v1653
        %v1686 = vadd.f32 %v1567, %v1654
        %v1687 = vadd.f32 %v1568, %v1655
        %v1688 = vadd.f32 %v1569, %v1656
        %v1689 = vadd.f32 %v1570, %v1657
        %v1690 = vadd.f32 %v1571, %v1658
        %v1691 = vadd.f32 %v1572, %v1659
        %v1692 = vlaneseq
        %v1693 = vshrl.u32 %v1692, 7
        %v1694 = vsub.s32 0, %v1693
        %v1695 = vrot.slane %v1618, %v1694
        %v1696 = vmul.f32 %v1575, %v1695
        %v1697 = vmul.f32 %v1576, %v1695
        %v1698 = vmul.f32 %v1577, %v1695
        %v1699 = vmul.f32 %v1578, %v1695
        %v1700 = vmul.f32 %v1579, %v1695
        %v1701 = vmul.f32 %v1580, %v1695
        %v1702 = vmul.f32 %v1581, %v1695
        %v1703 = vmul.f32 %v1582, %v1695
        %v1704 = vmul.f32 %v1583, %v1695
        %v1705 = vmul.f32 %v1584, %v1695
        %v1706 = vmul.f32 %v1585, %v1695
        %v1707 = vmul.f32 %v1586, %v1695
        %v1708 = vmul.f32 %v1587, %v1695
        %v1709 = vmul.f32 %v1588, %v1695
        %v1710 = vmul.f32 %v1589, %v1695
        %v1711 = vmul.f32 %v1590, %v1695
        %v1712 = vmul.f32 %v1591, %v1695
        %v1713 = vmul.f32 %v1592, %v1695
        %v1714 = vmul.f32 %v1593, %v1695
        %v1715 = vmul.f32 %v1594, %v1695
        %v1716 = vmul.f32 %v1595, %v1695
        %v1717 = vmul.f32 %v1596, %v1695
        %v1718 = vmul.f32 %v1597, %v1695
        %v1719 = vmul.f32 %v1598, %v1695
        %v1720 = vmul.f32 %v1599, %v1695
        %v1721 = vmul.f32 %v1600, %v1695
        %v1722 = vmul.f32 %v1601, %v1695
        %v1723 = vmul.f32 %v1602, %v1695
        %v1724 = vmul.f32 %v1603, %v1695
        %v1725 = vmul.f32 %v1604, %v1695
        %v1726 = vmul.f32 %v1605, %v1695
        %v1727 = vmul.f32 %v1606, %v1695
        %v1728 = vadd.f32 %v1660, %v1696
        %v1729 = vadd.f32 %v1661, %v1697
        %v1730 = vadd.f32 %v1662, %v1698
        %v1731 = vadd.f32 %v1663, %v1699
        %v1732 = vadd.f32 %v1664, %v1700
        %v1733 = vadd.f32 %v1665, %v1701
        %v1734 = vadd.f32 %v1666, %v1702
        %v1735 = vadd.f32 %v1667, %v1703
        %v1736 = vadd.f32 %v1668, %v1704
        %v1737 = vadd.f32 %v1669, %v1705
        %v1738 = vadd.f32 %v1670, %v1706
        %v1739 = vadd.f32 %v1671, %v1707
        %v1740 = vadd.f32 %v1672, %v1708
        %v1741 = vadd.f32 %v1673, %v1709
        %v1742 = vadd.f32 %v1674, %v1710
        %v1743 = vadd.f32 %v1675, %v1711
        %v1744 = vadd.f32 %v1676, %v1712
        %v1745 = vadd.f32 %v1677, %v1713
        %v1746 = vadd.f32 %v1678, %v1714
        %v1747 = vadd.f32 %v1679, %v1715
        %v1748 = vadd.f32 %v1680, %v1716
        %v1749 = vadd.f32 %v1681, %v1717
        %v1750 = vadd.f32 %v1682, %v1718
        %v1751 = vadd.f32 %v1683, %v1719
        %v1752 = vadd.f32 %v1684, %v1720
        %v1753 = vadd.f32 %v1685, %v1721
        %v1754 = vadd.f32 %v1686, %v1722
        %v1755 = vadd.f32 %v1687, %v1723
        %v1756 = vadd.f32 %v1688, %v1724
        %v1757 = vadd.f32 %v1689, %v1725
        %v1758 = vadd.f32 %v1690, %v1726
        %v1759 = vadd.f32 %v1691, %v1727
        %v1760 = vlaneseq
        %v1761 = vshrl.u32 %v1760, 7
        %v1762 = vsub.s32 0, %v1761
        %v1763 = vrot.slane %v1619, %v1762
        %v1764 = vmul.f32 %v1577, %v1763
        %v1765 = vmul.f32 %v1578, %v1763
        %v1766 = vmul.f32 %v1579, %v1763
        %v1767 = vmul.f32 %v1580, %v1763
        %v1768 = vmul.f32 %v1581, %v1763
        %v1769 = vmul.f32 %v1582, %v1763
        %v1770 = vmul.f32 %v1583, %v1763
        %v1771 = vmul.f32 %v1584, %v1763
        %v1772 = vmul.f32 %v1585, %v1763
        %v1773 = vmul.f32 %v1586, %v1763
        %v1774 = vmul.f32 %v1587, %v1763
        %v1775 = vmul.f32 %v1588, %v1763
        %v1776 = vmul.f32 %v1589, %v1763
        %v1777 = vmul.f32 %v1590, %v1763
        %v1778 = vmul.f32 %v1591, %v1763
        %v1779 = vmul.f32 %v1592, %v1763
        %v1780 = vmul.f32 %v1593, %v1763
        %v1781 = vmul.f32 %v1594, %v1763
        %v1782 = vmul.f32 %v1595, %v1763
        %v1783 = vmul.f32 %v1596, %v1763
        %v1784 = vmul.f32 %v1597, %v1763
        %v1785 = vmul.f32 %v1598, %v1763
        %v1786 = vmul.f32 %v1599, %v1763
        %v1787 = vmul.f32 %v1600, %v1763
        %v1788 = vmul.f32 %v1601, %v1763
        %v1789 = vmul.f32 %v1602, %v1763
        %v1790 = vmul.f32 %v1603, %v1763
        %v1791 = vmul.f32 %v1604, %v1763
        %v1792 = vmul.f32 %v1605, %v1763
        %v1793 = vmul.f32 %v1606, %v1763
        %v1794 = vmul.f32 %v1607, %v1763
        %v1795 = vmul.f32 %v1608, %v1763
        %v1796 = vadd.f32 %v1728, %v1764
        %v1797 = vadd.f32 %v1729, %v1765
        %v1798 = vadd.f32 %v1730, %v1766
        %v1799 = vadd.f32 %v1731, %v1767
        %v1800 = vadd.f32 %v1732, %v1768
        %v1801 = vadd.f32 %v1733, %v1769
        %v1802 = vadd.f32 %v1734, %v1770
        %v1803 = vadd.f32 %v1735, %v1771
        %v1804 = vadd.f32 %v1736, %v1772
        %v1805 = vadd.f32 %v1737, %v1773
        %v1806 = vadd.f32 %v1738, %v1774
        %v1807 = vadd.f32 %v1739, %v1775
        %v1808 = vadd.f32 %v1740, %v1776
        %v1809 = vadd.f32 %v1741, %v1777
        %v1810 = vadd.f32 %v1742, %v1778
        %v1811 = vadd.f32 %v1743, %v1779
        %v1812 = vadd.f32 %v1744, %v1780
        %v1813 = vadd.f32 %v1745, %v1781
        %v1814 = vadd.f32 %v1746, %v1782
        %v1815 = vadd.f32 %v1747, %v1783
        %v1816 = vadd.f32 %v1748, %v1784
        %v1817 = vadd.f32 %v1749, %v1785
        %v1818 = vadd.f32 %v1750, %v1786
        %v1819 = vadd.f32 %v1751, %v1787
        %v1820 = vadd.f32 %v1752, %v1788
        %v1821 = vadd.f32 %v1753, %v1789
        %v1822 = vadd.f32 %v1754, %v1790
        %v1823 = vadd.f32 %v1755, %v1791
        %v1824 = vadd.f32 %v1756, %v1792
        %v1825 = vadd.f32 %v1757, %v1793
        %v1826 = vadd.f32 %v1758, %v1794
        %v1827 = vadd.f32 %v1759, %v1795
        %v1828 = vlaneseq
        %v1829 = vshrl.u32 %v1828, 7
        %v1830 = vsub.s32 0, %v1829
        %v1831 = vrot.slane %v1620, %v1830
        %v1832 = vmul.f32 %v1579, %v1831
        %v1833 = vmul.f32 %v1580, %v1831
        %v1834 = vmul.f32 %v1581, %v1831
        %v1835 = vmul.f32 %v1582, %v1831
        %v1836 = vmul.f32 %v1583, %v1831
        %v1837 = vmul.f32 %v1584, %v1831
        %v1838 = vmul.f32 %v1585, %v1831
        %v1839 = vmul.f32 %v1586, %v1831
        %v1840 = vmul.f32 %v1587, %v1831
        %v1841 = vmul.f32 %v1588, %v1831
        %v1842 = vmul.f32 %v1589, %v1831
        %v1843 = vmul.f32 %v1590, %v1831
        %v1844 = vmul.f32 %v1591, %v1831
        %v1845 = vmul.f32 %v1592, %v1831
        %v1846 = vmul.f32 %v1593, %v1831
        %v1847 = vmul.f32 %v1594, %v1831
        %v1848 = vmul.f32 %v1595, %v1831
        %v1849 = vmul.f32 %v1596, %v1831
        %v1850 = vmul.f32 %v1597, %v1831
        %v1851 = vmul.f32 %v1598, %v1831
        %v1852 = vmul.f32 %v1599, %v1831
        %v1853 = vmul.f32 %v1600, %v1831
        %v1854 = vmul.f32 %v1601, %v1831
        %v1855 = vmul.f32 %v1602, %v1831
        %v1856 = vmul.f32 %v1603, %v1831
        %v1857 = vmul.f32 %v1604, %v1831
        %v1858 = vmul.f32 %v1605, %v1831
        %v1859 = vmul.f32 %v1606, %v1831
        %v1860 = vmul.f32 %v1607, %v1831
        %v1861 = vmul.f32 %v1608, %v1831
        %v1862 = vmul.f32 %v1609, %v1831
        %v1863 = vmul.f32 %v1610, %v1831
        %v1864 = vadd.f32 %v1796, %v1832
        %v1865 = vadd.f32 %v1797, %v1833
        %v1866 = vadd.f32 %v1798, %v1834
        %v1867 = vadd.f32 %v1799, %v1835
        %v1868 = vadd.f32 %v1800, %v1836
        %v1869 = vadd.f32 %v1801, %v1837
        %v1870 = vadd.f32 %v1802, %v1838
        %v1871 = vadd.f32 %v1803, %v1839
        %v1872 = vadd.f32 %v1804, %v1840
        %v1873 = vadd.f32 %v1805, %v1841
        %v1874 = vadd.f32 %v1806, %v1842
        %v1875 = vadd.f32 %v1807, %v1843
        %v1876 = vadd.f32 %v1808, %v1844
        %v1877 = vadd.f32 %v1809, %v1845
        %v1878 = vadd.f32 %v1810, %v1846
        %v1879 = vadd.f32 %v1811, %v1847
        %v1880 = vadd.f32 %v1812, %v1848
        %v1881 = vadd.f32 %v1813, %v1849
        %v1882 = vadd.f32 %v1814, %v1850
        %v1883 = vadd.f32 %v1815, %v1851
        %v1884 = vadd.f32 %v1816, %v1852
        %v1885 = vadd.f32 %v1817, %v1853
        %v1886 = vadd.f32 %v1818, %v1854
        %v1887 = vadd.f32 %v1819, %v1855
        %v1888 = vadd.f32 %v1820, %v1856
        %v1889 = vadd.f32 %v1821, %v1857
        %v1890 = vadd.f32 %v1822, %v1858
        %v1891 = vadd.f32 %v1823, %v1859
        %v1892 = vadd.f32 %v1824, %v1860
        %v1893 = vadd.f32 %v1825, %v1861
        %v1894 = vadd.f32 %v1826, %v1862
        %v1895 = vadd.f32 %v1827, %v1863
        %v1896 = vlaneseq
        %v1897 = vshrl.u32 %v1896, 7
        %v1898 = vsub.s32 0, %v1897
        %v1899 = vrot.slane %v1621, %v1898
        %v1900 = vmul.f32 %v1581, %v1899
        %v1901 = vmul.f32 %v1582, %v1899
        %v1902 = vmul.f32 %v1583, %v1899
        %v1903 = vmul.f32 %v1584, %v1899
        %v1904 = vmul.f32 %v1585, %v1899
        %v1905 = vmul.f32 %v1586, %v1899
        %v1906 = vmul.f32 %v1587, %v1899
        %v1907 = vmul.f32 %v1588, %v1899
        %v1908 = vmul.f32 %v1589, %v1899
        %v1909 = vmul.f32 %v1590, %v1899
        %v1910 = vmul.f32 %v1591, %v1899
        %v1911 = vmul.f32 %v1592, %v1899
        %v1912 = vmul.f32 %v1593, %v1899
        %v1913 = vmul.f32 %v1594, %v1899
        %v1914 = vmul.f32 %v1595, %v1899
        %v1915 = vmul.f32 %v1596, %v1899
        %v1916 = vmul.f32 %v1597, %v1899
        %v1917 = vmul.f32 %v1598, %v1899
        %v1918 = vmul.f32 %v1599, %v1899
        %v1919 = vmul.f32 %v1600, %v1899
        %v1920 = vmul.f32 %v1601, %v1899
        %v1921 = vmul.f32 %v1602, %v1899
        %v1922 = vmul.f32 %v1603, %v1899
        %v1923 = vmul.f32 %v1604, %v1899
        %v1924 = vmul.f32 %v1605, %v1899
        %v1925 = vmul.f32 %v1606, %v1899
        %v1926 = vmul.f32 %v1607, %v1899
        %v1927 = vmul.f32 %v1608, %v1899
        %v1928 = vmul.f32 %v1609, %v1899
        %v1929 = vmul.f32 %v1610, %v1899
        %v1930 = vmul.f32 %v1611, %v1899
        %v1931 = vmul.f32 %v1612, %v1899
        %v1932 = vadd.f32 %v1864, %v1900
        %v1933 = vadd.f32 %v1865, %v1901
        %v1934 = vadd.f32 %v1866, %v1902
        %v1935 = vadd.f32 %v1867, %v1903
        %v1936 = vadd.f32 %v1868, %v1904
        %v1937 = vadd.f32 %v1869, %v1905
        %v1938 = vadd.f32 %v1870, %v1906
        %v1939 = vadd.f32 %v1871, %v1907
        %v1940 = vadd.f32 %v1872, %v1908
        %v1941 = vadd.f32 %v1873, %v1909
        %v1942 = vadd.f32 %v1874, %v1910
        %v1943 = vadd.f32 %v1875, %v1911
        %v1944 = vadd.f32 %v1876, %v1912
        %v1945 = vadd.f32 %v1877, %v1913
        %v1946 = vadd.f32 %v1878, %v1914
        %v1947 = vadd.f32 %v1879, %v1915
        %v1948 = vadd.f32 %v1880, %v1916
        %v1949 = vadd.f32 %v1881, %v1917
        %v1950 = vadd.f32 %v1882, %v1918
        %v1951 = vadd.f32 %v1883, %v1919
        %v1952 = vadd.f32 %v1884, %v1920
        %v1953 = vadd.f32 %v1885, %v1921
        %v1954 = vadd.f32 %v1886, %v1922
        %v1955 = vadd.f32 %v1887, %v1923
        %v1956 = vadd.f32 %v1888, %v1924
        %v1957 = vadd.f32 %v1889, %v1925
        %v1958 = vadd.f32 %v1890, %v1926
        %v1959 = vadd.f32 %v1891, %v1927
        %v1960 = vadd.f32 %v1892, %v1928
        %v1961 = vadd.f32 %v1893, %v1929
        %v1962 = vadd.f32 %v1894, %v1930
        %v1963 = vadd.f32 %v1895, %v1931
        %v1964 = vlaneseq
        %v1965 = vshrl.u32 %v1964, 7
        %v1966 = vsub.s32 0, %v1965
        %v1967 = vrot.slane %v1622, %v1966
        %v1968 = vmul.f32 %v1583, %v1967
        %v1969 = vmul.f32 %v1584, %v1967
        %v1970 = vmul.f32 %v1585, %v1967
        %v1971 = vmul.f32 %v1586, %v1967
        %v1972 = vmul.f32 %v1587, %v1967
        %v1973 = vmul.f32 %v1588, %v1967
        %v1974 = vmul.f32 %v1589, %v1967
        %v1975 = vmul.f32 %v1590, %v1967
        %v1976 = vmul.f32 %v1591, %v1967
        %v1977 = vmul.f32 %v1592, %v1967
        %v1978 = vmul.f32 %v1593, %v1967
        %v1979 = vmul.f32 %v1594, %v1967
        %v1980 = vmul.f32 %v1595, %v1967
        %v1981 = vmul.f32 %v1596, %v1967
        %v1982 = vmul.f32 %v1597, %v1967
        %v1983 = vmul.f32 %v1598, %v1967
        %v1984 = vmul.f32 %v1599, %v1967
        %v1985 = vmul.f32 %v1600, %v1967
        %v1986 = vmul.f32 %v1601, %v1967
        %v1987 = vmul.f32 %v1602, %v1967
        %v1988 = vmul.f32 %v1603, %v1967
        %v1989 = vmul.f32 %v1604, %v1967
        %v1990 = vmul.f32 %v1605, %v1967
        %v1991 = vmul.f32 %v1606, %v1967
        %v1992 = vmul.f32 %v1607, %v1967
        %v1993 = vmul.f32 %v1608, %v1967
        %v1994 = vmul.f32 %v1609, %v1967
        %v1995 = vmul.f32 %v1610, %v1967
        %v1996 = vmul.f32 %v1611, %v1967
        %v1997 = vmul.f32 %v1612, %v1967
        %v1998 = vmul.f32 %v1613, %v1967
        %v1999 = vmul.f32 %v1614, %v1967
        %v2000 = vadd.f32 %v1932, %v1968
        %v2001 = vadd.f32 %v1933, %v1969
        %v2002 = vadd.f32 %v1934, %v1970
        %v2003 = vadd.f32 %v1935, %v1971
        %v2004 = vadd.f32 %v1936, %v1972
        %v2005 = vadd.f32 %v1937, %v1973
        %v2006 = vadd.f32 %v1938, %v1974
        %v2007 = vadd.f32 %v1939, %v1975
        %v2008 = vadd.f32 %v1940, %v1976
        %v2009 = vadd.f32 %v1941, %v1977
        %v2010 = vadd.f32 %v1942, %v1978
        %v2011 = vadd.f32 %v1943, %v1979
        %v2012 = vadd.f32 %v1944, %v1980
        %v2013 = vadd.f32 %v1945, %v1981
        %v2014 = vadd.f32 %v1946, %v1982
        %v2015 = vadd.f32 %v1947, %v1983
        %v2016 = vadd.f32 %v1948, %v1984
        %v2017 = vadd.f32 %v1949, %v1985
        %v2018 = vadd.f32 %v1950, %v1986
        %v2019 = vadd.f32 %v1951, %v1987
        %v2020 = vadd.f32 %v1952, %v1988
        %v2021 = vadd.f32 %v1953, %v1989
        %v2022 = vadd.f32 %v1954, %v1990
        %v2023 = vadd.f32 %v1955, %v1991
        %v2024 = vadd.f32 %v1956, %v1992
        %v2025 = vadd.f32 %v1957, %v1993
        %v2026 = vadd.f32 %v1958, %v1994
        %v2027 = vadd.f32 %v1959, %v1995
        %v2028 = vadd.f32 %v1960, %v1996
        %v2029 = vadd.f32 %v1961, %v1997
        %v2030 = vadd.f32 %v1962, %v1998
        %v2031 = vadd.f32 %v1963, %v1999
        %v2032 = vlaneseq
        %v2033 = vshrl.u32 %v2032, 7
        %v2034 = vsub.s32 0, %v2033
        %v2035 = vrot.slane %v1623, %v2034
        %v2036 = vmul.f32 %v1585, %v2035
        %v2037 = vmul.f32 %v1586, %v2035
        %v2038 = vmul.f32 %v1587, %v2035
        %v2039 = vmul.f32 %v1588, %v2035
        %v2040 = vmul.f32 %v1589, %v2035
        %v2041 = vmul.f32 %v1590, %v2035
        %v2042 = vmul.f32 %v1591, %v2035
        %v2043 = vmul.f32 %v1592, %v2035
        %v2044 = vmul.f32 %v1593, %v2035
        %v2045 = vmul.f32 %v1594, %v2035
        %v2046 = vmul.f32 %v1595, %v2035
        %v2047 = vmul.f32 %v1596, %v2035
        %v2048 = vmul.f32 %v1597, %v2035
        %v2049 = vmul.f32 %v1598, %v2035
        %v2050 = vmul.f32 %v1599, %v2035
        %v2051 = vmul.f32 %v1600, %v2035
        %v2052 = vmul.f32 %v1601, %v2035
        %v2053 = vmul.f32 %v1602, %v2035
        %v2054 = vmul.f32 %v1603, %v2035
        %v2055 = vmul.f32 %v1604, %v2035
        %v2056 = vmul.f32 %v1605, %v2035
        %v2057 = vmul.f32 %v1606, %v2035
        %v2058 = vmul.f32 %v1607, %v2035
        %v2059 = vmul.f32 %v1608, %v2035
        %v2060 = vmul.f32 %v1609, %v2035
        %v2061 = vmul.f32 %v1610, %v2035
        %v2062 = vmul.f32 %v1611, %v2035
        %v2063 = vmul.f32 %v1612, %v2035
        %v2064 = vmul.f32 %v1613, %v2035
        %v2065 = vmul.f32 %v1614, %v2035
        %v2066 = vmul.f32 %v1615, %v2035
        %v2067 = vmul.f32 %v1616, %v2035
        %v2068 = vadd.f32 %v2000, %v2036
        %v2069 = vadd.f32 %v2001, %v2037
        %v2070 = vadd.f32 %v2002, %v2038
        %v2071 = vadd.f32 %v2003, %v2039
        %v2072 = vadd.f32 %v2004, %v2040
        %v2073 = vadd.f32 %v2005, %v2041
        %v2074 = vadd.f32 %v2006, %v2042
        %v2075 = vadd.f32 %v2007, %v2043
        %v2076 = vadd.f32 %v2008, %v2044
        %v2077 = vadd.f32 %v2009, %v2045
        %v2078 = vadd.f32 %v2010, %v2046
        %v2079 = vadd.f32 %v2011, %v2047
        %v2080 = vadd.f32 %v2012, %v2048
        %v2081 = vadd.f32 %v2013, %v2049
        %v2082 = vadd.f32 %v2014, %v2050
        %v2083 = vadd.f32 %v2015, %v2051
        %v2084 = vadd.f32 %v2016, %v2052
        %v2085 = vadd.f32 %v2017, %v2053
        %v2086 = vadd.f32 %v2018, %v2054
        %v2087 = vadd.f32 %v2019, %v2055
        %v2088 = vadd.f32 %v2020, %v2056
        %v2089 = vadd.f32 %v2021, %v2057
        %v2090 = vadd.f32 %v2022, %v2058
        %v2091 = vadd.f32 %v2023, %v2059
        %v2092 = vadd.f32 %v2024, %v2060
        %v2093 = vadd.f32 %v2025, %v2061
        %v2094 = vadd.f32 %v2026, %v2062
        %v2095 = vadd.f32 %v2027, %v2063
        %v2096 = vadd.f32 %v2028, %v2064
        %v2097 = vadd.f32 %v2029, %v2065
        %v2098 = vadd.f32 %v2030, %v2066
        %v2099 = vadd.f32 %v2031, %v2067
        %v2100 = vld [vmem:[#allocation2 + $0x3] sm:$0xff]
        %v2101 = vld [vmem:[#allocation2 + $0xb] sm:$0xff]
        %v2102 = vld [vmem:[#allocation2 + $0x1b] sm:$0xff]
        %v2103 = vld [vmem:[#allocation2 + $0x23] sm:$0xff]
        %v2104 = vld [vmem:[#allocation2 + $0x33] sm:$0xff]
        %v2105 = vld [vmem:[#allocation2 + $0x3b] sm:$0xff]
        %v2106 = vld [vmem:[#allocation2 + $0x4b] sm:$0xff]
        %v2107 = vld [vmem:[#allocation2 + $0x53] sm:$0xff]
        %v2108 = vld [vmem:[#allocation2 + $0x63] sm:$0xff]
        %v2109 = vld [vmem:[#allocation2 + $0x6b] sm:$0xff]
        %v2110 = vld [vmem:[#allocation2 + $0x7b] sm:$0xff]
        %v2111 = vld [vmem:[#allocation2 + $0x83] sm:$0xff]
        %v2112 = vld [vmem:[#allocation2 + $0x93] sm:$0xff]
        %v2113 = vld [vmem:[#allocation2 + $0x9b] sm:$0xff]
        %v2114 = vld [vmem:[#allocation2 + $0xab] sm:$0xff]
        %v2115 = vld [vmem:[#allocation2 + $0xb3] sm:$0xff]
        %v2116 = vld [vmem:[#allocation2 + $0xc3] sm:$0xff]
        %v2117 = vld [vmem:[#allocation2 + $0xcb] sm:$0xff]
        %v2118 = vld [vmem:[#allocation2 + $0xdb] sm:$0xff]
        %v2119 = vld [vmem:[#allocation2 + $0xe3] sm:$0xff]
        %v2120 = vld [vmem:[#allocation2 + $0xf3] sm:$0xff]
        %v2121 = vld [vmem:[#allocation2 + $0xfb] sm:$0xff]
        %v2122 = vld [vmem:[#allocation2 + $0x10b] sm:$0xff]
        %v2123 = vld [vmem:[#allocation2 + $0x113] sm:$0xff]
        %v2124 = vld [vmem:[#allocation2 + $0x123] sm:$0xff]
        %v2125 = vld [vmem:[#allocation2 + $0x12b] sm:$0xff]
        %v2126 = vld [vmem:[#allocation2 + $0x13b] sm:$0xff]
        %v2127 = vld [vmem:[#allocation2 + $0x143] sm:$0xff]
        %v2128 = vld [vmem:[#allocation2 + $0x153] sm:$0xff]
        %v2129 = vld [vmem:[#allocation2 + $0x15b] sm:$0xff]
        %v2130 = vld [vmem:[#allocation2 + $0x16b] sm:$0xff]
        %v2131 = vld [vmem:[#allocation2 + $0x173] sm:$0xff]
        %v2132 = vld [vmem:[#allocation2 + $0x183] sm:$0xff]
        %v2133 = vld [vmem:[#allocation2 + $0x18b] sm:$0xff]
        %v2134 = vld [vmem:[#allocation2 + $0x19b] sm:$0xff]
        %v2135 = vld [vmem:[#allocation2 + $0x1a3] sm:$0xff]
        %v2136 = vld [vmem:[#allocation2 + $0x1b3] sm:$0xff]
        %v2137 = vld [vmem:[#allocation2 + $0x1bb] sm:$0xff]
        %v2138 = vld [vmem:[#allocation2 + $0x1cb] sm:$0xff]
        %v2139 = vld [vmem:[#allocation2 + $0x1d3] sm:$0xff]
        %v2140 = vld [vmem:[#allocation2 + $0x1e3] sm:$0xff]
        %v2141 = vld [vmem:[#allocation2 + $0x1eb] sm:$0xff]
        %v2142 = vld [vmem:[#allocation2 + $0x1fb] sm:$0xff]
        %v2143 = vld [vmem:[#allocation2 + $0x203] sm:$0xff]
        %v2144 = vld [vmem:[#allocation6 + $0x3] sm:$0x1]
        %v2145 = vld [vmem:[#allocation6 + $0xb] sm:$0x1]
        %v2146 = vld [vmem:[#allocation6 + $0x13] sm:$0x1]
        %v2147 = vld [vmem:[#allocation6 + $0x1b] sm:$0x1]
        %v2148 = vld [vmem:[#allocation6 + $0x23] sm:$0x1]
        %v2149 = vld [vmem:[#allocation6 + $0x2b] sm:$0x1]
        %v2150 = vld [vmem:[#allocation6 + $0x33] sm:$0x1]
        %v2151 = vlaneseq
        %v2152 = vshrl.u32 %v2151, 7
        %v2153 = vsub.s32 0, %v2152
        %v2154 = vrot.slane %v2144, %v2153
        %v2155 = vmul.f32 %v2100, %v2154
        %v2156 = vmul.f32 %v2101, %v2154
        %v2157 = vmul.f32 %v2102, %v2154
        %v2158 = vmul.f32 %v2103, %v2154
        %v2159 = vmul.f32 %v2104, %v2154
        %v2160 = vmul.f32 %v2105, %v2154
        %v2161 = vmul.f32 %v2106, %v2154
        %v2162 = vmul.f32 %v2107, %v2154
        %v2163 = vmul.f32 %v2108, %v2154
        %v2164 = vmul.f32 %v2109, %v2154
        %v2165 = vmul.f32 %v2110, %v2154
        %v2166 = vmul.f32 %v2111, %v2154
        %v2167 = vmul.f32 %v2112, %v2154
        %v2168 = vmul.f32 %v2113, %v2154
        %v2169 = vmul.f32 %v2114, %v2154
        %v2170 = vmul.f32 %v2115, %v2154
        %v2171 = vmul.f32 %v2116, %v2154
        %v2172 = vmul.f32 %v2117, %v2154
        %v2173 = vmul.f32 %v2118, %v2154
        %v2174 = vmul.f32 %v2119, %v2154
        %v2175 = vmul.f32 %v2120, %v2154
        %v2176 = vmul.f32 %v2121, %v2154
        %v2177 = vmul.f32 %v2122, %v2154
        %v2178 = vmul.f32 %v2123, %v2154
        %v2179 = vmul.f32 %v2124, %v2154
        %v2180 = vmul.f32 %v2125, %v2154
        %v2181 = vmul.f32 %v2126, %v2154
        %v2182 = vmul.f32 %v2127, %v2154
        %v2183 = vmul.f32 %v2128, %v2154
        %v2184 = vmul.f32 %v2129, %v2154
        %v2185 = vmul.f32 %v2130, %v2154
        %v2186 = vmul.f32 %v2131, %v2154
        %v2187 = vadd.f32 %v2068, %v2155
        %v2188 = vadd.f32 %v2069, %v2156
        %v2189 = vadd.f32 %v2070, %v2157
        %v2190 = vadd.f32 %v2071, %v2158
        %v2191 = vadd.f32 %v2072, %v2159
        %v2192 = vadd.f32 %v2073, %v2160
        %v2193 = vadd.f32 %v2074, %v2161
        %v2194 = vadd.f32 %v2075, %v2162
        %v2195 = vadd.f32 %v2076, %v2163
        %v2196 = vadd.f32 %v2077, %v2164
        %v2197 = vadd.f32 %v2078, %v2165
        %v2198 = vadd.f32 %v2079, %v2166
        %v2199 = vadd.f32 %v2080, %v2167
        %v2200 = vadd.f32 %v2081, %v2168
        %v2201 = vadd.f32 %v2082, %v2169
        %v2202 = vadd.f32 %v2083, %v2170
        %v2203 = vadd.f32 %v2084, %v2171
        %v2204 = vadd.f32 %v2085, %v2172
        %v2205 = vadd.f32 %v2086, %v2173
        %v2206 = vadd.f32 %v2087, %v2174
        %v2207 = vadd.f32 %v2088, %v2175
        %v2208 = vadd.f32 %v2089, %v2176
        %v2209 = vadd.f32 %v2090, %v2177
        %v2210 = vadd.f32 %v2091, %v2178
        %v2211 = vadd.f32 %v2092, %v2179
        %v2212 = vadd.f32 %v2093, %v2180
        %v2213 = vadd.f32 %v2094, %v2181
        %v2214 = vadd.f32 %v2095, %v2182
        %v2215 = vadd.f32 %v2096, %v2183
        %v2216 = vadd.f32 %v2097, %v2184
        %v2217 = vadd.f32 %v2098, %v2185
        %v2218 = vadd.f32 %v2099, %v2186
        %v2219 = vlaneseq
        %v2220 = vshrl.u32 %v2219, 7
        %v2221 = vsub.s32 0, %v2220
        %v2222 = vrot.slane %v2145, %v2221
        %v2223 = vmul.f32 %v2102, %v2222
        %v2224 = vmul.f32 %v2103, %v2222
        %v2225 = vmul.f32 %v2104, %v2222
        %v2226 = vmul.f32 %v2105, %v2222
        %v2227 = vmul.f32 %v2106, %v2222
        %v2228 = vmul.f32 %v2107, %v2222
        %v2229 = vmul.f32 %v2108, %v2222
        %v2230 = vmul.f32 %v2109, %v2222
        %v2231 = vmul.f32 %v2110, %v2222
        %v2232 = vmul.f32 %v2111, %v2222
        %v2233 = vmul.f32 %v2112, %v2222
        %v2234 = vmul.f32 %v2113, %v2222
        %v2235 = vmul.f32 %v2114, %v2222
        %v2236 = vmul.f32 %v2115, %v2222
        %v2237 = vmul.f32 %v2116, %v2222
        %v2238 = vmul.f32 %v2117, %v2222
        %v2239 = vmul.f32 %v2118, %v2222
        %v2240 = vmul.f32 %v2119, %v2222
        %v2241 = vmul.f32 %v2120, %v2222
        %v2242 = vmul.f32 %v2121, %v2222
        %v2243 = vmul.f32 %v2122, %v2222
        %v2244 = vmul.f32 %v2123, %v2222
        %v2245 = vmul.f32 %v2124, %v2222
        %v2246 = vmul.f32 %v2125, %v2222
        %v2247 = vmul.f32 %v2126, %v2222
        %v2248 = vmul.f32 %v2127, %v2222
        %v2249 = vmul.f32 %v2128, %v2222
        %v2250 = vmul.f32 %v2129, %v2222
        %v2251 = vmul.f32 %v2130, %v2222
        %v2252 = vmul.f32 %v2131, %v2222
        %v2253 = vmul.f32 %v2132, %v2222
        %v2254 = vmul.f32 %v2133, %v2222
        %v2255 = vadd.f32 %v2187, %v2223
        %v2256 = vadd.f32 %v2188, %v2224
        %v2257 = vadd.f32 %v2189, %v2225
        %v2258 = vadd.f32 %v2190, %v2226
        %v2259 = vadd.f32 %v2191, %v2227
        %v2260 = vadd.f32 %v2192, %v2228
        %v2261 = vadd.f32 %v2193, %v2229
        %v2262 = vadd.f32 %v2194, %v2230
        %v2263 = vadd.f32 %v2195, %v2231
        %v2264 = vadd.f32 %v2196, %v2232
        %v2265 = vadd.f32 %v2197, %v2233
        %v2266 = vadd.f32 %v2198, %v2234
        %v2267 = vadd.f32 %v2199, %v2235
        %v2268 = vadd.f32 %v2200, %v2236
        %v2269 = vadd.f32 %v2201, %v2237
        %v2270 = vadd.f32 %v2202, %v2238
        %v2271 = vadd.f32 %v2203, %v2239
        %v2272 = vadd.f32 %v2204, %v2240
        %v2273 = vadd.f32 %v2205, %v2241
        %v2274 = vadd.f32 %v2206, %v2242
        %v2275 = vadd.f32 %v2207, %v2243
        %v2276 = vadd.f32 %v2208, %v2244
        %v2277 = vadd.f32 %v2209, %v2245
        %v2278 = vadd.f32 %v2210, %v2246
        %v2279 = vadd.f32 %v2211, %v2247
        %v2280 = vadd.f32 %v2212, %v2248
        %v2281 = vadd.f32 %v2213, %v2249
        %v2282 = vadd.f32 %v2214, %v2250
        %v2283 = vadd.f32 %v2215, %v2251
        %v2284 = vadd.f32 %v2216, %v2252
        %v2285 = vadd.f32 %v2217, %v2253
        %v2286 = vadd.f32 %v2218, %v2254
        %v2287 = vlaneseq
        %v2288 = vshrl.u32 %v2287, 7
        %v2289 = vsub.s32 0, %v2288
        %v2290 = vrot.slane %v2146, %v2289
        %v2291 = vmul.f32 %v2104, %v2290
        %v2292 = vmul.f32 %v2105, %v2290
        %v2293 = vmul.f32 %v2106, %v2290
        %v2294 = vmul.f32 %v2107, %v2290
        %v2295 = vmul.f32 %v2108, %v2290
        %v2296 = vmul.f32 %v2109, %v2290
        %v2297 = vmul.f32 %v2110, %v2290
        %v2298 = vmul.f32 %v2111, %v2290
        %v2299 = vmul.f32 %v2112, %v2290
        %v2300 = vmul.f32 %v2113, %v2290
        %v2301 = vmul.f32 %v2114, %v2290
        %v2302 = vmul.f32 %v2115, %v2290
        %v2303 = vmul.f32 %v2116, %v2290
        %v2304 = vmul.f32 %v2117, %v2290
        %v2305 = vmul.f32 %v2118, %v2290
        %v2306 = vmul.f32 %v2119, %v2290
        %v2307 = vmul.f32 %v2120, %v2290
        %v2308 = vmul.f32 %v2121, %v2290
        %v2309 = vmul.f32 %v2122, %v2290
        %v2310 = vmul.f32 %v2123, %v2290
        %v2311 = vmul.f32 %v2124, %v2290
        %v2312 = vmul.f32 %v2125, %v2290
        %v2313 = vmul.f32 %v2126, %v2290
        %v2314 = vmul.f32 %v2127, %v2290
        %v2315 = vmul.f32 %v2128, %v2290
        %v2316 = vmul.f32 %v2129, %v2290
        %v2317 = vmul.f32 %v2130, %v2290
        %v2318 = vmul.f32 %v2131, %v2290
        %v2319 = vmul.f32 %v2132, %v2290
        %v2320 = vmul.f32 %v2133, %v2290
        %v2321 = vmul.f32 %v2134, %v2290
        %v2322 = vmul.f32 %v2135, %v2290
        %v2323 = vadd.f32 %v2255, %v2291
        %v2324 = vadd.f32 %v2256, %v2292
        %v2325 = vadd.f32 %v2257, %v2293
        %v2326 = vadd.f32 %v2258, %v2294
        %v2327 = vadd.f32 %v2259, %v2295
        %v2328 = vadd.f32 %v2260, %v2296
        %v2329 = vadd.f32 %v2261, %v2297
        %v2330 = vadd.f32 %v2262, %v2298
        %v2331 = vadd.f32 %v2263, %v2299
        %v2332 = vadd.f32 %v2264, %v2300
        %v2333 = vadd.f32 %v2265, %v2301
        %v2334 = vadd.f32 %v2266, %v2302
        %v2335 = vadd.f32 %v2267, %v2303
        %v2336 = vadd.f32 %v2268, %v2304
        %v2337 = vadd.f32 %v2269, %v2305
        %v2338 = vadd.f32 %v2270, %v2306
        %v2339 = vadd.f32 %v2271, %v2307
        %v2340 = vadd.f32 %v2272, %v2308
        %v2341 = vadd.f32 %v2273, %v2309
        %v2342 = vadd.f32 %v2274, %v2310
        %v2343 = vadd.f32 %v2275, %v2311
        %v2344 = vadd.f32 %v2276, %v2312
        %v2345 = vadd.f32 %v2277, %v2313
        %v2346 = vadd.f32 %v2278, %v2314
        %v2347 = vadd.f32 %v2279, %v2315
        %v2348 = vadd.f32 %v2280, %v2316
        %v2349 = vadd.f32 %v2281, %v2317
        %v2350 = vadd.f32 %v2282, %v2318
        %v2351 = vadd.f32 %v2283, %v2319
        %v2352 = vadd.f32 %v2284, %v2320
        %v2353 = vadd.f32 %v2285, %v2321
        %v2354 = vadd.f32 %v2286, %v2322
        %v2355 = vlaneseq
        %v2356 = vshrl.u32 %v2355, 7
        %v2357 = vsub.s32 0, %v2356
        %v2358 = vrot.slane %v2147, %v2357
        %v2359 = vmul.f32 %v2106, %v2358
        %v2360 = vmul.f32 %v2107, %v2358
        %v2361 = vmul.f32 %v2108, %v2358
        %v2362 = vmul.f32 %v2109, %v2358
        %v2363 = vmul.f32 %v2110, %v2358
        %v2364 = vmul.f32 %v2111, %v2358
        %v2365 = vmul.f32 %v2112, %v2358
        %v2366 = vmul.f32 %v2113, %v2358
        %v2367 = vmul.f32 %v2114, %v2358
        %v2368 = vmul.f32 %v2115, %v2358
        %v2369 = vmul.f32 %v2116, %v2358
        %v2370 = vmul.f32 %v2117, %v2358
        %v2371 = vmul.f32 %v2118, %v2358
        %v2372 = vmul.f32 %v2119, %v2358
        %v2373 = vmul.f32 %v2120, %v2358
        %v2374 = vmul.f32 %v2121, %v2358
        %v2375 = vmul.f32 %v2122, %v2358
        %v2376 = vmul.f32 %v2123, %v2358
        %v2377 = vmul.f32 %v2124, %v2358
        %v2378 = vmul.f32 %v2125, %v2358
        %v2379 = vmul.f32 %v2126, %v2358
        %v2380 = vmul.f32 %v2127, %v2358
        %v2381 = vmul.f32 %v2128, %v2358
        %v2382 = vmul.f32 %v2129, %v2358
        %v2383 = vmul.f32 %v2130, %v2358
        %v2384 = vmul.f32 %v2131, %v2358
        %v2385 = vmul.f32 %v2132, %v2358
        %v2386 = vmul.f32 %v2133, %v2358
        %v2387 = vmul.f32 %v2134, %v2358
        %v2388 = vmul.f32 %v2135, %v2358
        %v2389 = vmul.f32 %v2136, %v2358
        %v2390 = vmul.f32 %v2137, %v2358
        %v2391 = vadd.f32 %v2323, %v2359
        %v2392 = vadd.f32 %v2324, %v2360
        %v2393 = vadd.f32 %v2325, %v2361
        %v2394 = vadd.f32 %v2326, %v2362
        %v2395 = vadd.f32 %v2327, %v2363
        %v2396 = vadd.f32 %v2328, %v2364
        %v2397 = vadd.f32 %v2329, %v2365
        %v2398 = vadd.f32 %v2330, %v2366
        %v2399 = vadd.f32 %v2331, %v2367
        %v2400 = vadd.f32 %v2332, %v2368
        %v2401 = vadd.f32 %v2333, %v2369
        %v2402 = vadd.f32 %v2334, %v2370
        %v2403 = vadd.f32 %v2335, %v2371
        %v2404 = vadd.f32 %v2336, %v2372
        %v2405 = vadd.f32 %v2337, %v2373
        %v2406 = vadd.f32 %v2338, %v2374
        %v2407 = vadd.f32 %v2339, %v2375
        %v2408 = vadd.f32 %v2340, %v2376
        %v2409 = vadd.f32 %v2341, %v2377
        %v2410 = vadd.f32 %v2342, %v2378
        %v2411 = vadd.f32 %v2343, %v2379
        %v2412 = vadd.f32 %v2344, %v2380
        %v2413 = vadd.f32 %v2345, %v2381
        %v2414 = vadd.f32 %v2346, %v2382
        %v2415 = vadd.f32 %v2347, %v2383
        %v2416 = vadd.f32 %v2348, %v2384
        %v2417 = vadd.f32 %v2349, %v2385
        %v2418 = vadd.f32 %v2350, %v2386
        %v2419 = vadd.f32 %v2351, %v2387
        %v2420 = vadd.f32 %v2352, %v2388
        %v2421 = vadd.f32 %v2353, %v2389
        %v2422 = vadd.f32 %v2354, %v2390
        %v2423 = vlaneseq
        %v2424 = vshrl.u32 %v2423, 7
        %v2425 = vsub.s32 0, %v2424
        %v2426 = vrot.slane %v2148, %v2425
        %v2427 = vmul.f32 %v2108, %v2426
        %v2428 = vmul.f32 %v2109, %v2426
        %v2429 = vmul.f32 %v2110, %v2426
        %v2430 = vmul.f32 %v2111, %v2426
        %v2431 = vmul.f32 %v2112, %v2426
        %v2432 = vmul.f32 %v2113, %v2426
        %v2433 = vmul.f32 %v2114, %v2426
        %v2434 = vmul.f32 %v2115, %v2426
        %v2435 = vmul.f32 %v2116, %v2426
        %v2436 = vmul.f32 %v2117, %v2426
        %v2437 = vmul.f32 %v2118, %v2426
        %v2438 = vmul.f32 %v2119, %v2426
        %v2439 = vmul.f32 %v2120, %v2426
        %v2440 = vmul.f32 %v2121, %v2426
        %v2441 = vmul.f32 %v2122, %v2426
        %v2442 = vmul.f32 %v2123, %v2426
        %v2443 = vmul.f32 %v2124, %v2426
        %v2444 = vmul.f32 %v2125, %v2426
        %v2445 = vmul.f32 %v2126, %v2426
        %v2446 = vmul.f32 %v2127, %v2426
        %v2447 = vmul.f32 %v2128, %v2426
        %v2448 = vmul.f32 %v2129, %v2426
        %v2449 = vmul.f32 %v2130, %v2426
        %v2450 = vmul.f32 %v2131, %v2426
        %v2451 = vmul.f32 %v2132, %v2426
        %v2452 = vmul.f32 %v2133, %v2426
        %v2453 = vmul.f32 %v2134, %v2426
        %v2454 = vmul.f32 %v2135, %v2426
        %v2455 = vmul.f32 %v2136, %v2426
        %v2456 = vmul.f32 %v2137, %v2426
        %v2457 = vmul.f32 %v2138, %v2426
        %v2458 = vmul.f32 %v2139, %v2426
        %v2459 = vadd.f32 %v2391, %v2427
        %v2460 = vadd.f32 %v2392, %v2428
        %v2461 = vadd.f32 %v2393, %v2429
        %v2462 = vadd.f32 %v2394, %v2430
        %v2463 = vadd.f32 %v2395, %v2431
        %v2464 = vadd.f32 %v2396, %v2432
        %v2465 = vadd.f32 %v2397, %v2433
        %v2466 = vadd.f32 %v2398, %v2434
        %v2467 = vadd.f32 %v2399, %v2435
        %v2468 = vadd.f32 %v2400, %v2436
        %v2469 = vadd.f32 %v2401, %v2437
        %v2470 = vadd.f32 %v2402, %v2438
        %v2471 = vadd.f32 %v2403, %v2439
        %v2472 = vadd.f32 %v2404, %v2440
        %v2473 = vadd.f32 %v2405, %v2441
        %v2474 = vadd.f32 %v2406, %v2442
        %v2475 = vadd.f32 %v2407, %v2443
        %v2476 = vadd.f32 %v2408, %v2444
        %v2477 = vadd.f32 %v2409, %v2445
        %v2478 = vadd.f32 %v2410, %v2446
        %v2479 = vadd.f32 %v2411, %v2447
        %v2480 = vadd.f32 %v2412, %v2448
        %v2481 = vadd.f32 %v2413, %v2449
        %v2482 = vadd.f32 %v2414, %v2450
        %v2483 = vadd.f32 %v2415, %v2451
        %v2484 = vadd.f32 %v2416, %v2452
        %v2485 = vadd.f32 %v2417, %v2453
        %v2486 = vadd.f32 %v2418, %v2454
        %v2487 = vadd.f32 %v2419, %v2455
        %v2488 = vadd.f32 %v2420, %v2456
        %v2489 = vadd.f32 %v2421, %v2457
        %v2490 = vadd.f32 %v2422, %v2458
        %v2491 = vlaneseq
        %v2492 = vshrl.u32 %v2491, 7
        %v2493 = vsub.s32 0, %v2492
        %v2494 = vrot.slane %v2149, %v2493
        %v2495 = vmul.f32 %v2110, %v2494
        %v2496 = vmul.f32 %v2111, %v2494
        %v2497 = vmul.f32 %v2112, %v2494
        %v2498 = vmul.f32 %v2113, %v2494
        %v2499 = vmul.f32 %v2114, %v2494
        %v2500 = vmul.f32 %v2115, %v2494
        %v2501 = vmul.f32 %v2116, %v2494
        %v2502 = vmul.f32 %v2117, %v2494
        %v2503 = vmul.f32 %v2118, %v2494
        %v2504 = vmul.f32 %v2119, %v2494
        %v2505 = vmul.f32 %v2120, %v2494
        %v2506 = vmul.f32 %v2121, %v2494
        %v2507 = vmul.f32 %v2122, %v2494
        %v2508 = vmul.f32 %v2123, %v2494
        %v2509 = vmul.f32 %v2124, %v2494
        %v2510 = vmul.f32 %v2125, %v2494
        %v2511 = vmul.f32 %v2126, %v2494
        %v2512 = vmul.f32 %v2127, %v2494
        %v2513 = vmul.f32 %v2128, %v2494
        %v2514 = vmul.f32 %v2129, %v2494
        %v2515 = vmul.f32 %v2130, %v2494
        %v2516 = vmul.f32 %v2131, %v2494
        %v2517 = vmul.f32 %v2132, %v2494
        %v2518 = vmul.f32 %v2133, %v2494
        %v2519 = vmul.f32 %v2134, %v2494
        %v2520 = vmul.f32 %v2135, %v2494
        %v2521 = vmul.f32 %v2136, %v2494
        %v2522 = vmul.f32 %v2137, %v2494
        %v2523 = vmul.f32 %v2138, %v2494
        %v2524 = vmul.f32 %v2139, %v2494
        %v2525 = vmul.f32 %v2140, %v2494
        %v2526 = vmul.f32 %v2141, %v2494
        %v2527 = vadd.f32 %v2459, %v2495
        %v2528 = vadd.f32 %v2460, %v2496
        %v2529 = vadd.f32 %v2461, %v2497
        %v2530 = vadd.f32 %v2462, %v2498
        %v2531 = vadd.f32 %v2463, %v2499
        %v2532 = vadd.f32 %v2464, %v2500
        %v2533 = vadd.f32 %v2465, %v2501
        %v2534 = vadd.f32 %v2466, %v2502
        %v2535 = vadd.f32 %v2467, %v2503
        %v2536 = vadd.f32 %v2468, %v2504
        %v2537 = vadd.f32 %v2469, %v2505
        %v2538 = vadd.f32 %v2470, %v2506
        %v2539 = vadd.f32 %v2471, %v2507
        %v2540 = vadd.f32 %v2472, %v2508
        %v2541 = vadd.f32 %v2473, %v2509
        %v2542 = vadd.f32 %v2474, %v2510
        %v2543 = vadd.f32 %v2475, %v2511
        %v2544 = vadd.f32 %v2476, %v2512
        %v2545 = vadd.f32 %v2477, %v2513
        %v2546 = vadd.f32 %v2478, %v2514
        %v2547 = vadd.f32 %v2479, %v2515
        %v2548 = vadd.f32 %v2480, %v2516
        %v2549 = vadd.f32 %v2481, %v2517
        %v2550 = vadd.f32 %v2482, %v2518
        %v2551 = vadd.f32 %v2483, %v2519
        %v2552 = vadd.f32 %v2484, %v2520
        %v2553 = vadd.f32 %v2485, %v2521
        %v2554 = vadd.f32 %v2486, %v2522
        %v2555 = vadd.f32 %v2487, %v2523
        %v2556 = vadd.f32 %v2488, %v2524
        %v2557 = vadd.f32 %v2489, %v2525
        %v2558 = vadd.f32 %v2490, %v2526
        %v2559 = vlaneseq
        %v2560 = vshrl.u32 %v2559, 7
        %v2561 = vsub.s32 0, %v2560
        %v2562 = vrot.slane %v2150, %v2561
        %v2563 = vmul.f32 %v2112, %v2562
        %v2564 = vmul.f32 %v2113, %v2562
        %v2565 = vmul.f32 %v2114, %v2562
        %v2566 = vmul.f32 %v2115, %v2562
        %v2567 = vmul.f32 %v2116, %v2562
        %v2568 = vmul.f32 %v2117, %v2562
        %v2569 = vmul.f32 %v2118, %v2562
        %v2570 = vmul.f32 %v2119, %v2562
        %v2571 = vmul.f32 %v2120, %v2562
        %v2572 = vmul.f32 %v2121, %v2562
        %v2573 = vmul.f32 %v2122, %v2562
        %v2574 = vmul.f32 %v2123, %v2562
        %v2575 = vmul.f32 %v2124, %v2562
        %v2576 = vmul.f32 %v2125, %v2562
        %v2577 = vmul.f32 %v2126, %v2562
        %v2578 = vmul.f32 %v2127, %v2562
        %v2579 = vmul.f32 %v2128, %v2562
        %v2580 = vmul.f32 %v2129, %v2562
        %v2581 = vmul.f32 %v2130, %v2562
        %v2582 = vmul.f32 %v2131, %v2562
        %v2583 = vmul.f32 %v2132, %v2562
        %v2584 = vmul.f32 %v2133, %v2562
        %v2585 = vmul.f32 %v2134, %v2562
        %v2586 = vmul.f32 %v2135, %v2562
        %v2587 = vmul.f32 %v2136, %v2562
        %v2588 = vmul.f32 %v2137, %v2562
        %v2589 = vmul.f32 %v2138, %v2562
        %v2590 = vmul.f32 %v2139, %v2562
        %v2591 = vmul.f32 %v2140, %v2562
        %v2592 = vmul.f32 %v2141, %v2562
        %v2593 = vmul.f32 %v2142, %v2562
        %v2594 = vmul.f32 %v2143, %v2562
        %v2595 = vadd.f32 %v2527, %v2563
        %v2596 = vadd.f32 %v2528, %v2564
        %v2597 = vadd.f32 %v2529, %v2565
        %v2598 = vadd.f32 %v2530, %v2566
        %v2599 = vadd.f32 %v2531, %v2567
        %v2600 = vadd.f32 %v2532, %v2568
        %v2601 = vadd.f32 %v2533, %v2569
        %v2602 = vadd.f32 %v2534, %v2570
        %v2603 = vadd.f32 %v2535, %v2571
        %v2604 = vadd.f32 %v2536, %v2572
        %v2605 = vadd.f32 %v2537, %v2573
        %v2606 = vadd.f32 %v2538, %v2574
        %v2607 = vadd.f32 %v2539, %v2575
        %v2608 = vadd.f32 %v2540, %v2576
        %v2609 = vadd.f32 %v2541, %v2577
        %v2610 = vadd.f32 %v2542, %v2578
        %v2611 = vadd.f32 %v2543, %v2579
        %v2612 = vadd.f32 %v2544, %v2580
        %v2613 = vadd.f32 %v2545, %v2581
        %v2614 = vadd.f32 %v2546, %v2582
        %v2615 = vadd.f32 %v2547, %v2583
        %v2616 = vadd.f32 %v2548, %v2584
        %v2617 = vadd.f32 %v2549, %v2585
        %v2618 = vadd.f32 %v2550, %v2586
        %v2619 = vadd.f32 %v2551, %v2587
        %v2620 = vadd.f32 %v2552, %v2588
        %v2621 = vadd.f32 %v2553, %v2589
        %v2622 = vadd.f32 %v2554, %v2590
        %v2623 = vadd.f32 %v2555, %v2591
        %v2624 = vadd.f32 %v2556, %v2592
        %v2625 = vadd.f32 %v2557, %v2593
        %v2626 = vadd.f32 %v2558, %v2594
        %v2627 = vld [vmem:[#allocation2 + $0x4] sm:$0xff]
        %v2628 = vld [vmem:[#allocation2 + $0xc] sm:$0xff]
        %v2629 = vld [vmem:[#allocation2 + $0x1c] sm:$0xff]
        %v2630 = vld [vmem:[#allocation2 + $0x24] sm:$0xff]
        %v2631 = vld [vmem:[#allocation2 + $0x34] sm:$0xff]
        %v2632 = vld [vmem:[#allocation2 + $0x3c] sm:$0xff]
        %v2633 = vld [vmem:[#allocation2 + $0x4c] sm:$0xff]
        %v2634 = vld [vmem:[#allocation2 + $0x54] sm:$0xff]
        %v2635 = vld [vmem:[#allocation2 + $0x64] sm:$0xff]
        %v2636 = vld [vmem:[#allocation2 + $0x6c] sm:$0xff]
        %v2637 = vld [vmem:[#allocation2 + $0x7c] sm:$0xff]
        %v2638 = vld [vmem:[#allocation2 + $0x84] sm:$0xff]
        %v2639 = vld [vmem:[#allocation2 + $0x94] sm:$0xff]
        %v2640 = vld [vmem:[#allocation2 + $0x9c] sm:$0xff]
        %v2641 = vld [vmem:[#allocation2 + $0xac] sm:$0xff]
        %v2642 = vld [vmem:[#allocation2 + $0xb4] sm:$0xff]
        %v2643 = vld [vmem:[#allocation2 + $0xc4] sm:$0xff]
        %v2644 = vld [vmem:[#allocation2 + $0xcc] sm:$0xff]
        %v2645 = vld [vmem:[#allocation2 + $0xdc] sm:$0xff]
        %v2646 = vld [vmem:[#allocation2 + $0xe4] sm:$0xff]
        %v2647 = vld [vmem:[#allocation2 + $0xf4] sm:$0xff]
        %v2648 = vld [vmem:[#allocation2 + $0xfc] sm:$0xff]
        %v2649 = vld [vmem:[#allocation2 + $0x10c] sm:$0xff]
        %v2650 = vld [vmem:[#allocation2 + $0x114] sm:$0xff]
        %v2651 = vld [vmem:[#allocation2 + $0x124] sm:$0xff]
        %v2652 = vld [vmem:[#allocation2 + $0x12c] sm:$0xff]
        %v2653 = vld [vmem:[#allocation2 + $0x13c] sm:$0xff]
        %v2654 = vld [vmem:[#allocation2 + $0x144] sm:$0xff]
        %v2655 = vld [vmem:[#allocation2 + $0x154] sm:$0xff]
        %v2656 = vld [vmem:[#allocation2 + $0x15c] sm:$0xff]
        %v2657 = vld [vmem:[#allocation2 + $0x16c] sm:$0xff]
        %v2658 = vld [vmem:[#allocation2 + $0x174] sm:$0xff]
        %v2659 = vld [vmem:[#allocation2 + $0x184] sm:$0xff]
        %v2660 = vld [vmem:[#allocation2 + $0x18c] sm:$0xff]
        %v2661 = vld [vmem:[#allocation2 + $0x19c] sm:$0xff]
        %v2662 = vld [vmem:[#allocation2 + $0x1a4] sm:$0xff]
        %v2663 = vld [vmem:[#allocation2 + $0x1b4] sm:$0xff]
        %v2664 = vld [vmem:[#allocation2 + $0x1bc] sm:$0xff]
        %v2665 = vld [vmem:[#allocation2 + $0x1cc] sm:$0xff]
        %v2666 = vld [vmem:[#allocation2 + $0x1d4] sm:$0xff]
        %v2667 = vld [vmem:[#allocation2 + $0x1e4] sm:$0xff]
        %v2668 = vld [vmem:[#allocation2 + $0x1ec] sm:$0xff]
        %v2669 = vld [vmem:[#allocation2 + $0x1fc] sm:$0xff]
        %v2670 = vld [vmem:[#allocation2 + $0x204] sm:$0xff]
        %v2671 = vld [vmem:[#allocation6 + $0x4] sm:$0x1]
        %v2672 = vld [vmem:[#allocation6 + $0xc] sm:$0x1]
        %v2673 = vld [vmem:[#allocation6 + $0x14] sm:$0x1]
        %v2674 = vld [vmem:[#allocation6 + $0x1c] sm:$0x1]
        %v2675 = vld [vmem:[#allocation6 + $0x24] sm:$0x1]
        %v2676 = vld [vmem:[#allocation6 + $0x2c] sm:$0x1]
        %v2677 = vld [vmem:[#allocation6 + $0x34] sm:$0x1]
        %v2678 = vlaneseq
        %v2679 = vshrl.u32 %v2678, 7
        %v2680 = vsub.s32 0, %v2679
        %v2681 = vrot.slane %v2671, %v2680
        %v2682 = vmul.f32 %v2627, %v2681
        %v2683 = vmul.f32 %v2628, %v2681
        %v2684 = vmul.f32 %v2629, %v2681
        %v2685 = vmul.f32 %v2630, %v2681
        %v2686 = vmul.f32 %v2631, %v2681
        %v2687 = vmul.f32 %v2632, %v2681
        %v2688 = vmul.f32 %v2633, %v2681
        %v2689 = vmul.f32 %v2634, %v2681
        %v2690 = vmul.f32 %v2635, %v2681
        %v2691 = vmul.f32 %v2636, %v2681
        %v2692 = vmul.f32 %v2637, %v2681
        %v2693 = vmul.f32 %v2638, %v2681
        %v2694 = vmul.f32 %v2639, %v2681
        %v2695 = vmul.f32 %v2640, %v2681
        %v2696 = vmul.f32 %v2641, %v2681
        %v2697 = vmul.f32 %v2642, %v2681
        %v2698 = vmul.f32 %v2643, %v2681
        %v2699 = vmul.f32 %v2644, %v2681
        %v2700 = vmul.f32 %v2645, %v2681
        %v2701 = vmul.f32 %v2646, %v2681
        %v2702 = vmul.f32 %v2647, %v2681
        %v2703 = vmul.f32 %v2648, %v2681
        %v2704 = vmul.f32 %v2649, %v2681
        %v2705 = vmul.f32 %v2650, %v2681
        %v2706 = vmul.f32 %v2651, %v2681
        %v2707 = vmul.f32 %v2652, %v2681
        %v2708 = vmul.f32 %v2653, %v2681
        %v2709 = vmul.f32 %v2654, %v2681
        %v2710 = vmul.f32 %v2655, %v2681
        %v2711 = vmul.f32 %v2656, %v2681
        %v2712 = vmul.f32 %v2657, %v2681
        %v2713 = vmul.f32 %v2658, %v2681
        %v2714 = vadd.f32 %v2595, %v2682
        %v2715 = vadd.f32 %v2596, %v2683
        %v2716 = vadd.f32 %v2597, %v2684
        %v2717 = vadd.f32 %v2598, %v2685
        %v2718 = vadd.f32 %v2599, %v2686
        %v2719 = vadd.f32 %v2600, %v2687
        %v2720 = vadd.f32 %v2601, %v2688
        %v2721 = vadd.f32 %v2602, %v2689
        %v2722 = vadd.f32 %v2603, %v2690
        %v2723 = vadd.f32 %v2604, %v2691
        %v2724 = vadd.f32 %v2605, %v2692
        %v2725 = vadd.f32 %v2606, %v2693
        %v2726 = vadd.f32 %v2607, %v2694
        %v2727 = vadd.f32 %v2608, %v2695
        %v2728 = vadd.f32 %v2609, %v2696
        %v2729 = vadd.f32 %v2610, %v2697
        %v2730 = vadd.f32 %v2611, %v2698
        %v2731 = vadd.f32 %v2612, %v2699
        %v2732 = vadd.f32 %v2613, %v2700
        %v2733 = vadd.f32 %v2614, %v2701
        %v2734 = vadd.f32 %v2615, %v2702
        %v2735 = vadd.f32 %v2616, %v2703
        %v2736 = vadd.f32 %v2617, %v2704
        %v2737 = vadd.f32 %v2618, %v2705
        %v2738 = vadd.f32 %v2619, %v2706
        %v2739 = vadd.f32 %v2620, %v2707
        %v2740 = vadd.f32 %v2621, %v2708
        %v2741 = vadd.f32 %v2622, %v2709
        %v2742 = vadd.f32 %v2623, %v2710
        %v2743 = vadd.f32 %v2624, %v2711
        %v2744 = vadd.f32 %v2625, %v2712
        %v2745 = vadd.f32 %v2626, %v2713
        %v2746 = vlaneseq
        %v2747 = vshrl.u32 %v2746, 7
        %v2748 = vsub.s32 0, %v2747
        %v2749 = vrot.slane %v2672, %v2748
        %v2750 = vmul.f32 %v2629, %v2749
        %v2751 = vmul.f32 %v2630, %v2749
        %v2752 = vmul.f32 %v2631, %v2749
        %v2753 = vmul.f32 %v2632, %v2749
        %v2754 = vmul.f32 %v2633, %v2749
        %v2755 = vmul.f32 %v2634, %v2749
        %v2756 = vmul.f32 %v2635, %v2749
        %v2757 = vmul.f32 %v2636, %v2749
        %v2758 = vmul.f32 %v2637, %v2749
        %v2759 = vmul.f32 %v2638, %v2749
        %v2760 = vmul.f32 %v2639, %v2749
        %v2761 = vmul.f32 %v2640, %v2749
        %v2762 = vmul.f32 %v2641, %v2749
        %v2763 = vmul.f32 %v2642, %v2749
        %v2764 = vmul.f32 %v2643, %v2749
        %v2765 = vmul.f32 %v2644, %v2749
        %v2766 = vmul.f32 %v2645, %v2749
        %v2767 = vmul.f32 %v2646, %v2749
        %v2768 = vmul.f32 %v2647, %v2749
        %v2769 = vmul.f32 %v2648, %v2749
        %v2770 = vmul.f32 %v2649, %v2749
        %v2771 = vmul.f32 %v2650, %v2749
        %v2772 = vmul.f32 %v2651, %v2749
        %v2773 = vmul.f32 %v2652, %v2749
        %v2774 = vmul.f32 %v2653, %v2749
        %v2775 = vmul.f32 %v2654, %v2749
        %v2776 = vmul.f32 %v2655, %v2749
        %v2777 = vmul.f32 %v2656, %v2749
        %v2778 = vmul.f32 %v2657, %v2749
        %v2779 = vmul.f32 %v2658, %v2749
        %v2780 = vmul.f32 %v2659, %v2749
        %v2781 = vmul.f32 %v2660, %v2749
        %v2782 = vadd.f32 %v2714, %v2750
        %v2783 = vadd.f32 %v2715, %v2751
        %v2784 = vadd.f32 %v2716, %v2752
        %v2785 = vadd.f32 %v2717, %v2753
        %v2786 = vadd.f32 %v2718, %v2754
        %v2787 = vadd.f32 %v2719, %v2755
        %v2788 = vadd.f32 %v2720, %v2756
        %v2789 = vadd.f32 %v2721, %v2757
        %v2790 = vadd.f32 %v2722, %v2758
        %v2791 = vadd.f32 %v2723, %v2759
        %v2792 = vadd.f32 %v2724, %v2760
        %v2793 = vadd.f32 %v2725, %v2761
        %v2794 = vadd.f32 %v2726, %v2762
        %v2795 = vadd.f32 %v2727, %v2763
        %v2796 = vadd.f32 %v2728, %v2764
        %v2797 = vadd.f32 %v2729, %v2765
        %v2798 = vadd.f32 %v2730, %v2766
        %v2799 = vadd.f32 %v2731, %v2767
        %v2800 = vadd.f32 %v2732, %v2768
        %v2801 = vadd.f32 %v2733, %v2769
        %v2802 = vadd.f32 %v2734, %v2770
        %v2803 = vadd.f32 %v2735, %v2771
        %v2804 = vadd.f32 %v2736, %v2772
        %v2805 = vadd.f32 %v2737, %v2773
        %v2806 = vadd.f32 %v2738, %v2774
        %v2807 = vadd.f32 %v2739, %v2775
        %v2808 = vadd.f32 %v2740, %v2776
        %v2809 = vadd.f32 %v2741, %v2777
        %v2810 = vadd.f32 %v2742, %v2778
        %v2811 = vadd.f32 %v2743, %v2779
        %v2812 = vadd.f32 %v2744, %v2780
        %v2813 = vadd.f32 %v2745, %v2781
        %v2814 = vlaneseq
        %v2815 = vshrl.u32 %v2814, 7
        %v2816 = vsub.s32 0, %v2815
        %v2817 = vrot.slane %v2673, %v2816
        %v2818 = vmul.f32 %v2631, %v2817
        %v2819 = vmul.f32 %v2632, %v2817
        %v2820 = vmul.f32 %v2633, %v2817
        %v2821 = vmul.f32 %v2634, %v2817
        %v2822 = vmul.f32 %v2635, %v2817
        %v2823 = vmul.f32 %v2636, %v2817
        %v2824 = vmul.f32 %v2637, %v2817
        %v2825 = vmul.f32 %v2638, %v2817
        %v2826 = vmul.f32 %v2639, %v2817
        %v2827 = vmul.f32 %v2640, %v2817
        %v2828 = vmul.f32 %v2641, %v2817
        %v2829 = vmul.f32 %v2642, %v2817
        %v2830 = vmul.f32 %v2643, %v2817
        %v2831 = vmul.f32 %v2644, %v2817
        %v2832 = vmul.f32 %v2645, %v2817
        %v2833 = vmul.f32 %v2646, %v2817
        %v2834 = vmul.f32 %v2647, %v2817
        %v2835 = vmul.f32 %v2648, %v2817
        %v2836 = vmul.f32 %v2649, %v2817
        %v2837 = vmul.f32 %v2650, %v2817
        %v2838 = vmul.f32 %v2651, %v2817
        %v2839 = vmul.f32 %v2652, %v2817
        %v2840 = vmul.f32 %v2653, %v2817
        %v2841 = vmul.f32 %v2654, %v2817
        %v2842 = vmul.f32 %v2655, %v2817
        %v2843 = vmul.f32 %v2656, %v2817
        %v2844 = vmul.f32 %v2657, %v2817
        %v2845 = vmul.f32 %v2658, %v2817
        %v2846 = vmul.f32 %v2659, %v2817
        %v2847 = vmul.f32 %v2660, %v2817
        %v2848 = vmul.f32 %v2661, %v2817
        %v2849 = vmul.f32 %v2662, %v2817
        %v2850 = vadd.f32 %v2782, %v2818
        %v2851 = vadd.f32 %v2783, %v2819
        %v2852 = vadd.f32 %v2784, %v2820
        %v2853 = vadd.f32 %v2785, %v2821
        %v2854 = vadd.f32 %v2786, %v2822
        %v2855 = vadd.f32 %v2787, %v2823
        %v2856 = vadd.f32 %v2788, %v2824
        %v2857 = vadd.f32 %v2789, %v2825
        %v2858 = vadd.f32 %v2790, %v2826
        %v2859 = vadd.f32 %v2791, %v2827
        %v2860 = vadd.f32 %v2792, %v2828
        %v2861 = vadd.f32 %v2793, %v2829
        %v2862 = vadd.f32 %v2794, %v2830
        %v2863 = vadd.f32 %v2795, %v2831
        %v2864 = vadd.f32 %v2796, %v2832
        %v2865 = vadd.f32 %v2797, %v2833
        %v2866 = vadd.f32 %v2798, %v2834
        %v2867 = vadd.f32 %v2799, %v2835
        %v2868 = vadd.f32 %v2800, %v2836
        %v2869 = vadd.f32 %v2801, %v2837
        %v2870 = vadd.f32 %v2802, %v2838
        %v2871 = vadd.f32 %v2803, %v2839
        %v2872 = vadd.f32 %v2804, %v2840
        %v2873 = vadd.f32 %v2805, %v2841
        %v2874 = vadd.f32 %v2806, %v2842
        %v2875 = vadd.f32 %v2807, %v2843
        %v2876 = vadd.f32 %v2808, %v2844
        %v2877 = vadd.f32 %v2809, %v2845
        %v2878 = vadd.f32 %v2810, %v2846
        %v2879 = vadd.f32 %v2811, %v2847
        %v2880 = vadd.f32 %v2812, %v2848
        %v2881 = vadd.f32 %v2813, %v2849
        %v2882 = vlaneseq
        %v2883 = vshrl.u32 %v2882, 7
        %v2884 = vsub.s32 0, %v2883
        %v2885 = vrot.slane %v2674, %v2884
        %v2886 = vmul.f32 %v2633, %v2885
        %v2887 = vmul.f32 %v2634, %v2885
        %v2888 = vmul.f32 %v2635, %v2885
        %v2889 = vmul.f32 %v2636, %v2885
        %v2890 = vmul.f32 %v2637, %v2885
        %v2891 = vmul.f32 %v2638, %v2885
        %v2892 = vmul.f32 %v2639, %v2885
        %v2893 = vmul.f32 %v2640, %v2885
        %v2894 = vmul.f32 %v2641, %v2885
        %v2895 = vmul.f32 %v2642, %v2885
        %v2896 = vmul.f32 %v2643, %v2885
        %v2897 = vmul.f32 %v2644, %v2885
        %v2898 = vmul.f32 %v2645, %v2885
        %v2899 = vmul.f32 %v2646, %v2885
        %v2900 = vmul.f32 %v2647, %v2885
        %v2901 = vmul.f32 %v2648, %v2885
        %v2902 = vmul.f32 %v2649, %v2885
        %v2903 = vmul.f32 %v2650, %v2885
        %v2904 = vmul.f32 %v2651, %v2885
        %v2905 = vmul.f32 %v2652, %v2885
        %v2906 = vmul.f32 %v2653, %v2885
        %v2907 = vmul.f32 %v2654, %v2885
        %v2908 = vmul.f32 %v2655, %v2885
        %v2909 = vmul.f32 %v2656, %v2885
        %v2910 = vmul.f32 %v2657, %v2885
        %v2911 = vmul.f32 %v2658, %v2885
        %v2912 = vmul.f32 %v2659, %v2885
        %v2913 = vmul.f32 %v2660, %v2885
        %v2914 = vmul.f32 %v2661, %v2885
        %v2915 = vmul.f32 %v2662, %v2885
        %v2916 = vmul.f32 %v2663, %v2885
        %v2917 = vmul.f32 %v2664, %v2885
        %v2918 = vadd.f32 %v2850, %v2886
        %v2919 = vadd.f32 %v2851, %v2887
        %v2920 = vadd.f32 %v2852, %v2888
        %v2921 = vadd.f32 %v2853, %v2889
        %v2922 = vadd.f32 %v2854, %v2890
        %v2923 = vadd.f32 %v2855, %v2891
        %v2924 = vadd.f32 %v2856, %v2892
        %v2925 = vadd.f32 %v2857, %v2893
        %v2926 = vadd.f32 %v2858, %v2894
        %v2927 = vadd.f32 %v2859, %v2895
        %v2928 = vadd.f32 %v2860, %v2896
        %v2929 = vadd.f32 %v2861, %v2897
        %v2930 = vadd.f32 %v2862, %v2898
        %v2931 = vadd.f32 %v2863, %v2899
        %v2932 = vadd.f32 %v2864, %v2900
        %v2933 = vadd.f32 %v2865, %v2901
        %v2934 = vadd.f32 %v2866, %v2902
        %v2935 = vadd.f32 %v2867, %v2903
        %v2936 = vadd.f32 %v2868, %v2904
        %v2937 = vadd.f32 %v2869, %v2905
        %v2938 = vadd.f32 %v2870, %v2906
        %v2939 = vadd.f32 %v2871, %v2907
        %v2940 = vadd.f32 %v2872, %v2908
        %v2941 = vadd.f32 %v2873, %v2909
        %v2942 = vadd.f32 %v2874, %v2910
        %v2943 = vadd.f32 %v2875, %v2911
        %v2944 = vadd.f32 %v2876, %v2912
        %v2945 = vadd.f32 %v2877, %v2913
        %v2946 = vadd.f32 %v2878, %v2914
        %v2947 = vadd.f32 %v2879, %v2915
        %v2948 = vadd.f32 %v2880, %v2916
        %v2949 = vadd.f32 %v2881, %v2917
        %v2950 = vlaneseq
        %v2951 = vshrl.u32 %v2950, 7
        %v2952 = vsub.s32 0, %v2951
        %v2953 = vrot.slane %v2675, %v2952
        %v2954 = vmul.f32 %v2635, %v2953
        %v2955 = vmul.f32 %v2636, %v2953
        %v2956 = vmul.f32 %v2637, %v2953
        %v2957 = vmul.f32 %v2638, %v2953
        %v2958 = vmul.f32 %v2639, %v2953
        %v2959 = vmul.f32 %v2640, %v2953
        %v2960 = vmul.f32 %v2641, %v2953
        %v2961 = vmul.f32 %v2642, %v2953
        %v2962 = vmul.f32 %v2643, %v2953
        %v2963 = vmul.f32 %v2644, %v2953
        %v2964 = vmul.f32 %v2645, %v2953
        %v2965 = vmul.f32 %v2646, %v2953
        %v2966 = vmul.f32 %v2647, %v2953
        %v2967 = vmul.f32 %v2648, %v2953
        %v2968 = vmul.f32 %v2649, %v2953
        %v2969 = vmul.f32 %v2650, %v2953
        %v2970 = vmul.f32 %v2651, %v2953
        %v2971 = vmul.f32 %v2652, %v2953
        %v2972 = vmul.f32 %v2653, %v2953
        %v2973 = vmul.f32 %v2654, %v2953
        %v2974 = vmul.f32 %v2655, %v2953
        %v2975 = vmul.f32 %v2656, %v2953
        %v2976 = vmul.f32 %v2657, %v2953
        %v2977 = vmul.f32 %v2658, %v2953
        %v2978 = vmul.f32 %v2659, %v2953
        %v2979 = vmul.f32 %v2660, %v2953
        %v2980 = vmul.f32 %v2661, %v2953
        %v2981 = vmul.f32 %v2662, %v2953
        %v2982 = vmul.f32 %v2663, %v2953
        %v2983 = vmul.f32 %v2664, %v2953
        %v2984 = vmul.f32 %v2665, %v2953
        %v2985 = vmul.f32 %v2666, %v2953
        %v2986 = vadd.f32 %v2918, %v2954
        %v2987 = vadd.f32 %v2919, %v2955
        %v2988 = vadd.f32 %v2920, %v2956
        %v2989 = vadd.f32 %v2921, %v2957
        %v2990 = vadd.f32 %v2922, %v2958
        %v2991 = vadd.f32 %v2923, %v2959
        %v2992 = vadd.f32 %v2924, %v2960
        %v2993 = vadd.f32 %v2925, %v2961
        %v2994 = vadd.f32 %v2926, %v2962
        %v2995 = vadd.f32 %v2927, %v2963
        %v2996 = vadd.f32 %v2928, %v2964
        %v2997 = vadd.f32 %v2929, %v2965
        %v2998 = vadd.f32 %v2930, %v2966
        %v2999 = vadd.f32 %v2931, %v2967
        %v3000 = vadd.f32 %v2932, %v2968
        %v3001 = vadd.f32 %v2933, %v2969
        %v3002 = vadd.f32 %v2934, %v2970
        %v3003 = vadd.f32 %v2935, %v2971
        %v3004 = vadd.f32 %v2936, %v2972
        %v3005 = vadd.f32 %v2937, %v2973
        %v3006 = vadd.f32 %v2938, %v2974
        %v3007 = vadd.f32 %v2939, %v2975
        %v3008 = vadd.f32 %v2940, %v2976
        %v3009 = vadd.f32 %v2941, %v2977
        %v3010 = vadd.f32 %v2942, %v2978
        %v3011 = vadd.f32 %v2943, %v2979
        %v3012 = vadd.f32 %v2944, %v2980
        %v3013 = vadd.f32 %v2945, %v2981
        %v3014 = vadd.f32 %v2946, %v2982
        %v3015 = vadd.f32 %v2947, %v2983
        %v3016 = vadd.f32 %v2948, %v2984
        %v3017 = vadd.f32 %v2949, %v2985
        %v3018 = vlaneseq
        %v3019 = vshrl.u32 %v3018, 7
        %v3020 = vsub.s32 0, %v3019
        %v3021 = vrot.slane %v2676, %v3020
        %v3022 = vmul.f32 %v2637, %v3021
        %v3023 = vmul.f32 %v2638, %v3021
        %v3024 = vmul.f32 %v2639, %v3021
        %v3025 = vmul.f32 %v2640, %v3021
        %v3026 = vmul.f32 %v2641, %v3021
        %v3027 = vmul.f32 %v2642, %v3021
        %v3028 = vmul.f32 %v2643, %v3021
        %v3029 = vmul.f32 %v2644, %v3021
        %v3030 = vmul.f32 %v2645, %v3021
        %v3031 = vmul.f32 %v2646, %v3021
        %v3032 = vmul.f32 %v2647, %v3021
        %v3033 = vmul.f32 %v2648, %v3021
        %v3034 = vmul.f32 %v2649, %v3021
        %v3035 = vmul.f32 %v2650, %v3021
        %v3036 = vmul.f32 %v2651, %v3021
        %v3037 = vmul.f32 %v2652, %v3021
        %v3038 = vmul.f32 %v2653, %v3021
        %v3039 = vmul.f32 %v2654, %v3021
        %v3040 = vmul.f32 %v2655, %v3021
        %v3041 = vmul.f32 %v2656, %v3021
        %v3042 = vmul.f32 %v2657, %v3021
        %v3043 = vmul.f32 %v2658, %v3021
        %v3044 = vmul.f32 %v2659, %v3021
        %v3045 = vmul.f32 %v2660, %v3021
        %v3046 = vmul.f32 %v2661, %v3021
        %v3047 = vmul.f32 %v2662, %v3021
        %v3048 = vmul.f32 %v2663, %v3021
        %v3049 = vmul.f32 %v2664, %v3021
        %v3050 = vmul.f32 %v2665, %v3021
        %v3051 = vmul.f32 %v2666, %v3021
        %v3052 = vmul.f32 %v2667, %v3021
        %v3053 = vmul.f32 %v2668, %v3021
        %v3054 = vadd.f32 %v2986, %v3022
        %v3055 = vadd.f32 %v2987, %v3023
        %v3056 = vadd.f32 %v2988, %v3024
        %v3057 = vadd.f32 %v2989, %v3025
        %v3058 = vadd.f32 %v2990, %v3026
        %v3059 = vadd.f32 %v2991, %v3027
        %v3060 = vadd.f32 %v2992, %v3028
        %v3061 = vadd.f32 %v2993, %v3029
        %v3062 = vadd.f32 %v2994, %v3030
        %v3063 = vadd.f32 %v2995, %v3031
        %v3064 = vadd.f32 %v2996, %v3032
        %v3065 = vadd.f32 %v2997, %v3033
        %v3066 = vadd.f32 %v2998, %v3034
        %v3067 = vadd.f32 %v2999, %v3035
        %v3068 = vadd.f32 %v3000, %v3036
        %v3069 = vadd.f32 %v3001, %v3037
        %v3070 = vadd.f32 %v3002, %v3038
        %v3071 = vadd.f32 %v3003, %v3039
        %v3072 = vadd.f32 %v3004, %v3040
        %v3073 = vadd.f32 %v3005, %v3041
        %v3074 = vadd.f32 %v3006, %v3042
        %v3075 = vadd.f32 %v3007, %v3043
        %v3076 = vadd.f32 %v3008, %v3044
        %v3077 = vadd.f32 %v3009, %v3045
        %v3078 = vadd.f32 %v3010, %v3046
        %v3079 = vadd.f32 %v3011, %v3047
        %v3080 = vadd.f32 %v3012, %v3048
        %v3081 = vadd.f32 %v3013, %v3049
        %v3082 = vadd.f32 %v3014, %v3050
        %v3083 = vadd.f32 %v3015, %v3051
        %v3084 = vadd.f32 %v3016, %v3052
        %v3085 = vadd.f32 %v3017, %v3053
        %v3086 = vlaneseq
        %v3087 = vshrl.u32 %v3086, 7
        %v3088 = vsub.s32 0, %v3087
        %v3089 = vrot.slane %v2677, %v3088
        %v3090 = vmul.f32 %v2639, %v3089
        %v3091 = vmul.f32 %v2640, %v3089
        %v3092 = vmul.f32 %v2641, %v3089
        %v3093 = vmul.f32 %v2642, %v3089
        %v3094 = vmul.f32 %v2643, %v3089
        %v3095 = vmul.f32 %v2644, %v3089
        %v3096 = vmul.f32 %v2645, %v3089
        %v3097 = vmul.f32 %v2646, %v3089
        %v3098 = vmul.f32 %v2647, %v3089
        %v3099 = vmul.f32 %v2648, %v3089
        %v3100 = vmul.f32 %v2649, %v3089
        %v3101 = vmul.f32 %v2650, %v3089
        %v3102 = vmul.f32 %v2651, %v3089
        %v3103 = vmul.f32 %v2652, %v3089
        %v3104 = vmul.f32 %v2653, %v3089
        %v3105 = vmul.f32 %v2654, %v3089
        %v3106 = vmul.f32 %v2655, %v3089
        %v3107 = vmul.f32 %v2656, %v3089
        %v3108 = vmul.f32 %v2657, %v3089
        %v3109 = vmul.f32 %v2658, %v3089
        %v3110 = vmul.f32 %v2659, %v3089
        %v3111 = vmul.f32 %v2660, %v3089
        %v3112 = vmul.f32 %v2661, %v3089
        %v3113 = vmul.f32 %v2662, %v3089
        %v3114 = vmul.f32 %v2663, %v3089
        %v3115 = vmul.f32 %v2664, %v3089
        %v3116 = vmul.f32 %v2665, %v3089
        %v3117 = vmul.f32 %v2666, %v3089
        %v3118 = vmul.f32 %v2667, %v3089
        %v3119 = vmul.f32 %v2668, %v3089
        %v3120 = vmul.f32 %v2669, %v3089
        %v3121 = vmul.f32 %v2670, %v3089
        %v3122 = vadd.f32 %v3054, %v3090
        %v3123 = vadd.f32 %v3055, %v3091
        %v3124 = vadd.f32 %v3056, %v3092
        %v3125 = vadd.f32 %v3057, %v3093
        %v3126 = vadd.f32 %v3058, %v3094
        %v3127 = vadd.f32 %v3059, %v3095
        %v3128 = vadd.f32 %v3060, %v3096
        %v3129 = vadd.f32 %v3061, %v3097
        %v3130 = vadd.f32 %v3062, %v3098
        %v3131 = vadd.f32 %v3063, %v3099
        %v3132 = vadd.f32 %v3064, %v3100
        %v3133 = vadd.f32 %v3065, %v3101
        %v3134 = vadd.f32 %v3066, %v3102
        %v3135 = vadd.f32 %v3067, %v3103
        %v3136 = vadd.f32 %v3068, %v3104
        %v3137 = vadd.f32 %v3069, %v3105
        %v3138 = vadd.f32 %v3070, %v3106
        %v3139 = vadd.f32 %v3071, %v3107
        %v3140 = vadd.f32 %v3072, %v3108
        %v3141 = vadd.f32 %v3073, %v3109
        %v3142 = vadd.f32 %v3074, %v3110
        %v3143 = vadd.f32 %v3075, %v3111
        %v3144 = vadd.f32 %v3076, %v3112
        %v3145 = vadd.f32 %v3077, %v3113
        %v3146 = vadd.f32 %v3078, %v3114
        %v3147 = vadd.f32 %v3079, %v3115
        %v3148 = vadd.f32 %v3080, %v3116
        %v3149 = vadd.f32 %v3081, %v3117
        %v3150 = vadd.f32 %v3082, %v3118
        %v3151 = vadd.f32 %v3083, %v3119
        %v3152 = vadd.f32 %v3084, %v3120
        %v3153 = vadd.f32 %v3085, %v3121
        %v3154 = vld [vmem:[#allocation2 + $0x5] sm:$0xff]
        %v3155 = vld [vmem:[#allocation2 + $0xd] sm:$0xff]
        %v3156 = vld [vmem:[#allocation2 + $0x1d] sm:$0xff]
        %v3157 = vld [vmem:[#allocation2 + $0x25] sm:$0xff]
        %v3158 = vld [vmem:[#allocation2 + $0x35] sm:$0xff]
        %v3159 = vld [vmem:[#allocation2 + $0x3d] sm:$0xff]
        %v3160 = vld [vmem:[#allocation2 + $0x4d] sm:$0xff]
        %v3161 = vld [vmem:[#allocation2 + $0x55] sm:$0xff]
        %v3162 = vld [vmem:[#allocation2 + $0x65] sm:$0xff]
        %v3163 = vld [vmem:[#allocation2 + $0x6d] sm:$0xff]
        %v3164 = vld [vmem:[#allocation2 + $0x7d] sm:$0xff]
        %v3165 = vld [vmem:[#allocation2 + $0x85] sm:$0xff]
        %v3166 = vld [vmem:[#allocation2 + $0x95] sm:$0xff]
        %v3167 = vld [vmem:[#allocation2 + $0x9d] sm:$0xff]
        %v3168 = vld [vmem:[#allocation2 + $0xad] sm:$0xff]
        %v3169 = vld [vmem:[#allocation2 + $0xb5] sm:$0xff]
        %v3170 = vld [vmem:[#allocation2 + $0xc5] sm:$0xff]
        %v3171 = vld [vmem:[#allocation2 + $0xcd] sm:$0xff]
        %v3172 = vld [vmem:[#allocation2 + $0xdd] sm:$0xff]
        %v3173 = vld [vmem:[#allocation2 + $0xe5] sm:$0xff]
        %v3174 = vld [vmem:[#allocation2 + $0xf5] sm:$0xff]
        %v3175 = vld [vmem:[#allocation2 + $0xfd] sm:$0xff]
        %v3176 = vld [vmem:[#allocation2 + $0x10d] sm:$0xff]
        %v3177 = vld [vmem:[#allocation2 + $0x115] sm:$0xff]
        %v3178 = vld [vmem:[#allocation2 + $0x125] sm:$0xff]
        %v3179 = vld [vmem:[#allocation2 + $0x12d] sm:$0xff]
        %v3180 = vld [vmem:[#allocation2 + $0x13d] sm:$0xff]
        %v3181 = vld [vmem:[#allocation2 + $0x145] sm:$0xff]
        %v3182 = vld [vmem:[#allocation2 + $0x155] sm:$0xff]
        %v3183 = vld [vmem:[#allocation2 + $0x15d] sm:$0xff]
        %v3184 = vld [vmem:[#allocation2 + $0x16d] sm:$0xff]
        %v3185 = vld [vmem:[#allocation2 + $0x175] sm:$0xff]
        %v3186 = vld [vmem:[#allocation2 + $0x185] sm:$0xff]
        %v3187 = vld [vmem:[#allocation2 + $0x18d] sm:$0xff]
        %v3188 = vld [vmem:[#allocation2 + $0x19d] sm:$0xff]
        %v3189 = vld [vmem:[#allocation2 + $0x1a5] sm:$0xff]
        %v3190 = vld [vmem:[#allocation2 + $0x1b5] sm:$0xff]
        %v3191 = vld [vmem:[#allocation2 + $0x1bd] sm:$0xff]
        %v3192 = vld [vmem:[#allocation2 + $0x1cd] sm:$0xff]
        %v3193 = vld [vmem:[#allocation2 + $0x1d5] sm:$0xff]
        %v3194 = vld [vmem:[#allocation2 + $0x1e5] sm:$0xff]
        %v3195 = vld [vmem:[#allocation2 + $0x1ed] sm:$0xff]
        %v3196 = vld [vmem:[#allocation2 + $0x1fd] sm:$0xff]
        %v3197 = vld [vmem:[#allocation2 + $0x205] sm:$0xff]
        %v3198 = vld [vmem:[#allocation6 + $0x5] sm:$0x1]
        %v3199 = vld [vmem:[#allocation6 + $0xd] sm:$0x1]
        %v3200 = vld [vmem:[#allocation6 + $0x15] sm:$0x1]
        %v3201 = vld [vmem:[#allocation6 + $0x1d] sm:$0x1]
        %v3202 = vld [vmem:[#allocation6 + $0x25] sm:$0x1]
        %v3203 = vld [vmem:[#allocation6 + $0x2d] sm:$0x1]
        %v3204 = vld [vmem:[#allocation6 + $0x35] sm:$0x1]
        %v3205 = vlaneseq
        %v3206 = vshrl.u32 %v3205, 7
        %v3207 = vsub.s32 0, %v3206
        %v3208 = vrot.slane %v3198, %v3207
        %v3209 = vmul.f32 %v3154, %v3208
        %v3210 = vmul.f32 %v3155, %v3208
        %v3211 = vmul.f32 %v3156, %v3208
        %v3212 = vmul.f32 %v3157, %v3208
        %v3213 = vmul.f32 %v3158, %v3208
        %v3214 = vmul.f32 %v3159, %v3208
        %v3215 = vmul.f32 %v3160, %v3208
        %v3216 = vmul.f32 %v3161, %v3208
        %v3217 = vmul.f32 %v3162, %v3208
        %v3218 = vmul.f32 %v3163, %v3208
        %v3219 = vmul.f32 %v3164, %v3208
        %v3220 = vmul.f32 %v3165, %v3208
        %v3221 = vmul.f32 %v3166, %v3208
        %v3222 = vmul.f32 %v3167, %v3208
        %v3223 = vmul.f32 %v3168, %v3208
        %v3224 = vmul.f32 %v3169, %v3208
        %v3225 = vmul.f32 %v3170, %v3208
        %v3226 = vmul.f32 %v3171, %v3208
        %v3227 = vmul.f32 %v3172, %v3208
        %v3228 = vmul.f32 %v3173, %v3208
        %v3229 = vmul.f32 %v3174, %v3208
        %v3230 = vmul.f32 %v3175, %v3208
        %v3231 = vmul.f32 %v3176, %v3208
        %v3232 = vmul.f32 %v3177, %v3208
        %v3233 = vmul.f32 %v3178, %v3208
        %v3234 = vmul.f32 %v3179, %v3208
        %v3235 = vmul.f32 %v3180, %v3208
        %v3236 = vmul.f32 %v3181, %v3208
        %v3237 = vmul.f32 %v3182, %v3208
        %v3238 = vmul.f32 %v3183, %v3208
        %v3239 = vmul.f32 %v3184, %v3208
        %v3240 = vmul.f32 %v3185, %v3208
        %v3241 = vadd.f32 %v3122, %v3209
        %v3242 = vadd.f32 %v3123, %v3210
        %v3243 = vadd.f32 %v3124, %v3211
        %v3244 = vadd.f32 %v3125, %v3212
        %v3245 = vadd.f32 %v3126, %v3213
        %v3246 = vadd.f32 %v3127, %v3214
        %v3247 = vadd.f32 %v3128, %v3215
        %v3248 = vadd.f32 %v3129, %v3216
        %v3249 = vadd.f32 %v3130, %v3217
        %v3250 = vadd.f32 %v3131, %v3218
        %v3251 = vadd.f32 %v3132, %v3219
        %v3252 = vadd.f32 %v3133, %v3220
        %v3253 = vadd.f32 %v3134, %v3221
        %v3254 = vadd.f32 %v3135, %v3222
        %v3255 = vadd.f32 %v3136, %v3223
        %v3256 = vadd.f32 %v3137, %v3224
        %v3257 = vadd.f32 %v3138, %v3225
        %v3258 = vadd.f32 %v3139, %v3226
        %v3259 = vadd.f32 %v3140, %v3227
        %v3260 = vadd.f32 %v3141, %v3228
        %v3261 = vadd.f32 %v3142, %v3229
        %v3262 = vadd.f32 %v3143, %v3230
        %v3263 = vadd.f32 %v3144, %v3231
        %v3264 = vadd.f32 %v3145, %v3232
        %v3265 = vadd.f32 %v3146, %v3233
        %v3266 = vadd.f32 %v3147, %v3234
        %v3267 = vadd.f32 %v3148, %v3235
        %v3268 = vadd.f32 %v3149, %v3236
        %v3269 = vadd.f32 %v3150, %v3237
        %v3270 = vadd.f32 %v3151, %v3238
        %v3271 = vadd.f32 %v3152, %v3239
        %v3272 = vadd.f32 %v3153, %v3240
        %v3273 = vlaneseq
        %v3274 = vshrl.u32 %v3273, 7
        %v3275 = vsub.s32 0, %v3274
        %v3276 = vrot.slane %v3199, %v3275
        %v3277 = vmul.f32 %v3156, %v3276
        %v3278 = vmul.f32 %v3157, %v3276
        %v3279 = vmul.f32 %v3158, %v3276
        %v3280 = vmul.f32 %v3159, %v3276
        %v3281 = vmul.f32 %v3160, %v3276
        %v3282 = vmul.f32 %v3161, %v3276
        %v3283 = vmul.f32 %v3162, %v3276
        %v3284 = vmul.f32 %v3163, %v3276
        %v3285 = vmul.f32 %v3164, %v3276
        %v3286 = vmul.f32 %v3165, %v3276
        %v3287 = vmul.f32 %v3166, %v3276
        %v3288 = vmul.f32 %v3167, %v3276
        %v3289 = vmul.f32 %v3168, %v3276
        %v3290 = vmul.f32 %v3169, %v3276
        %v3291 = vmul.f32 %v3170, %v3276
        %v3292 = vmul.f32 %v3171, %v3276
        %v3293 = vmul.f32 %v3172, %v3276
        %v3294 = vmul.f32 %v3173, %v3276
        %v3295 = vmul.f32 %v3174, %v3276
        %v3296 = vmul.f32 %v3175, %v3276
        %v3297 = vmul.f32 %v3176, %v3276
        %v3298 = vmul.f32 %v3177, %v3276
        %v3299 = vmul.f32 %v3178, %v3276
        %v3300 = vmul.f32 %v3179, %v3276
        %v3301 = vmul.f32 %v3180, %v3276
        %v3302 = vmul.f32 %v3181, %v3276
        %v3303 = vmul.f32 %v3182, %v3276
        %v3304 = vmul.f32 %v3183, %v3276
        %v3305 = vmul.f32 %v3184, %v3276
        %v3306 = vmul.f32 %v3185, %v3276
        %v3307 = vmul.f32 %v3186, %v3276
        %v3308 = vmul.f32 %v3187, %v3276
        %v3309 = vadd.f32 %v3241, %v3277
        %v3310 = vadd.f32 %v3242, %v3278
        %v3311 = vadd.f32 %v3243, %v3279
        %v3312 = vadd.f32 %v3244, %v3280
        %v3313 = vadd.f32 %v3245, %v3281
        %v3314 = vadd.f32 %v3246, %v3282
        %v3315 = vadd.f32 %v3247, %v3283
        %v3316 = vadd.f32 %v3248, %v3284
        %v3317 = vadd.f32 %v3249, %v3285
        %v3318 = vadd.f32 %v3250, %v3286
        %v3319 = vadd.f32 %v3251, %v3287
        %v3320 = vadd.f32 %v3252, %v3288
        %v3321 = vadd.f32 %v3253, %v3289
        %v3322 = vadd.f32 %v3254, %v3290
        %v3323 = vadd.f32 %v3255, %v3291
        %v3324 = vadd.f32 %v3256, %v3292
        %v3325 = vadd.f32 %v3257, %v3293
        %v3326 = vadd.f32 %v3258, %v3294
        %v3327 = vadd.f32 %v3259, %v3295
        %v3328 = vadd.f32 %v3260, %v3296
        %v3329 = vadd.f32 %v3261, %v3297
        %v3330 = vadd.f32 %v3262, %v3298
        %v3331 = vadd.f32 %v3263, %v3299
        %v3332 = vadd.f32 %v3264, %v3300
        %v3333 = vadd.f32 %v3265, %v3301
        %v3334 = vadd.f32 %v3266, %v3302
        %v3335 = vadd.f32 %v3267, %v3303
        %v3336 = vadd.f32 %v3268, %v3304
        %v3337 = vadd.f32 %v3269, %v3305
        %v3338 = vadd.f32 %v3270, %v3306
        %v3339 = vadd.f32 %v3271, %v3307
        %v3340 = vadd.f32 %v3272, %v3308
        %v3341 = vlaneseq
        %v3342 = vshrl.u32 %v3341, 7
        %v3343 = vsub.s32 0, %v3342
        %v3344 = vrot.slane %v3200, %v3343
        %v3345 = vmul.f32 %v3158, %v3344
        %v3346 = vmul.f32 %v3159, %v3344
        %v3347 = vmul.f32 %v3160, %v3344
        %v3348 = vmul.f32 %v3161, %v3344
        %v3349 = vmul.f32 %v3162, %v3344
        %v3350 = vmul.f32 %v3163, %v3344
        %v3351 = vmul.f32 %v3164, %v3344
        %v3352 = vmul.f32 %v3165, %v3344
        %v3353 = vmul.f32 %v3166, %v3344
        %v3354 = vmul.f32 %v3167, %v3344
        %v3355 = vmul.f32 %v3168, %v3344
        %v3356 = vmul.f32 %v3169, %v3344
        %v3357 = vmul.f32 %v3170, %v3344
        %v3358 = vmul.f32 %v3171, %v3344
        %v3359 = vmul.f32 %v3172, %v3344
        %v3360 = vmul.f32 %v3173, %v3344
        %v3361 = vmul.f32 %v3174, %v3344
        %v3362 = vmul.f32 %v3175, %v3344
        %v3363 = vmul.f32 %v3176, %v3344
        %v3364 = vmul.f32 %v3177, %v3344
        %v3365 = vmul.f32 %v3178, %v3344
        %v3366 = vmul.f32 %v3179, %v3344
        %v3367 = vmul.f32 %v3180, %v3344
        %v3368 = vmul.f32 %v3181, %v3344
        %v3369 = vmul.f32 %v3182, %v3344
        %v3370 = vmul.f32 %v3183, %v3344
        %v3371 = vmul.f32 %v3184, %v3344
        %v3372 = vmul.f32 %v3185, %v3344
        %v3373 = vmul.f32 %v3186, %v3344
        %v3374 = vmul.f32 %v3187, %v3344
        %v3375 = vmul.f32 %v3188, %v3344
        %v3376 = vmul.f32 %v3189, %v3344
        %v3377 = vadd.f32 %v3309, %v3345
        %v3378 = vadd.f32 %v3310, %v3346
        %v3379 = vadd.f32 %v3311, %v3347
        %v3380 = vadd.f32 %v3312, %v3348
        %v3381 = vadd.f32 %v3313, %v3349
        %v3382 = vadd.f32 %v3314, %v3350
        %v3383 = vadd.f32 %v3315, %v3351
        %v3384 = vadd.f32 %v3316, %v3352
        %v3385 = vadd.f32 %v3317, %v3353
        %v3386 = vadd.f32 %v3318, %v3354
        %v3387 = vadd.f32 %v3319, %v3355
        %v3388 = vadd.f32 %v3320, %v3356
        %v3389 = vadd.f32 %v3321, %v3357
        %v3390 = vadd.f32 %v3322, %v3358
        %v3391 = vadd.f32 %v3323, %v3359
        %v3392 = vadd.f32 %v3324, %v3360
        %v3393 = vadd.f32 %v3325, %v3361
        %v3394 = vadd.f32 %v3326, %v3362
        %v3395 = vadd.f32 %v3327, %v3363
        %v3396 = vadd.f32 %v3328, %v3364
        %v3397 = vadd.f32 %v3329, %v3365
        %v3398 = vadd.f32 %v3330, %v3366
        %v3399 = vadd.f32 %v3331, %v3367
        %v3400 = vadd.f32 %v3332, %v3368
        %v3401 = vadd.f32 %v3333, %v3369
        %v3402 = vadd.f32 %v3334, %v3370
        %v3403 = vadd.f32 %v3335, %v3371
        %v3404 = vadd.f32 %v3336, %v3372
        %v3405 = vadd.f32 %v3337, %v3373
        %v3406 = vadd.f32 %v3338, %v3374
        %v3407 = vadd.f32 %v3339, %v3375
        %v3408 = vadd.f32 %v3340, %v3376
        %v3409 = vlaneseq
        %v3410 = vshrl.u32 %v3409, 7
        %v3411 = vsub.s32 0, %v3410
        %v3412 = vrot.slane %v3201, %v3411
        %v3413 = vmul.f32 %v3160, %v3412
        %v3414 = vmul.f32 %v3161, %v3412
        %v3415 = vmul.f32 %v3162, %v3412
        %v3416 = vmul.f32 %v3163, %v3412
        %v3417 = vmul.f32 %v3164, %v3412
        %v3418 = vmul.f32 %v3165, %v3412
        %v3419 = vmul.f32 %v3166, %v3412
        %v3420 = vmul.f32 %v3167, %v3412
        %v3421 = vmul.f32 %v3168, %v3412
        %v3422 = vmul.f32 %v3169, %v3412
        %v3423 = vmul.f32 %v3170, %v3412
        %v3424 = vmul.f32 %v3171, %v3412
        %v3425 = vmul.f32 %v3172, %v3412
        %v3426 = vmul.f32 %v3173, %v3412
        %v3427 = vmul.f32 %v3174, %v3412
        %v3428 = vmul.f32 %v3175, %v3412
        %v3429 = vmul.f32 %v3176, %v3412
        %v3430 = vmul.f32 %v3177, %v3412
        %v3431 = vmul.f32 %v3178, %v3412
        %v3432 = vmul.f32 %v3179, %v3412
        %v3433 = vmul.f32 %v3180, %v3412
        %v3434 = vmul.f32 %v3181, %v3412
        %v3435 = vmul.f32 %v3182, %v3412
        %v3436 = vmul.f32 %v3183, %v3412
        %v3437 = vmul.f32 %v3184, %v3412
        %v3438 = vmul.f32 %v3185, %v3412
        %v3439 = vmul.f32 %v3186, %v3412
        %v3440 = vmul.f32 %v3187, %v3412
        %v3441 = vmul.f32 %v3188, %v3412
        %v3442 = vmul.f32 %v3189, %v3412
        %v3443 = vmul.f32 %v3190, %v3412
        %v3444 = vmul.f32 %v3191, %v3412
        %v3445 = vadd.f32 %v3377, %v3413
        %v3446 = vadd.f32 %v3378, %v3414
        %v3447 = vadd.f32 %v3379, %v3415
        %v3448 = vadd.f32 %v3380, %v3416
        %v3449 = vadd.f32 %v3381, %v3417
        %v3450 = vadd.f32 %v3382, %v3418
        %v3451 = vadd.f32 %v3383, %v3419
        %v3452 = vadd.f32 %v3384, %v3420
        %v3453 = vadd.f32 %v3385, %v3421
        %v3454 = vadd.f32 %v3386, %v3422
        %v3455 = vadd.f32 %v3387, %v3423
        %v3456 = vadd.f32 %v3388, %v3424
        %v3457 = vadd.f32 %v3389, %v3425
        %v3458 = vadd.f32 %v3390, %v3426
        %v3459 = vadd.f32 %v3391, %v3427
        %v3460 = vadd.f32 %v3392, %v3428
        %v3461 = vadd.f32 %v3393, %v3429
        %v3462 = vadd.f32 %v3394, %v3430
        %v3463 = vadd.f32 %v3395, %v3431
        %v3464 = vadd.f32 %v3396, %v3432
        %v3465 = vadd.f32 %v3397, %v3433
        %v3466 = vadd.f32 %v3398, %v3434
        %v3467 = vadd.f32 %v3399, %v3435
        %v3468 = vadd.f32 %v3400, %v3436
        %v3469 = vadd.f32 %v3401, %v3437
        %v3470 = vadd.f32 %v3402, %v3438
        %v3471 = vadd.f32 %v3403, %v3439
        %v3472 = vadd.f32 %v3404, %v3440
        %v3473 = vadd.f32 %v3405, %v3441
        %v3474 = vadd.f32 %v3406, %v3442
        %v3475 = vadd.f32 %v3407, %v3443
        %v3476 = vadd.f32 %v3408, %v3444
        %v3477 = vlaneseq
        %v3478 = vshrl.u32 %v3477, 7
        %v3479 = vsub.s32 0, %v3478
        %v3480 = vrot.slane %v3202, %v3479
        %v3481 = vmul.f32 %v3162, %v3480
        %v3482 = vmul.f32 %v3163, %v3480
        %v3483 = vmul.f32 %v3164, %v3480
        %v3484 = vmul.f32 %v3165, %v3480
        %v3485 = vmul.f32 %v3166, %v3480
        %v3486 = vmul.f32 %v3167, %v3480
        %v3487 = vmul.f32 %v3168, %v3480
        %v3488 = vmul.f32 %v3169, %v3480
        %v3489 = vmul.f32 %v3170, %v3480
        %v3490 = vmul.f32 %v3171, %v3480
        %v3491 = vmul.f32 %v3172, %v3480
        %v3492 = vmul.f32 %v3173, %v3480
        %v3493 = vmul.f32 %v3174, %v3480
        %v3494 = vmul.f32 %v3175, %v3480
        %v3495 = vmul.f32 %v3176, %v3480
        %v3496 = vmul.f32 %v3177, %v3480
        %v3497 = vmul.f32 %v3178, %v3480
        %v3498 = vmul.f32 %v3179, %v3480
        %v3499 = vmul.f32 %v3180, %v3480
        %v3500 = vmul.f32 %v3181, %v3480
        %v3501 = vmul.f32 %v3182, %v3480
        %v3502 = vmul.f32 %v3183, %v3480
        %v3503 = vmul.f32 %v3184, %v3480
        %v3504 = vmul.f32 %v3185, %v3480
        %v3505 = vmul.f32 %v3186, %v3480
        %v3506 = vmul.f32 %v3187, %v3480
        %v3507 = vmul.f32 %v3188, %v3480
        %v3508 = vmul.f32 %v3189, %v3480
        %v3509 = vmul.f32 %v3190, %v3480
        %v3510 = vmul.f32 %v3191, %v3480
        %v3511 = vmul.f32 %v3192, %v3480
        %v3512 = vmul.f32 %v3193, %v3480
        %v3513 = vadd.f32 %v3445, %v3481
        %v3514 = vadd.f32 %v3446, %v3482
        %v3515 = vadd.f32 %v3447, %v3483
        %v3516 = vadd.f32 %v3448, %v3484
        %v3517 = vadd.f32 %v3449, %v3485
        %v3518 = vadd.f32 %v3450, %v3486
        %v3519 = vadd.f32 %v3451, %v3487
        %v3520 = vadd.f32 %v3452, %v3488
        %v3521 = vadd.f32 %v3453, %v3489
        %v3522 = vadd.f32 %v3454, %v3490
        %v3523 = vadd.f32 %v3455, %v3491
        %v3524 = vadd.f32 %v3456, %v3492
        %v3525 = vadd.f32 %v3457, %v3493
        %v3526 = vadd.f32 %v3458, %v3494
        %v3527 = vadd.f32 %v3459, %v3495
        %v3528 = vadd.f32 %v3460, %v3496
        %v3529 = vadd.f32 %v3461, %v3497
        %v3530 = vadd.f32 %v3462, %v3498
        %v3531 = vadd.f32 %v3463, %v3499
        %v3532 = vadd.f32 %v3464, %v3500
        %v3533 = vadd.f32 %v3465, %v3501
        %v3534 = vadd.f32 %v3466, %v3502
        %v3535 = vadd.f32 %v3467, %v3503
        %v3536 = vadd.f32 %v3468, %v3504
        %v3537 = vadd.f32 %v3469, %v3505
        %v3538 = vadd.f32 %v3470, %v3506
        %v3539 = vadd.f32 %v3471, %v3507
        %v3540 = vadd.f32 %v3472, %v3508
        %v3541 = vadd.f32 %v3473, %v3509
        %v3542 = vadd.f32 %v3474, %v3510
        %v3543 = vadd.f32 %v3475, %v3511
        %v3544 = vadd.f32 %v3476, %v3512
        %v3545 = vlaneseq
        %v3546 = vshrl.u32 %v3545, 7
        %v3547 = vsub.s32 0, %v3546
        %v3548 = vrot.slane %v3203, %v3547
        %v3549 = vmul.f32 %v3164, %v3548
        %v3550 = vmul.f32 %v3165, %v3548
        %v3551 = vmul.f32 %v3166, %v3548
        %v3552 = vmul.f32 %v3167, %v3548
        %v3553 = vmul.f32 %v3168, %v3548
        %v3554 = vmul.f32 %v3169, %v3548
        %v3555 = vmul.f32 %v3170, %v3548
        %v3556 = vmul.f32 %v3171, %v3548
        %v3557 = vmul.f32 %v3172, %v3548
        %v3558 = vmul.f32 %v3173, %v3548
        %v3559 = vmul.f32 %v3174, %v3548
        %v3560 = vmul.f32 %v3175, %v3548
        %v3561 = vmul.f32 %v3176, %v3548
        %v3562 = vmul.f32 %v3177, %v3548
        %v3563 = vmul.f32 %v3178, %v3548
        %v3564 = vmul.f32 %v3179, %v3548
        %v3565 = vmul.f32 %v3180, %v3548
        %v3566 = vmul.f32 %v3181, %v3548
        %v3567 = vmul.f32 %v3182, %v3548
        %v3568 = vmul.f32 %v3183, %v3548
        %v3569 = vmul.f32 %v3184, %v3548
        %v3570 = vmul.f32 %v3185, %v3548
        %v3571 = vmul.f32 %v3186, %v3548
        %v3572 = vmul.f32 %v3187, %v3548
        %v3573 = vmul.f32 %v3188, %v3548
        %v3574 = vmul.f32 %v3189, %v3548
        %v3575 = vmul.f32 %v3190, %v3548
        %v3576 = vmul.f32 %v3191, %v3548
        %v3577 = vmul.f32 %v3192, %v3548
        %v3578 = vmul.f32 %v3193, %v3548
        %v3579 = vmul.f32 %v3194, %v3548
        %v3580 = vmul.f32 %v3195, %v3548
        %v3581 = vadd.f32 %v3513, %v3549
        %v3582 = vadd.f32 %v3514, %v3550
        %v3583 = vadd.f32 %v3515, %v3551
        %v3584 = vadd.f32 %v3516, %v3552
        %v3585 = vadd.f32 %v3517, %v3553
        %v3586 = vadd.f32 %v3518, %v3554
        %v3587 = vadd.f32 %v3519, %v3555
        %v3588 = vadd.f32 %v3520, %v3556
        %v3589 = vadd.f32 %v3521, %v3557
        %v3590 = vadd.f32 %v3522, %v3558
        %v3591 = vadd.f32 %v3523, %v3559
        %v3592 = vadd.f32 %v3524, %v3560
        %v3593 = vadd.f32 %v3525, %v3561
        %v3594 = vadd.f32 %v3526, %v3562
        %v3595 = vadd.f32 %v3527, %v3563
        %v3596 = vadd.f32 %v3528, %v3564
        %v3597 = vadd.f32 %v3529, %v3565
        %v3598 = vadd.f32 %v3530, %v3566
        %v3599 = vadd.f32 %v3531, %v3567
        %v3600 = vadd.f32 %v3532, %v3568
        %v3601 = vadd.f32 %v3533, %v3569
        %v3602 = vadd.f32 %v3534, %v3570
        %v3603 = vadd.f32 %v3535, %v3571
        %v3604 = vadd.f32 %v3536, %v3572
        %v3605 = vadd.f32 %v3537, %v3573
        %v3606 = vadd.f32 %v3538, %v3574
        %v3607 = vadd.f32 %v3539, %v3575
        %v3608 = vadd.f32 %v3540, %v3576
        %v3609 = vadd.f32 %v3541, %v3577
        %v3610 = vadd.f32 %v3542, %v3578
        %v3611 = vadd.f32 %v3543, %v3579
        %v3612 = vadd.f32 %v3544, %v3580
        %v3613 = vlaneseq
        %v3614 = vshrl.u32 %v3613, 7
        %v3615 = vsub.s32 0, %v3614
        %v3616 = vrot.slane %v3204, %v3615
        %v3617 = vmul.f32 %v3166, %v3616
        %v3618 = vmul.f32 %v3167, %v3616
        %v3619 = vmul.f32 %v3168, %v3616
        %v3620 = vmul.f32 %v3169, %v3616
        %v3621 = vmul.f32 %v3170, %v3616
        %v3622 = vmul.f32 %v3171, %v3616
        %v3623 = vmul.f32 %v3172, %v3616
        %v3624 = vmul.f32 %v3173, %v3616
        %v3625 = vmul.f32 %v3174, %v3616
        %v3626 = vmul.f32 %v3175, %v3616
        %v3627 = vmul.f32 %v3176, %v3616
        %v3628 = vmul.f32 %v3177, %v3616
        %v3629 = vmul.f32 %v3178, %v3616
        %v3630 = vmul.f32 %v3179, %v3616
        %v3631 = vmul.f32 %v3180, %v3616
        %v3632 = vmul.f32 %v3181, %v3616
        %v3633 = vmul.f32 %v3182, %v3616
        %v3634 = vmul.f32 %v3183, %v3616
        %v3635 = vmul.f32 %v3184, %v3616
        %v3636 = vmul.f32 %v3185, %v3616
        %v3637 = vmul.f32 %v3186, %v3616
        %v3638 = vmul.f32 %v3187, %v3616
        %v3639 = vmul.f32 %v3188, %v3616
        %v3640 = vmul.f32 %v3189, %v3616
        %v3641 = vmul.f32 %v3190, %v3616
        %v3642 = vmul.f32 %v3191, %v3616
        %v3643 = vmul.f32 %v3192, %v3616
        %v3644 = vmul.f32 %v3193, %v3616
        %v3645 = vmul.f32 %v3194, %v3616
        %v3646 = vmul.f32 %v3195, %v3616
        %v3647 = vmul.f32 %v3196, %v3616
        %v3648 = vmul.f32 %v3197, %v3616
        %v3649 = vadd.f32 %v3581, %v3617
        %v3650 = vadd.f32 %v3582, %v3618
        %v3651 = vadd.f32 %v3583, %v3619
        %v3652 = vadd.f32 %v3584, %v3620
        %v3653 = vadd.f32 %v3585, %v3621
        %v3654 = vadd.f32 %v3586, %v3622
        %v3655 = vadd.f32 %v3587, %v3623
        %v3656 = vadd.f32 %v3588, %v3624
        %v3657 = vadd.f32 %v3589, %v3625
        %v3658 = vadd.f32 %v3590, %v3626
        %v3659 = vadd.f32 %v3591, %v3627
        %v3660 = vadd.f32 %v3592, %v3628
        %v3661 = vadd.f32 %v3593, %v3629
        %v3662 = vadd.f32 %v3594, %v3630
        %v3663 = vadd.f32 %v3595, %v3631
        %v3664 = vadd.f32 %v3596, %v3632
        %v3665 = vadd.f32 %v3597, %v3633
        %v3666 = vadd.f32 %v3598, %v3634
        %v3667 = vadd.f32 %v3599, %v3635
        %v3668 = vadd.f32 %v3600, %v3636
        %v3669 = vadd.f32 %v3601, %v3637
        %v3670 = vadd.f32 %v3602, %v3638
        %v3671 = vadd.f32 %v3603, %v3639
        %v3672 = vadd.f32 %v3604, %v3640
        %v3673 = vadd.f32 %v3605, %v3641
        %v3674 = vadd.f32 %v3606, %v3642
        %v3675 = vadd.f32 %v3607, %v3643
        %v3676 = vadd.f32 %v3608, %v3644
        %v3677 = vadd.f32 %v3609, %v3645
        %v3678 = vadd.f32 %v3610, %v3646
        %v3679 = vadd.f32 %v3611, %v3647
        %v3680 = vadd.f32 %v3612, %v3648
        %v3681 = vld [vmem:[#allocation2 + $0x6] sm:$0xff]
        %v3682 = vld [vmem:[#allocation2 + $0xe] sm:$0xff]
        %v3683 = vld [vmem:[#allocation2 + $0x1e] sm:$0xff]
        %v3684 = vld [vmem:[#allocation2 + $0x26] sm:$0xff]
        %v3685 = vld [vmem:[#allocation2 + $0x36] sm:$0xff]
        %v3686 = vld [vmem:[#allocation2 + $0x3e] sm:$0xff]
        %v3687 = vld [vmem:[#allocation2 + $0x4e] sm:$0xff]
        %v3688 = vld [vmem:[#allocation2 + $0x56] sm:$0xff]
        %v3689 = vld [vmem:[#allocation2 + $0x66] sm:$0xff]
        %v3690 = vld [vmem:[#allocation2 + $0x6e] sm:$0xff]
        %v3691 = vld [vmem:[#allocation2 + $0x7e] sm:$0xff]
        %v3692 = vld [vmem:[#allocation2 + $0x86] sm:$0xff]
        %v3693 = vld [vmem:[#allocation2 + $0x96] sm:$0xff]
        %v3694 = vld [vmem:[#allocation2 + $0x9e] sm:$0xff]
        %v3695 = vld [vmem:[#allocation2 + $0xae] sm:$0xff]
        %v3696 = vld [vmem:[#allocation2 + $0xb6] sm:$0xff]
        %v3697 = vld [vmem:[#allocation2 + $0xc6] sm:$0xff]
        %v3698 = vld [vmem:[#allocation2 + $0xce] sm:$0xff]
        %v3699 = vld [vmem:[#allocation2 + $0xde] sm:$0xff]
        %v3700 = vld [vmem:[#allocation2 + $0xe6] sm:$0xff]
        %v3701 = vld [vmem:[#allocation2 + $0xf6] sm:$0xff]
        %v3702 = vld [vmem:[#allocation2 + $0xfe] sm:$0xff]
        %v3703 = vld [vmem:[#allocation2 + $0x10e] sm:$0xff]
        %v3704 = vld [vmem:[#allocation2 + $0x116] sm:$0xff]
        %v3705 = vld [vmem:[#allocation2 + $0x126] sm:$0xff]
        %v3706 = vld [vmem:[#allocation2 + $0x12e] sm:$0xff]
        %v3707 = vld [vmem:[#allocation2 + $0x13e] sm:$0xff]
        %v3708 = vld [vmem:[#allocation2 + $0x146] sm:$0xff]
        %v3709 = vld [vmem:[#allocation2 + $0x156] sm:$0xff]
        %v3710 = vld [vmem:[#allocation2 + $0x15e] sm:$0xff]
        %v3711 = vld [vmem:[#allocation2 + $0x16e] sm:$0xff]
        %v3712 = vld [vmem:[#allocation2 + $0x176] sm:$0xff]
        %v3713 = vld [vmem:[#allocation2 + $0x186] sm:$0xff]
        %v3714 = vld [vmem:[#allocation2 + $0x18e] sm:$0xff]
        %v3715 = vld [vmem:[#allocation2 + $0x19e] sm:$0xff]
        %v3716 = vld [vmem:[#allocation2 + $0x1a6] sm:$0xff]
        %v3717 = vld [vmem:[#allocation2 + $0x1b6] sm:$0xff]
        %v3718 = vld [vmem:[#allocation2 + $0x1be] sm:$0xff]
        %v3719 = vld [vmem:[#allocation2 + $0x1ce] sm:$0xff]
        %v3720 = vld [vmem:[#allocation2 + $0x1d6] sm:$0xff]
        %v3721 = vld [vmem:[#allocation2 + $0x1e6] sm:$0xff]
        %v3722 = vld [vmem:[#allocation2 + $0x1ee] sm:$0xff]
        %v3723 = vld [vmem:[#allocation2 + $0x1fe] sm:$0xff]
        %v3724 = vld [vmem:[#allocation2 + $0x206] sm:$0xff]
        %v3725 = vld [vmem:[#allocation6 + $0x6] sm:$0x1]
        %v3726 = vld [vmem:[#allocation6 + $0xe] sm:$0x1]
        %v3727 = vld [vmem:[#allocation6 + $0x16] sm:$0x1]
        %v3728 = vld [vmem:[#allocation6 + $0x1e] sm:$0x1]
        %v3729 = vld [vmem:[#allocation6 + $0x26] sm:$0x1]
        %v3730 = vld [vmem:[#allocation6 + $0x2e] sm:$0x1]
        %v3731 = vld [vmem:[#allocation6 + $0x36] sm:$0x1]
        %v3732 = vlaneseq
        %v3733 = vshrl.u32 %v3732, 7
        %v3734 = vsub.s32 0, %v3733
        %v3735 = vrot.slane %v3725, %v3734
        %v3736 = vmul.f32 %v3681, %v3735
        %v3737 = vmul.f32 %v3682, %v3735
        %v3738 = vmul.f32 %v3683, %v3735
        %v3739 = vmul.f32 %v3684, %v3735
        %v3740 = vmul.f32 %v3685, %v3735
        %v3741 = vmul.f32 %v3686, %v3735
        %v3742 = vmul.f32 %v3687, %v3735
        %v3743 = vmul.f32 %v3688, %v3735
        %v3744 = vmul.f32 %v3689, %v3735
        %v3745 = vmul.f32 %v3690, %v3735
        %v3746 = vmul.f32 %v3691, %v3735
        %v3747 = vmul.f32 %v3692, %v3735
        %v3748 = vmul.f32 %v3693, %v3735
        %v3749 = vmul.f32 %v3694, %v3735
        %v3750 = vmul.f32 %v3695, %v3735
        %v3751 = vmul.f32 %v3696, %v3735
        %v3752 = vmul.f32 %v3697, %v3735
        %v3753 = vmul.f32 %v3698, %v3735
        %v3754 = vmul.f32 %v3699, %v3735
        %v3755 = vmul.f32 %v3700, %v3735
        %v3756 = vmul.f32 %v3701, %v3735
        %v3757 = vmul.f32 %v3702, %v3735
        %v3758 = vmul.f32 %v3703, %v3735
        %v3759 = vmul.f32 %v3704, %v3735
        %v3760 = vmul.f32 %v3705, %v3735
        %v3761 = vmul.f32 %v3706, %v3735
        %v3762 = vmul.f32 %v3707, %v3735
        %v3763 = vmul.f32 %v3708, %v3735
        %v3764 = vmul.f32 %v3709, %v3735
        %v3765 = vmul.f32 %v3710, %v3735
        %v3766 = vmul.f32 %v3711, %v3735
        %v3767 = vmul.f32 %v3712, %v3735
        %v3768 = vadd.f32 %v3649, %v3736
        %v3769 = vadd.f32 %v3650, %v3737
        %v3770 = vadd.f32 %v3651, %v3738
        %v3771 = vadd.f32 %v3652, %v3739
        %v3772 = vadd.f32 %v3653, %v3740
        %v3773 = vadd.f32 %v3654, %v3741
        %v3774 = vadd.f32 %v3655, %v3742
        %v3775 = vadd.f32 %v3656, %v3743
        %v3776 = vadd.f32 %v3657, %v3744
        %v3777 = vadd.f32 %v3658, %v3745
        %v3778 = vadd.f32 %v3659, %v3746
        %v3779 = vadd.f32 %v3660, %v3747
        %v3780 = vadd.f32 %v3661, %v3748
        %v3781 = vadd.f32 %v3662, %v3749
        %v3782 = vadd.f32 %v3663, %v3750
        %v3783 = vadd.f32 %v3664, %v3751
        %v3784 = vadd.f32 %v3665, %v3752
        %v3785 = vadd.f32 %v3666, %v3753
        %v3786 = vadd.f32 %v3667, %v3754
        %v3787 = vadd.f32 %v3668, %v3755
        %v3788 = vadd.f32 %v3669, %v3756
        %v3789 = vadd.f32 %v3670, %v3757
        %v3790 = vadd.f32 %v3671, %v3758
        %v3791 = vadd.f32 %v3672, %v3759
        %v3792 = vadd.f32 %v3673, %v3760
        %v3793 = vadd.f32 %v3674, %v3761
        %v3794 = vadd.f32 %v3675, %v3762
        %v3795 = vadd.f32 %v3676, %v3763
        %v3796 = vadd.f32 %v3677, %v3764
        %v3797 = vadd.f32 %v3678, %v3765
        %v3798 = vadd.f32 %v3679, %v3766
        %v3799 = vadd.f32 %v3680, %v3767
        %v3800 = vlaneseq
        %v3801 = vshrl.u32 %v3800, 7
        %v3802 = vsub.s32 0, %v3801
        %v3803 = vrot.slane %v3726, %v3802
        %v3804 = vmul.f32 %v3683, %v3803
        %v3805 = vmul.f32 %v3684, %v3803
        %v3806 = vmul.f32 %v3685, %v3803
        %v3807 = vmul.f32 %v3686, %v3803
        %v3808 = vmul.f32 %v3687, %v3803
        %v3809 = vmul.f32 %v3688, %v3803
        %v3810 = vmul.f32 %v3689, %v3803
        %v3811 = vmul.f32 %v3690, %v3803
        %v3812 = vmul.f32 %v3691, %v3803
        %v3813 = vmul.f32 %v3692, %v3803
        %v3814 = vmul.f32 %v3693, %v3803
        %v3815 = vmul.f32 %v3694, %v3803
        %v3816 = vmul.f32 %v3695, %v3803
        %v3817 = vmul.f32 %v3696, %v3803
        %v3818 = vmul.f32 %v3697, %v3803
        %v3819 = vmul.f32 %v3698, %v3803
        %v3820 = vmul.f32 %v3699, %v3803
        %v3821 = vmul.f32 %v3700, %v3803
        %v3822 = vmul.f32 %v3701, %v3803
        %v3823 = vmul.f32 %v3702, %v3803
        %v3824 = vmul.f32 %v3703, %v3803
        %v3825 = vmul.f32 %v3704, %v3803
        %v3826 = vmul.f32 %v3705, %v3803
        %v3827 = vmul.f32 %v3706, %v3803
        %v3828 = vmul.f32 %v3707, %v3803
        %v3829 = vmul.f32 %v3708, %v3803
        %v3830 = vmul.f32 %v3709, %v3803
        %v3831 = vmul.f32 %v3710, %v3803
        %v3832 = vmul.f32 %v3711, %v3803
        %v3833 = vmul.f32 %v3712, %v3803
        %v3834 = vmul.f32 %v3713, %v3803
        %v3835 = vmul.f32 %v3714, %v3803
        %v3836 = vadd.f32 %v3768, %v3804
        %v3837 = vadd.f32 %v3769, %v3805
        %v3838 = vadd.f32 %v3770, %v3806
        %v3839 = vadd.f32 %v3771, %v3807
        %v3840 = vadd.f32 %v3772, %v3808
        %v3841 = vadd.f32 %v3773, %v3809
        %v3842 = vadd.f32 %v3774, %v3810
        %v3843 = vadd.f32 %v3775, %v3811
        %v3844 = vadd.f32 %v3776, %v3812
        %v3845 = vadd.f32 %v3777, %v3813
        %v3846 = vadd.f32 %v3778, %v3814
        %v3847 = vadd.f32 %v3779, %v3815
        %v3848 = vadd.f32 %v3780, %v3816
        %v3849 = vadd.f32 %v3781, %v3817
        %v3850 = vadd.f32 %v3782, %v3818
        %v3851 = vadd.f32 %v3783, %v3819
        %v3852 = vadd.f32 %v3784, %v3820
        %v3853 = vadd.f32 %v3785, %v3821
        %v3854 = vadd.f32 %v3786, %v3822
        %v3855 = vadd.f32 %v3787, %v3823
        %v3856 = vadd.f32 %v3788, %v3824
        %v3857 = vadd.f32 %v3789, %v3825
        %v3858 = vadd.f32 %v3790, %v3826
        %v3859 = vadd.f32 %v3791, %v3827
        %v3860 = vadd.f32 %v3792, %v3828
        %v3861 = vadd.f32 %v3793, %v3829
        %v3862 = vadd.f32 %v3794, %v3830
        %v3863 = vadd.f32 %v3795, %v3831
        %v3864 = vadd.f32 %v3796, %v3832
        %v3865 = vadd.f32 %v3797, %v3833
        %v3866 = vadd.f32 %v3798, %v3834
        %v3867 = vadd.f32 %v3799, %v3835
        %v3868 = vlaneseq
        %v3869 = vshrl.u32 %v3868, 7
        %v3870 = vsub.s32 0, %v3869
        %v3871 = vrot.slane %v3727, %v3870
        %v3872 = vmul.f32 %v3685, %v3871
        %v3873 = vmul.f32 %v3686, %v3871
        %v3874 = vmul.f32 %v3687, %v3871
        %v3875 = vmul.f32 %v3688, %v3871
        %v3876 = vmul.f32 %v3689, %v3871
        %v3877 = vmul.f32 %v3690, %v3871
        %v3878 = vmul.f32 %v3691, %v3871
        %v3879 = vmul.f32 %v3692, %v3871
        %v3880 = vmul.f32 %v3693, %v3871
        %v3881 = vmul.f32 %v3694, %v3871
        %v3882 = vmul.f32 %v3695, %v3871
        %v3883 = vmul.f32 %v3696, %v3871
        %v3884 = vmul.f32 %v3697, %v3871
        %v3885 = vmul.f32 %v3698, %v3871
        %v3886 = vmul.f32 %v3699, %v3871
        %v3887 = vmul.f32 %v3700, %v3871
        %v3888 = vmul.f32 %v3701, %v3871
        %v3889 = vmul.f32 %v3702, %v3871
        %v3890 = vmul.f32 %v3703, %v3871
        %v3891 = vmul.f32 %v3704, %v3871
        %v3892 = vmul.f32 %v3705, %v3871
        %v3893 = vmul.f32 %v3706, %v3871
        %v3894 = vmul.f32 %v3707, %v3871
        %v3895 = vmul.f32 %v3708, %v3871
        %v3896 = vmul.f32 %v3709, %v3871
        %v3897 = vmul.f32 %v3710, %v3871
        %v3898 = vmul.f32 %v3711, %v3871
        %v3899 = vmul.f32 %v3712, %v3871
        %v3900 = vmul.f32 %v3713, %v3871
        %v3901 = vmul.f32 %v3714, %v3871
        %v3902 = vmul.f32 %v3715, %v3871
        %v3903 = vmul.f32 %v3716, %v3871
        %v3904 = vadd.f32 %v3836, %v3872
        %v3905 = vadd.f32 %v3837, %v3873
        %v3906 = vadd.f32 %v3838, %v3874
        %v3907 = vadd.f32 %v3839, %v3875
        %v3908 = vadd.f32 %v3840, %v3876
        %v3909 = vadd.f32 %v3841, %v3877
        %v3910 = vadd.f32 %v3842, %v3878
        %v3911 = vadd.f32 %v3843, %v3879
        %v3912 = vadd.f32 %v3844, %v3880
        %v3913 = vadd.f32 %v3845, %v3881
        %v3914 = vadd.f32 %v3846, %v3882
        %v3915 = vadd.f32 %v3847, %v3883
        %v3916 = vadd.f32 %v3848, %v3884
        %v3917 = vadd.f32 %v3849, %v3885
        %v3918 = vadd.f32 %v3850, %v3886
        %v3919 = vadd.f32 %v3851, %v3887
        %v3920 = vadd.f32 %v3852, %v3888
        %v3921 = vadd.f32 %v3853, %v3889
        %v3922 = vadd.f32 %v3854, %v3890
        %v3923 = vadd.f32 %v3855, %v3891
        %v3924 = vadd.f32 %v3856, %v3892
        %v3925 = vadd.f32 %v3857, %v3893
        %v3926 = vadd.f32 %v3858, %v3894
        %v3927 = vadd.f32 %v3859, %v3895
        %v3928 = vadd.f32 %v3860, %v3896
        %v3929 = vadd.f32 %v3861, %v3897
        %v3930 = vadd.f32 %v3862, %v3898
        %v3931 = vadd.f32 %v3863, %v3899
        %v3932 = vadd.f32 %v3864, %v3900
        %v3933 = vadd.f32 %v3865, %v3901
        %v3934 = vadd.f32 %v3866, %v3902
        %v3935 = vadd.f32 %v3867, %v3903
        %v3936 = vlaneseq
        %v3937 = vshrl.u32 %v3936, 7
        %v3938 = vsub.s32 0, %v3937
        %v3939 = vrot.slane %v3728, %v3938
        %v3940 = vmul.f32 %v3687, %v3939
        %v3941 = vmul.f32 %v3688, %v3939
        %v3942 = vmul.f32 %v3689, %v3939
        %v3943 = vmul.f32 %v3690, %v3939
        %v3944 = vmul.f32 %v3691, %v3939
        %v3945 = vmul.f32 %v3692, %v3939
        %v3946 = vmul.f32 %v3693, %v3939
        %v3947 = vmul.f32 %v3694, %v3939
        %v3948 = vmul.f32 %v3695, %v3939
        %v3949 = vmul.f32 %v3696, %v3939
        %v3950 = vmul.f32 %v3697, %v3939
        %v3951 = vmul.f32 %v3698, %v3939
        %v3952 = vmul.f32 %v3699, %v3939
        %v3953 = vmul.f32 %v3700, %v3939
        %v3954 = vmul.f32 %v3701, %v3939
        %v3955 = vmul.f32 %v3702, %v3939
        %v3956 = vmul.f32 %v3703, %v3939
        %v3957 = vmul.f32 %v3704, %v3939
        %v3958 = vmul.f32 %v3705, %v3939
        %v3959 = vmul.f32 %v3706, %v3939
        %v3960 = vmul.f32 %v3707, %v3939
        %v3961 = vmul.f32 %v3708, %v3939
        %v3962 = vmul.f32 %v3709, %v3939
        %v3963 = vmul.f32 %v3710, %v3939
        %v3964 = vmul.f32 %v3711, %v3939
        %v3965 = vmul.f32 %v3712, %v3939
        %v3966 = vmul.f32 %v3713, %v3939
        %v3967 = vmul.f32 %v3714, %v3939
        %v3968 = vmul.f32 %v3715, %v3939
        %v3969 = vmul.f32 %v3716, %v3939
        %v3970 = vmul.f32 %v3717, %v3939
        %v3971 = vmul.f32 %v3718, %v3939
        %v3972 = vadd.f32 %v3904, %v3940
        %v3973 = vadd.f32 %v3905, %v3941
        %v3974 = vadd.f32 %v3906, %v3942
        %v3975 = vadd.f32 %v3907, %v3943
        %v3976 = vadd.f32 %v3908, %v3944
        %v3977 = vadd.f32 %v3909, %v3945
        %v3978 = vadd.f32 %v3910, %v3946
        %v3979 = vadd.f32 %v3911, %v3947
        %v3980 = vadd.f32 %v3912, %v3948
        %v3981 = vadd.f32 %v3913, %v3949
        %v3982 = vadd.f32 %v3914, %v3950
        %v3983 = vadd.f32 %v3915, %v3951
        %v3984 = vadd.f32 %v3916, %v3952
        %v3985 = vadd.f32 %v3917, %v3953
        %v3986 = vadd.f32 %v3918, %v3954
        %v3987 = vadd.f32 %v3919, %v3955
        %v3988 = vadd.f32 %v3920, %v3956
        %v3989 = vadd.f32 %v3921, %v3957
        %v3990 = vadd.f32 %v3922, %v3958
        %v3991 = vadd.f32 %v3923, %v3959
        %v3992 = vadd.f32 %v3924, %v3960
        %v3993 = vadd.f32 %v3925, %v3961
        %v3994 = vadd.f32 %v3926, %v3962
        %v3995 = vadd.f32 %v3927, %v3963
        %v3996 = vadd.f32 %v3928, %v3964
        %v3997 = vadd.f32 %v3929, %v3965
        %v3998 = vadd.f32 %v3930, %v3966
        %v3999 = vadd.f32 %v3931, %v3967
        %v4000 = vadd.f32 %v3932, %v3968
        %v4001 = vadd.f32 %v3933, %v3969
        %v4002 = vadd.f32 %v3934, %v3970
        %v4003 = vadd.f32 %v3935, %v3971
        %v4004 = vlaneseq
        %v4005 = vshrl.u32 %v4004, 7
        %v4006 = vsub.s32 0, %v4005
        %v4007 = vrot.slane %v3729, %v4006
        %v4008 = vmul.f32 %v3689, %v4007
        %v4009 = vmul.f32 %v3690, %v4007
        %v4010 = vmul.f32 %v3691, %v4007
        %v4011 = vmul.f32 %v3692, %v4007
        %v4012 = vmul.f32 %v3693, %v4007
        %v4013 = vmul.f32 %v3694, %v4007
        %v4014 = vmul.f32 %v3695, %v4007
        %v4015 = vmul.f32 %v3696, %v4007
        %v4016 = vmul.f32 %v3697, %v4007
        %v4017 = vmul.f32 %v3698, %v4007
        %v4018 = vmul.f32 %v3699, %v4007
        %v4019 = vmul.f32 %v3700, %v4007
        %v4020 = vmul.f32 %v3701, %v4007
        %v4021 = vmul.f32 %v3702, %v4007
        %v4022 = vmul.f32 %v3703, %v4007
        %v4023 = vmul.f32 %v3704, %v4007
        %v4024 = vmul.f32 %v3705, %v4007
        %v4025 = vmul.f32 %v3706, %v4007
        %v4026 = vmul.f32 %v3707, %v4007
        %v4027 = vmul.f32 %v3708, %v4007
        %v4028 = vmul.f32 %v3709, %v4007
        %v4029 = vmul.f32 %v3710, %v4007
        %v4030 = vmul.f32 %v3711, %v4007
        %v4031 = vmul.f32 %v3712, %v4007
        %v4032 = vmul.f32 %v3713, %v4007
        %v4033 = vmul.f32 %v3714, %v4007
        %v4034 = vmul.f32 %v3715, %v4007
        %v4035 = vmul.f32 %v3716, %v4007
        %v4036 = vmul.f32 %v3717, %v4007
        %v4037 = vmul.f32 %v3718, %v4007
        %v4038 = vmul.f32 %v3719, %v4007
        %v4039 = vmul.f32 %v3720, %v4007
        %v4040 = vadd.f32 %v3972, %v4008
        %v4041 = vadd.f32 %v3973, %v4009
        %v4042 = vadd.f32 %v3974, %v4010
        %v4043 = vadd.f32 %v3975, %v4011
        %v4044 = vadd.f32 %v3976, %v4012
        %v4045 = vadd.f32 %v3977, %v4013
        %v4046 = vadd.f32 %v3978, %v4014
        %v4047 = vadd.f32 %v3979, %v4015
        %v4048 = vadd.f32 %v3980, %v4016
        %v4049 = vadd.f32 %v3981, %v4017
        %v4050 = vadd.f32 %v3982, %v4018
        %v4051 = vadd.f32 %v3983, %v4019
        %v4052 = vadd.f32 %v3984, %v4020
        %v4053 = vadd.f32 %v3985, %v4021
        %v4054 = vadd.f32 %v3986, %v4022
        %v4055 = vadd.f32 %v3987, %v4023
        %v4056 = vadd.f32 %v3988, %v4024
        %v4057 = vadd.f32 %v3989, %v4025
        %v4058 = vadd.f32 %v3990, %v4026
        %v4059 = vadd.f32 %v3991, %v4027
        %v4060 = vadd.f32 %v3992, %v4028
        %v4061 = vadd.f32 %v3993, %v4029
        %v4062 = vadd.f32 %v3994, %v4030
        %v4063 = vadd.f32 %v3995, %v4031
        %v4064 = vadd.f32 %v3996, %v4032
        %v4065 = vadd.f32 %v3997, %v4033
        %v4066 = vadd.f32 %v3998, %v4034
        %v4067 = vadd.f32 %v3999, %v4035
        %v4068 = vadd.f32 %v4000, %v4036
        %v4069 = vadd.f32 %v4001, %v4037
        %v4070 = vadd.f32 %v4002, %v4038
        %v4071 = vadd.f32 %v4003, %v4039
        %v4072 = vlaneseq
        %v4073 = vshrl.u32 %v4072, 7
        %v4074 = vsub.s32 0, %v4073
        %v4075 = vrot.slane %v3730, %v4074
        %v4076 = vmul.f32 %v3691, %v4075
        %v4077 = vmul.f32 %v3692, %v4075
        %v4078 = vmul.f32 %v3693, %v4075
        %v4079 = vmul.f32 %v3694, %v4075
        %v4080 = vmul.f32 %v3695, %v4075
        %v4081 = vmul.f32 %v3696, %v4075
        %v4082 = vmul.f32 %v3697, %v4075
        %v4083 = vmul.f32 %v3698, %v4075
        %v4084 = vmul.f32 %v3699, %v4075
        %v4085 = vmul.f32 %v3700, %v4075
        %v4086 = vmul.f32 %v3701, %v4075
        %v4087 = vmul.f32 %v3702, %v4075
        %v4088 = vmul.f32 %v3703, %v4075
        %v4089 = vmul.f32 %v3704, %v4075
        %v4090 = vmul.f32 %v3705, %v4075
        %v4091 = vmul.f32 %v3706, %v4075
        %v4092 = vmul.f32 %v3707, %v4075
        %v4093 = vmul.f32 %v3708, %v4075
        %v4094 = vmul.f32 %v3709, %v4075
        %v4095 = vmul.f32 %v3710, %v4075
        %v4096 = vmul.f32 %v3711, %v4075
        %v4097 = vmul.f32 %v3712, %v4075
        %v4098 = vmul.f32 %v3713, %v4075
        %v4099 = vmul.f32 %v3714, %v4075
        %v4100 = vmul.f32 %v3715, %v4075
        %v4101 = vmul.f32 %v3716, %v4075
        %v4102 = vmul.f32 %v3717, %v4075
        %v4103 = vmul.f32 %v3718, %v4075
        %v4104 = vmul.f32 %v3719, %v4075
        %v4105 = vmul.f32 %v3720, %v4075
        %v4106 = vmul.f32 %v3721, %v4075
        %v4107 = vmul.f32 %v3722, %v4075
        %v4108 = vadd.f32 %v4040, %v4076
        %v4109 = vadd.f32 %v4041, %v4077
        %v4110 = vadd.f32 %v4042, %v4078
        %v4111 = vadd.f32 %v4043, %v4079
        %v4112 = vadd.f32 %v4044, %v4080
        %v4113 = vadd.f32 %v4045, %v4081
        %v4114 = vadd.f32 %v4046, %v4082
        %v4115 = vadd.f32 %v4047, %v4083
        %v4116 = vadd.f32 %v4048, %v4084
        %v4117 = vadd.f32 %v4049, %v4085
        %v4118 = vadd.f32 %v4050, %v4086
        %v4119 = vadd.f32 %v4051, %v4087
        %v4120 = vadd.f32 %v4052, %v4088
        %v4121 = vadd.f32 %v4053, %v4089
        %v4122 = vadd.f32 %v4054, %v4090
        %v4123 = vadd.f32 %v4055, %v4091
        %v4124 = vadd.f32 %v4056, %v4092
        %v4125 = vadd.f32 %v4057, %v4093
        %v4126 = vadd.f32 %v4058, %v4094
        %v4127 = vadd.f32 %v4059, %v4095
        %v4128 = vadd.f32 %v4060, %v4096
        %v4129 = vadd.f32 %v4061, %v4097
        %v4130 = vadd.f32 %v4062, %v4098
        %v4131 = vadd.f32 %v4063, %v4099
        %v4132 = vadd.f32 %v4064, %v4100
        %v4133 = vadd.f32 %v4065, %v4101
        %v4134 = vadd.f32 %v4066, %v4102
        %v4135 = vadd.f32 %v4067, %v4103
        %v4136 = vadd.f32 %v4068, %v4104
        %v4137 = vadd.f32 %v4069, %v4105
        %v4138 = vadd.f32 %v4070, %v4106
        %v4139 = vadd.f32 %v4071, %v4107
        %v4140 = vlaneseq
        %v4141 = vshrl.u32 %v4140, 7
        %v4142 = vsub.s32 0, %v4141
        %v4143 = vrot.slane %v3731, %v4142
        %v4144 = vmul.f32 %v3693, %v4143
        %v4145 = vmul.f32 %v3694, %v4143
        %v4146 = vmul.f32 %v3695, %v4143
        %v4147 = vmul.f32 %v3696, %v4143
        %v4148 = vmul.f32 %v3697, %v4143
        %v4149 = vmul.f32 %v3698, %v4143
        %v4150 = vmul.f32 %v3699, %v4143
        %v4151 = vmul.f32 %v3700, %v4143
        %v4152 = vmul.f32 %v3701, %v4143
        %v4153 = vmul.f32 %v3702, %v4143
        %v4154 = vmul.f32 %v3703, %v4143
        %v4155 = vmul.f32 %v3704, %v4143
        %v4156 = vmul.f32 %v3705, %v4143
        %v4157 = vmul.f32 %v3706, %v4143
        %v4158 = vmul.f32 %v3707, %v4143
        %v4159 = vmul.f32 %v3708, %v4143
        %v4160 = vmul.f32 %v3709, %v4143
        %v4161 = vmul.f32 %v3710, %v4143
        %v4162 = vmul.f32 %v3711, %v4143
        %v4163 = vmul.f32 %v3712, %v4143
        %v4164 = vmul.f32 %v3713, %v4143
        %v4165 = vmul.f32 %v3714, %v4143
        %v4166 = vmul.f32 %v3715, %v4143
        %v4167 = vmul.f32 %v3716, %v4143
        %v4168 = vmul.f32 %v3717, %v4143
        %v4169 = vmul.f32 %v3718, %v4143
        %v4170 = vmul.f32 %v3719, %v4143
        %v4171 = vmul.f32 %v3720, %v4143
        %v4172 = vmul.f32 %v3721, %v4143
        %v4173 = vmul.f32 %v3722, %v4143
        %v4174 = vmul.f32 %v3723, %v4143
        %v4175 = vmul.f32 %v3724, %v4143
        %v4176 = vadd.f32 %v4108, %v4144
        %v4177 = vadd.f32 %v4109, %v4145
        %v4178 = vadd.f32 %v4110, %v4146
        %v4179 = vadd.f32 %v4111, %v4147
        %v4180 = vadd.f32 %v4112, %v4148
        %v4181 = vadd.f32 %v4113, %v4149
        %v4182 = vadd.f32 %v4114, %v4150
        %v4183 = vadd.f32 %v4115, %v4151
        %v4184 = vadd.f32 %v4116, %v4152
        %v4185 = vadd.f32 %v4117, %v4153
        %v4186 = vadd.f32 %v4118, %v4154
        %v4187 = vadd.f32 %v4119, %v4155
        %v4188 = vadd.f32 %v4120, %v4156
        %v4189 = vadd.f32 %v4121, %v4157
        %v4190 = vadd.f32 %v4122, %v4158
        %v4191 = vadd.f32 %v4123, %v4159
        %v4192 = vadd.f32 %v4124, %v4160
        %v4193 = vadd.f32 %v4125, %v4161
        %v4194 = vadd.f32 %v4126, %v4162
        %v4195 = vadd.f32 %v4127, %v4163
        %v4196 = vadd.f32 %v4128, %v4164
        %v4197 = vadd.f32 %v4129, %v4165
        %v4198 = vadd.f32 %v4130, %v4166
        %v4199 = vadd.f32 %v4131, %v4167
        %v4200 = vadd.f32 %v4132, %v4168
        %v4201 = vadd.f32 %v4133, %v4169
        %v4202 = vadd.f32 %v4134, %v4170
        %v4203 = vadd.f32 %v4135, %v4171
        %v4204 = vadd.f32 %v4136, %v4172
        %v4205 = vadd.f32 %v4137, %v4173
        %v4206 = vadd.f32 %v4138, %v4174
        %v4207 = vadd.f32 %v4139, %v4175
        %4208 = vadd.xlane.f32.xlu0 %v4176
        %v4209 = vpop.xlane.xlu0 %4208
        %4210 = vadd.xlane.f32.xlu0 %v4177
        %v4211 = vpop.xlane.xlu0 %4210
        %4212 = vadd.xlane.f32.xlu0 %v4178
        %v4213 = vpop.xlane.xlu0 %4212
        %4214 = vadd.xlane.f32.xlu0 %v4179
        %v4215 = vpop.xlane.xlu0 %4214
        %4216 = vadd.xlane.f32.xlu0 %v4180
        %v4217 = vpop.xlane.xlu0 %4216
        %4218 = vadd.xlane.f32.xlu0 %v4181
        %v4219 = vpop.xlane.xlu0 %4218
        %4220 = vadd.xlane.f32.xlu0 %v4182
        %v4221 = vpop.xlane.xlu0 %4220
        %4222 = vadd.xlane.f32.xlu0 %v4183
        %v4223 = vpop.xlane.xlu0 %4222
        %4224 = vadd.xlane.f32.xlu0 %v4184
        %v4225 = vpop.xlane.xlu0 %4224
        %4226 = vadd.xlane.f32.xlu0 %v4185
        %v4227 = vpop.xlane.xlu0 %4226
        %4228 = vadd.xlane.f32.xlu0 %v4186
        %v4229 = vpop.xlane.xlu0 %4228
        %4230 = vadd.xlane.f32.xlu0 %v4187
        %v4231 = vpop.xlane.xlu0 %4230
        %4232 = vadd.xlane.f32.xlu0 %v4188
        %v4233 = vpop.xlane.xlu0 %4232
        %4234 = vadd.xlane.f32.xlu0 %v4189
        %v4235 = vpop.xlane.xlu0 %4234
        %4236 = vadd.xlane.f32.xlu0 %v4190
        %v4237 = vpop.xlane.xlu0 %4236
        %4238 = vadd.xlane.f32.xlu0 %v4191
        %v4239 = vpop.xlane.xlu0 %4238
        %4240 = vadd.xlane.f32.xlu0 %v4192
        %v4241 = vpop.xlane.xlu0 %4240
        %4242 = vadd.xlane.f32.xlu0 %v4193
        %v4243 = vpop.xlane.xlu0 %4242
        %4244 = vadd.xlane.f32.xlu0 %v4194
        %v4245 = vpop.xlane.xlu0 %4244
        %4246 = vadd.xlane.f32.xlu0 %v4195
        %v4247 = vpop.xlane.xlu0 %4246
        %4248 = vadd.xlane.f32.xlu0 %v4196
        %v4249 = vpop.xlane.xlu0 %4248
        %4250 = vadd.xlane.f32.xlu0 %v4197
        %v4251 = vpop.xlane.xlu0 %4250
        %4252 = vadd.xlane.f32.xlu0 %v4198
        %v4253 = vpop.xlane.xlu0 %4252
        %4254 = vadd.xlane.f32.xlu0 %v4199
        %v4255 = vpop.xlane.xlu0 %4254
        %4256 = vadd.xlane.f32.xlu0 %v4200
        %v4257 = vpop.xlane.xlu0 %4256
        %4258 = vadd.xlane.f32.xlu0 %v4201
        %v4259 = vpop.xlane.xlu0 %4258
        %4260 = vadd.xlane.f32.xlu0 %v4202
        %v4261 = vpop.xlane.xlu0 %4260
        %4262 = vadd.xlane.f32.xlu0 %v4203
        %v4263 = vpop.xlane.xlu0 %4262
        %4264 = vadd.xlane.f32.xlu0 %v4204
        %v4265 = vpop.xlane.xlu0 %4264
        %4266 = vadd.xlane.f32.xlu0 %v4205
        %v4267 = vpop.xlane.xlu0 %4266
        %4268 = vadd.xlane.f32.xlu0 %v4206
        %v4269 = vpop.xlane.xlu0 %4268
        %4270 = vadd.xlane.f32.xlu0 %v4207
        %v4271 = vpop.xlane.xlu0 %4270
        %v4272 = vmul.f32 %v4176, %v4176
        %v4273 = vmul.f32 %v4177, %v4177
        %v4274 = vmul.f32 %v4178, %v4178
        %v4275 = vmul.f32 %v4179, %v4179
        %v4276 = vmul.f32 %v4180, %v4180
        %v4277 = vmul.f32 %v4181, %v4181
        %v4278 = vmul.f32 %v4182, %v4182
        %v4279 = vmul.f32 %v4183, %v4183
        %v4280 = vmul.f32 %v4184, %v4184
        %v4281 = vmul.f32 %v4185, %v4185
        %v4282 = vmul.f32 %v4186, %v4186
        %v4283 = vmul.f32 %v4187, %v4187
        %v4284 = vmul.f32 %v4188, %v4188
        %v4285 = vmul.f32 %v4189, %v4189
        %v4286 = vmul.f32 %v4190, %v4190
        %v4287 = vmul.f32 %v4191, %v4191
        %v4288 = vmul.f32 %v4192, %v4192
        %v4289 = vmul.f32 %v4193, %v4193
        %v4290 = vmul.f32 %v4194, %v4194
        %v4291 = vmul.f32 %v4195, %v4195
        %v4292 = vmul.f32 %v4196, %v4196
        %v4293 = vmul.f32 %v4197, %v4197
        %v4294 = vmul.f32 %v4198, %v4198
        %v4295 = vmul.f32 %v4199, %v4199
        %v4296 = vmul.f32 %v4200, %v4200
        %v4297 = vmul.f32 %v4201, %v4201
        %v4298 = vmul.f32 %v4202, %v4202
        %v4299 = vmul.f32 %v4203, %v4203
        %v4300 = vmul.f32 %v4204, %v4204
        %v4301 = vmul.f32 %v4205, %v4205
        %v4302 = vmul.f32 %v4206, %v4206
        %v4303 = vmul.f32 %v4207, %v4207
        %4304 = vadd.xlane.f32.xlu0 %v4272
        %v4305 = vpop.xlane.xlu0 %4304
        %4306 = vadd.xlane.f32.xlu0 %v4273
        %v4307 = vpop.xlane.xlu0 %4306
        %4308 = vadd.xlane.f32.xlu0 %v4274
        %v4309 = vpop.xlane.xlu0 %4308
        %4310 = vadd.xlane.f32.xlu0 %v4275
        %v4311 = vpop.xlane.xlu0 %4310
        %4312 = vadd.xlane.f32.xlu0 %v4276
        %v4313 = vpop.xlane.xlu0 %4312
        %4314 = vadd.xlane.f32.xlu0 %v4277
        %v4315 = vpop.xlane.xlu0 %4314
        %4316 = vadd.xlane.f32.xlu0 %v4278
        %v4317 = vpop.xlane.xlu0 %4316
        %4318 = vadd.xlane.f32.xlu0 %v4279
        %v4319 = vpop.xlane.xlu0 %4318
        %4320 = vadd.xlane.f32.xlu0 %v4280
        %v4321 = vpop.xlane.xlu0 %4320
        %4322 = vadd.xlane.f32.xlu0 %v4281
        %v4323 = vpop.xlane.xlu0 %4322
        %4324 = vadd.xlane.f32.xlu0 %v4282
        %v4325 = vpop.xlane.xlu0 %4324
        %4326 = vadd.xlane.f32.xlu0 %v4283
        %v4327 = vpop.xlane.xlu0 %4326
        %4328 = vadd.xlane.f32.xlu0 %v4284
        %v4329 = vpop.xlane.xlu0 %4328
        %4330 = vadd.xlane.f32.xlu0 %v4285
        %v4331 = vpop.xlane.xlu0 %4330
        %4332 = vadd.xlane.f32.xlu0 %v4286
        %v4333 = vpop.xlane.xlu0 %4332
        %4334 = vadd.xlane.f32.xlu0 %v4287
        %v4335 = vpop.xlane.xlu0 %4334
        %4336 = vadd.xlane.f32.xlu0 %v4288
        %v4337 = vpop.xlane.xlu0 %4336
        %4338 = vadd.xlane.f32.xlu0 %v4289
        %v4339 = vpop.xlane.xlu0 %4338
        %4340 = vadd.xlane.f32.xlu0 %v4290
        %v4341 = vpop.xlane.xlu0 %4340
        %4342 = vadd.xlane.f32.xlu0 %v4291
        %v4343 = vpop.xlane.xlu0 %4342
        %4344 = vadd.xlane.f32.xlu0 %v4292
        %v4345 = vpop.xlane.xlu0 %4344
        %4346 = vadd.xlane.f32.xlu0 %v4293
        %v4347 = vpop.xlane.xlu0 %4346
        %4348 = vadd.xlane.f32.xlu0 %v4294
        %v4349 = vpop.xlane.xlu0 %4348
        %4350 = vadd.xlane.f32.xlu0 %v4295
        %v4351 = vpop.xlane.xlu0 %4350
        %4352 = vadd.xlane.f32.xlu0 %v4296
        %v4353 = vpop.xlane.xlu0 %4352
        %4354 = vadd.xlane.f32.xlu0 %v4297
        %v4355 = vpop.xlane.xlu0 %4354
        %4356 = vadd.xlane.f32.xlu0 %v4298
        %v4357 = vpop.xlane.xlu0 %4356
        %4358 = vadd.xlane.f32.xlu0 %v4299
        %v4359 = vpop.xlane.xlu0 %4358
        %4360 = vadd.xlane.f32.xlu0 %v4300
        %v4361 = vpop.xlane.xlu0 %4360
        %4362 = vadd.xlane.f32.xlu0 %v4301
        %v4363 = vpop.xlane.xlu0 %4362
        %4364 = vadd.xlane.f32.xlu0 %v4302
        %v4365 = vpop.xlane.xlu0 %4364
        %4366 = vadd.xlane.f32.xlu0 %v4303
        %v4367 = vpop.xlane.xlu0 %4366
        %v4368 = vmul.f32 %v4209, 0.25
        %v4369 = vmul.f32 %v4211, 0.25
        %v4370 = vmul.f32 %v4213, 0.25
        %v4371 = vmul.f32 %v4215, 0.25
        %v4372 = vmul.f32 %v4217, 0.25
        %v4373 = vmul.f32 %v4219, 0.25
        %v4374 = vmul.f32 %v4221, 0.25
        %v4375 = vmul.f32 %v4223, 0.25
        %v4376 = vmul.f32 %v4225, 0.25
        %v4377 = vmul.f32 %v4227, 0.25
        %v4378 = vmul.f32 %v4229, 0.25
        %v4379 = vmul.f32 %v4231, 0.25
        %v4380 = vmul.f32 %v4233, 0.25
        %v4381 = vmul.f32 %v4235, 0.25
        %v4382 = vmul.f32 %v4237, 0.25
        %v4383 = vmul.f32 %v4239, 0.25
        %v4384 = vmul.f32 %v4241, 0.25
        %v4385 = vmul.f32 %v4243, 0.25
        %v4386 = vmul.f32 %v4245, 0.25
        %v4387 = vmul.f32 %v4247, 0.25
        %v4388 = vmul.f32 %v4249, 0.25
        %v4389 = vmul.f32 %v4251, 0.25
        %v4390 = vmul.f32 %v4253, 0.25
        %v4391 = vmul.f32 %v4255, 0.25
        %v4392 = vmul.f32 %v4257, 0.25
        %v4393 = vmul.f32 %v4259, 0.25
        %v4394 = vmul.f32 %v4261, 0.25
        %v4395 = vmul.f32 %v4263, 0.25
        %v4396 = vmul.f32 %v4265, 0.25
        %v4397 = vmul.f32 %v4267, 0.25
        %v4398 = vmul.f32 %v4269, 0.25
        %v4399 = vmul.f32 %v4271, 0.25
        %v4400 = vmul.f32 %v4305, 0.25
        %v4401 = vmul.f32 %v4307, 0.25
        %v4402 = vmul.f32 %v4309, 0.25
        %v4403 = vmul.f32 %v4311, 0.25
        %v4404 = vmul.f32 %v4313, 0.25
        %v4405 = vmul.f32 %v4315, 0.25
        %v4406 = vmul.f32 %v4317, 0.25
        %v4407 = vmul.f32 %v4319, 0.25
        %v4408 = vmul.f32 %v4321, 0.25
        %v4409 = vmul.f32 %v4323, 0.25
        %v4410 = vmul.f32 %v4325, 0.25
        %v4411 = vmul.f32 %v4327, 0.25
        %v4412 = vmul.f32 %v4329, 0.25
        %v4413 = vmul.f32 %v4331, 0.25
        %v4414 = vmul.f32 %v4333, 0.25
        %v4415 = vmul.f32 %v4335, 0.25
        %v4416 = vmul.f32 %v4337, 0.25
        %v4417 = vmul.f32 %v4339, 0.25
        %v4418 = vmul.f32 %v4341, 0.25
        %v4419 = vmul.f32 %v4343, 0.25
        %v4420 = vmul.f32 %v4345, 0.25
        %v4421 = vmul.f32 %v4347, 0.25
        %v4422 = vmul.f32 %v4349, 0.25
        %v4423 = vmul.f32 %v4351, 0.25
        %v4424 = vmul.f32 %v4353, 0.25
        %v4425 = vmul.f32 %v4355, 0.25
        %v4426 = vmul.f32 %v4357, 0.25
        %v4427 = vmul.f32 %v4359, 0.25
        %v4428 = vmul.f32 %v4361, 0.25
        %v4429 = vmul.f32 %v4363, 0.25
        %v4430 = vmul.f32 %v4365, 0.25
        %v4431 = vmul.f32 %v4367, 0.25
        %v4432 = vmul.f32 %v4368, %v4368
        %v4433 = vmul.f32 %v4369, %v4369
        %v4434 = vmul.f32 %v4370, %v4370
        %v4435 = vmul.f32 %v4371, %v4371
        %v4436 = vmul.f32 %v4372, %v4372
        %v4437 = vmul.f32 %v4373, %v4373
        %v4438 = vmul.f32 %v4374, %v4374
        %v4439 = vmul.f32 %v4375, %v4375
        %v4440 = vmul.f32 %v4376, %v4376
        %v4441 = vmul.f32 %v4377, %v4377
        %v4442 = vmul.f32 %v4378, %v4378
        %v4443 = vmul.f32 %v4379, %v4379
        %v4444 = vmul.f32 %v4380, %v4380
        %v4445 = vmul.f32 %v4381, %v4381
        %v4446 = vmul.f32 %v4382, %v4382
        %v4447 = vmul.f32 %v4383, %v4383
        %v4448 = vmul.f32 %v4384, %v4384
        %v4449 = vmul.f32 %v4385, %v4385
        %v4450 = vmul.f32 %v4386, %v4386
        %v4451 = vmul.f32 %v4387, %v4387
        %v4452 = vmul.f32 %v4388, %v4388
        %v4453 = vmul.f32 %v4389, %v4389
        %v4454 = vmul.f32 %v4390, %v4390
        %v4455 = vmul.f32 %v4391, %v4391
        %v4456 = vmul.f32 %v4392, %v4392
        %v4457 = vmul.f32 %v4393, %v4393
        %v4458 = vmul.f32 %v4394, %v4394
        %v4459 = vmul.f32 %v4395, %v4395
        %v4460 = vmul.f32 %v4396, %v4396
        %v4461 = vmul.f32 %v4397, %v4397
        %v4462 = vmul.f32 %v4398, %v4398
        %v4463 = vmul.f32 %v4399, %v4399
        %v4464 = vsub.f32 %v4400, %v4432
        %v4465 = vsub.f32 %v4401, %v4433
        %v4466 = vsub.f32 %v4402, %v4434
        %v4467 = vsub.f32 %v4403, %v4435
        %v4468 = vsub.f32 %v4404, %v4436
        %v4469 = vsub.f32 %v4405, %v4437
        %v4470 = vsub.f32 %v4406, %v4438
        %v4471 = vsub.f32 %v4407, %v4439
        %v4472 = vsub.f32 %v4408, %v4440
        %v4473 = vsub.f32 %v4409, %v4441
        %v4474 = vsub.f32 %v4410, %v4442
        %v4475 = vsub.f32 %v4411, %v4443
        %v4476 = vsub.f32 %v4412, %v4444
        %v4477 = vsub.f32 %v4413, %v4445
        %v4478 = vsub.f32 %v4414, %v4446
        %v4479 = vsub.f32 %v4415, %v4447
        %v4480 = vsub.f32 %v4416, %v4448
        %v4481 = vsub.f32 %v4417, %v4449
        %v4482 = vsub.f32 %v4418, %v4450
        %v4483 = vsub.f32 %v4419, %v4451
        %v4484 = vsub.f32 %v4420, %v4452
        %v4485 = vsub.f32 %v4421, %v4453
        %v4486 = vsub.f32 %v4422, %v4454
        %v4487 = vsub.f32 %v4423, %v4455
        %v4488 = vsub.f32 %v4424, %v4456
        %v4489 = vsub.f32 %v4425, %v4457
        %v4490 = vsub.f32 %v4426, %v4458
        %v4491 = vsub.f32 %v4427, %v4459
        %v4492 = vsub.f32 %v4428, %v4460
        %v4493 = vsub.f32 %v4429, %v4461
        %v4494 = vsub.f32 %v4430, %v4462
        %v4495 = vsub.f32 %v4431, %v4463
        %v4496 = vsub.f32 %v4176, %v4368
        %v4497 = vsub.f32 %v4177, %v4369
        %v4498 = vsub.f32 %v4178, %v4370
        %v4499 = vsub.f32 %v4179, %v4371
        %v4500 = vsub.f32 %v4180, %v4372
        %v4501 = vsub.f32 %v4181, %v4373
        %v4502 = vsub.f32 %v4182, %v4374
        %v4503 = vsub.f32 %v4183, %v4375
        %v4504 = vsub.f32 %v4184, %v4376
        %v4505 = vsub.f32 %v4185, %v4377
        %v4506 = vsub.f32 %v4186, %v4378
        %v4507 = vsub.f32 %v4187, %v4379
        %v4508 = vsub.f32 %v4188, %v4380
        %v4509 = vsub.f32 %v4189, %v4381
        %v4510 = vsub.f32 %v4190, %v4382
        %v4511 = vsub.f32 %v4191, %v4383
        %v4512 = vsub.f32 %v4192, %v4384
        %v4513 = vsub.f32 %v4193, %v4385
        %v4514 = vsub.f32 %v4194, %v4386
        %v4515 = vsub.f32 %v4195, %v4387
        %v4516 = vsub.f32 %v4196, %v4388
        %v4517 = vsub.f32 %v4197, %v4389
        %v4518 = vsub.f32 %v4198, %v4390
        %v4519 = vsub.f32 %v4199, %v4391
        %v4520 = vsub.f32 %v4200, %v4392
        %v4521 = vsub.f32 %v4201, %v4393
        %v4522 = vsub.f32 %v4202, %v4394
        %v4523 = vsub.f32 %v4203, %v4395
        %v4524 = vsub.f32 %v4204, %v4396
        %v4525 = vsub.f32 %v4205, %v4397
        %v4526 = vsub.f32 %v4206, %v4398
        %v4527 = vsub.f32 %v4207, %v4399
        %v4528 = vadd.f32 %v4464, 1e-06
        %v4529 = vadd.f32 %v4465, 1e-06
        %v4530 = vadd.f32 %v4466, 1e-06
        %v4531 = vadd.f32 %v4467, 1e-06
        %v4532 = vadd.f32 %v4468, 1e-06
        %v4533 = vadd.f32 %v4469, 1e-06
        %v4534 = vadd.f32 %v4470, 1e-06
        %v4535 = vadd.f32 %v4471, 1e-06
        %v4536 = vadd.f32 %v4472, 1e-06
        %v4537 = vadd.f32 %v4473, 1e-06
        %v4538 = vadd.f32 %v4474, 1e-06
        %v4539 = vadd.f32 %v4475, 1e-06
        %v4540 = vadd.f32 %v4476, 1e-06
        %v4541 = vadd.f32 %v4477, 1e-06
        %v4542 = vadd.f32 %v4478, 1e-06
        %v4543 = vadd.f32 %v4479, 1e-06
        %v4544 = vadd.f32 %v4480, 1e-06
        %v4545 = vadd.f32 %v4481, 1e-06
        %v4546 = vadd.f32 %v4482, 1e-06
        %v4547 = vadd.f32 %v4483, 1e-06
        %v4548 = vadd.f32 %v4484, 1e-06
        %v4549 = vadd.f32 %v4485, 1e-06
        %v4550 = vadd.f32 %v4486, 1e-06
        %v4551 = vadd.f32 %v4487, 1e-06
        %v4552 = vadd.f32 %v4488, 1e-06
        %v4553 = vadd.f32 %v4489, 1e-06
        %v4554 = vadd.f32 %v4490, 1e-06
        %v4555 = vadd.f32 %v4491, 1e-06
        %v4556 = vadd.f32 %v4492, 1e-06
        %v4557 = vadd.f32 %v4493, 1e-06
        %v4558 = vadd.f32 %v4494, 1e-06
        %v4559 = vadd.f32 %v4495, 1e-06
        %v4560 = vrsqrt.pop %v4528
        %v4561 = vrsqrt.pop %v4529
        %v4562 = vrsqrt.pop %v4530
        %v4563 = vrsqrt.pop %v4531
        %v4564 = vrsqrt.pop %v4532
        %v4565 = vrsqrt.pop %v4533
        %v4566 = vrsqrt.pop %v4534
        %v4567 = vrsqrt.pop %v4535
        %v4568 = vrsqrt.pop %v4536
        %v4569 = vrsqrt.pop %v4537
        %v4570 = vrsqrt.pop %v4538
        %v4571 = vrsqrt.pop %v4539
        %v4572 = vrsqrt.pop %v4540
        %v4573 = vrsqrt.pop %v4541
        %v4574 = vrsqrt.pop %v4542
        %v4575 = vrsqrt.pop %v4543
        %v4576 = vrsqrt.pop %v4544
        %v4577 = vrsqrt.pop %v4545
        %v4578 = vrsqrt.pop %v4546
        %v4579 = vrsqrt.pop %v4547
        %v4580 = vrsqrt.pop %v4548
        %v4581 = vrsqrt.pop %v4549
        %v4582 = vrsqrt.pop %v4550
        %v4583 = vrsqrt.pop %v4551
        %v4584 = vrsqrt.pop %v4552
        %v4585 = vrsqrt.pop %v4553
        %v4586 = vrsqrt.pop %v4554
        %v4587 = vrsqrt.pop %v4555
        %v4588 = vrsqrt.pop %v4556
        %v4589 = vrsqrt.pop %v4557
        %v4590 = vrsqrt.pop %v4558
        %v4591 = vrsqrt.pop %v4559
        %v4592 = vmul.f32 %v4496, %v4560
        %v4593 = vmul.f32 %v4497, %v4561
        %v4594 = vmul.f32 %v4498, %v4562
        %v4595 = vmul.f32 %v4499, %v4563
        %v4596 = vmul.f32 %v4500, %v4564
        %v4597 = vmul.f32 %v4501, %v4565
        %v4598 = vmul.f32 %v4502, %v4566
        %v4599 = vmul.f32 %v4503, %v4567
        %v4600 = vmul.f32 %v4504, %v4568
        %v4601 = vmul.f32 %v4505, %v4569
        %v4602 = vmul.f32 %v4506, %v4570
        %v4603 = vmul.f32 %v4507, %v4571
        %v4604 = vmul.f32 %v4508, %v4572
        %v4605 = vmul.f32 %v4509, %v4573
        %v4606 = vmul.f32 %v4510, %v4574
        %v4607 = vmul.f32 %v4511, %v4575
        %v4608 = vmul.f32 %v4512, %v4576
        %v4609 = vmul.f32 %v4513, %v4577
        %v4610 = vmul.f32 %v4514, %v4578
        %v4611 = vmul.f32 %v4515, %v4579
        %v4612 = vmul.f32 %v4516, %v4580
        %v4613 = vmul.f32 %v4517, %v4581
        %v4614 = vmul.f32 %v4518, %v4582
        %v4615 = vmul.f32 %v4519, %v4583
        %v4616 = vmul.f32 %v4520, %v4584
        %v4617 = vmul.f32 %v4521, %v4585
        %v4618 = vmul.f32 %v4522, %v4586
        %v4619 = vmul.f32 %v4523, %v4587
        %v4620 = vmul.f32 %v4524, %v4588
        %v4621 = vmul.f32 %v4525, %v4589
        %v4622 = vmul.f32 %v4526, %v4590
        %v4623 = vmul.f32 %v4527, %v4591
        %v4624 = vpack.c.bf16 %v4593, %v4592
        %v4625 = vpack.c.bf16 %v4595, %v4594
        %v4626 = vpack.c.bf16 %v4597, %v4596
        %v4627 = vpack.c.bf16 %v4599, %v4598
        %v4628 = vpack.c.bf16 %v4601, %v4600
        %v4629 = vpack.c.bf16 %v4603, %v4602
        %v4630 = vpack.c.bf16 %v4605, %v4604
        %v4631 = vpack.c.bf16 %v4607, %v4606
        %v4632 = vpack.c.bf16 %v4609, %v4608
        %v4633 = vpack.c.bf16 %v4611, %v4610
        %v4634 = vpack.c.bf16 %v4613, %v4612
        %v4635 = vpack.c.bf16 %v4615, %v4614
        %v4636 = vpack.c.bf16 %v4617, %v4616
        %v4637 = vpack.c.bf16 %v4619, %v4618
        %v4638 = vpack.c.bf16 %v4621, %v4620
        %v4639 = vpack.c.bf16 %v4623, %v4622
        %v4640 = vld [vmem:[#allocation8] sm:$0xf]
        %v4641 = vld [vmem:[#allocation8 + $0x4] sm:$0xf]
        %v4642 = vld [vmem:[#allocation8 + $0x8] sm:$0xf]
        %v4643 = vld [vmem:[#allocation8 + $0xc] sm:$0xf]
        %v4644 = vld [vmem:[#allocation8 + $0x10] sm:$0xf]
        %v4645 = vld [vmem:[#allocation8 + $0x14] sm:$0xf]
        %v4646 = vld [vmem:[#allocation8 + $0x18] sm:$0xf]
        %v4647 = vld [vmem:[#allocation8 + $0x1c] sm:$0xf]
        %v4648 = vld [vmem:[#allocation8 + $0x20] sm:$0xf]
        %v4649 = vld [vmem:[#allocation8 + $0x24] sm:$0xf]
        %v4650 = vld [vmem:[#allocation8 + $0x28] sm:$0xf]
        %v4651 = vld [vmem:[#allocation8 + $0x2c] sm:$0xf]
        %v4652 = vld [vmem:[#allocation8 + $0x30] sm:$0xf]
        %v4653 = vld [vmem:[#allocation8 + $0x34] sm:$0xf]
        %v4654 = vld [vmem:[#allocation8 + $0x38] sm:$0xf]
        %v4655 = vld [vmem:[#allocation8 + $0x3c] sm:$0xf]
        %v4656 = vld [vmem:[%s4] sm:$0x1]
        %v4658 = vlaneseq
        %v4659 = vshrl.u32 %v4658, 7
        %v4660 = vsub.s32 0, %v4659
        %v4661 = vrot.slane %v4656, %v4660
        %v4679 = vunpack.c.l.b16 %v4640
        %v4680 = vunpack.c.l.b16 %v4641
        %v4681 = vunpack.c.l.b16 %v4642
        %v4682 = vunpack.c.l.b16 %v4643
        %v4683 = vunpack.c.l.b16 %v4644
        %v4684 = vunpack.c.l.b16 %v4645
        %v4685 = vunpack.c.l.b16 %v4646
        %v4686 = vunpack.c.l.b16 %v4647
        %v4687 = vunpack.c.l.b16 %v4648
        %v4688 = vunpack.c.l.b16 %v4649
        %v4689 = vunpack.c.l.b16 %v4650
        %v4690 = vunpack.c.l.b16 %v4651
        %v4691 = vunpack.c.l.b16 %v4652
        %v4692 = vunpack.c.l.b16 %v4653
        %v4693 = vunpack.c.l.b16 %v4654
        %v4694 = vunpack.c.l.b16 %v4655
        %v4695 = vpack.c.b16 %v4680, %v4679
        %v4696 = vpack.c.b16 %v4682, %v4681
        %v4697 = vpack.c.b16 %v4684, %v4683
        %v4698 = vpack.c.b16 %v4686, %v4685
        %v4699 = vpack.c.b16 %v4688, %v4687
        %v4700 = vpack.c.b16 %v4690, %v4689
        %v4701 = vpack.c.b16 %v4692, %v4691
        %v4702 = vpack.c.b16 %v4694, %v4693
        %4711 = vmatprep.subr.bf16.mxu0 0
        %4712 = vmatpush1.bf16.msra.mxu0 %v4702
        %4713 = vmatprep.subr.bf16.mxu0 0
        %4714 = vmatpush1.bf16.msra.mxu0 %v4701
        %4715 = vmatprep.subr.bf16.mxu0 0
        %4716 = vmatpush1.bf16.msra.mxu0 %v4700
        %4717 = vmatprep.subr.bf16.mxu0 0
        %4718 = vmatpush1.bf16.msra.mxu0 %v4699
        %4719 = vmatprep.subr.bf16.mxu0 0
        %4720 = vmatpush1.bf16.msra.mxu0 %v4698
        %4721 = vmatprep.subr.bf16.mxu0 0
        %4722 = vmatpush1.bf16.msra.mxu0 %v4697
        %4723 = vmatprep.subr.bf16.mxu0 0
        %4724 = vmatpush1.bf16.msra.mxu0 %v4696
        %4725 = vmatprep.subr.bf16.mxu0 0
        %4726 = vmatpush1.bf16.msra.mxu0 %v4695
        %4727 = vmatprep.subr.bf16.mxu0 0
        %4728 = vmatpush2.bf16.msra.mxu0 0
        %4729 = vmatprep.subr.bf16.mxu0 0
        %4730 = vmatpush2.bf16.msra.mxu0 0
        %4731 = vmatprep.subr.bf16.mxu0 0
        %4732 = vmatpush2.bf16.msra.mxu0 0
        %4733 = vmatprep.subr.bf16.mxu0 0
        %4734 = vmatpush2.bf16.msra.mxu0 0
        %4735 = vmatprep.subr.bf16.mxu0 0
        %4736 = vmatpush2.bf16.msra.mxu0 0
        %4737 = vmatprep.subr.bf16.mxu0 0
        %4738 = vmatpush2.bf16.msra.mxu0 0
        %4739 = vmatprep.subr.bf16.mxu0 0
        %4740 = vmatpush2.bf16.msra.mxu0 0
        %4741 = vmatprep.subr.bf16.mxu0 0
        %4742 = vmatpush2.bf16.msra.mxu0 0
        %4743 = vmatprep.mubr.bf16.mxu0 0
        %4744 = vmatmul.mubr.bf16.gmra.mxu0 %v4624
        %v4745 = vpop.f32.mrf.mxu0
        %v4746 = vadd.f32 %v4661, %v4745
        %v4747 = vpop.f32.mrf.mxu0
        %v4748 = vpop.f32.mrf.mxu0
        %v4749 = vadd.f32 %v4661, %v4748
        %v4750 = vpop.f32.mrf.mxu0
        %4751 = vmatprep.mubr.bf16.mxu0 0
        %4752 = vmatmul.mubr.bf16.gmra.mxu0 %v4625
        %v4753 = vpop.f32.mrf.mxu0
        %v4754 = vadd.f32 %v4661, %v4753
        %v4755 = vpop.f32.mrf.mxu0
        %v4756 = vpop.f32.mrf.mxu0
        %v4757 = vadd.f32 %v4661, %v4756
        %v4758 = vpop.f32.mrf.mxu0
        %4759 = vmatprep.mubr.bf16.mxu0 0
        %4760 = vmatmul.mubr.bf16.gmra.mxu0 %v4626
        %v4761 = vpop.f32.mrf.mxu0
        %v4762 = vadd.f32 %v4661, %v4761
        %v4763 = vpop.f32.mrf.mxu0
        %v4764 = vpop.f32.mrf.mxu0
        %v4765 = vadd.f32 %v4661, %v4764
        %v4766 = vpop.f32.mrf.mxu0
        %4767 = vmatprep.mubr.bf16.mxu0 0
        %4768 = vmatmul.mubr.bf16.gmra.mxu0 %v4627
        %v4769 = vpop.f32.mrf.mxu0
        %v4770 = vadd.f32 %v4661, %v4769
        %v4771 = vpop.f32.mrf.mxu0
        %v4772 = vpop.f32.mrf.mxu0
        %v4773 = vadd.f32 %v4661, %v4772
        %v4774 = vpop.f32.mrf.mxu0
        %4775 = vmatprep.mubr.bf16.mxu0 0
        %4776 = vmatmul.mubr.bf16.gmra.mxu0 %v4628
        %v4777 = vpop.f32.mrf.mxu0
        %v4778 = vadd.f32 %v4661, %v4777
        %v4779 = vpop.f32.mrf.mxu0
        %v4780 = vpop.f32.mrf.mxu0
        %v4781 = vadd.f32 %v4661, %v4780
        %v4782 = vpop.f32.mrf.mxu0
        %4783 = vmatprep.mubr.bf16.mxu0 0
        %4784 = vmatmul.mubr.bf16.gmra.mxu0 %v4629
        %v4785 = vpop.f32.mrf.mxu0
        %v4786 = vadd.f32 %v4661, %v4785
        %v4787 = vpop.f32.mrf.mxu0
        %v4788 = vpop.f32.mrf.mxu0
        %v4789 = vadd.f32 %v4661, %v4788
        %v4790 = vpop.f32.mrf.mxu0
        %4791 = vmatprep.mubr.bf16.mxu0 0
        %4792 = vmatmul.mubr.bf16.gmra.mxu0 %v4630
        %v4793 = vpop.f32.mrf.mxu0
        %v4794 = vadd.f32 %v4661, %v4793
        %v4795 = vpop.f32.mrf.mxu0
        %v4796 = vpop.f32.mrf.mxu0
        %v4797 = vadd.f32 %v4661, %v4796
        %v4798 = vpop.f32.mrf.mxu0
        %4799 = vmatprep.mubr.bf16.mxu0 0
        %4800 = vmatmul.mubr.bf16.gmra.mxu0 %v4631
        %v4801 = vpop.f32.mrf.mxu0
        %v4802 = vadd.f32 %v4661, %v4801
        %v4803 = vpop.f32.mrf.mxu0
        %v4804 = vpop.f32.mrf.mxu0
        %v4805 = vadd.f32 %v4661, %v4804
        %v4806 = vpop.f32.mrf.mxu0
        %4807 = vmatprep.mubr.bf16.mxu0 0
        %4808 = vmatmul.mubr.bf16.gmra.mxu0 %v4632
        %v4809 = vpop.f32.mrf.mxu0
        %v4810 = vadd.f32 %v4661, %v4809
        %v4811 = vpop.f32.mrf.mxu0
        %v4812 = vpop.f32.mrf.mxu0
        %v4813 = vadd.f32 %v4661, %v4812
        %v4814 = vpop.f32.mrf.mxu0
        %4815 = vmatprep.mubr.bf16.mxu0 0
        %4816 = vmatmul.mubr.bf16.gmra.mxu0 %v4633
        %v4817 = vpop.f32.mrf.mxu0
        %v4818 = vadd.f32 %v4661, %v4817
        %v4819 = vpop.f32.mrf.mxu0
        %v4820 = vpop.f32.mrf.mxu0
        %v4821 = vadd.f32 %v4661, %v4820
        %v4822 = vpop.f32.mrf.mxu0
        %4823 = vmatprep.mubr.bf16.mxu0 0
        %4824 = vmatmul.mubr.bf16.gmra.mxu0 %v4634
        %v4825 = vpop.f32.mrf.mxu0
        %v4826 = vadd.f32 %v4661, %v4825
        %v4827 = vpop.f32.mrf.mxu0
        %v4828 = vpop.f32.mrf.mxu0
        %v4829 = vadd.f32 %v4661, %v4828
        %v4830 = vpop.f32.mrf.mxu0
        %4831 = vmatprep.mubr.bf16.mxu0 0
        %4832 = vmatmul.mubr.bf16.gmra.mxu0 %v4635
        %v4833 = vpop.f32.mrf.mxu0
        %v4834 = vadd.f32 %v4661, %v4833
        %v4835 = vpop.f32.mrf.mxu0
        %v4836 = vpop.f32.mrf.mxu0
        %v4837 = vadd.f32 %v4661, %v4836
        %v4838 = vpop.f32.mrf.mxu0
        %4839 = vmatprep.mubr.bf16.mxu0 0
        %4840 = vmatmul.mubr.bf16.gmra.mxu0 %v4636
        %v4841 = vpop.f32.mrf.mxu0
        %v4842 = vadd.f32 %v4661, %v4841
        %v4843 = vpop.f32.mrf.mxu0
        %v4844 = vpop.f32.mrf.mxu0
        %v4845 = vadd.f32 %v4661, %v4844
        %v4846 = vpop.f32.mrf.mxu0
        %4847 = vmatprep.mubr.bf16.mxu0 0
        %4848 = vmatmul.mubr.bf16.gmra.mxu0 %v4637
        %v4849 = vpop.f32.mrf.mxu0
        %v4850 = vadd.f32 %v4661, %v4849
        %v4851 = vpop.f32.mrf.mxu0
        %v4852 = vpop.f32.mrf.mxu0
        %v4853 = vadd.f32 %v4661, %v4852
        %v4854 = vpop.f32.mrf.mxu0
        %4855 = vmatprep.mubr.bf16.mxu0 0
        %4856 = vmatmul.mubr.bf16.gmra.mxu0 %v4638
        %v4857 = vpop.f32.mrf.mxu0
        %v4858 = vadd.f32 %v4661, %v4857
        %v4859 = vpop.f32.mrf.mxu0
        %v4860 = vpop.f32.mrf.mxu0
        %v4861 = vadd.f32 %v4661, %v4860
        %v4862 = vpop.f32.mrf.mxu0
        %4863 = vmatprep.mubr.bf16.mxu0 0
        %4864 = vmatmul.mubr.bf16.gmra.mxu0 %v4639
        %v4865 = vpop.f32.mrf.mxu0
        %v4866 = vadd.f32 %v4661, %v4865
        %v4867 = vpop.f32.mrf.mxu0
        %v4868 = vpop.f32.mrf.mxu0
        %v4869 = vadd.f32 %v4661, %v4868
        %v4870 = vpop.f32.mrf.mxu0
        %4871 = vdwg.mxu0
        %v4872 = vmul.f32 %v4746, %v4746
        %v4873 = vmul.f32 %v4749, %v4749
        %v4874 = vmul.f32 %v4754, %v4754
        %v4875 = vmul.f32 %v4757, %v4757
        %v4876 = vmul.f32 %v4762, %v4762
        %v4877 = vmul.f32 %v4765, %v4765
        %v4878 = vmul.f32 %v4770, %v4770
        %v4879 = vmul.f32 %v4773, %v4773
        %v4880 = vmul.f32 %v4778, %v4778
        %v4881 = vmul.f32 %v4781, %v4781
        %v4882 = vmul.f32 %v4786, %v4786
        %v4883 = vmul.f32 %v4789, %v4789
        %v4884 = vmul.f32 %v4794, %v4794
        %v4885 = vmul.f32 %v4797, %v4797
        %v4886 = vmul.f32 %v4802, %v4802
        %v4887 = vmul.f32 %v4805, %v4805
        %v4888 = vmul.f32 %v4810, %v4810
        %v4889 = vmul.f32 %v4813, %v4813
        %v4890 = vmul.f32 %v4818, %v4818
        %v4891 = vmul.f32 %v4821, %v4821
        %v4892 = vmul.f32 %v4826, %v4826
        %v4893 = vmul.f32 %v4829, %v4829
        %v4894 = vmul.f32 %v4834, %v4834
        %v4895 = vmul.f32 %v4837, %v4837
        %v4896 = vmul.f32 %v4842, %v4842
        %v4897 = vmul.f32 %v4845, %v4845
        %v4898 = vmul.f32 %v4850, %v4850
        %v4899 = vmul.f32 %v4853, %v4853
        %v4900 = vmul.f32 %v4858, %v4858
        %v4901 = vmul.f32 %v4861, %v4861
        %v4902 = vmul.f32 %v4866, %v4866
        %v4903 = vmul.f32 %v4869, %v4869
        %v4904 = vmul.f32 %v4746, %v4872
        %v4905 = vmul.f32 %v4749, %v4873
        %v4906 = vmul.f32 %v4754, %v4874
        %v4907 = vmul.f32 %v4757, %v4875
        %v4908 = vmul.f32 %v4762, %v4876
        %v4909 = vmul.f32 %v4765, %v4877
        %v4910 = vmul.f32 %v4770, %v4878
        %v4911 = vmul.f32 %v4773, %v4879
        %v4912 = vmul.f32 %v4778, %v4880
        %v4913 = vmul.f32 %v4781, %v4881
        %v4914 = vmul.f32 %v4786, %v4882
        %v4915 = vmul.f32 %v4789, %v4883
        %v4916 = vmul.f32 %v4794, %v4884
        %v4917 = vmul.f32 %v4797, %v4885
        %v4918 = vmul.f32 %v4802, %v4886
        %v4919 = vmul.f32 %v4805, %v4887
        %v4920 = vmul.f32 %v4810, %v4888
        %v4921 = vmul.f32 %v4813, %v4889
        %v4922 = vmul.f32 %v4818, %v4890
        %v4923 = vmul.f32 %v4821, %v4891
        %v4924 = vmul.f32 %v4826, %v4892
        %v4925 = vmul.f32 %v4829, %v4893
        %v4926 = vmul.f32 %v4834, %v4894
        %v4927 = vmul.f32 %v4837, %v4895
        %v4928 = vmul.f32 %v4842, %v4896
        %v4929 = vmul.f32 %v4845, %v4897
        %v4930 = vmul.f32 %v4850, %v4898
        %v4931 = vmul.f32 %v4853, %v4899
        %v4932 = vmul.f32 %v4858, %v4900
        %v4933 = vmul.f32 %v4861, %v4901
        %v4934 = vmul.f32 %v4866, %v4902
        %v4935 = vmul.f32 %v4869, %v4903
        %v4936 = vmul.f32 %v4904, 0.044715
        %v4937 = vmul.f32 %v4905, 0.044715
        %v4938 = vmul.f32 %v4906, 0.044715
        %v4939 = vmul.f32 %v4907, 0.044715
        %v4940 = vmul.f32 %v4908, 0.044715
        %v4941 = vmul.f32 %v4909, 0.044715
        %v4942 = vmul.f32 %v4910, 0.044715
        %v4943 = vmul.f32 %v4911, 0.044715
        %v4944 = vmul.f32 %v4912, 0.044715
        %v4945 = vmul.f32 %v4913, 0.044715
        %v4946 = vmul.f32 %v4914, 0.044715
        %v4947 = vmul.f32 %v4915, 0.044715
        %v4948 = vmul.f32 %v4916, 0.044715
        %v4949 = vmul.f32 %v4917, 0.044715
        %v4950 = vmul.f32 %v4918, 0.044715
        %v4951 = vmul.f32 %v4919, 0.044715
        %v4952 = vmul.f32 %v4920, 0.044715
        %v4953 = vmul.f32 %v4921, 0.044715
        %v4954 = vmul.f32 %v4922, 0.044715
        %v4955 = vmul.f32 %v4923, 0.044715
        %v4956 = vmul.f32 %v4924, 0.044715
        %v4957 = vmul.f32 %v4925, 0.044715
        %v4958 = vmul.f32 %v4926, 0.044715
        %v4959 = vmul.f32 %v4927, 0.044715
        %v4960 = vmul.f32 %v4928, 0.044715
        %v4961 = vmul.f32 %v4929, 0.044715
        %v4962 = vmul.f32 %v4930, 0.044715
        %v4963 = vmul.f32 %v4931, 0.044715
        %v4964 = vmul.f32 %v4932, 0.044715
        %v4965 = vmul.f32 %v4933, 0.044715
        %v4966 = vmul.f32 %v4934, 0.044715
        %v4967 = vmul.f32 %v4935, 0.044715
        %v4968 = vadd.f32 %v4746, %v4936
        %v4969 = vadd.f32 %v4749, %v4937
        %v4970 = vadd.f32 %v4754, %v4938
        %v4971 = vadd.f32 %v4757, %v4939
        %v4972 = vadd.f32 %v4762, %v4940
        %v4973 = vadd.f32 %v4765, %v4941
        %v4974 = vadd.f32 %v4770, %v4942
        %v4975 = vadd.f32 %v4773, %v4943
        %v4976 = vadd.f32 %v4778, %v4944
        %v4977 = vadd.f32 %v4781, %v4945
        %v4978 = vadd.f32 %v4786, %v4946
        %v4979 = vadd.f32 %v4789, %v4947
        %v4980 = vadd.f32 %v4794, %v4948
        %v4981 = vadd.f32 %v4797, %v4949
        %v4982 = vadd.f32 %v4802, %v4950
        %v4983 = vadd.f32 %v4805, %v4951
        %v4984 = vadd.f32 %v4810, %v4952
        %v4985 = vadd.f32 %v4813, %v4953
        %v4986 = vadd.f32 %v4818, %v4954
        %v4987 = vadd.f32 %v4821, %v4955
        %v4988 = vadd.f32 %v4826, %v4956
        %v4989 = vadd.f32 %v4829, %v4957
        %v4990 = vadd.f32 %v4834, %v4958
        %v4991 = vadd.f32 %v4837, %v4959
        %v4992 = vadd.f32 %v4842, %v4960
        %v4993 = vadd.f32 %v4845, %v4961
        %v4994 = vadd.f32 %v4850, %v4962
        %v4995 = vadd.f32 %v4853, %v4963
        %v4996 = vadd.f32 %v4858, %v4964
        %v4997 = vadd.f32 %v4861, %v4965
        %v4998 = vadd.f32 %v4866, %v4966
        %v4999 = vadd.f32 %v4869, %v4967
        %v5000 = vmul.f32 %v4968, 0.7978846
        %v5001 = vmul.f32 %v4969, 0.7978846
        %v5002 = vmul.f32 %v4970, 0.7978846
        %v5003 = vmul.f32 %v4971, 0.7978846
        %v5004 = vmul.f32 %v4972, 0.7978846
        %v5005 = vmul.f32 %v4973, 0.7978846
        %v5006 = vmul.f32 %v4974, 0.7978846
        %v5007 = vmul.f32 %v4975, 0.7978846
        %v5008 = vmul.f32 %v4976, 0.7978846
        %v5009 = vmul.f32 %v4977, 0.7978846
        %v5010 = vmul.f32 %v4978, 0.7978846
        %v5011 = vmul.f32 %v4979, 0.7978846
        %v5012 = vmul.f32 %v4980, 0.7978846
        %v5013 = vmul.f32 %v4981, 0.7978846
        %v5014 = vmul.f32 %v4982, 0.7978846
        %v5015 = vmul.f32 %v4983, 0.7978846
        %v5016 = vmul.f32 %v4984, 0.7978846
        %v5017 = vmul.f32 %v4985, 0.7978846
        %v5018 = vmul.f32 %v4986, 0.7978846
        %v5019 = vmul.f32 %v4987, 0.7978846
        %v5020 = vmul.f32 %v4988, 0.7978846
        %v5021 = vmul.f32 %v4989, 0.7978846
        %v5022 = vmul.f32 %v4990, 0.7978846
        %v5023 = vmul.f32 %v4991, 0.7978846
        %v5024 = vmul.f32 %v4992, 0.7978846
        %v5025 = vmul.f32 %v4993, 0.7978846
        %v5026 = vmul.f32 %v4994, 0.7978846
        %v5027 = vmul.f32 %v4995, 0.7978846
        %v5028 = vmul.f32 %v4996, 0.7978846
        %v5029 = vmul.f32 %v4997, 0.7978846
        %v5030 = vmul.f32 %v4998, 0.7978846
        %v5031 = vmul.f32 %v4999, 0.7978846
        %v5032 = vtanh.pop %v5000
        %v5033 = vtanh.pop %v5001
        %v5034 = vtanh.pop %v5002
        %v5035 = vtanh.pop %v5003
        %v5036 = vtanh.pop %v5004
        %v5037 = vtanh.pop %v5005
        %v5038 = vtanh.pop %v5006
        %v5039 = vtanh.pop %v5007
        %v5040 = vtanh.pop %v5008
        %v5041 = vtanh.pop %v5009
        %v5042 = vtanh.pop %v5010
        %v5043 = vtanh.pop %v5011
        %v5044 = vtanh.pop %v5012
        %v5045 = vtanh.pop %v5013
        %v5046 = vtanh.pop %v5014
        %v5047 = vtanh.pop %v5015
        %v5048 = vtanh.pop %v5016
        %v5049 = vtanh.pop %v5017
        %v5050 = vtanh.pop %v5018
        %v5051 = vtanh.pop %v5019
        %v5052 = vtanh.pop %v5020
        %v5053 = vtanh.pop %v5021
        %v5054 = vtanh.pop %v5022
        %v5055 = vtanh.pop %v5023
        %v5056 = vtanh.pop %v5024
        %v5057 = vtanh.pop %v5025
        %v5058 = vtanh.pop %v5026
        %v5059 = vtanh.pop %v5027
        %v5060 = vtanh.pop %v5028
        %v5061 = vtanh.pop %v5029
        %v5062 = vtanh.pop %v5030
        %v5063 = vtanh.pop %v5031
        %v5064 = vadd.f32 %v5032, 1.0
        %v5065 = vadd.f32 %v5033, 1.0
        %v5066 = vadd.f32 %v5034, 1.0
        %v5067 = vadd.f32 %v5035, 1.0
        %v5068 = vadd.f32 %v5036, 1.0
        %v5069 = vadd.f32 %v5037, 1.0
        %v5070 = vadd.f32 %v5038, 1.0
        %v5071 = vadd.f32 %v5039, 1.0
        %v5072 = vadd.f32 %v5040, 1.0
        %v5073 = vadd.f32 %v5041, 1.0
        %v5074 = vadd.f32 %v5042, 1.0
        %v5075 = vadd.f32 %v5043, 1.0
        %v5076 = vadd.f32 %v5044, 1.0
        %v5077 = vadd.f32 %v5045, 1.0
        %v5078 = vadd.f32 %v5046, 1.0
        %v5079 = vadd.f32 %v5047, 1.0
        %v5080 = vadd.f32 %v5048, 1.0
        %v5081 = vadd.f32 %v5049, 1.0
        %v5082 = vadd.f32 %v5050, 1.0
        %v5083 = vadd.f32 %v5051, 1.0
        %v5084 = vadd.f32 %v5052, 1.0
        %v5085 = vadd.f32 %v5053, 1.0
        %v5086 = vadd.f32 %v5054, 1.0
        %v5087 = vadd.f32 %v5055, 1.0
        %v5088 = vadd.f32 %v5056, 1.0
        %v5089 = vadd.f32 %v5057, 1.0
        %v5090 = vadd.f32 %v5058, 1.0
        %v5091 = vadd.f32 %v5059, 1.0
        %v5092 = vadd.f32 %v5060, 1.0
        %v5093 = vadd.f32 %v5061, 1.0
        %v5094 = vadd.f32 %v5062, 1.0
        %v5095 = vadd.f32 %v5063, 1.0
        %v5096 = vmul.f32 %v5064, 0.5
        %v5097 = vmul.f32 %v5065, 0.5
        %v5098 = vmul.f32 %v5066, 0.5
        %v5099 = vmul.f32 %v5067, 0.5
        %v5100 = vmul.f32 %v5068, 0.5
        %v5101 = vmul.f32 %v5069, 0.5
        %v5102 = vmul.f32 %v5070, 0.5
        %v5103 = vmul.f32 %v5071, 0.5
        %v5104 = vmul.f32 %v5072, 0.5
        %v5105 = vmul.f32 %v5073, 0.5
        %v5106 = vmul.f32 %v5074, 0.5
        %v5107 = vmul.f32 %v5075, 0.5
        %v5108 = vmul.f32 %v5076, 0.5
        %v5109 = vmul.f32 %v5077, 0.5
        %v5110 = vmul.f32 %v5078, 0.5
        %v5111 = vmul.f32 %v5079, 0.5
        %v5112 = vmul.f32 %v5080, 0.5
        %v5113 = vmul.f32 %v5081, 0.5
        %v5114 = vmul.f32 %v5082, 0.5
        %v5115 = vmul.f32 %v5083, 0.5
        %v5116 = vmul.f32 %v5084, 0.5
        %v5117 = vmul.f32 %v5085, 0.5
        %v5118 = vmul.f32 %v5086, 0.5
        %v5119 = vmul.f32 %v5087, 0.5
        %v5120 = vmul.f32 %v5088, 0.5
        %v5121 = vmul.f32 %v5089, 0.5
        %v5122 = vmul.f32 %v5090, 0.5
        %v5123 = vmul.f32 %v5091, 0.5
        %v5124 = vmul.f32 %v5092, 0.5
        %v5125 = vmul.f32 %v5093, 0.5
        %v5126 = vmul.f32 %v5094, 0.5
        %v5127 = vmul.f32 %v5095, 0.5
        %v5128 = vmul.f32 %v4746, %v5096
        %v5129 = vmul.f32 %v4749, %v5097
        %v5130 = vmul.f32 %v4754, %v5098
        %v5131 = vmul.f32 %v4757, %v5099
        %v5132 = vmul.f32 %v4762, %v5100
        %v5133 = vmul.f32 %v4765, %v5101
        %v5134 = vmul.f32 %v4770, %v5102
        %v5135 = vmul.f32 %v4773, %v5103
        %v5136 = vmul.f32 %v4778, %v5104
        %v5137 = vmul.f32 %v4781, %v5105
        %v5138 = vmul.f32 %v4786, %v5106
        %v5139 = vmul.f32 %v4789, %v5107
        %v5140 = vmul.f32 %v4794, %v5108
        %v5141 = vmul.f32 %v4797, %v5109
        %v5142 = vmul.f32 %v4802, %v5110
        %v5143 = vmul.f32 %v4805, %v5111
        %v5144 = vmul.f32 %v4810, %v5112
        %v5145 = vmul.f32 %v4813, %v5113
        %v5146 = vmul.f32 %v4818, %v5114
        %v5147 = vmul.f32 %v4821, %v5115
        %v5148 = vmul.f32 %v4826, %v5116
        %v5149 = vmul.f32 %v4829, %v5117
        %v5150 = vmul.f32 %v4834, %v5118
        %v5151 = vmul.f32 %v4837, %v5119
        %v5152 = vmul.f32 %v4842, %v5120
        %v5153 = vmul.f32 %v4845, %v5121
        %v5154 = vmul.f32 %v4850, %v5122
        %v5155 = vmul.f32 %v4853, %v5123
        %v5156 = vmul.f32 %v4858, %v5124
        %v5157 = vmul.f32 %v4861, %v5125
        %v5158 = vmul.f32 %v4866, %v5126
        %v5159 = vmul.f32 %v4869, %v5127
        %v5160 = vmul.f32 %v5128, %v5128
        %v5161 = vmul.f32 %v5129, %v5129
        %v5162 = vmul.f32 %v5130, %v5130
        %v5163 = vmul.f32 %v5131, %v5131
        %v5164 = vmul.f32 %v5132, %v5132
        %v5165 = vmul.f32 %v5133, %v5133
        %v5166 = vmul.f32 %v5134, %v5134
        %v5167 = vmul.f32 %v5135, %v5135
        %v5168 = vmul.f32 %v5136, %v5136
        %v5169 = vmul.f32 %v5137, %v5137
        %v5170 = vmul.f32 %v5138, %v5138
        %v5171 = vmul.f32 %v5139, %v5139
        %v5172 = vmul.f32 %v5140, %v5140
        %v5173 = vmul.f32 %v5141, %v5141
        %v5174 = vmul.f32 %v5142, %v5142
        %v5175 = vmul.f32 %v5143, %v5143
        %v5176 = vmul.f32 %v5144, %v5144
        %v5177 = vmul.f32 %v5145, %v5145
        %v5178 = vmul.f32 %v5146, %v5146
        %v5179 = vmul.f32 %v5147, %v5147
        %v5180 = vmul.f32 %v5148, %v5148
        %v5181 = vmul.f32 %v5149, %v5149
        %v5182 = vmul.f32 %v5150, %v5150
        %v5183 = vmul.f32 %v5151, %v5151
        %v5184 = vmul.f32 %v5152, %v5152
        %v5185 = vmul.f32 %v5153, %v5153
        %v5186 = vmul.f32 %v5154, %v5154
        %v5187 = vmul.f32 %v5155, %v5155
        %v5188 = vmul.f32 %v5156, %v5156
        %v5189 = vmul.f32 %v5157, %v5157
        %v5190 = vmul.f32 %v5158, %v5158
        %v5191 = vmul.f32 %v5159, %v5159
        %v5192 = vadd.f32 %v5160, %v5161
        %v5193 = vadd.f32 %v5192, %v5162
        %v5194 = vadd.f32 %v5193, %v5163
        %v5195 = vadd.f32 %v5194, %v5164
        %v5196 = vadd.f32 %v5195, %v5165
        %v5197 = vadd.f32 %v5196, %v5166
        %v5198 = vadd.f32 %v5197, %v5167
        %v5199 = vadd.f32 %v5198, %v5168
        %v5200 = vadd.f32 %v5199, %v5169
        %v5201 = vadd.f32 %v5200, %v5170
        %v5202 = vadd.f32 %v5201, %v5171
        %v5203 = vadd.f32 %v5202, %v5172
        %v5204 = vadd.f32 %v5203, %v5173
        %v5205 = vadd.f32 %v5204, %v5174
        %v5206 = vadd.f32 %v5205, %v5175
        %v5207 = vadd.f32 %v5206, %v5176
        %v5208 = vadd.f32 %v5207, %v5177
        %v5209 = vadd.f32 %v5208, %v5178
        %v5210 = vadd.f32 %v5209, %v5179
        %v5211 = vadd.f32 %v5210, %v5180
        %v5212 = vadd.f32 %v5211, %v5181
        %v5213 = vadd.f32 %v5212, %v5182
        %v5214 = vadd.f32 %v5213, %v5183
        %v5215 = vadd.f32 %v5214, %v5184
        %v5216 = vadd.f32 %v5215, %v5185
        %v5217 = vadd.f32 %v5216, %v5186
        %v5218 = vadd.f32 %v5217, %v5187
        %v5219 = vadd.f32 %v5218, %v5188
        %v5220 = vadd.f32 %v5219, %v5189
        %v5221 = vadd.f32 %v5220, %v5190
        %v5222 = vadd.f32 %v5221, %v5191
        %v5223 = vrot.slane %v5222, 4
        %v5224 = vadd.f32 %v5222, %v5223
        %v5225 = vrot.slane %v5224, 2
        %v5226 = vadd.f32 %v5224, %v5225
        %v5227 = vrot.slane %v5226, 1
        %v5228 = vadd.f32 %v5226, %v5227
        %v5229 = vrsqrt.pop %v5228
        %v5230 = vmul.f32 %v5228, %v5229
        %vm5231 = vcmp.eq.f32.partialorder %v5228, inf
        %v5232 = vsel %vm5231, %v5228, %v5230
        %vm5233 = vcmp.eq.f32.partialorder %v5228, 0.0
        %v5234 = vand.u32 %v5228, 2147483648
        %v5235 = vsel %vm5233, %v5234, %v5232
        %5236 = vadd.xlane.f32.xlu0 %v5235
        %v5237 = vpop.xlane.xlu0 %5236
        %v5238 = vmul.f32 %v5237, 0.0625
        %v5239 = vadd.f32 %v5238, 1e-06
        %v5240 = vrcp.pop %v5239
        %v5241 = vmul.f32 %v5235, %v5240
        %v5242 = vld [vmem:[%s5] sm:$0x1]
        %v5243 = vmul.f32 %v5242, %v5241
        %v5244 = vadd.f32 %v5243, 1.0
        %v5245 = vpack.c.bf16 %v5244, %v5244
        %v5246 = vpack.c.bf16 %v5129, %v5128
        %v5247 = vpack.c.bf16 %v5131, %v5130
        %v5248 = vpack.c.bf16 %v5133, %v5132
        %v5249 = vpack.c.bf16 %v5135, %v5134
        %v5250 = vpack.c.bf16 %v5137, %v5136
        %v5251 = vpack.c.bf16 %v5139, %v5138
        %v5252 = vpack.c.bf16 %v5141, %v5140
        %v5253 = vpack.c.bf16 %v5143, %v5142
        %v5254 = vpack.c.bf16 %v5145, %v5144
        %v5255 = vpack.c.bf16 %v5147, %v5146
        %v5256 = vpack.c.bf16 %v5149, %v5148
        %v5257 = vpack.c.bf16 %v5151, %v5150
        %v5258 = vpack.c.bf16 %v5153, %v5152
        %v5259 = vpack.c.bf16 %v5155, %v5154
        %v5260 = vpack.c.bf16 %v5157, %v5156
        %v5261 = vpack.c.bf16 %v5159, %v5158
        %v5263 = vpack.i.b16 %v5245, %v5245
        %v5265 = vlaneseq
        %v5266 = vshrl.u32 %v5265, 7
        %v5267 = vsub.s32 0, %v5266
        %v5268 = vrot.slane %v5263, %v5267
        %v5269 = vmul.bf16 %v5246, %v5268
        %v5270 = vmul.bf16 %v5247, %v5268
        %v5271 = vmul.bf16 %v5248, %v5268
        %v5272 = vmul.bf16 %v5249, %v5268
        %v5273 = vmul.bf16 %v5250, %v5268
        %v5274 = vmul.bf16 %v5251, %v5268
        %v5275 = vmul.bf16 %v5252, %v5268
        %v5276 = vmul.bf16 %v5253, %v5268
        %v5277 = vmul.bf16 %v5254, %v5268
        %v5278 = vmul.bf16 %v5255, %v5268
        %v5279 = vmul.bf16 %v5256, %v5268
        %v5280 = vmul.bf16 %v5257, %v5268
        %v5281 = vmul.bf16 %v5258, %v5268
        %v5282 = vmul.bf16 %v5259, %v5268
        %v5283 = vmul.bf16 %v5260, %v5268
        %v5284 = vmul.bf16 %v5261, %v5268
        %v5285 = vld [vmem:[%s6] sm:$0x1]
        %v5286 = vpack.c.bf16 %v5285, %v5285
        %v5288 = vpack.i.b16 %v5286, %v5286
        %v5290 = vlaneseq
        %v5291 = vshrl.u32 %v5290, 7
        %v5292 = vsub.s32 0, %v5291
        %v5293 = vrot.slane %v5288, %v5292
        %v5294 = vadd.bf16 %v5269, %v5293
        %v5295 = vadd.bf16 %v5270, %v5293
        %v5296 = vadd.bf16 %v5271, %v5293
        %v5297 = vadd.bf16 %v5272, %v5293
        %v5298 = vadd.bf16 %v5273, %v5293
        %v5299 = vadd.bf16 %v5274, %v5293
        %v5300 = vadd.bf16 %v5275, %v5293
        %v5301 = vadd.bf16 %v5276, %v5293
        %v5302 = vadd.bf16 %v5277, %v5293
        %v5303 = vadd.bf16 %v5278, %v5293
        %v5304 = vadd.bf16 %v5279, %v5293
        %v5305 = vadd.bf16 %v5280, %v5293
        %v5306 = vadd.bf16 %v5281, %v5293
        %v5307 = vadd.bf16 %v5282, %v5293
        %v5308 = vadd.bf16 %v5283, %v5293
        %v5309 = vadd.bf16 %v5284, %v5293
        %v5310 = vld [vmem:[#allocation9] sm:$0xf]
        %v5311 = vld [vmem:[#allocation9 + $0x4] sm:$0xf]
        %v5312 = vld [vmem:[#allocation9 + $0x8] sm:$0xf]
        %v5313 = vld [vmem:[#allocation9 + $0xc] sm:$0xf]
        %v5314 = vld [vmem:[#allocation9 + $0x10] sm:$0xf]
        %v5315 = vld [vmem:[#allocation9 + $0x14] sm:$0xf]
        %v5316 = vld [vmem:[#allocation9 + $0x18] sm:$0xf]
        %v5317 = vld [vmem:[#allocation9 + $0x1c] sm:$0xf]
        %v5318 = vld [vmem:[#allocation9 + $0x20] sm:$0xf]
        %v5319 = vld [vmem:[#allocation9 + $0x24] sm:$0xf]
        %v5320 = vld [vmem:[#allocation9 + $0x28] sm:$0xf]
        %v5321 = vld [vmem:[#allocation9 + $0x2c] sm:$0xf]
        %v5322 = vld [vmem:[#allocation9 + $0x30] sm:$0xf]
        %v5323 = vld [vmem:[#allocation9 + $0x34] sm:$0xf]
        %v5324 = vld [vmem:[#allocation9 + $0x38] sm:$0xf]
        %v5325 = vld [vmem:[#allocation9 + $0x3c] sm:$0xf]
        %v5326 = vld [vmem:[%s8] sm:$0x1]
        %v5328 = vlaneseq
        %v5329 = vshrl.u32 %v5328, 7
        %v5330 = vsub.s32 0, %v5329
        %v5331 = vrot.slane %v5326, %v5330
        %v5349 = vunpack.c.l.b16 %v5310
        %v5350 = vunpack.c.l.b16 %v5311
        %v5351 = vunpack.c.l.b16 %v5312
        %v5352 = vunpack.c.l.b16 %v5313
        %v5353 = vunpack.c.l.b16 %v5314
        %v5354 = vunpack.c.l.b16 %v5315
        %v5355 = vunpack.c.l.b16 %v5316
        %v5356 = vunpack.c.l.b16 %v5317
        %v5357 = vunpack.c.l.b16 %v5318
        %v5358 = vunpack.c.l.b16 %v5319
        %v5359 = vunpack.c.l.b16 %v5320
        %v5360 = vunpack.c.l.b16 %v5321
        %v5361 = vunpack.c.l.b16 %v5322
        %v5362 = vunpack.c.l.b16 %v5323
        %v5363 = vunpack.c.l.b16 %v5324
        %v5364 = vunpack.c.l.b16 %v5325
        %v5365 = vpack.c.b16 %v5350, %v5349
        %v5366 = vpack.c.b16 %v5352, %v5351
        %v5367 = vpack.c.b16 %v5354, %v5353
        %v5368 = vpack.c.b16 %v5356, %v5355
        %v5369 = vpack.c.b16 %v5358, %v5357
        %v5370 = vpack.c.b16 %v5360, %v5359
        %v5371 = vpack.c.b16 %v5362, %v5361
        %v5372 = vpack.c.b16 %v5364, %v5363
        %5381 = vmatprep.subr.bf16.mxu0 0
        %5382 = vmatpush1.bf16.msra.mxu0 %v5372
        %5383 = vmatprep.subr.bf16.mxu0 0
        %5384 = vmatpush1.bf16.msra.mxu0 %v5371
        %5385 = vmatprep.subr.bf16.mxu0 0
        %5386 = vmatpush1.bf16.msra.mxu0 %v5370
        %5387 = vmatprep.subr.bf16.mxu0 0
        %5388 = vmatpush1.bf16.msra.mxu0 %v5369
        %5389 = vmatprep.subr.bf16.mxu0 0
        %5390 = vmatpush1.bf16.msra.mxu0 %v5368
        %5391 = vmatprep.subr.bf16.mxu0 0
        %5392 = vmatpush1.bf16.msra.mxu0 %v5367
        %5393 = vmatprep.subr.bf16.mxu0 0
        %5394 = vmatpush1.bf16.msra.mxu0 %v5366
        %5395 = vmatprep.subr.bf16.mxu0 0
        %5396 = vmatpush1.bf16.msra.mxu0 %v5365
        %5397 = vmatprep.subr.bf16.mxu0 0
        %5398 = vmatpush2.bf16.msra.mxu0 0
        %5399 = vmatprep.subr.bf16.mxu0 0
        %5400 = vmatpush2.bf16.msra.mxu0 0
        %5401 = vmatprep.subr.bf16.mxu0 0
        %5402 = vmatpush2.bf16.msra.mxu0 0
        %5403 = vmatprep.subr.bf16.mxu0 0
        %5404 = vmatpush2.bf16.msra.mxu0 0
        %5405 = vmatprep.subr.bf16.mxu0 0
        %5406 = vmatpush2.bf16.msra.mxu0 0
        %5407 = vmatprep.subr.bf16.mxu0 0
        %5408 = vmatpush2.bf16.msra.mxu0 0
        %5409 = vmatprep.subr.bf16.mxu0 0
        %5410 = vmatpush2.bf16.msra.mxu0 0
        %5411 = vmatprep.subr.bf16.mxu0 0
        %5412 = vmatpush2.bf16.msra.mxu0 0
        %5413 = vmatprep.mubr.bf16.mxu0 0
        %5414 = vmatmul.mubr.bf16.gmra.mxu0 %v5294
        %v5415 = vpop.f32.mrf.mxu0
        %v5416 = vadd.f32 %v5331, %v5415
        %v5417 = vpop.f32.mrf.mxu0
        %v5418 = vpop.f32.mrf.mxu0
        %v5419 = vadd.f32 %v5331, %v5418
        %v5420 = vpop.f32.mrf.mxu0
        %5421 = vmatprep.mubr.bf16.mxu0 0
        %5422 = vmatmul.mubr.bf16.gmra.mxu0 %v5295
        %v5423 = vpop.f32.mrf.mxu0
        %v5424 = vadd.f32 %v5331, %v5423
        %v5425 = vpop.f32.mrf.mxu0
        %v5426 = vpop.f32.mrf.mxu0
        %v5427 = vadd.f32 %v5331, %v5426
        %v5428 = vpop.f32.mrf.mxu0
        %5429 = vmatprep.mubr.bf16.mxu0 0
        %5430 = vmatmul.mubr.bf16.gmra.mxu0 %v5296
        %v5431 = vpop.f32.mrf.mxu0
        %v5432 = vadd.f32 %v5331, %v5431
        %v5433 = vpop.f32.mrf.mxu0
        %v5434 = vpop.f32.mrf.mxu0
        %v5435 = vadd.f32 %v5331, %v5434
        %v5436 = vpop.f32.mrf.mxu0
        %5437 = vmatprep.mubr.bf16.mxu0 0
        %5438 = vmatmul.mubr.bf16.gmra.mxu0 %v5297
        %v5439 = vpop.f32.mrf.mxu0
        %v5440 = vadd.f32 %v5331, %v5439
        %v5441 = vpop.f32.mrf.mxu0
        %v5442 = vpop.f32.mrf.mxu0
        %v5443 = vadd.f32 %v5331, %v5442
        %v5444 = vpop.f32.mrf.mxu0
        %5445 = vmatprep.mubr.bf16.mxu0 0
        %5446 = vmatmul.mubr.bf16.gmra.mxu0 %v5298
        %v5447 = vpop.f32.mrf.mxu0
        %v5448 = vadd.f32 %v5331, %v5447
        %v5449 = vpop.f32.mrf.mxu0
        %v5450 = vpop.f32.mrf.mxu0
        %v5451 = vadd.f32 %v5331, %v5450
        %v5452 = vpop.f32.mrf.mxu0
        %5453 = vmatprep.mubr.bf16.mxu0 0
        %5454 = vmatmul.mubr.bf16.gmra.mxu0 %v5299
        %v5455 = vpop.f32.mrf.mxu0
        %v5456 = vadd.f32 %v5331, %v5455
        %v5457 = vpop.f32.mrf.mxu0
        %v5458 = vpop.f32.mrf.mxu0
        %v5459 = vadd.f32 %v5331, %v5458
        %v5460 = vpop.f32.mrf.mxu0
        %5461 = vmatprep.mubr.bf16.mxu0 0
        %5462 = vmatmul.mubr.bf16.gmra.mxu0 %v5300
        %v5463 = vpop.f32.mrf.mxu0
        %v5464 = vadd.f32 %v5331, %v5463
        %v5465 = vpop.f32.mrf.mxu0
        %v5466 = vpop.f32.mrf.mxu0
        %v5467 = vadd.f32 %v5331, %v5466
        %v5468 = vpop.f32.mrf.mxu0
        %5469 = vmatprep.mubr.bf16.mxu0 0
        %5470 = vmatmul.mubr.bf16.gmra.mxu0 %v5301
        %v5471 = vpop.f32.mrf.mxu0
        %v5472 = vadd.f32 %v5331, %v5471
        %v5473 = vpop.f32.mrf.mxu0
        %v5474 = vpop.f32.mrf.mxu0
        %v5475 = vadd.f32 %v5331, %v5474
        %v5476 = vpop.f32.mrf.mxu0
        %5477 = vmatprep.mubr.bf16.mxu0 0
        %5478 = vmatmul.mubr.bf16.gmra.mxu0 %v5302
        %v5479 = vpop.f32.mrf.mxu0
        %v5480 = vadd.f32 %v5331, %v5479
        %v5481 = vpop.f32.mrf.mxu0
        %v5482 = vpop.f32.mrf.mxu0
        %v5483 = vadd.f32 %v5331, %v5482
        %v5484 = vpop.f32.mrf.mxu0
        %5485 = vmatprep.mubr.bf16.mxu0 0
        %5486 = vmatmul.mubr.bf16.gmra.mxu0 %v5303
        %v5487 = vpop.f32.mrf.mxu0
        %v5488 = vadd.f32 %v5331, %v5487
        %v5489 = vpop.f32.mrf.mxu0
        %v5490 = vpop.f32.mrf.mxu0
        %v5491 = vadd.f32 %v5331, %v5490
        %v5492 = vpop.f32.mrf.mxu0
        %5493 = vmatprep.mubr.bf16.mxu0 0
        %5494 = vmatmul.mubr.bf16.gmra.mxu0 %v5304
        %v5495 = vpop.f32.mrf.mxu0
        %v5496 = vadd.f32 %v5331, %v5495
        %v5497 = vpop.f32.mrf.mxu0
        %v5498 = vpop.f32.mrf.mxu0
        %v5499 = vadd.f32 %v5331, %v5498
        %v5500 = vpop.f32.mrf.mxu0
        %5501 = vmatprep.mubr.bf16.mxu0 0
        %5502 = vmatmul.mubr.bf16.gmra.mxu0 %v5305
        %v5503 = vpop.f32.mrf.mxu0
        %v5504 = vadd.f32 %v5331, %v5503
        %v5505 = vpop.f32.mrf.mxu0
        %v5506 = vpop.f32.mrf.mxu0
        %v5507 = vadd.f32 %v5331, %v5506
        %v5508 = vpop.f32.mrf.mxu0
        %5509 = vmatprep.mubr.bf16.mxu0 0
        %5510 = vmatmul.mubr.bf16.gmra.mxu0 %v5306
        %v5511 = vpop.f32.mrf.mxu0
        %v5512 = vadd.f32 %v5331, %v5511
        %v5513 = vpop.f32.mrf.mxu0
        %v5514 = vpop.f32.mrf.mxu0
        %v5515 = vadd.f32 %v5331, %v5514
        %v5516 = vpop.f32.mrf.mxu0
        %5517 = vmatprep.mubr.bf16.mxu0 0
        %5518 = vmatmul.mubr.bf16.gmra.mxu0 %v5307
        %v5519 = vpop.f32.mrf.mxu0
        %v5520 = vadd.f32 %v5331, %v5519
        %v5521 = vpop.f32.mrf.mxu0
        %v5522 = vpop.f32.mrf.mxu0
        %v5523 = vadd.f32 %v5331, %v5522
        %v5524 = vpop.f32.mrf.mxu0
        %5525 = vmatprep.mubr.bf16.mxu0 0
        %5526 = vmatmul.mubr.bf16.gmra.mxu0 %v5308
        %v5527 = vpop.f32.mrf.mxu0
        %v5528 = vadd.f32 %v5331, %v5527
        %v5529 = vpop.f32.mrf.mxu0
        %v5530 = vpop.f32.mrf.mxu0
        %v5531 = vadd.f32 %v5331, %v5530
        %v5532 = vpop.f32.mrf.mxu0
        %5533 = vmatprep.mubr.bf16.mxu0 0
        %5534 = vmatmul.mubr.bf16.gmra.mxu0 %v5309
        %v5535 = vpop.f32.mrf.mxu0
        %v5536 = vadd.f32 %v5331, %v5535
        %v5537 = vpop.f32.mrf.mxu0
        %v5538 = vpop.f32.mrf.mxu0
        %v5539 = vadd.f32 %v5331, %v5538
        %v5540 = vpop.f32.mrf.mxu0
        %5541 = vdwg.mxu0
        %v5542 = vld [vmem:[%s348] sm:$0xff]
        %v5543 = vld [vmem:[%s348 + $0x8] sm:$0xff]
        %v5544 = vld [vmem:[%s348 + $0x10] sm:$0xff]
        %v5545 = vld [vmem:[%s348 + $0x18] sm:$0xff]
        %v5546 = vld [vmem:[%s348 + $0x20] sm:$0xff]
        %v5547 = vld [vmem:[%s348 + $0x28] sm:$0xff]
        %v5548 = vld [vmem:[%s348 + $0x30] sm:$0xff]
        %v5549 = vld [vmem:[%s348 + $0x38] sm:$0xff]
        %v5550 = vld [vmem:[%s348 + $0x40] sm:$0xff]
        %v5551 = vld [vmem:[%s348 + $0x48] sm:$0xff]
        %v5552 = vld [vmem:[%s348 + $0x50] sm:$0xff]
        %v5553 = vld [vmem:[%s348 + $0x58] sm:$0xff]
        %v5554 = vld [vmem:[%s348 + $0x60] sm:$0xff]
        %v5555 = vld [vmem:[%s348 + $0x68] sm:$0xff]
        %v5556 = vld [vmem:[%s348 + $0x70] sm:$0xff]
        %v5557 = vld [vmem:[%s348 + $0x78] sm:$0xff]
        %v5558 = vld [vmem:[%s348 + $0x80] sm:$0xff]
        %v5559 = vld [vmem:[%s348 + $0x88] sm:$0xff]
        %v5560 = vld [vmem:[%s348 + $0x90] sm:$0xff]
        %v5561 = vld [vmem:[%s348 + $0x98] sm:$0xff]
        %v5562 = vld [vmem:[%s348 + $0xa0] sm:$0xff]
        %v5563 = vld [vmem:[%s348 + $0xa8] sm:$0xff]
        %v5564 = vld [vmem:[%s348 + $0xb0] sm:$0xff]
        %v5565 = vld [vmem:[%s348 + $0xb8] sm:$0xff]
        %v5566 = vld [vmem:[%s348 + $0xc0] sm:$0xff]
        %v5567 = vld [vmem:[%s348 + $0xc8] sm:$0xff]
        %v5568 = vld [vmem:[%s348 + $0xd0] sm:$0xff]
        %v5569 = vld [vmem:[%s348 + $0xd8] sm:$0xff]
        %v5570 = vld [vmem:[%s348 + $0xe0] sm:$0xff]
        %v5571 = vld [vmem:[%s348 + $0xe8] sm:$0xff]
        %v5572 = vld [vmem:[%s348 + $0xf0] sm:$0xff]
        %v5573 = vld [vmem:[%s348 + $0xf8] sm:$0xff]
        %v5574 = vadd.f32 %v5542, %v5416
        %v5575 = vadd.f32 %v5543, %v5419
        %v5576 = vadd.f32 %v5544, %v5424
        %v5577 = vadd.f32 %v5545, %v5427
        %v5578 = vadd.f32 %v5546, %v5432
        %v5579 = vadd.f32 %v5547, %v5435
        %v5580 = vadd.f32 %v5548, %v5440
        %v5581 = vadd.f32 %v5549, %v5443
        %v5582 = vadd.f32 %v5550, %v5448
        %v5583 = vadd.f32 %v5551, %v5451
        %v5584 = vadd.f32 %v5552, %v5456
        %v5585 = vadd.f32 %v5553, %v5459
        %v5586 = vadd.f32 %v5554, %v5464
        %v5587 = vadd.f32 %v5555, %v5467
        %v5588 = vadd.f32 %v5556, %v5472
        %v5589 = vadd.f32 %v5557, %v5475
        %v5590 = vadd.f32 %v5558, %v5480
        %v5591 = vadd.f32 %v5559, %v5483
        %v5592 = vadd.f32 %v5560, %v5488
        %v5593 = vadd.f32 %v5561, %v5491
        %v5594 = vadd.f32 %v5562, %v5496
        %v5595 = vadd.f32 %v5563, %v5499
        %v5596 = vadd.f32 %v5564, %v5504
        %v5597 = vadd.f32 %v5565, %v5507
        %v5598 = vadd.f32 %v5566, %v5512
        %v5599 = vadd.f32 %v5567, %v5515
        %v5600 = vadd.f32 %v5568, %v5520
        %v5601 = vadd.f32 %v5569, %v5523
        %v5602 = vadd.f32 %v5570, %v5528
        %v5603 = vadd.f32 %v5571, %v5531
        %v5604 = vadd.f32 %v5572, %v5536
        %v5605 = vadd.f32 %v5573, %v5539
        %5606 = vst [vmem:[%s394] sm:$0xff] %v5574
        %5607 = vst [vmem:[%s394 + $0x8] sm:$0xff] %v5575
        %5608 = vst [vmem:[%s394 + $0x10] sm:$0xff] %v5576
        %5609 = vst [vmem:[%s394 + $0x18] sm:$0xff] %v5577
        %5610 = vst [vmem:[%s394 + $0x20] sm:$0xff] %v5578
        %5611 = vst [vmem:[%s394 + $0x28] sm:$0xff] %v5579
        %5612 = vst [vmem:[%s394 + $0x30] sm:$0xff] %v5580
        %5613 = vst [vmem:[%s394 + $0x38] sm:$0xff] %v5581
        %5614 = vst [vmem:[%s394 + $0x40] sm:$0xff] %v5582
        %5615 = vst [vmem:[%s394 + $0x48] sm:$0xff] %v5583
        %5616 = vst [vmem:[%s394 + $0x50] sm:$0xff] %v5584
        %5617 = vst [vmem:[%s394 + $0x58] sm:$0xff] %v5585
        %5618 = vst [vmem:[%s394 + $0x60] sm:$0xff] %v5586
        %5619 = vst [vmem:[%s394 + $0x68] sm:$0xff] %v5587
        %5620 = vst [vmem:[%s394 + $0x70] sm:$0xff] %v5588
        %5621 = vst [vmem:[%s394 + $0x78] sm:$0xff] %v5589
        %5622 = vst [vmem:[%s394 + $0x80] sm:$0xff] %v5590
        %5623 = vst [vmem:[%s394 + $0x88] sm:$0xff] %v5591
        %5624 = vst [vmem:[%s394 + $0x90] sm:$0xff] %v5592
        %5625 = vst [vmem:[%s394 + $0x98] sm:$0xff] %v5593
        %5626 = vst [vmem:[%s394 + $0xa0] sm:$0xff] %v5594
        %5627 = vst [vmem:[%s394 + $0xa8] sm:$0xff] %v5595
        %5628 = vst [vmem:[%s394 + $0xb0] sm:$0xff] %v5596
        %5629 = vst [vmem:[%s394 + $0xb8] sm:$0xff] %v5597
        %5630 = vst [vmem:[%s394 + $0xc0] sm:$0xff] %v5598
        %5631 = vst [vmem:[%s394 + $0xc8] sm:$0xff] %v5599
        %5632 = vst [vmem:[%s394 + $0xd0] sm:$0xff] %v5600
        %5633 = vst [vmem:[%s394 + $0xd8] sm:$0xff] %v5601
        %5634 = vst [vmem:[%s394 + $0xe0] sm:$0xff] %v5602
        %5635 = vst [vmem:[%s394 + $0xe8] sm:$0xff] %v5603
        %5636 = vst [vmem:[%s394 + $0xf0] sm:$0xff] %v5604
        %5637 = vst [vmem:[%s394 + $0xf8] sm:$0xff] %v5605
        %s5638 = sand.u32 %s230, 1
        %s5639 = scalar_lea.sflag [#allocation5], %s5638
        %s5640 = sand.u32 %s230, 1
        %s5641 = smul.addr %s5640, 256
        %s5642 = scalar_lea.vmem [#allocation11], %s5641
        // Predicated region
        $region73: #{tpu_custom_call.1} parent=55 // pred_check
          %p5643 = pneg %p240
        $region74: #{tpu_custom_call.1} parent=55 // pred_check_branch
          %5645 = sbr.rel (%p5643) target = $region76
        $region75: #{tpu_custom_call.1} parent=55 // pred_region
          %s5647 = ssub.s32 4096, 4096
          %5648 = vsyncadd %s5639, %s5647
          %s5649 = smul.addr %s28, 32
          %s5650 = smul.addr %s5649, 128
          %s5651 = scalar_lea.hbm %s9, %s5650
          %s5652 = sshll.u32 %s5642, 4
          %s5653 = int_to_ptr.vmem [resolvable:$true] %s5652
          %5658 = dma.vmem_to_hbm [thread:$0]  %s5653, 4096, %s5651, %s5639, 128, 128, 8
        $region76: #{tpu_custom_call.1} parent=55 // pred_fallthru
          _
      $region56: #{tpu_custom_call.1} parent=5 // pred_fallthru
        _
      %p5659 = scmp.le.s32.totalorder 2, %s23
      // Predicated region
      $region77: #{tpu_custom_call.1} parent=5 // pred_check
        %p5660 = pneg %p5659
      $region78: #{tpu_custom_call.1} parent=5 // pred_check_branch
        %5662 = sbr.rel (%p5660) target = $region80
      $region79: #{tpu_custom_call.1} parent=5 // pred_region
        %s5663 = ssub.s32 %s23, 2
        // Predicated region
        $region81: #{tpu_custom_call.1} parent=79 // pred_check
          %p5664 = pneg %p246
        $region82: #{tpu_custom_call.1} parent=79 // pred_check_branch
          %5666 = sbr.rel (%p5664) target = $region84
        $region83: #{tpu_custom_call.1} parent=79 // pred_region
          %s5667 = sand.u32 %s231, 1
          %s5668 = scalar_lea.sflag [#allocation5], %s5667
          %s5669 = sand.u32 %s231, 1
          %s5670 = smul.addr %s5669, 256
          %s5671 = scalar_lea.vmem [#allocation11], %s5670
          %5672 = dma.done %s5668, 4096
        $region84: #{tpu_custom_call.1} parent=79 // pred_fallthru
          _
      $region80: #{tpu_custom_call.1} parent=5 // pred_fallthru
        _
    $region6: #{tpu_custom_call.1} parent=1 // loop_footer
      %s27 = sadd.s32 1, %s23
    $region7: #{tpu_custom_call.1} parent=1 // loop_footer_branch
      %22 = sbr.rel target = $region3
    $region8: #{tpu_custom_call.1} parent=1 // loop_exit
      _
    %5673 = vsyncpa [#allocation4], 1
    %s5674 = scalar_lea.sflag [#allocation4], 1
    %5675 = vsyncpa %s5674, 1
    %5676 = vsyncpa [#allocation7], 1
    %5677 = vsyncpa [#allocation10], 1
    %5678 = vsyncpa [#allocation5], 1
    %s5679 = scalar_lea.sflag [#allocation5], 1
    %5680 = vsyncpa %s5679, 1

</llo_original>
